<compile_context>
chip_gen: v7x
topology: tpu7x:2x2x1
jax: 0.10.0
libtpu: 0.0.40
codegen_flags: <defaults>
</compile_context>

<pallas_src>
import math
import jax
import jax.numpy as jnp
from jax.experimental import pallas as pl
from jax.experimental.pallas import tpu as pltpu

IN_DIM     = 40
D_MODEL    = 80
N_HEADS    = 2
HEAD_DIM   = D_MODEL // N_HEADS      # 40
HEAD_PAD   = 128                     # per-head lane slot (vreg-aligned)
D_FF       = 256
N_LAYERS   = 2
N_SPKS     = 600
N_SPKS_PAD = 640                     # 5 * 128 lanes -> unmasked logits stores
LN_EPS     = 1e-5
_MM_DT     = jnp.bfloat16            # matmul-input dtype; accumulation stays f32


def _layer_norm(x, w, b):
    mu = jnp.mean(x, axis=-1, keepdims=True)
    var = jnp.mean(jnp.square(x - mu), axis=-1, keepdims=True)
    return (x - mu) * jax.lax.rsqrt(var + LN_EPS) * w + b


def _classifier_kernel(mels_ref, wpre_ref, bpre_ref,
                       wqkv_ref, bqkv_ref, wo_ref, bo_ref,
                       ln1w_ref, ln1b_ref,
                       ff1w_ref, ff1b_ref, ff2w_ref, ff2b_ref,
                       ln2w_ref, ln2b_ref,
                       wp1_ref, bp1_ref, wp2_ref, bp2_ref, o_ref):
    TB, L, _ = mels_ref.shape
    x = mels_ref[...].reshape(TB * L, IN_DIM)                            # (TB*L, 40)

    # prenet: Linear(40 -> 80) on the flattened batch*length matrix.
    h = jnp.dot(x.astype(_MM_DT), wpre_ref[...],
                preferred_element_type=jnp.float32) + bpre_ref[...]      # (TB*L, 80) f32

    for l in range(N_LAYERS):                                            # static unroll
        # ---- fused QKV; each (q|k|v, head) block occupies its own 128-lane slot ----
        qkv = jnp.dot(h.astype(_MM_DT), wqkv_ref[l],
                      preferred_element_type=jnp.float32) + bqkv_ref[l]  # (TB*L, 768)
        qkv = qkv.reshape(TB, L, 6 * HEAD_PAD)

        attn = bo_ref[l]                                                 # (1, 80); broadcasts
        for hd in range(N_HEADS):                                        # static unroll
            q = qkv[:, :, hd * HEAD_PAD:(hd + 1) * HEAD_PAD].astype(_MM_DT)
            k = qkv[:, :, (N_HEADS + hd) * HEAD_PAD:
                          (N_HEADS + hd + 1) * HEAD_PAD].astype(_MM_DT)
            v = qkv[:, :, (2 * N_HEADS + hd) * HEAD_PAD:
                          (2 * N_HEADS + hd + 1) * HEAD_PAD].astype(_MM_DT)
            # softmax scale is pre-folded into the Q weights; padded lanes are exactly 0.
            s = jnp.einsum('bqd,bkd->bqk', q, k,
                           preferred_element_type=jnp.float32)           # (TB, L, L) f32
            s = s - jnp.max(s, axis=-1, keepdims=True)
            p = jnp.exp(s)
            p = p * pl.reciprocal(jnp.sum(p, axis=-1, keepdims=True), approx=True)
            pv = jnp.einsum('bqk,bkd->bqd', p.astype(_MM_DT), v,
                            preferred_element_type=jnp.float32)          # (TB, L, 128)
            # per-head out_proj (rows >= 40 of wo are zero) accumulated -> no lane concat
            attn = attn + jnp.dot(pv.reshape(TB * L, HEAD_PAD).astype(_MM_DT),
                                  wo_ref[l, hd],
                                  preferred_element_type=jnp.float32)    # (TB*L, 80)
        h = _layer_norm(h + attn, ln1w_ref[l], ln1b_ref[l])

        # ---- feed-forward: Linear(80->256) -> ReLU -> Linear(256->80) ----
        ff = jnp.dot(h.astype(_MM_DT), ff1w_ref[l],
                     preferred_element_type=jnp.float32) + ff1b_ref[l]
        ff = jnp.maximum(ff, 0.0)
        ff = jnp.dot(ff.astype(_MM_DT), ff2w_ref[l],
                     preferred_element_type=jnp.float32) + ff2b_ref[l]
        h = _layer_norm(h + ff, ln2w_ref[l], ln2b_ref[l])

    # ---- mean pool over sequence, prediction head on the (TB, 80) block ----
    stats = jnp.mean(h.reshape(TB, L, D_MODEL), axis=1)                  # (TB, 80)
    p1 = jnp.dot(stats.astype(_MM_DT), wp1_ref[...],
                 preferred_element_type=jnp.float32) + bp1_ref[...]
    p1 = jnp.maximum(p1, 0.0)
    logits = jnp.dot(p1.astype(_MM_DT), wp2_ref[...],
                     preferred_element_type=jnp.float32) + bp2_ref[...]  # (TB, 640)
    o_ref[...] = logits                                                  # dense (8,128) stores


PACKED_ORDER = ["wpre", "bpre", "wqkv", "bqkv", "wo", "bo",
                "ln1w", "ln1b", "ff1w", "ff1b", "ff2w", "ff2b",
                "ln2w", "ln2b", "wp1", "bp1", "wp2", "bp2"]


def _replicated_spec(p):
    nd = p.ndim
    return pl.BlockSpec(p.shape, lambda b, _nd=nd: (0,) * _nd)


def _cdiv(a, b):
    return -(-a // b)


def _choose_tiling(B, L, *, m_target=512, vmem_budget=20 << 20):
    """Pick (TB, B_pad).  TB is a multiple of 8 (dense-sublane logits stores) unless the
    whole padded batch fits in one block.  Grid kept >= 2 (>= 4 when M stays >= 128) so
    both v7x TensorCores get work; TB clamped so the f32 scores + activations fit VMEM."""
    def fits(tb):
        act = tb * L * (6 * HEAD_PAD + 2 * D_FF + 4 * D_MODEL) * 4       # f32 live activations
        scores = 2 * tb * L * L * 4                                       # per-head s + exp(s)
        return act + scores <= vmem_budget

    cap = max(1, m_target // max(L, 1))                                   # GEMM M target
    while cap > 1 and not fits(cap):                                      # VMEM clamp (v7x!)
        cap -= 1

    if B < 16 and B <= cap:
        return B, B                                                       # one step, full block

    tb = max(8, (min(cap, B // 2) // 8) * 8)                              # grid >= 2
    while _cdiv(B, tb) < 4 and tb % 16 == 0 and (tb // 2) * L >= 128:
        tb //= 2                                                          # prefer grid >= 4
    b_pad = _cdiv(B, tb) * tb
    return tb, b_pad


def pack_params(P):
    """Lane-align per-head QKV blocks (pad 40->128), fold softmax scale into Q, pad the
    head matrix to 640 columns, cast matmul weights to bf16."""
    scale = 1.0 / math.sqrt(HEAD_DIM)

    def pad_lanes(w, width):
        return jnp.pad(w, [(0, 0)] * (w.ndim - 1) + [(0, width - w.shape[-1])])

    qw = [pad_lanes(P["wq"][:, h] * scale, HEAD_PAD) for h in range(N_HEADS)]
    kw = [pad_lanes(P["wk"][:, h], HEAD_PAD) for h in range(N_HEADS)]
    vw = [pad_lanes(P["wv"][:, h], HEAD_PAD) for h in range(N_HEADS)]
    wqkv = jnp.concatenate(qw + kw + vw, axis=-1)                          # (Lyr, 80, 768)
    qb = [pad_lanes(P["bq"][:, h] * scale, HEAD_PAD) for h in range(N_HEADS)]
    kb = [pad_lanes(P["bk"][:, h], HEAD_PAD) for h in range(N_HEADS)]
    vb = [pad_lanes(P["bv"][:, h], HEAD_PAD) for h in range(N_HEADS)]
    bqkv = jnp.concatenate(qb + kb + vb, axis=-1)                          # (Lyr, 1, 768)

    # per-head out_proj, rows padded 40 -> 128 so the padded PV hits it directly
    wo = jnp.pad(P["wo"], ((0, 0), (0, 0), (0, HEAD_PAD - HEAD_DIM), (0, 0)))  # (Lyr,H,128,80)

    wp2 = pad_lanes(P["wp2"], N_SPKS_PAD)                                  # (80, 640)
    bp2 = pad_lanes(P["bp2"], N_SPKS_PAD)                                  # (1, 640)

    return {
        "wpre": P["wpre"].astype(_MM_DT), "bpre": P["bpre"],
        "wqkv": wqkv.astype(_MM_DT),      "bqkv": bqkv,
        "wo":   wo.astype(_MM_DT),        "bo":   P["bo"],
        "ln1w": P["ln1w"], "ln1b": P["ln1b"],
        "ff1w": P["ff1w"].astype(_MM_DT), "ff1b": P["ff1b"],
        "ff2w": P["ff2w"].astype(_MM_DT), "ff2b": P["ff2b"],
        "ln2w": P["ln2w"], "ln2b": P["ln2b"],
        "wp1":  P["wp1"].astype(_MM_DT),  "bp1":  P["bp1"],
        "wp2":  wp2.astype(_MM_DT),       "bp2":  bp2,
    }


def medium_classifier(mels, packed):
    """mels: (B, L, 40) f32  ->  logits (B, 600) f32."""
    B, L, _ = mels.shape
    TB, B_pad = _choose_tiling(B, L)
    if B_pad != B:
        mels = jnp.pad(mels, ((0, B_pad - B), (0, 0), (0, 0)))            # zero sequences
    grid = (B_pad // TB,)
    plist = [packed[k] for k in PACKED_ORDER]

    in_specs = [pl.BlockSpec((TB, L, IN_DIM), lambda b: (b, 0, 0))]
    in_specs += [_replicated_spec(p) for p in plist]
    out_spec = pl.BlockSpec((TB, N_SPKS_PAD), lambda b: (b, 0))

    # Advisory cost estimate (params counted once: replicated blocks stay VMEM-resident).
    attn_tok = (2 * D_MODEL * 6 * HEAD_PAD + N_HEADS * 4 * L * HEAD_PAD
                + N_HEADS * 2 * HEAD_PAD * D_MODEL)
    ffn_tok = 4 * D_MODEL * D_FF
    flops_tok = 2 * IN_DIM * D_MODEL + N_LAYERS * (attn_tok + ffn_tok)
    flops_seq = 2 * D_MODEL * D_MODEL + 2 * D_MODEL * N_SPKS_PAD
    flops = B_pad * (L * flops_tok + flops_seq)
    transcendentals = B_pad * N_LAYERS * N_HEADS * L * L
    param_bytes = sum(int(p.size) * jnp.dtype(p.dtype).itemsize for p in plist)
    bytes_accessed = B_pad * L * IN_DIM * 4 + param_bytes + B_pad * N_SPKS_PAD * 4

    out = pl.pallas_call(
        _classifier_kernel,
        grid=grid,
        in_specs=in_specs,
        out_specs=out_spec,
        out_shape=jax.ShapeDtypeStruct((B_pad, N_SPKS_PAD), jnp.float32),
        compiler_params=pltpu.CompilerParams(
            dimension_semantics=("parallel",),
            vmem_limit_bytes=32 * 1024 * 1024),
        cost_estimate=pl.CostEstimate(flops=flops, transcendentals=transcendentals,
                                      bytes_accessed=bytes_accessed),
    )(mels, *plist)
    return out[:B, :N_SPKS]


# ------------------------- parameter init (PyTorch-style decomposition) -------------------------
def init_params(key):
    keys = jax.random.split(key, 32)
    ki = iter(keys)
    w = lambda shape, s=0.1: (s * jax.random.normal(next(ki), shape)).astype(jnp.float32)
    return {
        "wpre": w((IN_DIM, D_MODEL)),               "bpre": w((1, D_MODEL), 0.02),
        "wq": w((N_LAYERS, N_HEADS, D_MODEL, HEAD_DIM)),
        "bq": w((N_LAYERS, N_HEADS, 1, HEAD_DIM), 0.02),
        "wk": w((N_LAYERS, N_HEADS, D_MODEL, HEAD_DIM)),
        "bk": w((N_LAYERS, N_HEADS, 1, HEAD_DIM), 0.02),
        "wv": w((N_LAYERS, N_HEADS, D_MODEL, HEAD_DIM)),
        "bv": w((N_LAYERS, N_HEADS, 1, HEAD_DIM), 0.02),
        "wo": w((N_LAYERS, N_HEADS, HEAD_DIM, D_MODEL)),
        "bo": w((N_LAYERS, 1, D_MODEL), 0.02),
        "ln1w": jnp.ones((N_LAYERS, 1, D_MODEL), jnp.float32),
        "ln1b": jnp.zeros((N_LAYERS, 1, D_MODEL), jnp.float32),
        "ff1w": w((N_LAYERS, D_MODEL, D_FF)),       "ff1b": w((N_LAYERS, 1, D_FF), 0.02),
        "ff2w": w((N_LAYERS, D_FF, D_MODEL)),       "ff2b": w((N_LAYERS, 1, D_MODEL), 0.02),
        "ln2w": jnp.ones((N_LAYERS, 1, D_MODEL), jnp.float32),
        "ln2b": jnp.zeros((N_LAYERS, 1, D_MODEL), jnp.float32),
        "wp1": w((D_MODEL, D_MODEL)),               "bp1": w((1, D_MODEL), 0.02),
        "wp2": w((D_MODEL, N_SPKS)),                "bp2": w((1, N_SPKS), 0.02),
    }


# ------------------------- pure-JAX f32 reference (module math, per-head) -------------------------
def _ref_single(x, P):
    scale = 1.0 / math.sqrt(HEAD_DIM)
    h = x @ P["wpre"] + P["bpre"]
    for l in range(N_LAYERS):
        attn = P["bo"][l]
        for hd in range(N_HEADS):
            q = (h @ P["wq"][l, hd] + P["bq"][l, hd]) * scale
            k = h @ P["wk"][l, hd] + P["bk"][l, hd]
            v = h @ P["wv"][l, hd] + P["bv"][l, hd]
            p = jax.nn.softmax(q @ k.T, axis=-1)
            attn = attn + (p @ v) @ P["wo"][l, hd]
        h = _layer_norm(h + attn, P["ln1w"][l], P["ln1b"][l])
        ff = jnp.maximum(h @ P["ff1w"][l] + P["ff1b"][l], 0.0) @ P["ff2w"][l] + P["ff2b"][l]
        h = _layer_norm(h + ff, P["ln2w"][l], P["ln2b"][l])
    stats = jnp.mean(h, axis=0, keepdims=True)
    return (jnp.maximum(stats @ P["wp1"] + P["bp1"], 0.0) @ P["wp2"] + P["bp2"])[0]


if __name__ == "__main__":
    key = jax.random.PRNGKey(0)
    pkey, xkey = jax.random.split(key)
    params = init_params(pkey)
    packed = pack_params(params)

    B, L = 16, 16                      # -> TB=8, grid=2 parallel steps, GEMM M = TB*L = 128
    mels = jax.random.normal(xkey, (B, L, IN_DIM), dtype=jnp.float32)

    out = jax.jit(medium_classifier)(mels, packed)
    out = jax.block_until_ready(out)
    assert out.shape == (B, N_SPKS), out.shape

    ref = jax.vmap(lambda x: _ref_single(x, params))(mels)
    # Kernel feeds bf16 into the MXU (f32 accumulation) and uses an approx reciprocal in
    # the softmax; tolerance vs. the pure-f32 reference is widened accordingly.
    assert jnp.allclose(out, ref, atol=3e-2, rtol=3e-2), float(jnp.max(jnp.abs(out - ref)))

    print("KERNEL_OK")
</pallas_src>

<mosaic_0001>
module attributes {stable_mosaic.version = 11 : i64} {
  func.func @_classifier_kernel(%arg0: i32, %arg1: memref<8x16x40xf32, #tpu.memory_space<vmem>>, %arg2: memref<40x80xbf16, #tpu.memory_space<vmem>>, %arg3: memref<1x80xf32, #tpu.memory_space<vmem>>, %arg4: memref<2x80x768xbf16, #tpu.memory_space<vmem>>, %arg5: memref<2x1x768xf32, #tpu.memory_space<vmem>>, %arg6: memref<2x2x128x80xbf16, #tpu.memory_space<vmem>>, %arg7: memref<2x1x80xf32, #tpu.memory_space<vmem>>, %arg8: memref<2x1x80xf32, #tpu.memory_space<vmem>>, %arg9: memref<2x1x80xf32, #tpu.memory_space<vmem>>, %arg10: memref<2x80x256xbf16, #tpu.memory_space<vmem>>, %arg11: memref<2x1x256xf32, #tpu.memory_space<vmem>>, %arg12: memref<2x256x80xbf16, #tpu.memory_space<vmem>>, %arg13: memref<2x1x80xf32, #tpu.memory_space<vmem>>, %arg14: memref<2x1x80xf32, #tpu.memory_space<vmem>>, %arg15: memref<2x1x80xf32, #tpu.memory_space<vmem>>, %arg16: memref<80x80xbf16, #tpu.memory_space<vmem>>, %arg17: memref<1x80xf32, #tpu.memory_space<vmem>>, %arg18: memref<80x640xbf16, #tpu.memory_space<vmem>>, %arg19: memref<1x640xf32, #tpu.memory_space<vmem>>, %arg20: memref<8x640xf32, #tpu.memory_space<vmem>>) attributes {dimension_semantics = [#tpu.dimension_semantics<parallel>], iteration_bounds = array<i64: 2>, scalar_prefetch = 0 : i64, scratch_operands = 0 : i64, tpu.core_type = #tpu.core_type<tc>, window_params = [{transform_indices = @transform_0, window_bounds = array<i64: 8, 16, 40>}, {pipeline_mode = #tpu.pipeline_mode<synchronous>, transform_indices = @transform_1, window_bounds = array<i64: 40, 80>}, {pipeline_mode = #tpu.pipeline_mode<synchronous>, transform_indices = @transform_2, window_bounds = array<i64: 1, 80>}, {pipeline_mode = #tpu.pipeline_mode<synchronous>, transform_indices = @transform_3, window_bounds = array<i64: 2, 80, 768>}, {pipeline_mode = #tpu.pipeline_mode<synchronous>, transform_indices = @transform_4, window_bounds = array<i64: 2, 1, 768>}, {pipeline_mode = #tpu.pipeline_mode<synchronous>, transform_indices = @transform_5, window_bounds = array<i64: 2, 2, 128, 80>}, {pipeline_mode = #tpu.pipeline_mode<synchronous>, transform_indices = @transform_6, window_bounds = array<i64: 2, 1, 80>}, {pipeline_mode = #tpu.pipeline_mode<synchronous>, transform_indices = @transform_7, window_bounds = array<i64: 2, 1, 80>}, {pipeline_mode = #tpu.pipeline_mode<synchronous>, transform_indices = @transform_8, window_bounds = array<i64: 2, 1, 80>}, {pipeline_mode = #tpu.pipeline_mode<synchronous>, transform_indices = @transform_9, window_bounds = array<i64: 2, 80, 256>}, {pipeline_mode = #tpu.pipeline_mode<synchronous>, transform_indices = @transform_10, window_bounds = array<i64: 2, 1, 256>}, {pipeline_mode = #tpu.pipeline_mode<synchronous>, transform_indices = @transform_11, window_bounds = array<i64: 2, 256, 80>}, {pipeline_mode = #tpu.pipeline_mode<synchronous>, transform_indices = @transform_12, window_bounds = array<i64: 2, 1, 80>}, {pipeline_mode = #tpu.pipeline_mode<synchronous>, transform_indices = @transform_13, window_bounds = array<i64: 2, 1, 80>}, {pipeline_mode = #tpu.pipeline_mode<synchronous>, transform_indices = @transform_14, window_bounds = array<i64: 2, 1, 80>}, {pipeline_mode = #tpu.pipeline_mode<synchronous>, transform_indices = @transform_15, window_bounds = array<i64: 80, 80>}, {pipeline_mode = #tpu.pipeline_mode<synchronous>, transform_indices = @transform_16, window_bounds = array<i64: 1, 80>}, {pipeline_mode = #tpu.pipeline_mode<synchronous>, transform_indices = @transform_17, window_bounds = array<i64: 80, 640>}, {pipeline_mode = #tpu.pipeline_mode<synchronous>, transform_indices = @transform_18, window_bounds = array<i64: 1, 640>}, {transform_indices = @transform_19, window_bounds = array<i64: 8, 640>}]} {
    %c0 = arith.constant 0 : index
    %c0_0 = arith.constant 0 : index
    %c0_1 = arith.constant 0 : index
    %0 = vector.load %arg1[%c0, %c0_0, %c0_1] : memref<8x16x40xf32, #tpu.memory_space<vmem>>, vector<8x16x40xf32>
    %1 = vector.shape_cast %0 : vector<8x16x40xf32> to vector<128x40xf32>
    %2 = arith.truncf %1 : vector<128x40xf32> to vector<128x40xbf16>
    %c0_2 = arith.constant 0 : index
    %c0_3 = arith.constant 0 : index
    %3 = vector.load %arg2[%c0_2, %c0_3] : memref<40x80xbf16, #tpu.memory_space<vmem>>, vector<40x80xbf16>
    %cst = arith.constant dense<0.000000e+00> : vector<128x80xf32>
    %4 = tpu.matmul %2, %3, %cst {dimension_numbers = #tpu.dot_dimension_numbers<[1], [0], [0], [1], [0, 0, 1, 1], [], []>} : vector<128x40xbf16>, vector<40x80xbf16>, vector<128x80xf32> -> vector<128x80xf32>
    %c0_4 = arith.constant 0 : index
    %c0_5 = arith.constant 0 : index
    %5 = vector.load %arg3[%c0_4, %c0_5] : memref<1x80xf32, #tpu.memory_space<vmem>>, vector<1x80xf32>
    %6 = vector.broadcast %5 : vector<1x80xf32> to vector<128x80xf32>
    %7 = arith.addf %4, %6 : vector<128x80xf32>
    %8 = arith.truncf %7 : vector<128x80xf32> to vector<128x80xbf16>
    %c0_6 = arith.constant 0 : index
    %c0_7 = arith.constant 0 : index
    %c0_8 = arith.constant 0 : index
    %9 = vector.load %arg4[%c0_6, %c0_7, %c0_8] : memref<2x80x768xbf16, #tpu.memory_space<vmem>>, vector<1x80x768xbf16>
    %10 = vector.shape_cast %9 : vector<1x80x768xbf16> to vector<80x768xbf16>
    %cst_9 = arith.constant dense<0.000000e+00> : vector<128x768xf32>
    %11 = tpu.matmul %8, %10, %cst_9 {dimension_numbers = #tpu.dot_dimension_numbers<[1], [0], [0], [1], [0, 0, 1, 1], [], []>} : vector<128x80xbf16>, vector<80x768xbf16>, vector<128x768xf32> -> vector<128x768xf32>
    %c0_10 = arith.constant 0 : index
    %c0_11 = arith.constant 0 : index
    %c0_12 = arith.constant 0 : index
    %12 = vector.load %arg5[%c0_10, %c0_11, %c0_12] : memref<2x1x768xf32, #tpu.memory_space<vmem>>, vector<1x1x768xf32>
    %13 = vector.shape_cast %12 : vector<1x1x768xf32> to vector<1x768xf32>
    %14 = vector.broadcast %13 : vector<1x768xf32> to vector<128x768xf32>
    %15 = arith.addf %11, %14 : vector<128x768xf32>
    %16 = vector.shape_cast %15 : vector<128x768xf32> to vector<8x16x768xf32>
    %c0_13 = arith.constant 0 : index
    %c0_14 = arith.constant 0 : index
    %c0_15 = arith.constant 0 : index
    %17 = vector.load %arg7[%c0_13, %c0_14, %c0_15] : memref<2x1x80xf32, #tpu.memory_space<vmem>>, vector<1x1x80xf32>
    %18 = vector.shape_cast %17 : vector<1x1x80xf32> to vector<1x80xf32>
    %19 = vector.extract_strided_slice %16 {offsets = [0, 0, 0], sizes = [8, 16, 128], strides = [1, 1, 1]} : vector<8x16x768xf32> to vector<8x16x128xf32>
    %20 = arith.truncf %19 : vector<8x16x128xf32> to vector<8x16x128xbf16>
    %21 = vector.extract_strided_slice %16 {offsets = [0, 0, 256], sizes = [8, 16, 128], strides = [1, 1, 1]} : vector<8x16x768xf32> to vector<8x16x128xf32>
    %22 = arith.truncf %21 : vector<8x16x128xf32> to vector<8x16x128xbf16>
    %23 = vector.extract_strided_slice %16 {offsets = [0, 0, 512], sizes = [8, 16, 128], strides = [1, 1, 1]} : vector<8x16x768xf32> to vector<8x16x128xf32>
    %24 = arith.truncf %23 : vector<8x16x128xf32> to vector<8x16x128xbf16>
    "tpu.trace_start"() <{level = 10 : i32, message = "bqd,bkd->bqk"}> : () -> ()
    %cst_16 = arith.constant dense<0.000000e+00> : vector<8x16x16xf32>
    %25 = tpu.matmul %20, %22, %cst_16 {dimension_numbers = #tpu.dot_dimension_numbers<[2], [2], [1], [1], [0, 0, 0, 1, 1, 1], [0], [0]>} : vector<8x16x128xbf16>, vector<8x16x128xbf16>, vector<8x16x16xf32> -> vector<8x16x16xf32>
    "tpu.trace_stop"() : () -> ()
    %cst_17 = arith.constant dense<0xFF800000> : vector<8x16xf32>
    %26 = vector.multi_reduction <maximumf>, %25, %cst_17 [2] : vector<8x16x16xf32> to vector<8x16xf32>
    %27 = vector.shape_cast %26 : vector<8x16xf32> to vector<8x16x1xf32>
    %28 = vector.broadcast %27 : vector<8x16x1xf32> to vector<8x16x16xf32>
    %29 = arith.subf %25, %28 : vector<8x16x16xf32>
    %30 = math.exp %29 : vector<8x16x16xf32>
    %cst_18 = arith.constant dense<0.000000e+00> : vector<8x16xf32>
    %31 = vector.multi_reduction <add>, %30, %cst_18 [2] : vector<8x16x16xf32> to vector<8x16xf32>
    %32 = vector.shape_cast %31 : vector<8x16xf32> to vector<8x16x1xf32>
    %33 = tpu.reciprocal %32 {approx = true} : vector<8x16x1xf32> -> vector<8x16x1xf32>
    %34 = vector.broadcast %33 : vector<8x16x1xf32> to vector<8x16x16xf32>
    %35 = arith.mulf %30, %34 : vector<8x16x16xf32>
    %36 = arith.truncf %35 : vector<8x16x16xf32> to vector<8x16x16xbf16>
    "tpu.trace_start"() <{level = 10 : i32, message = "bqk,bkd->bqd"}> : () -> ()
    %cst_19 = arith.constant dense<0.000000e+00> : vector<8x16x128xf32>
    %37 = tpu.matmul %36, %24, %cst_19 {dimension_numbers = #tpu.dot_dimension_numbers<[2], [1], [1], [2], [0, 0, 0, 1, 1, 2], [0], [0]>} : vector<8x16x16xbf16>, vector<8x16x128xbf16>, vector<8x16x128xf32> -> vector<8x16x128xf32>
    "tpu.trace_stop"() : () -> ()
    %38 = vector.shape_cast %37 : vector<8x16x128xf32> to vector<128x128xf32>
    %39 = arith.truncf %38 : vector<128x128xf32> to vector<128x128xbf16>
    %c0_20 = arith.constant 0 : index
    %c0_21 = arith.constant 0 : index
    %c0_22 = arith.constant 0 : index
    %c0_23 = arith.constant 0 : index
    %40 = vector.load %arg6[%c0_20, %c0_21, %c0_22, %c0_23] : memref<2x2x128x80xbf16, #tpu.memory_space<vmem>>, vector<1x1x128x80xbf16>
    %41 = vector.shape_cast %40 : vector<1x1x128x80xbf16> to vector<128x80xbf16>
    %cst_24 = arith.constant dense<0.000000e+00> : vector<128x80xf32>
    %42 = tpu.matmul %39, %41, %cst_24 {dimension_numbers = #tpu.dot_dimension_numbers<[1], [0], [0], [1], [0, 0, 1, 1], [], []>} : vector<128x128xbf16>, vector<128x80xbf16>, vector<128x80xf32> -> vector<128x80xf32>
    %43 = vector.broadcast %18 : vector<1x80xf32> to vector<128x80xf32>
    %44 = arith.addf %43, %42 : vector<128x80xf32>
    %45 = vector.extract_strided_slice %16 {offsets = [0, 0, 128], sizes = [8, 16, 128], strides = [1, 1, 1]} : vector<8x16x768xf32> to vector<8x16x128xf32>
    %46 = arith.truncf %45 : vector<8x16x128xf32> to vector<8x16x128xbf16>
    %47 = vector.extract_strided_slice %16 {offsets = [0, 0, 384], sizes = [8, 16, 128], strides = [1, 1, 1]} : vector<8x16x768xf32> to vector<8x16x128xf32>
    %48 = arith.truncf %47 : vector<8x16x128xf32> to vector<8x16x128xbf16>
    %49 = vector.extract_strided_slice %16 {offsets = [0, 0, 640], sizes = [8, 16, 128], strides = [1, 1, 1]} : vector<8x16x768xf32> to vector<8x16x128xf32>
    %50 = arith.truncf %49 : vector<8x16x128xf32> to vector<8x16x128xbf16>
    "tpu.trace_start"() <{level = 10 : i32, message = "bqd,bkd->bqk"}> : () -> ()
    %cst_25 = arith.constant dense<0.000000e+00> : vector<8x16x16xf32>
    %51 = tpu.matmul %46, %48, %cst_25 {dimension_numbers = #tpu.dot_dimension_numbers<[2], [2], [1], [1], [0, 0, 0, 1, 1, 1], [0], [0]>} : vector<8x16x128xbf16>, vector<8x16x128xbf16>, vector<8x16x16xf32> -> vector<8x16x16xf32>
    "tpu.trace_stop"() : () -> ()
    %cst_26 = arith.constant dense<0xFF800000> : vector<8x16xf32>
    %52 = vector.multi_reduction <maximumf>, %51, %cst_26 [2] : vector<8x16x16xf32> to vector<8x16xf32>
    %53 = vector.shape_cast %52 : vector<8x16xf32> to vector<8x16x1xf32>
    %54 = vector.broadcast %53 : vector<8x16x1xf32> to vector<8x16x16xf32>
    %55 = arith.subf %51, %54 : vector<8x16x16xf32>
    %56 = math.exp %55 : vector<8x16x16xf32>
    %cst_27 = arith.constant dense<0.000000e+00> : vector<8x16xf32>
    %57 = vector.multi_reduction <add>, %56, %cst_27 [2] : vector<8x16x16xf32> to vector<8x16xf32>
    %58 = vector.shape_cast %57 : vector<8x16xf32> to vector<8x16x1xf32>
    %59 = tpu.reciprocal %58 {approx = true} : vector<8x16x1xf32> -> vector<8x16x1xf32>
    %60 = vector.broadcast %59 : vector<8x16x1xf32> to vector<8x16x16xf32>
    %61 = arith.mulf %56, %60 : vector<8x16x16xf32>
    %62 = arith.truncf %61 : vector<8x16x16xf32> to vector<8x16x16xbf16>
    "tpu.trace_start"() <{level = 10 : i32, message = "bqk,bkd->bqd"}> : () -> ()
    %cst_28 = arith.constant dense<0.000000e+00> : vector<8x16x128xf32>
    %63 = tpu.matmul %62, %50, %cst_28 {dimension_numbers = #tpu.dot_dimension_numbers<[2], [1], [1], [2], [0, 0, 0, 1, 1, 2], [0], [0]>} : vector<8x16x16xbf16>, vector<8x16x128xbf16>, vector<8x16x128xf32> -> vector<8x16x128xf32>
    "tpu.trace_stop"() : () -> ()
    %64 = vector.shape_cast %63 : vector<8x16x128xf32> to vector<128x128xf32>
    %65 = arith.truncf %64 : vector<128x128xf32> to vector<128x128xbf16>
    %c0_29 = arith.constant 0 : index
    %c1 = arith.constant 1 : index
    %c0_30 = arith.constant 0 : index
    %c0_31 = arith.constant 0 : index
    %66 = vector.load %arg6[%c0_29, %c1, %c0_30, %c0_31] : memref<2x2x128x80xbf16, #tpu.memory_space<vmem>>, vector<1x1x128x80xbf16>
    %67 = vector.shape_cast %66 : vector<1x1x128x80xbf16> to vector<128x80xbf16>
    %cst_32 = arith.constant dense<0.000000e+00> : vector<128x80xf32>
    %68 = tpu.matmul %65, %67, %cst_32 {dimension_numbers = #tpu.dot_dimension_numbers<[1], [0], [0], [1], [0, 0, 1, 1], [], []>} : vector<128x128xbf16>, vector<128x80xbf16>, vector<128x80xf32> -> vector<128x80xf32>
    %69 = arith.addf %44, %68 : vector<128x80xf32>
    %70 = arith.addf %7, %69 : vector<128x80xf32>
    %c0_33 = arith.constant 0 : index
    %c0_34 = arith.constant 0 : index
    %c0_35 = arith.constant 0 : index
    %71 = vector.load %arg8[%c0_33, %c0_34, %c0_35] : memref<2x1x80xf32, #tpu.memory_space<vmem>>, vector<1x1x80xf32>
    %72 = vector.shape_cast %71 : vector<1x1x80xf32> to vector<1x80xf32>
    %c0_36 = arith.constant 0 : index
    %c0_37 = arith.constant 0 : index
    %c0_38 = arith.constant 0 : index
    %73 = vector.load %arg9[%c0_36, %c0_37, %c0_38] : memref<2x1x80xf32, #tpu.memory_space<vmem>>, vector<1x1x80xf32>
    %74 = vector.shape_cast %73 : vector<1x1x80xf32> to vector<1x80xf32>
    %cst_39 = arith.constant dense<0.000000e+00> : vector<128xf32>
    %75 = vector.multi_reduction <add>, %70, %cst_39 [1] : vector<128x80xf32> to vector<128xf32>
    %76 = vector.shape_cast %75 : vector<128xf32> to vector<128x1xf32>
    %cst_40 = arith.constant 8.000000e+01 : f32
    %77 = vector.broadcast %cst_40 : f32 to vector<128x1xf32>
    %78 = arith.divf %76, %77 : vector<128x1xf32>
    %79 = vector.broadcast %78 : vector<128x1xf32> to vector<128x80xf32>
    %80 = arith.subf %70, %79 : vector<128x80xf32>
    %81 = arith.mulf %80, %80 : vector<128x80xf32>
    %cst_41 = arith.constant dense<0.000000e+00> : vector<128xf32>
    %82 = vector.multi_reduction <add>, %81, %cst_41 [1] : vector<128x80xf32> to vector<128xf32>
    %83 = vector.shape_cast %82 : vector<128xf32> to vector<128x1xf32>
    %cst_42 = arith.constant 8.000000e+01 : f32
    %84 = vector.broadcast %cst_42 : f32 to vector<128x1xf32>
    %85 = arith.divf %83, %84 : vector<128x1xf32>
    %86 = vector.broadcast %78 : vector<128x1xf32> to vector<128x80xf32>
    %87 = arith.subf %70, %86 : vector<128x80xf32>
    %cst_43 = arith.constant 9.99999974E-6 : f32
    %88 = vector.broadcast %cst_43 : f32 to vector<128x1xf32>
    %89 = arith.addf %85, %88 : vector<128x1xf32>
    %90 = math.rsqrt %89 : vector<128x1xf32>
    %91 = vector.broadcast %90 : vector<128x1xf32> to vector<128x80xf32>
    %92 = arith.mulf %87, %91 : vector<128x80xf32>
    %93 = vector.broadcast %72 : vector<1x80xf32> to vector<128x80xf32>
    %94 = arith.mulf %92, %93 : vector<128x80xf32>
    %95 = vector.broadcast %74 : vector<1x80xf32> to vector<128x80xf32>
    %96 = arith.addf %94, %95 : vector<128x80xf32>
    %97 = arith.truncf %96 : vector<128x80xf32> to vector<128x80xbf16>
    %c0_44 = arith.constant 0 : index
    %c0_45 = arith.constant 0 : index
    %c0_46 = arith.constant 0 : index
    %98 = vector.load %arg10[%c0_44, %c0_45, %c0_46] : memref<2x80x256xbf16, #tpu.memory_space<vmem>>, vector<1x80x256xbf16>
    %99 = vector.shape_cast %98 : vector<1x80x256xbf16> to vector<80x256xbf16>
    %cst_47 = arith.constant dense<0.000000e+00> : vector<128x256xf32>
    %100 = tpu.matmul %97, %99, %cst_47 {dimension_numbers = #tpu.dot_dimension_numbers<[1], [0], [0], [1], [0, 0, 1, 1], [], []>} : vector<128x80xbf16>, vector<80x256xbf16>, vector<128x256xf32> -> vector<128x256xf32>
    %c0_48 = arith.constant 0 : index
    %c0_49 = arith.constant 0 : index
    %c0_50 = arith.constant 0 : index
    %101 = vector.load %arg11[%c0_48, %c0_49, %c0_50] : memref<2x1x256xf32, #tpu.memory_space<vmem>>, vector<1x1x256xf32>
    %102 = vector.shape_cast %101 : vector<1x1x256xf32> to vector<1x256xf32>
    %103 = vector.broadcast %102 : vector<1x256xf32> to vector<128x256xf32>
    %104 = arith.addf %100, %103 : vector<128x256xf32>
    %cst_51 = arith.constant 0.000000e+00 : f32
    %105 = vector.broadcast %cst_51 : f32 to vector<128x256xf32>
    %106 = arith.maximumf %104, %105 : vector<128x256xf32>
    %107 = arith.truncf %106 : vector<128x256xf32> to vector<128x256xbf16>
    %c0_52 = arith.constant 0 : index
    %c0_53 = arith.constant 0 : index
    %c0_54 = arith.constant 0 : index
    %108 = vector.load %arg12[%c0_52, %c0_53, %c0_54] : memref<2x256x80xbf16, #tpu.memory_space<vmem>>, vector<1x256x80xbf16>
    %109 = vector.shape_cast %108 : vector<1x256x80xbf16> to vector<256x80xbf16>
    %cst_55 = arith.constant dense<0.000000e+00> : vector<128x80xf32>
    %110 = tpu.matmul %107, %109, %cst_55 {dimension_numbers = #tpu.dot_dimension_numbers<[1], [0], [0], [1], [0, 0, 1, 1], [], []>} : vector<128x256xbf16>, vector<256x80xbf16>, vector<128x80xf32> -> vector<128x80xf32>
    %c0_56 = arith.constant 0 : index
    %c0_57 = arith.constant 0 : index
    %c0_58 = arith.constant 0 : index
    %111 = vector.load %arg13[%c0_56, %c0_57, %c0_58] : memref<2x1x80xf32, #tpu.memory_space<vmem>>, vector<1x1x80xf32>
    %112 = vector.shape_cast %111 : vector<1x1x80xf32> to vector<1x80xf32>
    %113 = vector.broadcast %112 : vector<1x80xf32> to vector<128x80xf32>
    %114 = arith.addf %110, %113 : vector<128x80xf32>
    %115 = arith.addf %96, %114 : vector<128x80xf32>
    %c0_59 = arith.constant 0 : index
    %c0_60 = arith.constant 0 : index
    %c0_61 = arith.constant 0 : index
    %116 = vector.load %arg14[%c0_59, %c0_60, %c0_61] : memref<2x1x80xf32, #tpu.memory_space<vmem>>, vector<1x1x80xf32>
    %117 = vector.shape_cast %116 : vector<1x1x80xf32> to vector<1x80xf32>
    %c0_62 = arith.constant 0 : index
    %c0_63 = arith.constant 0 : index
    %c0_64 = arith.constant 0 : index
    %118 = vector.load %arg15[%c0_62, %c0_63, %c0_64] : memref<2x1x80xf32, #tpu.memory_space<vmem>>, vector<1x1x80xf32>
    %119 = vector.shape_cast %118 : vector<1x1x80xf32> to vector<1x80xf32>
    %cst_65 = arith.constant dense<0.000000e+00> : vector<128xf32>
    %120 = vector.multi_reduction <add>, %115, %cst_65 [1] : vector<128x80xf32> to vector<128xf32>
    %121 = vector.shape_cast %120 : vector<128xf32> to vector<128x1xf32>
    %cst_66 = arith.constant 8.000000e+01 : f32
    %122 = vector.broadcast %cst_66 : f32 to vector<128x1xf32>
    %123 = arith.divf %121, %122 : vector<128x1xf32>
    %124 = vector.broadcast %123 : vector<128x1xf32> to vector<128x80xf32>
    %125 = arith.subf %115, %124 : vector<128x80xf32>
    %126 = arith.mulf %125, %125 : vector<128x80xf32>
    %cst_67 = arith.constant dense<0.000000e+00> : vector<128xf32>
    %127 = vector.multi_reduction <add>, %126, %cst_67 [1] : vector<128x80xf32> to vector<128xf32>
    %128 = vector.shape_cast %127 : vector<128xf32> to vector<128x1xf32>
    %cst_68 = arith.constant 8.000000e+01 : f32
    %129 = vector.broadcast %cst_68 : f32 to vector<128x1xf32>
    %130 = arith.divf %128, %129 : vector<128x1xf32>
    %131 = vector.broadcast %123 : vector<128x1xf32> to vector<128x80xf32>
    %132 = arith.subf %115, %131 : vector<128x80xf32>
    %cst_69 = arith.constant 9.99999974E-6 : f32
    %133 = vector.broadcast %cst_69 : f32 to vector<128x1xf32>
    %134 = arith.addf %130, %133 : vector<128x1xf32>
    %135 = math.rsqrt %134 : vector<128x1xf32>
    %136 = vector.broadcast %135 : vector<128x1xf32> to vector<128x80xf32>
    %137 = arith.mulf %132, %136 : vector<128x80xf32>
    %138 = vector.broadcast %117 : vector<1x80xf32> to vector<128x80xf32>
    %139 = arith.mulf %137, %138 : vector<128x80xf32>
    %140 = vector.broadcast %119 : vector<1x80xf32> to vector<128x80xf32>
    %141 = arith.addf %139, %140 : vector<128x80xf32>
    %142 = arith.truncf %141 : vector<128x80xf32> to vector<128x80xbf16>
    %c1_70 = arith.constant 1 : index
    %c0_71 = arith.constant 0 : index
    %c0_72 = arith.constant 0 : index
    %143 = vector.load %arg4[%c1_70, %c0_71, %c0_72] : memref<2x80x768xbf16, #tpu.memory_space<vmem>>, vector<1x80x768xbf16>
    %144 = vector.shape_cast %143 : vector<1x80x768xbf16> to vector<80x768xbf16>
    %cst_73 = arith.constant dense<0.000000e+00> : vector<128x768xf32>
    %145 = tpu.matmul %142, %144, %cst_73 {dimension_numbers = #tpu.dot_dimension_numbers<[1], [0], [0], [1], [0, 0, 1, 1], [], []>} : vector<128x80xbf16>, vector<80x768xbf16>, vector<128x768xf32> -> vector<128x768xf32>
    %c1_74 = arith.constant 1 : index
    %c0_75 = arith.constant 0 : index
    %c0_76 = arith.constant 0 : index
    %146 = vector.load %arg5[%c1_74, %c0_75, %c0_76] : memref<2x1x768xf32, #tpu.memory_space<vmem>>, vector<1x1x768xf32>
    %147 = vector.shape_cast %146 : vector<1x1x768xf32> to vector<1x768xf32>
    %148 = vector.broadcast %147 : vector<1x768xf32> to vector<128x768xf32>
    %149 = arith.addf %145, %148 : vector<128x768xf32>
    %150 = vector.shape_cast %149 : vector<128x768xf32> to vector<8x16x768xf32>
    %c1_77 = arith.constant 1 : index
    %c0_78 = arith.constant 0 : index
    %c0_79 = arith.constant 0 : index
    %151 = vector.load %arg7[%c1_77, %c0_78, %c0_79] : memref<2x1x80xf32, #tpu.memory_space<vmem>>, vector<1x1x80xf32>
    %152 = vector.shape_cast %151 : vector<1x1x80xf32> to vector<1x80xf32>
    %153 = vector.extract_strided_slice %150 {offsets = [0, 0, 0], sizes = [8, 16, 128], strides = [1, 1, 1]} : vector<8x16x768xf32> to vector<8x16x128xf32>
    %154 = arith.truncf %153 : vector<8x16x128xf32> to vector<8x16x128xbf16>
    %155 = vector.extract_strided_slice %150 {offsets = [0, 0, 256], sizes = [8, 16, 128], strides = [1, 1, 1]} : vector<8x16x768xf32> to vector<8x16x128xf32>
    %156 = arith.truncf %155 : vector<8x16x128xf32> to vector<8x16x128xbf16>
    %157 = vector.extract_strided_slice %150 {offsets = [0, 0, 512], sizes = [8, 16, 128], strides = [1, 1, 1]} : vector<8x16x768xf32> to vector<8x16x128xf32>
    %158 = arith.truncf %157 : vector<8x16x128xf32> to vector<8x16x128xbf16>
    "tpu.trace_start"() <{level = 10 : i32, message = "bqd,bkd->bqk"}> : () -> ()
    %cst_80 = arith.constant dense<0.000000e+00> : vector<8x16x16xf32>
    %159 = tpu.matmul %154, %156, %cst_80 {dimension_numbers = #tpu.dot_dimension_numbers<[2], [2], [1], [1], [0, 0, 0, 1, 1, 1], [0], [0]>} : vector<8x16x128xbf16>, vector<8x16x128xbf16>, vector<8x16x16xf32> -> vector<8x16x16xf32>
    "tpu.trace_stop"() : () -> ()
    %cst_81 = arith.constant dense<0xFF800000> : vector<8x16xf32>
    %160 = vector.multi_reduction <maximumf>, %159, %cst_81 [2] : vector<8x16x16xf32> to vector<8x16xf32>
    %161 = vector.shape_cast %160 : vector<8x16xf32> to vector<8x16x1xf32>
    %162 = vector.broadcast %161 : vector<8x16x1xf32> to vector<8x16x16xf32>
    %163 = arith.subf %159, %162 : vector<8x16x16xf32>
    %164 = math.exp %163 : vector<8x16x16xf32>
    %cst_82 = arith.constant dense<0.000000e+00> : vector<8x16xf32>
    %165 = vector.multi_reduction <add>, %164, %cst_82 [2] : vector<8x16x16xf32> to vector<8x16xf32>
    %166 = vector.shape_cast %165 : vector<8x16xf32> to vector<8x16x1xf32>
    %167 = tpu.reciprocal %166 {approx = true} : vector<8x16x1xf32> -> vector<8x16x1xf32>
    %168 = vector.broadcast %167 : vector<8x16x1xf32> to vector<8x16x16xf32>
    %169 = arith.mulf %164, %168 : vector<8x16x16xf32>
    %170 = arith.truncf %169 : vector<8x16x16xf32> to vector<8x16x16xbf16>
    "tpu.trace_start"() <{level = 10 : i32, message = "bqk,bkd->bqd"}> : () -> ()
    %cst_83 = arith.constant dense<0.000000e+00> : vector<8x16x128xf32>
    %171 = tpu.matmul %170, %158, %cst_83 {dimension_numbers = #tpu.dot_dimension_numbers<[2], [1], [1], [2], [0, 0, 0, 1, 1, 2], [0], [0]>} : vector<8x16x16xbf16>, vector<8x16x128xbf16>, vector<8x16x128xf32> -> vector<8x16x128xf32>
    "tpu.trace_stop"() : () -> ()
    %172 = vector.shape_cast %171 : vector<8x16x128xf32> to vector<128x128xf32>
    %173 = arith.truncf %172 : vector<128x128xf32> to vector<128x128xbf16>
    %c1_84 = arith.constant 1 : index
    %c0_85 = arith.constant 0 : index
    %c0_86 = arith.constant 0 : index
    %c0_87 = arith.constant 0 : index
    %174 = vector.load %arg6[%c1_84, %c0_85, %c0_86, %c0_87] : memref<2x2x128x80xbf16, #tpu.memory_space<vmem>>, vector<1x1x128x80xbf16>
    %175 = vector.shape_cast %174 : vector<1x1x128x80xbf16> to vector<128x80xbf16>
    %cst_88 = arith.constant dense<0.000000e+00> : vector<128x80xf32>
    %176 = tpu.matmul %173, %175, %cst_88 {dimension_numbers = #tpu.dot_dimension_numbers<[1], [0], [0], [1], [0, 0, 1, 1], [], []>} : vector<128x128xbf16>, vector<128x80xbf16>, vector<128x80xf32> -> vector<128x80xf32>
    %177 = vector.broadcast %152 : vector<1x80xf32> to vector<128x80xf32>
    %178 = arith.addf %177, %176 : vector<128x80xf32>
    %179 = vector.extract_strided_slice %150 {offsets = [0, 0, 128], sizes = [8, 16, 128], strides = [1, 1, 1]} : vector<8x16x768xf32> to vector<8x16x128xf32>
    %180 = arith.truncf %179 : vector<8x16x128xf32> to vector<8x16x128xbf16>
    %181 = vector.extract_strided_slice %150 {offsets = [0, 0, 384], sizes = [8, 16, 128], strides = [1, 1, 1]} : vector<8x16x768xf32> to vector<8x16x128xf32>
    %182 = arith.truncf %181 : vector<8x16x128xf32> to vector<8x16x128xbf16>
    %183 = vector.extract_strided_slice %150 {offsets = [0, 0, 640], sizes = [8, 16, 128], strides = [1, 1, 1]} : vector<8x16x768xf32> to vector<8x16x128xf32>
    %184 = arith.truncf %183 : vector<8x16x128xf32> to vector<8x16x128xbf16>
    "tpu.trace_start"() <{level = 10 : i32, message = "bqd,bkd->bqk"}> : () -> ()
    %cst_89 = arith.constant dense<0.000000e+00> : vector<8x16x16xf32>
    %185 = tpu.matmul %180, %182, %cst_89 {dimension_numbers = #tpu.dot_dimension_numbers<[2], [2], [1], [1], [0, 0, 0, 1, 1, 1], [0], [0]>} : vector<8x16x128xbf16>, vector<8x16x128xbf16>, vector<8x16x16xf32> -> vector<8x16x16xf32>
    "tpu.trace_stop"() : () -> ()
    %cst_90 = arith.constant dense<0xFF800000> : vector<8x16xf32>
    %186 = vector.multi_reduction <maximumf>, %185, %cst_90 [2] : vector<8x16x16xf32> to vector<8x16xf32>
    %187 = vector.shape_cast %186 : vector<8x16xf32> to vector<8x16x1xf32>
    %188 = vector.broadcast %187 : vector<8x16x1xf32> to vector<8x16x16xf32>
    %189 = arith.subf %185, %188 : vector<8x16x16xf32>
    %190 = math.exp %189 : vector<8x16x16xf32>
    %cst_91 = arith.constant dense<0.000000e+00> : vector<8x16xf32>
    %191 = vector.multi_reduction <add>, %190, %cst_91 [2] : vector<8x16x16xf32> to vector<8x16xf32>
    %192 = vector.shape_cast %191 : vector<8x16xf32> to vector<8x16x1xf32>
    %193 = tpu.reciprocal %192 {approx = true} : vector<8x16x1xf32> -> vector<8x16x1xf32>
    %194 = vector.broadcast %193 : vector<8x16x1xf32> to vector<8x16x16xf32>
    %195 = arith.mulf %190, %194 : vector<8x16x16xf32>
    %196 = arith.truncf %195 : vector<8x16x16xf32> to vector<8x16x16xbf16>
    "tpu.trace_start"() <{level = 10 : i32, message = "bqk,bkd->bqd"}> : () -> ()
    %cst_92 = arith.constant dense<0.000000e+00> : vector<8x16x128xf32>
    %197 = tpu.matmul %196, %184, %cst_92 {dimension_numbers = #tpu.dot_dimension_numbers<[2], [1], [1], [2], [0, 0, 0, 1, 1, 2], [0], [0]>} : vector<8x16x16xbf16>, vector<8x16x128xbf16>, vector<8x16x128xf32> -> vector<8x16x128xf32>
    "tpu.trace_stop"() : () -> ()
    %198 = vector.shape_cast %197 : vector<8x16x128xf32> to vector<128x128xf32>
    %199 = arith.truncf %198 : vector<128x128xf32> to vector<128x128xbf16>
    %c1_93 = arith.constant 1 : index
    %c1_94 = arith.constant 1 : index
    %c0_95 = arith.constant 0 : index
    %c0_96 = arith.constant 0 : index
    %200 = vector.load %arg6[%c1_93, %c1_94, %c0_95, %c0_96] : memref<2x2x128x80xbf16, #tpu.memory_space<vmem>>, vector<1x1x128x80xbf16>
    %201 = vector.shape_cast %200 : vector<1x1x128x80xbf16> to vector<128x80xbf16>
    %cst_97 = arith.constant dense<0.000000e+00> : vector<128x80xf32>
    %202 = tpu.matmul %199, %201, %cst_97 {dimension_numbers = #tpu.dot_dimension_numbers<[1], [0], [0], [1], [0, 0, 1, 1], [], []>} : vector<128x128xbf16>, vector<128x80xbf16>, vector<128x80xf32> -> vector<128x80xf32>
    %203 = arith.addf %178, %202 : vector<128x80xf32>
    %204 = arith.addf %141, %203 : vector<128x80xf32>
    %c1_98 = arith.constant 1 : index
    %c0_99 = arith.constant 0 : index
    %c0_100 = arith.constant 0 : index
    %205 = vector.load %arg8[%c1_98, %c0_99, %c0_100] : memref<2x1x80xf32, #tpu.memory_space<vmem>>, vector<1x1x80xf32>
    %206 = vector.shape_cast %205 : vector<1x1x80xf32> to vector<1x80xf32>
    %c1_101 = arith.constant 1 : index
    %c0_102 = arith.constant 0 : index
    %c0_103 = arith.constant 0 : index
    %207 = vector.load %arg9[%c1_101, %c0_102, %c0_103] : memref<2x1x80xf32, #tpu.memory_space<vmem>>, vector<1x1x80xf32>
    %208 = vector.shape_cast %207 : vector<1x1x80xf32> to vector<1x80xf32>
    %cst_104 = arith.constant dense<0.000000e+00> : vector<128xf32>
    %209 = vector.multi_reduction <add>, %204, %cst_104 [1] : vector<128x80xf32> to vector<128xf32>
    %210 = vector.shape_cast %209 : vector<128xf32> to vector<128x1xf32>
    %cst_105 = arith.constant 8.000000e+01 : f32
    %211 = vector.broadcast %cst_105 : f32 to vector<128x1xf32>
    %212 = arith.divf %210, %211 : vector<128x1xf32>
    %213 = vector.broadcast %212 : vector<128x1xf32> to vector<128x80xf32>
    %214 = arith.subf %204, %213 : vector<128x80xf32>
    %215 = arith.mulf %214, %214 : vector<128x80xf32>
    %cst_106 = arith.constant dense<0.000000e+00> : vector<128xf32>
    %216 = vector.multi_reduction <add>, %215, %cst_106 [1] : vector<128x80xf32> to vector<128xf32>
    %217 = vector.shape_cast %216 : vector<128xf32> to vector<128x1xf32>
    %cst_107 = arith.constant 8.000000e+01 : f32
    %218 = vector.broadcast %cst_107 : f32 to vector<128x1xf32>
    %219 = arith.divf %217, %218 : vector<128x1xf32>
    %220 = vector.broadcast %212 : vector<128x1xf32> to vector<128x80xf32>
    %221 = arith.subf %204, %220 : vector<128x80xf32>
    %cst_108 = arith.constant 9.99999974E-6 : f32
    %222 = vector.broadcast %cst_108 : f32 to vector<128x1xf32>
    %223 = arith.addf %219, %222 : vector<128x1xf32>
    %224 = math.rsqrt %223 : vector<128x1xf32>
    %225 = vector.broadcast %224 : vector<128x1xf32> to vector<128x80xf32>
    %226 = arith.mulf %221, %225 : vector<128x80xf32>
    %227 = vector.broadcast %206 : vector<1x80xf32> to vector<128x80xf32>
    %228 = arith.mulf %226, %227 : vector<128x80xf32>
    %229 = vector.broadcast %208 : vector<1x80xf32> to vector<128x80xf32>
    %230 = arith.addf %228, %229 : vector<128x80xf32>
    %231 = arith.truncf %230 : vector<128x80xf32> to vector<128x80xbf16>
    %c1_109 = arith.constant 1 : index
    %c0_110 = arith.constant 0 : index
    %c0_111 = arith.constant 0 : index
    %232 = vector.load %arg10[%c1_109, %c0_110, %c0_111] : memref<2x80x256xbf16, #tpu.memory_space<vmem>>, vector<1x80x256xbf16>
    %233 = vector.shape_cast %232 : vector<1x80x256xbf16> to vector<80x256xbf16>
    %cst_112 = arith.constant dense<0.000000e+00> : vector<128x256xf32>
    %234 = tpu.matmul %231, %233, %cst_112 {dimension_numbers = #tpu.dot_dimension_numbers<[1], [0], [0], [1], [0, 0, 1, 1], [], []>} : vector<128x80xbf16>, vector<80x256xbf16>, vector<128x256xf32> -> vector<128x256xf32>
    %c1_113 = arith.constant 1 : index
    %c0_114 = arith.constant 0 : index
    %c0_115 = arith.constant 0 : index
    %235 = vector.load %arg11[%c1_113, %c0_114, %c0_115] : memref<2x1x256xf32, #tpu.memory_space<vmem>>, vector<1x1x256xf32>
    %236 = vector.shape_cast %235 : vector<1x1x256xf32> to vector<1x256xf32>
    %237 = vector.broadcast %236 : vector<1x256xf32> to vector<128x256xf32>
    %238 = arith.addf %234, %237 : vector<128x256xf32>
    %cst_116 = arith.constant 0.000000e+00 : f32
    %239 = vector.broadcast %cst_116 : f32 to vector<128x256xf32>
    %240 = arith.maximumf %238, %239 : vector<128x256xf32>
    %241 = arith.truncf %240 : vector<128x256xf32> to vector<128x256xbf16>
    %c1_117 = arith.constant 1 : index
    %c0_118 = arith.constant 0 : index
    %c0_119 = arith.constant 0 : index
    %242 = vector.load %arg12[%c1_117, %c0_118, %c0_119] : memref<2x256x80xbf16, #tpu.memory_space<vmem>>, vector<1x256x80xbf16>
    %243 = vector.shape_cast %242 : vector<1x256x80xbf16> to vector<256x80xbf16>
    %cst_120 = arith.constant dense<0.000000e+00> : vector<128x80xf32>
    %244 = tpu.matmul %241, %243, %cst_120 {dimension_numbers = #tpu.dot_dimension_numbers<[1], [0], [0], [1], [0, 0, 1, 1], [], []>} : vector<128x256xbf16>, vector<256x80xbf16>, vector<128x80xf32> -> vector<128x80xf32>
    %c1_121 = arith.constant 1 : index
    %c0_122 = arith.constant 0 : index
    %c0_123 = arith.constant 0 : index
    %245 = vector.load %arg13[%c1_121, %c0_122, %c0_123] : memref<2x1x80xf32, #tpu.memory_space<vmem>>, vector<1x1x80xf32>
    %246 = vector.shape_cast %245 : vector<1x1x80xf32> to vector<1x80xf32>
    %247 = vector.broadcast %246 : vector<1x80xf32> to vector<128x80xf32>
    %248 = arith.addf %244, %247 : vector<128x80xf32>
    %249 = arith.addf %230, %248 : vector<128x80xf32>
    %c1_124 = arith.constant 1 : index
    %c0_125 = arith.constant 0 : index
    %c0_126 = arith.constant 0 : index
    %250 = vector.load %arg14[%c1_124, %c0_125, %c0_126] : memref<2x1x80xf32, #tpu.memory_space<vmem>>, vector<1x1x80xf32>
    %251 = vector.shape_cast %250 : vector<1x1x80xf32> to vector<1x80xf32>
    %c1_127 = arith.constant 1 : index
    %c0_128 = arith.constant 0 : index
    %c0_129 = arith.constant 0 : index
    %252 = vector.load %arg15[%c1_127, %c0_128, %c0_129] : memref<2x1x80xf32, #tpu.memory_space<vmem>>, vector<1x1x80xf32>
    %253 = vector.shape_cast %252 : vector<1x1x80xf32> to vector<1x80xf32>
    %cst_130 = arith.constant dense<0.000000e+00> : vector<128xf32>
    %254 = vector.multi_reduction <add>, %249, %cst_130 [1] : vector<128x80xf32> to vector<128xf32>
    %255 = vector.shape_cast %254 : vector<128xf32> to vector<128x1xf32>
    %cst_131 = arith.constant 8.000000e+01 : f32
    %256 = vector.broadcast %cst_131 : f32 to vector<128x1xf32>
    %257 = arith.divf %255, %256 : vector<128x1xf32>
    %258 = vector.broadcast %257 : vector<128x1xf32> to vector<128x80xf32>
    %259 = arith.subf %249, %258 : vector<128x80xf32>
    %260 = arith.mulf %259, %259 : vector<128x80xf32>
    %cst_132 = arith.constant dense<0.000000e+00> : vector<128xf32>
    %261 = vector.multi_reduction <add>, %260, %cst_132 [1] : vector<128x80xf32> to vector<128xf32>
    %262 = vector.shape_cast %261 : vector<128xf32> to vector<128x1xf32>
    %cst_133 = arith.constant 8.000000e+01 : f32
    %263 = vector.broadcast %cst_133 : f32 to vector<128x1xf32>
    %264 = arith.divf %262, %263 : vector<128x1xf32>
    %265 = vector.broadcast %257 : vector<128x1xf32> to vector<128x80xf32>
    %266 = arith.subf %249, %265 : vector<128x80xf32>
    %cst_134 = arith.constant 9.99999974E-6 : f32
    %267 = vector.broadcast %cst_134 : f32 to vector<128x1xf32>
    %268 = arith.addf %264, %267 : vector<128x1xf32>
    %269 = math.rsqrt %268 : vector<128x1xf32>
    %270 = vector.broadcast %269 : vector<128x1xf32> to vector<128x80xf32>
    %271 = arith.mulf %266, %270 : vector<128x80xf32>
    %272 = vector.broadcast %251 : vector<1x80xf32> to vector<128x80xf32>
    %273 = arith.mulf %271, %272 : vector<128x80xf32>
    %274 = vector.broadcast %253 : vector<1x80xf32> to vector<128x80xf32>
    %275 = arith.addf %273, %274 : vector<128x80xf32>
    %276 = vector.shape_cast %275 : vector<128x80xf32> to vector<8x16x80xf32>
    %cst_135 = arith.constant dense<0.000000e+00> : vector<8x80xf32>
    %277 = vector.multi_reduction <add>, %276, %cst_135 [1] : vector<8x16x80xf32> to vector<8x80xf32>
    %cst_136 = arith.constant 1.600000e+01 : f32
    %278 = vector.broadcast %cst_136 : f32 to vector<8x80xf32>
    %279 = arith.divf %277, %278 : vector<8x80xf32>
    %280 = arith.truncf %279 : vector<8x80xf32> to vector<8x80xbf16>
    %c0_137 = arith.constant 0 : index
    %c0_138 = arith.constant 0 : index
    %281 = vector.load %arg16[%c0_137, %c0_138] : memref<80x80xbf16, #tpu.memory_space<vmem>>, vector<80x80xbf16>
    %cst_139 = arith.constant dense<0.000000e+00> : vector<8x80xf32>
    %282 = tpu.matmul %280, %281, %cst_139 {dimension_numbers = #tpu.dot_dimension_numbers<[1], [0], [0], [1], [0, 0, 1, 1], [], []>} : vector<8x80xbf16>, vector<80x80xbf16>, vector<8x80xf32> -> vector<8x80xf32>
    %c0_140 = arith.constant 0 : index
    %c0_141 = arith.constant 0 : index
    %283 = vector.load %arg17[%c0_140, %c0_141] : memref<1x80xf32, #tpu.memory_space<vmem>>, vector<1x80xf32>
    %284 = vector.broadcast %283 : vector<1x80xf32> to vector<8x80xf32>
    %285 = arith.addf %282, %284 : vector<8x80xf32>
    %cst_142 = arith.constant 0.000000e+00 : f32
    %286 = vector.broadcast %cst_142 : f32 to vector<8x80xf32>
    %287 = arith.maximumf %285, %286 : vector<8x80xf32>
    %288 = arith.truncf %287 : vector<8x80xf32> to vector<8x80xbf16>
    %c0_143 = arith.constant 0 : index
    %c0_144 = arith.constant 0 : index
    %289 = vector.load %arg18[%c0_143, %c0_144] : memref<80x640xbf16, #tpu.memory_space<vmem>>, vector<80x640xbf16>
    %cst_145 = arith.constant dense<0.000000e+00> : vector<8x640xf32>
    %290 = tpu.matmul %288, %289, %cst_145 {dimension_numbers = #tpu.dot_dimension_numbers<[1], [0], [0], [1], [0, 0, 1, 1], [], []>} : vector<8x80xbf16>, vector<80x640xbf16>, vector<8x640xf32> -> vector<8x640xf32>
    %c0_146 = arith.constant 0 : index
    %c0_147 = arith.constant 0 : index
    %291 = vector.load %arg19[%c0_146, %c0_147] : memref<1x640xf32, #tpu.memory_space<vmem>>, vector<1x640xf32>
    %292 = vector.broadcast %291 : vector<1x640xf32> to vector<8x640xf32>
    %293 = arith.addf %290, %292 : vector<8x640xf32>
    %c0_148 = arith.constant 0 : index
    %c0_149 = arith.constant 0 : index
    %294 = vector.load %arg20[%c0_148, %c0_149] : memref<8x640xf32, #tpu.memory_space<vmem>>, vector<8x640xf32>
    tpu.vector_store %arg20[%c0_148, %c0_149], %293 {strides = array<i32>} : memref<8x640xf32, #tpu.memory_space<vmem>>, vector<8x640xf32>,
    return
  }
  func.func @transform_0(%arg0: i32) -> (i32, i32, i32) {
    %c0_i32 = arith.constant 0 : i32
    %c0_i32_0 = arith.constant 0 : i32
    %c0_i32_1 = arith.constant 0 : i32
    return %arg0, %c0_i32, %c0_i32_0 : i32, i32, i32
  }
  func.func @transform_1(%arg0: i32) -> (i32, i32) {
    %c0_i32 = arith.constant 0 : i32
    %c0_i32_0 = arith.constant 0 : i32
    %c0_i32_1 = arith.constant 0 : i32
    return %c0_i32, %c0_i32_0 : i32, i32
  }
  func.func @transform_2(%arg0: i32) -> (i32, i32) {
    %c0_i32 = arith.constant 0 : i32
    %c0_i32_0 = arith.constant 0 : i32
    %c0_i32_1 = arith.constant 0 : i32
    return %c0_i32, %c0_i32_0 : i32, i32
  }
  func.func @transform_3(%arg0: i32) -> (i32, i32, i32) {
    %c0_i32 = arith.constant 0 : i32
    %c0_i32_0 = arith.constant 0 : i32
    %c0_i32_1 = arith.constant 0 : i32
    %c0_i32_2 = arith.constant 0 : i32
    return %c0_i32, %c0_i32_0, %c0_i32_1 : i32, i32, i32
  }
  func.func @transform_4(%arg0: i32) -> (i32, i32, i32) {
    %c0_i32 = arith.constant 0 : i32
    %c0_i32_0 = arith.constant 0 : i32
    %c0_i32_1 = arith.constant 0 : i32
    %c0_i32_2 = arith.constant 0 : i32
    return %c0_i32, %c0_i32_0, %c0_i32_1 : i32, i32, i32
  }
  func.func @transform_5(%arg0: i32) -> (i32, i32, i32, i32) {
    %c0_i32 = arith.constant 0 : i32
    %c0_i32_0 = arith.constant 0 : i32
    %c0_i32_1 = arith.constant 0 : i32
    %c0_i32_2 = arith.constant 0 : i32
    %c0_i32_3 = arith.constant 0 : i32
    return %c0_i32, %c0_i32_0, %c0_i32_1, %c0_i32_2 : i32, i32, i32, i32
  }
  func.func @transform_6(%arg0: i32) -> (i32, i32, i32) {
    %c0_i32 = arith.constant 0 : i32
    %c0_i32_0 = arith.constant 0 : i32
    %c0_i32_1 = arith.constant 0 : i32
    %c0_i32_2 = arith.constant 0 : i32
    return %c0_i32, %c0_i32_0, %c0_i32_1 : i32, i32, i32
  }
  func.func @transform_7(%arg0: i32) -> (i32, i32, i32) {
    %c0_i32 = arith.constant 0 : i32
    %c0_i32_0 = arith.constant 0 : i32
    %c0_i32_1 = arith.constant 0 : i32
    %c0_i32_2 = arith.constant 0 : i32
    return %c0_i32, %c0_i32_0, %c0_i32_1 : i32, i32, i32
  }
  func.func @transform_8(%arg0: i32) -> (i32, i32, i32) {
    %c0_i32 = arith.constant 0 : i32
    %c0_i32_0 = arith.constant 0 : i32
    %c0_i32_1 = arith.constant 0 : i32
    %c0_i32_2 = arith.constant 0 : i32
    return %c0_i32, %c0_i32_0, %c0_i32_1 : i32, i32, i32
  }
  func.func @transform_9(%arg0: i32) -> (i32, i32, i32) {
    %c0_i32 = arith.constant 0 : i32
    %c0_i32_0 = arith.constant 0 : i32
    %c0_i32_1 = arith.constant 0 : i32
    %c0_i32_2 = arith.constant 0 : i32
    return %c0_i32, %c0_i32_0, %c0_i32_1 : i32, i32, i32
  }
  func.func @transform_10(%arg0: i32) -> (i32, i32, i32) {
    %c0_i32 = arith.constant 0 : i32
    %c0_i32_0 = arith.constant 0 : i32
    %c0_i32_1 = arith.constant 0 : i32
    %c0_i32_2 = arith.constant 0 : i32
    return %c0_i32, %c0_i32_0, %c0_i32_1 : i32, i32, i32
  }
  func.func @transform_11(%arg0: i32) -> (i32, i32, i32) {
    %c0_i32 = arith.constant 0 : i32
    %c0_i32_0 = arith.constant 0 : i32
    %c0_i32_1 = arith.constant 0 : i32
    %c0_i32_2 = arith.constant 0 : i32
    return %c0_i32, %c0_i32_0, %c0_i32_1 : i32, i32, i32
  }
  func.func @transform_12(%arg0: i32) -> (i32, i32, i32) {
    %c0_i32 = arith.constant 0 : i32
    %c0_i32_0 = arith.constant 0 : i32
    %c0_i32_1 = arith.constant 0 : i32
    %c0_i32_2 = arith.constant 0 : i32
    return %c0_i32, %c0_i32_0, %c0_i32_1 : i32, i32, i32
  }
  func.func @transform_13(%arg0: i32) -> (i32, i32, i32) {
    %c0_i32 = arith.constant 0 : i32
    %c0_i32_0 = arith.constant 0 : i32
    %c0_i32_1 = arith.constant 0 : i32
    %c0_i32_2 = arith.constant 0 : i32
    return %c0_i32, %c0_i32_0, %c0_i32_1 : i32, i32, i32
  }
  func.func @transform_14(%arg0: i32) -> (i32, i32, i32) {
    %c0_i32 = arith.constant 0 : i32
    %c0_i32_0 = arith.constant 0 : i32
    %c0_i32_1 = arith.constant 0 : i32
    %c0_i32_2 = arith.constant 0 : i32
    return %c0_i32, %c0_i32_0, %c0_i32_1 : i32, i32, i32
  }
  func.func @transform_15(%arg0: i32) -> (i32, i32) {
    %c0_i32 = arith.constant 0 : i32
    %c0_i32_0 = arith.constant 0 : i32
    %c0_i32_1 = arith.constant 0 : i32
    return %c0_i32, %c0_i32_0 : i32, i32
  }
  func.func @transform_16(%arg0: i32) -> (i32, i32) {
    %c0_i32 = arith.constant 0 : i32
    %c0_i32_0 = arith.constant 0 : i32
    %c0_i32_1 = arith.constant 0 : i32
    return %c0_i32, %c0_i32_0 : i32, i32
  }
  func.func @transform_17(%arg0: i32) -> (i32, i32) {
    %c0_i32 = arith.constant 0 : i32
    %c0_i32_0 = arith.constant 0 : i32
    %c0_i32_1 = arith.constant 0 : i32
    return %c0_i32, %c0_i32_0 : i32, i32
  }
  func.func @transform_18(%arg0: i32) -> (i32, i32) {
    %c0_i32 = arith.constant 0 : i32
    %c0_i32_0 = arith.constant 0 : i32
    %c0_i32_1 = arith.constant 0 : i32
    return %c0_i32, %c0_i32_0 : i32, i32
  }
  func.func @transform_19(%arg0: i32) -> (i32, i32) {
    %c0_i32 = arith.constant 0 : i32
    %c0_i32_0 = arith.constant 0 : i32
    return %arg0, %c0_i32 : i32, i32
  }
}

</mosaic_0001>

<llo_original>
// kernel: medium_classifier.1
$region0: #{medium_classifier.1}
  #allocation0 [shape = 'u32[]', space=smem, size = 0x4, offset = 0x4, fixed_abs, tag = 'smem constant byte address 0x4 - core index']
  #allocation1 [shape = 'u32[144,128]{1,0:T(1,128)}', space=vmem, size = 0x12000, scoped, tag = 'internal scratch']
  %s0 = inlined_call_operand.vmem [shape: f32[16,16,40], index: 0, kind: input, shape index: {}]
  %s1 = inlined_call_operand.hbm [shape: bf16[40,80], index: 1, kind: input, shape index: {}]
  %s2 = inlined_call_operand.hbm [shape: f32[1,80], index: 2, kind: input, shape index: {}]
  %s3 = inlined_call_operand.vmem [shape: bf16[2,80,768], index: 3, kind: input, shape index: {}]
  %s4 = inlined_call_operand.hbm [shape: f32[2,1,768], index: 4, kind: input, shape index: {}]
  %s5 = inlined_call_operand.vmem [shape: bf16[2,2,128,80], index: 5, kind: input, shape index: {}]
  %s6 = inlined_call_operand.hbm [shape: f32[2,1,80], index: 6, kind: input, shape index: {}]
  %s7 = inlined_call_operand.hbm [shape: f32[2,1,80], index: 7, kind: input, shape index: {}]
  %s8 = inlined_call_operand.hbm [shape: f32[2,1,80], index: 8, kind: input, shape index: {}]
  %s9 = inlined_call_operand.vmem [shape: bf16[2,80,256], index: 9, kind: input, shape index: {}]
  %s10 = inlined_call_operand.vmem [shape: f32[2,1,256], index: 10, kind: input, shape index: {}]
  %s11 = inlined_call_operand.vmem [shape: bf16[2,256,80], index: 11, kind: input, shape index: {}]
  %s12 = inlined_call_operand.hbm [shape: f32[2,1,80], index: 12, kind: input, shape index: {}]
  %s13 = inlined_call_operand.hbm [shape: f32[2,1,80], index: 13, kind: input, shape index: {}]
  %s14 = inlined_call_operand.hbm [shape: f32[2,1,80], index: 14, kind: input, shape index: {}]
  %s15 = inlined_call_operand.hbm [shape: bf16[80,80], index: 15, kind: input, shape index: {}]
  %s16 = inlined_call_operand.hbm [shape: f32[1,80], index: 16, kind: input, shape index: {}]
  %s17 = inlined_call_operand.hbm [shape: bf16[80,640], index: 17, kind: input, shape index: {}]
  %s18 = inlined_call_operand.hbm [shape: f32[1,640], index: 18, kind: input, shape index: {}]
  %s19 = inlined_call_operand.hbm [shape: f32[16,640], index: 19, kind: output, shape index: {}]
  %s20 = sld [smem:[#allocation0]]
  $region161: #{medium_classifier.1} parent=0
    _
  %s22 = ssub.s32 1, %s20
  %s23 = scalar_select 0, %s22, %s20
  $region1: #{medium_classifier.1} parent=0
    #allocation2 [shape = 'u8[10240]{0}', space=vmem, size = 0x2800, scoped, tag = 'input window, operand 1, single buffered']
    #allocation3 [shape = 's32[2]{0}', space=sflag, size = 0x8, scoped, tag = 'scoped memory for medium_classifier.1']
    #allocation4 [shape = 's32[2]{0}', space=sflag, size = 0x8, scoped, tag = 'scoped memory for medium_classifier.1']
    #allocation5 [shape = 'u8[512]{0}', space=vmem, size = 0x400, scoped, tag = 'input window, operand 2, single buffered']
    #allocation6 [shape = 's32[1]{0}', space=sflag, size = 0x4, scoped, tag = 'scoped memory for medium_classifier.1']
    #allocation7 [shape = 'u8[6144]{0}', space=vmem, size = 0x1800, scoped, tag = 'input window, operand 4, single buffered']
    #allocation8 [shape = 'u8[1024]{0}', space=vmem, size = 0x400, scoped, tag = 'input window, operand 6, single buffered']
    #allocation9 [shape = 's32[1]{0}', space=sflag, size = 0x4, scoped, tag = 'scoped memory for medium_classifier.1']
    #allocation10 [shape = 'u8[1024]{0}', space=vmem, size = 0x400, scoped, tag = 'input window, operand 7, single buffered']
    #allocation11 [shape = 'u8[1024]{0}', space=vmem, size = 0x400, scoped, tag = 'input window, operand 8, single buffered']
    #allocation12 [shape = 's32[1]{0}', space=sflag, size = 0x4, scoped, tag = 'scoped memory for medium_classifier.1']
    #allocation13 [shape = 'u8[1024]{0}', space=vmem, size = 0x400, scoped, tag = 'input window, operand 12, single buffered']
    #allocation14 [shape = 'u8[1024]{0}', space=vmem, size = 0x400, scoped, tag = 'input window, operand 13, single buffered']
    #allocation15 [shape = 's32[1]{0}', space=sflag, size = 0x4, scoped, tag = 'scoped memory for medium_classifier.1']
    #allocation16 [shape = 'u8[1024]{0}', space=vmem, size = 0x400, scoped, tag = 'input window, operand 14, single buffered']
    #allocation17 [shape = 'u8[20480]{0}', space=vmem, size = 0x5000, scoped, tag = 'input window, operand 15, single buffered']
    #allocation18 [shape = 's32[1]{0}', space=sflag, size = 0x4, scoped, tag = 'scoped memory for medium_classifier.1']
    #allocation19 [shape = 'u8[512]{0}', space=vmem, size = 0x400, scoped, tag = 'input window, operand 16, single buffered']
    #allocation20 [shape = 'u8[102400]{0}', space=vmem, size = 0x19000, scoped, tag = 'input window, operand 17, single buffered']
    #allocation21 [shape = 's32[1]{0}', space=sflag, size = 0x4, scoped, tag = 'scoped memory for medium_classifier.1']
    #allocation22 [shape = 'u8[2560]{0}', space=vmem, size = 0xc00, scoped, tag = 'input window, operand 18, single buffered']
    #allocation23 [shape = 'u8[40960]{0}', space=vmem, size = 0xa000, scoped, tag = 'output window, operand 0']
    %24 = vsyncpa [#allocation3], 0
    %25 = vsyncpa [#allocation6], 0
    %26 = vsyncpa [#allocation9], 0
    %27 = vsyncpa [#allocation12], 0
    %28 = vsyncpa [#allocation15], 0
    %29 = vsyncpa [#allocation18], 0
    %30 = vsyncpa [#allocation21], 0
    %31 = vsyncpa [#allocation4], 0
    %s32 = scalar_lea.sflag [#allocation4], 1
    %33 = vsyncpa %s32, 0
    loop: start=0, step=1, limit=4
    $region2: #{medium_classifier.1} parent=1 // loop_pre_header
      _
    $region3: #{medium_classifier.1} parent=1 // loop_header
      %s35 = sphi 0, %s39
      %p36 = scmp.ge.s32.totalorder %s35, 4
      %s45 = sphi 0, %s47
      %s48 = sphi 0, %s45
      %s49 = sphi 0, %s48
      %s65 = sphi 0, %s49
      %s69 = sphi 0, %s69
      %s71 = sphi 0, %s69
      %s72 = sphi 0, %s71
      %s86 = sphi 0, %s72
      %s90 = sphi 0, %s90
      %s92 = sphi 0, %s90
      %s93 = sphi 0, %s92
      %s107 = sphi 0, %s93
      %s111 = sphi 0, %s111
      %s113 = sphi 0, %s111
      %s114 = sphi 0, %s113
      %s128 = sphi 0, %s114
      %s132 = sphi 0, %s132
      %s134 = sphi 0, %s132
      %s135 = sphi 0, %s134
      %s149 = sphi 0, %s135
      %s153 = sphi 0, %s153
      %s155 = sphi 0, %s153
      %s156 = sphi 0, %s155
      %s170 = sphi 0, %s156
      %s174 = sphi 0, %s174
      %s176 = sphi 0, %s174
      %s177 = sphi 0, %s176
      %s191 = sphi 0, %s177
      %s195 = sphi 0, %s195
      %s197 = sphi 0, %s195
      %s198 = sphi 0, %s197
      %s212 = sphi 0, %s198
      %s216 = sphi 0, %s216
      %s218 = sphi 0, %s216
      %s219 = sphi 0, %s218
      %s233 = sphi 0, %s219
      %s237 = sphi 0, %s237
      %s239 = sphi 0, %s237
      %s240 = sphi 0, %s239
      %s254 = sphi 0, %s240
      %s258 = sphi 0, %s258
      %s260 = sphi 0, %s258
      %s261 = sphi 0, %s260
      %s275 = sphi 0, %s261
      %s279 = sphi 0, %s279
      %s281 = sphi 0, %s279
      %s282 = sphi 0, %s281
      %s296 = sphi 0, %s282
      %s300 = sphi 0, %s300
      %s302 = sphi 0, %s300
      %s303 = sphi 0, %s302
      %s317 = sphi 0, %s303
      %s321 = sphi 0, %s321
      %s323 = sphi 0, %s321
      %s324 = sphi 0, %s323
      %s338 = sphi 0, %s324
      %s342 = sphi 0, %s342
      %s344 = sphi 0, %s342
      %s345 = sphi 0, %s344
      %s359 = sphi 0, %s345
      %s363 = sphi 0, %s363
      %s365 = sphi 0, %s363
      %s366 = sphi 0, %s365
      %s380 = sphi 0, %s366
      %s384 = sphi 0, %s384
      %s386 = sphi 0, %s384
      %s387 = sphi 0, %s386
      %s401 = sphi 0, %s387
      %s405 = sphi 0, %s405
      %s407 = sphi 0, %s405
      %s408 = sphi 0, %s407
      %s422 = sphi 0, %s408
      %s426 = sphi 0, %s426
      %s428 = sphi 0, %s426
      %s429 = sphi 0, %s428
      %s443 = sphi 0, %s429
      %s449 = sphi 0, %s451
      %s452 = sphi 0, %s449
      %s453 = sphi 0, %s452
      %s469 = sphi 0, %s453
    $region4: #{medium_classifier.1} parent=1 // loop_header_branch
      %38 = sbr.rel (%p36) target = $region8
    $region5: #{medium_classifier.1} parent=1 // loop_body
      %s40 = ssub.s32 %s35, 1
      %s41 = ssub.s32 %s35, 2
      %s42 = sadd.s32 %s35, 1
      %s43 = ssub.s32 %s35, %s42
      %p44 = scmp.eq.s32.totalorder %s43, 0
      %s46 = sadd.s32 %s45, 1
      %s47 = scalar_select %p44, %s45, %s46
      %p50 = pneg %p44
      %p51 = scmp.eq.s32.totalorder %s35, 1
      %p52 = por %p50, %p51
      %p53 = scmp.ne.s32.totalorder %s45, %s48
      %p54 = scmp.eq.s32.totalorder %s35, 0
      %p55 = por %p53, %p54
      %p56 = scmp.ne.s32.totalorder %s45, %s48
      %p57 = scmp.eq.s32.totalorder %s40, 1
      %p58 = por %p56, %p57
      %p59 = scmp.ne.s32.totalorder %s48, %s49
      %p60 = scmp.eq.s32.totalorder %s40, 0
      %p61 = por %p59, %p60
      %p62 = scmp.ne.s32.totalorder %s48, %s49
      %p63 = scmp.eq.s32.totalorder %s41, 1
      %p64 = por %p62, %p63
      %p66 = scmp.ne.s32.totalorder %s49, %s65
      %p67 = scmp.eq.s32.totalorder %s41, 0
      %p68 = por %p66, %p67
      %s70 = sadd.s32 %s69, 1
      %p73 = scmp.eq.s32.totalorder %s35, 1
      %p74 = scmp.ne.s32.totalorder %s69, %s71
      %p75 = scmp.eq.s32.totalorder %s35, 0
      %p76 = por %p74, %p75
      %p77 = scmp.ne.s32.totalorder %s69, %s71
      %p78 = scmp.eq.s32.totalorder %s40, 1
      %p79 = por %p77, %p78
      %p80 = scmp.ne.s32.totalorder %s71, %s72
      %p81 = scmp.eq.s32.totalorder %s40, 0
      %p82 = por %p80, %p81
      %p83 = scmp.ne.s32.totalorder %s71, %s72
      %p84 = scmp.eq.s32.totalorder %s41, 1
      %p85 = por %p83, %p84
      %p87 = scmp.ne.s32.totalorder %s72, %s86
      %p88 = scmp.eq.s32.totalorder %s41, 0
      %p89 = por %p87, %p88
      %s91 = sadd.s32 %s90, 1
      %p94 = scmp.eq.s32.totalorder %s35, 1
      %p95 = scmp.ne.s32.totalorder %s90, %s92
      %p96 = scmp.eq.s32.totalorder %s35, 0
      %p97 = por %p95, %p96
      %p98 = scmp.ne.s32.totalorder %s90, %s92
      %p99 = scmp.eq.s32.totalorder %s40, 1
      %p100 = por %p98, %p99
      %p101 = scmp.ne.s32.totalorder %s92, %s93
      %p102 = scmp.eq.s32.totalorder %s40, 0
      %p103 = por %p101, %p102
      %p104 = scmp.ne.s32.totalorder %s92, %s93
      %p105 = scmp.eq.s32.totalorder %s41, 1
      %p106 = por %p104, %p105
      %p108 = scmp.ne.s32.totalorder %s93, %s107
      %p109 = scmp.eq.s32.totalorder %s41, 0
      %p110 = por %p108, %p109
      %s112 = sadd.s32 %s111, 1
      %p115 = scmp.eq.s32.totalorder %s35, 1
      %p116 = scmp.ne.s32.totalorder %s111, %s113
      %p117 = scmp.eq.s32.totalorder %s35, 0
      %p118 = por %p116, %p117
      %p119 = scmp.ne.s32.totalorder %s111, %s113
      %p120 = scmp.eq.s32.totalorder %s40, 1
      %p121 = por %p119, %p120
      %p122 = scmp.ne.s32.totalorder %s113, %s114
      %p123 = scmp.eq.s32.totalorder %s40, 0
      %p124 = por %p122, %p123
      %p125 = scmp.ne.s32.totalorder %s113, %s114
      %p126 = scmp.eq.s32.totalorder %s41, 1
      %p127 = por %p125, %p126
      %p129 = scmp.ne.s32.totalorder %s114, %s128
      %p130 = scmp.eq.s32.totalorder %s41, 0
      %p131 = por %p129, %p130
      %s133 = sadd.s32 %s132, 1
      %p136 = scmp.eq.s32.totalorder %s35, 1
      %p137 = scmp.ne.s32.totalorder %s132, %s134
      %p138 = scmp.eq.s32.totalorder %s35, 0
      %p139 = por %p137, %p138
      %p140 = scmp.ne.s32.totalorder %s132, %s134
      %p141 = scmp.eq.s32.totalorder %s40, 1
      %p142 = por %p140, %p141
      %p143 = scmp.ne.s32.totalorder %s134, %s135
      %p144 = scmp.eq.s32.totalorder %s40, 0
      %p145 = por %p143, %p144
      %p146 = scmp.ne.s32.totalorder %s134, %s135
      %p147 = scmp.eq.s32.totalorder %s41, 1
      %p148 = por %p146, %p147
      %p150 = scmp.ne.s32.totalorder %s135, %s149
      %p151 = scmp.eq.s32.totalorder %s41, 0
      %p152 = por %p150, %p151
      %s154 = sadd.s32 %s153, 1
      %p157 = scmp.eq.s32.totalorder %s35, 1
      %p158 = scmp.ne.s32.totalorder %s153, %s155
      %p159 = scmp.eq.s32.totalorder %s35, 0
      %p160 = por %p158, %p159
      %p161 = scmp.ne.s32.totalorder %s153, %s155
      %p162 = scmp.eq.s32.totalorder %s40, 1
      %p163 = por %p161, %p162
      %p164 = scmp.ne.s32.totalorder %s155, %s156
      %p165 = scmp.eq.s32.totalorder %s40, 0
      %p166 = por %p164, %p165
      %p167 = scmp.ne.s32.totalorder %s155, %s156
      %p168 = scmp.eq.s32.totalorder %s41, 1
      %p169 = por %p167, %p168
      %p171 = scmp.ne.s32.totalorder %s156, %s170
      %p172 = scmp.eq.s32.totalorder %s41, 0
      %p173 = por %p171, %p172
      %s175 = sadd.s32 %s174, 1
      %p178 = scmp.eq.s32.totalorder %s35, 1
      %p179 = scmp.ne.s32.totalorder %s174, %s176
      %p180 = scmp.eq.s32.totalorder %s35, 0
      %p181 = por %p179, %p180
      %p182 = scmp.ne.s32.totalorder %s174, %s176
      %p183 = scmp.eq.s32.totalorder %s40, 1
      %p184 = por %p182, %p183
      %p185 = scmp.ne.s32.totalorder %s176, %s177
      %p186 = scmp.eq.s32.totalorder %s40, 0
      %p187 = por %p185, %p186
      %p188 = scmp.ne.s32.totalorder %s176, %s177
      %p189 = scmp.eq.s32.totalorder %s41, 1
      %p190 = por %p188, %p189
      %p192 = scmp.ne.s32.totalorder %s177, %s191
      %p193 = scmp.eq.s32.totalorder %s41, 0
      %p194 = por %p192, %p193
      %s196 = sadd.s32 %s195, 1
      %p199 = scmp.eq.s32.totalorder %s35, 1
      %p200 = scmp.ne.s32.totalorder %s195, %s197
      %p201 = scmp.eq.s32.totalorder %s35, 0
      %p202 = por %p200, %p201
      %p203 = scmp.ne.s32.totalorder %s195, %s197
      %p204 = scmp.eq.s32.totalorder %s40, 1
      %p205 = por %p203, %p204
      %p206 = scmp.ne.s32.totalorder %s197, %s198
      %p207 = scmp.eq.s32.totalorder %s40, 0
      %p208 = por %p206, %p207
      %p209 = scmp.ne.s32.totalorder %s197, %s198
      %p210 = scmp.eq.s32.totalorder %s41, 1
      %p211 = por %p209, %p210
      %p213 = scmp.ne.s32.totalorder %s198, %s212
      %p214 = scmp.eq.s32.totalorder %s41, 0
      %p215 = por %p213, %p214
      %s217 = sadd.s32 %s216, 1
      %p220 = scmp.eq.s32.totalorder %s35, 1
      %p221 = scmp.ne.s32.totalorder %s216, %s218
      %p222 = scmp.eq.s32.totalorder %s35, 0
      %p223 = por %p221, %p222
      %p224 = scmp.ne.s32.totalorder %s216, %s218
      %p225 = scmp.eq.s32.totalorder %s40, 1
      %p226 = por %p224, %p225
      %p227 = scmp.ne.s32.totalorder %s218, %s219
      %p228 = scmp.eq.s32.totalorder %s40, 0
      %p229 = por %p227, %p228
      %p230 = scmp.ne.s32.totalorder %s218, %s219
      %p231 = scmp.eq.s32.totalorder %s41, 1
      %p232 = por %p230, %p231
      %p234 = scmp.ne.s32.totalorder %s219, %s233
      %p235 = scmp.eq.s32.totalorder %s41, 0
      %p236 = por %p234, %p235
      %s238 = sadd.s32 %s237, 1
      %p241 = scmp.eq.s32.totalorder %s35, 1
      %p242 = scmp.ne.s32.totalorder %s237, %s239
      %p243 = scmp.eq.s32.totalorder %s35, 0
      %p244 = por %p242, %p243
      %p245 = scmp.ne.s32.totalorder %s237, %s239
      %p246 = scmp.eq.s32.totalorder %s40, 1
      %p247 = por %p245, %p246
      %p248 = scmp.ne.s32.totalorder %s239, %s240
      %p249 = scmp.eq.s32.totalorder %s40, 0
      %p250 = por %p248, %p249
      %p251 = scmp.ne.s32.totalorder %s239, %s240
      %p252 = scmp.eq.s32.totalorder %s41, 1
      %p253 = por %p251, %p252
      %p255 = scmp.ne.s32.totalorder %s240, %s254
      %p256 = scmp.eq.s32.totalorder %s41, 0
      %p257 = por %p255, %p256
      %s259 = sadd.s32 %s258, 1
      %p262 = scmp.eq.s32.totalorder %s35, 1
      %p263 = scmp.ne.s32.totalorder %s258, %s260
      %p264 = scmp.eq.s32.totalorder %s35, 0
      %p265 = por %p263, %p264
      %p266 = scmp.ne.s32.totalorder %s258, %s260
      %p267 = scmp.eq.s32.totalorder %s40, 1
      %p268 = por %p266, %p267
      %p269 = scmp.ne.s32.totalorder %s260, %s261
      %p270 = scmp.eq.s32.totalorder %s40, 0
      %p271 = por %p269, %p270
      %p272 = scmp.ne.s32.totalorder %s260, %s261
      %p273 = scmp.eq.s32.totalorder %s41, 1
      %p274 = por %p272, %p273
      %p276 = scmp.ne.s32.totalorder %s261, %s275
      %p277 = scmp.eq.s32.totalorder %s41, 0
      %p278 = por %p276, %p277
      %s280 = sadd.s32 %s279, 1
      %p283 = scmp.eq.s32.totalorder %s35, 1
      %p284 = scmp.ne.s32.totalorder %s279, %s281
      %p285 = scmp.eq.s32.totalorder %s35, 0
      %p286 = por %p284, %p285
      %p287 = scmp.ne.s32.totalorder %s279, %s281
      %p288 = scmp.eq.s32.totalorder %s40, 1
      %p289 = por %p287, %p288
      %p290 = scmp.ne.s32.totalorder %s281, %s282
      %p291 = scmp.eq.s32.totalorder %s40, 0
      %p292 = por %p290, %p291
      %p293 = scmp.ne.s32.totalorder %s281, %s282
      %p294 = scmp.eq.s32.totalorder %s41, 1
      %p295 = por %p293, %p294
      %p297 = scmp.ne.s32.totalorder %s282, %s296
      %p298 = scmp.eq.s32.totalorder %s41, 0
      %p299 = por %p297, %p298
      %s301 = sadd.s32 %s300, 1
      %p304 = scmp.eq.s32.totalorder %s35, 1
      %p305 = scmp.ne.s32.totalorder %s300, %s302
      %p306 = scmp.eq.s32.totalorder %s35, 0
      %p307 = por %p305, %p306
      %p308 = scmp.ne.s32.totalorder %s300, %s302
      %p309 = scmp.eq.s32.totalorder %s40, 1
      %p310 = por %p308, %p309
      %p311 = scmp.ne.s32.totalorder %s302, %s303
      %p312 = scmp.eq.s32.totalorder %s40, 0
      %p313 = por %p311, %p312
      %p314 = scmp.ne.s32.totalorder %s302, %s303
      %p315 = scmp.eq.s32.totalorder %s41, 1
      %p316 = por %p314, %p315
      %p318 = scmp.ne.s32.totalorder %s303, %s317
      %p319 = scmp.eq.s32.totalorder %s41, 0
      %p320 = por %p318, %p319
      %s322 = sadd.s32 %s321, 1
      %p325 = scmp.eq.s32.totalorder %s35, 1
      %p326 = scmp.ne.s32.totalorder %s321, %s323
      %p327 = scmp.eq.s32.totalorder %s35, 0
      %p328 = por %p326, %p327
      %p329 = scmp.ne.s32.totalorder %s321, %s323
      %p330 = scmp.eq.s32.totalorder %s40, 1
      %p331 = por %p329, %p330
      %p332 = scmp.ne.s32.totalorder %s323, %s324
      %p333 = scmp.eq.s32.totalorder %s40, 0
      %p334 = por %p332, %p333
      %p335 = scmp.ne.s32.totalorder %s323, %s324
      %p336 = scmp.eq.s32.totalorder %s41, 1
      %p337 = por %p335, %p336
      %p339 = scmp.ne.s32.totalorder %s324, %s338
      %p340 = scmp.eq.s32.totalorder %s41, 0
      %p341 = por %p339, %p340
      %s343 = sadd.s32 %s342, 1
      %p346 = scmp.eq.s32.totalorder %s35, 1
      %p347 = scmp.ne.s32.totalorder %s342, %s344
      %p348 = scmp.eq.s32.totalorder %s35, 0
      %p349 = por %p347, %p348
      %p350 = scmp.ne.s32.totalorder %s342, %s344
      %p351 = scmp.eq.s32.totalorder %s40, 1
      %p352 = por %p350, %p351
      %p353 = scmp.ne.s32.totalorder %s344, %s345
      %p354 = scmp.eq.s32.totalorder %s40, 0
      %p355 = por %p353, %p354
      %p356 = scmp.ne.s32.totalorder %s344, %s345
      %p357 = scmp.eq.s32.totalorder %s41, 1
      %p358 = por %p356, %p357
      %p360 = scmp.ne.s32.totalorder %s345, %s359
      %p361 = scmp.eq.s32.totalorder %s41, 0
      %p362 = por %p360, %p361
      %s364 = sadd.s32 %s363, 1
      %p367 = scmp.eq.s32.totalorder %s35, 1
      %p368 = scmp.ne.s32.totalorder %s363, %s365
      %p369 = scmp.eq.s32.totalorder %s35, 0
      %p370 = por %p368, %p369
      %p371 = scmp.ne.s32.totalorder %s363, %s365
      %p372 = scmp.eq.s32.totalorder %s40, 1
      %p373 = por %p371, %p372
      %p374 = scmp.ne.s32.totalorder %s365, %s366
      %p375 = scmp.eq.s32.totalorder %s40, 0
      %p376 = por %p374, %p375
      %p377 = scmp.ne.s32.totalorder %s365, %s366
      %p378 = scmp.eq.s32.totalorder %s41, 1
      %p379 = por %p377, %p378
      %p381 = scmp.ne.s32.totalorder %s366, %s380
      %p382 = scmp.eq.s32.totalorder %s41, 0
      %p383 = por %p381, %p382
      %s385 = sadd.s32 %s384, 1
      %p388 = scmp.eq.s32.totalorder %s35, 1
      %p389 = scmp.ne.s32.totalorder %s384, %s386
      %p390 = scmp.eq.s32.totalorder %s35, 0
      %p391 = por %p389, %p390
      %p392 = scmp.ne.s32.totalorder %s384, %s386
      %p393 = scmp.eq.s32.totalorder %s40, 1
      %p394 = por %p392, %p393
      %p395 = scmp.ne.s32.totalorder %s386, %s387
      %p396 = scmp.eq.s32.totalorder %s40, 0
      %p397 = por %p395, %p396
      %p398 = scmp.ne.s32.totalorder %s386, %s387
      %p399 = scmp.eq.s32.totalorder %s41, 1
      %p400 = por %p398, %p399
      %p402 = scmp.ne.s32.totalorder %s387, %s401
      %p403 = scmp.eq.s32.totalorder %s41, 0
      %p404 = por %p402, %p403
      %s406 = sadd.s32 %s405, 1
      %p409 = scmp.eq.s32.totalorder %s35, 1
      %p410 = scmp.ne.s32.totalorder %s405, %s407
      %p411 = scmp.eq.s32.totalorder %s35, 0
      %p412 = por %p410, %p411
      %p413 = scmp.ne.s32.totalorder %s405, %s407
      %p414 = scmp.eq.s32.totalorder %s40, 1
      %p415 = por %p413, %p414
      %p416 = scmp.ne.s32.totalorder %s407, %s408
      %p417 = scmp.eq.s32.totalorder %s40, 0
      %p418 = por %p416, %p417
      %p419 = scmp.ne.s32.totalorder %s407, %s408
      %p420 = scmp.eq.s32.totalorder %s41, 1
      %p421 = por %p419, %p420
      %p423 = scmp.ne.s32.totalorder %s408, %s422
      %p424 = scmp.eq.s32.totalorder %s41, 0
      %p425 = por %p423, %p424
      %s427 = sadd.s32 %s426, 1
      %p430 = scmp.eq.s32.totalorder %s35, 1
      %p431 = scmp.ne.s32.totalorder %s426, %s428
      %p432 = scmp.eq.s32.totalorder %s35, 0
      %p433 = por %p431, %p432
      %p434 = scmp.ne.s32.totalorder %s426, %s428
      %p435 = scmp.eq.s32.totalorder %s40, 1
      %p436 = por %p434, %p435
      %p437 = scmp.ne.s32.totalorder %s428, %s429
      %p438 = scmp.eq.s32.totalorder %s40, 0
      %p439 = por %p437, %p438
      %p440 = scmp.ne.s32.totalorder %s428, %s429
      %p441 = scmp.eq.s32.totalorder %s41, 1
      %p442 = por %p440, %p441
      %p444 = scmp.ne.s32.totalorder %s429, %s443
      %p445 = scmp.eq.s32.totalorder %s41, 0
      %p446 = por %p444, %p445
      %s447 = ssub.s32 %s35, %s42
      %p448 = scmp.eq.s32.totalorder %s447, 0
      %s450 = sadd.s32 %s449, 1
      %s451 = scalar_select %p448, %s449, %s450
      %p454 = pneg %p448
      %p455 = scmp.eq.s32.totalorder %s35, 1
      %p456 = por %p454, %p455
      %p457 = scmp.ne.s32.totalorder %s449, %s452
      %p458 = scmp.eq.s32.totalorder %s35, 0
      %p459 = por %p457, %p458
      %p460 = scmp.ne.s32.totalorder %s449, %s452
      %p461 = scmp.eq.s32.totalorder %s40, 1
      %p462 = por %p460, %p461
      %p463 = scmp.ne.s32.totalorder %s452, %s453
      %p464 = scmp.eq.s32.totalorder %s40, 0
      %p465 = por %p463, %p464
      %p466 = scmp.ne.s32.totalorder %s452, %s453
      %p467 = scmp.eq.s32.totalorder %s41, 1
      %p468 = por %p466, %p467
      %p470 = scmp.ne.s32.totalorder %s453, %s469
      %p471 = scmp.eq.s32.totalorder %s41, 0
      %p472 = por %p470, %p471
      %p473 = scmp.le.s32.totalorder 1, %s35
      %p474 = scmp.lt.s32.totalorder %s35, 3
      %p475 = pnand %p473, %p474
      %p476 = pneg %p475
      // Predicated region
      $region9: #{medium_classifier.1} parent=5 // pred_check
        _
      $region10: #{medium_classifier.1} parent=5 // pred_check_branch
        %478 = sbr.rel (%p475) target = $region12
      $region11: #{medium_classifier.1} parent=5 // pred_region
        %s479 = ssub.s32 %s35, 1
        // Predicated region
        $region13: #{medium_classifier.1} parent=11 // pred_check
          %p480 = pneg %p82
        $region14: #{medium_classifier.1} parent=11 // pred_check_branch
          %482 = sbr.rel (%p480) target = $region16
        $region15: #{medium_classifier.1} parent=11 // pred_region
          %s484 = ssub.s32 320, 320
          %485 = vsyncadd [#allocation3], %s484
          %s486 = sshll.u32 [#allocation2], 4
          %s487 = int_to_ptr.vmem [resolvable:$true] %s486
          %492 = dma.hbm_to_vmem [thread:$0]  %s1, 320, %s487, [#allocation3], 64, 64, 4
        $region16: #{medium_classifier.1} parent=11 // pred_fallthru
          _
        // Predicated region
        $region17: #{medium_classifier.1} parent=11 // pred_check
          %p493 = pneg %p103
        $region18: #{medium_classifier.1} parent=11 // pred_check_branch
          %495 = sbr.rel (%p493) target = $region20
        $region19: #{medium_classifier.1} parent=11 // pred_region
          %s497 = ssub.s32 16, 16
          %498 = vsyncadd [#allocation6], %s497
          %s500 = sshll.u32 [#allocation5], 4
          %s501 = int_to_ptr.vmem [resolvable:$true] %s500
          %503 = dma.hbm_to_vmem [thread:$0]  %s2, 16, %s501, [#allocation6]
        $region20: #{medium_classifier.1} parent=11 // pred_fallthru
          _
        // Predicated region
        $region21: #{medium_classifier.1} parent=11 // pred_check
          %p504 = pneg %p124
        $region22: #{medium_classifier.1} parent=11 // pred_check_branch
          %506 = sbr.rel (%p504) target = $region24
        $region23: #{medium_classifier.1} parent=11 // pred_region
          _
        $region24: #{medium_classifier.1} parent=11 // pred_fallthru
          _
        // Predicated region
        $region25: #{medium_classifier.1} parent=11 // pred_check
          %p507 = pneg %p145
        $region26: #{medium_classifier.1} parent=11 // pred_check_branch
          %509 = sbr.rel (%p507) target = $region28
        $region27: #{medium_classifier.1} parent=11 // pred_region
          %s511 = ssub.s32 192, 192
          %512 = vsyncadd [#allocation6], %s511
          %s513 = sshll.u32 [#allocation7], 4
          %s514 = int_to_ptr.vmem [resolvable:$true] %s513
          %519 = dma.hbm_to_vmem [thread:$0]  %s4, 192, %s514, [#allocation6], 96, 96, 6
        $region28: #{medium_classifier.1} parent=11 // pred_fallthru
          _
        // Predicated region
        $region29: #{medium_classifier.1} parent=11 // pred_check
          %p520 = pneg %p166
        $region30: #{medium_classifier.1} parent=11 // pred_check_branch
          %522 = sbr.rel (%p520) target = $region32
        $region31: #{medium_classifier.1} parent=11 // pred_region
          _
        $region32: #{medium_classifier.1} parent=11 // pred_fallthru
          _
        // Predicated region
        $region33: #{medium_classifier.1} parent=11 // pred_check
          %p523 = pneg %p187
        $region34: #{medium_classifier.1} parent=11 // pred_check_branch
          %525 = sbr.rel (%p523) target = $region36
        $region35: #{medium_classifier.1} parent=11 // pred_region
          %s527 = ssub.s32 32, 32
          %528 = vsyncadd [#allocation9], %s527
          %s529 = sshll.u32 [#allocation8], 4
          %s530 = int_to_ptr.vmem [resolvable:$true] %s529
          %535 = dma.hbm_to_vmem [thread:$0]  %s6, 32, %s530, [#allocation9], 16, 16, 1
        $region36: #{medium_classifier.1} parent=11 // pred_fallthru
          _
        // Predicated region
        $region37: #{medium_classifier.1} parent=11 // pred_check
          %p536 = pneg %p208
        $region38: #{medium_classifier.1} parent=11 // pred_check_branch
          %538 = sbr.rel (%p536) target = $region40
        $region39: #{medium_classifier.1} parent=11 // pred_region
          %s540 = ssub.s32 32, 32
          %541 = vsyncadd [#allocation9], %s540
          %s542 = sshll.u32 [#allocation10], 4
          %s543 = int_to_ptr.vmem [resolvable:$true] %s542
          %548 = dma.hbm_to_vmem [thread:$0]  %s7, 32, %s543, [#allocation9], 16, 16, 1
        $region40: #{medium_classifier.1} parent=11 // pred_fallthru
          _
        // Predicated region
        $region41: #{medium_classifier.1} parent=11 // pred_check
          %p549 = pneg %p229
        $region42: #{medium_classifier.1} parent=11 // pred_check_branch
          %551 = sbr.rel (%p549) target = $region44
        $region43: #{medium_classifier.1} parent=11 // pred_region
          %s553 = ssub.s32 32, 32
          %554 = vsyncadd [#allocation12], %s553
          %s555 = sshll.u32 [#allocation11], 4
          %s556 = int_to_ptr.vmem [resolvable:$true] %s555
          %561 = dma.hbm_to_vmem [thread:$0]  %s8, 32, %s556, [#allocation12], 16, 16, 1
        $region44: #{medium_classifier.1} parent=11 // pred_fallthru
          _
        // Predicated region
        $region45: #{medium_classifier.1} parent=11 // pred_check
          %p562 = pneg %p250
        $region46: #{medium_classifier.1} parent=11 // pred_check_branch
          %564 = sbr.rel (%p562) target = $region48
        $region47: #{medium_classifier.1} parent=11 // pred_region
          _
        $region48: #{medium_classifier.1} parent=11 // pred_fallthru
          _
        // Predicated region
        $region49: #{medium_classifier.1} parent=11 // pred_check
          %p565 = pneg %p271
        $region50: #{medium_classifier.1} parent=11 // pred_check_branch
          %567 = sbr.rel (%p565) target = $region52
        $region51: #{medium_classifier.1} parent=11 // pred_region
          _
        $region52: #{medium_classifier.1} parent=11 // pred_fallthru
          _
        // Predicated region
        $region53: #{medium_classifier.1} parent=11 // pred_check
          %p568 = pneg %p292
        $region54: #{medium_classifier.1} parent=11 // pred_check_branch
          %570 = sbr.rel (%p568) target = $region56
        $region55: #{medium_classifier.1} parent=11 // pred_region
          _
        $region56: #{medium_classifier.1} parent=11 // pred_fallthru
          _
        // Predicated region
        $region57: #{medium_classifier.1} parent=11 // pred_check
          %p571 = pneg %p313
        $region58: #{medium_classifier.1} parent=11 // pred_check_branch
          %573 = sbr.rel (%p571) target = $region60
        $region59: #{medium_classifier.1} parent=11 // pred_region
          %s575 = ssub.s32 32, 32
          %576 = vsyncadd [#allocation12], %s575
          %s577 = sshll.u32 [#allocation13], 4
          %s578 = int_to_ptr.vmem [resolvable:$true] %s577
          %583 = dma.hbm_to_vmem [thread:$0]  %s12, 32, %s578, [#allocation12], 16, 16, 1
        $region60: #{medium_classifier.1} parent=11 // pred_fallthru
          _
        // Predicated region
        $region61: #{medium_classifier.1} parent=11 // pred_check
          %p584 = pneg %p334
        $region62: #{medium_classifier.1} parent=11 // pred_check_branch
          %586 = sbr.rel (%p584) target = $region64
        $region63: #{medium_classifier.1} parent=11 // pred_region
          %s588 = ssub.s32 32, 32
          %589 = vsyncadd [#allocation15], %s588
          %s590 = sshll.u32 [#allocation14], 4
          %s591 = int_to_ptr.vmem [resolvable:$true] %s590
          %596 = dma.hbm_to_vmem [thread:$0]  %s13, 32, %s591, [#allocation15], 16, 16, 1
        $region64: #{medium_classifier.1} parent=11 // pred_fallthru
          _
        // Predicated region
        $region65: #{medium_classifier.1} parent=11 // pred_check
          %p597 = pneg %p355
        $region66: #{medium_classifier.1} parent=11 // pred_check_branch
          %599 = sbr.rel (%p597) target = $region68
        $region67: #{medium_classifier.1} parent=11 // pred_region
          %s601 = ssub.s32 32, 32
          %602 = vsyncadd [#allocation15], %s601
          %s603 = sshll.u32 [#allocation16], 4
          %s604 = int_to_ptr.vmem [resolvable:$true] %s603
          %609 = dma.hbm_to_vmem [thread:$0]  %s14, 32, %s604, [#allocation15], 16, 16, 1
        $region68: #{medium_classifier.1} parent=11 // pred_fallthru
          _
        // Predicated region
        $region69: #{medium_classifier.1} parent=11 // pred_check
          %p610 = pneg %p376
        $region70: #{medium_classifier.1} parent=11 // pred_check_branch
          %612 = sbr.rel (%p610) target = $region72
        $region71: #{medium_classifier.1} parent=11 // pred_region
          %s614 = ssub.s32 640, 640
          %615 = vsyncadd [#allocation18], %s614
          %s616 = sshll.u32 [#allocation17], 4
          %s617 = int_to_ptr.vmem [resolvable:$true] %s616
          %622 = dma.hbm_to_vmem [thread:$0]  %s15, 640, %s617, [#allocation18], 64, 64, 4
        $region72: #{medium_classifier.1} parent=11 // pred_fallthru
          _
        // Predicated region
        $region73: #{medium_classifier.1} parent=11 // pred_check
          %p623 = pneg %p397
        $region74: #{medium_classifier.1} parent=11 // pred_check_branch
          %625 = sbr.rel (%p623) target = $region76
        $region75: #{medium_classifier.1} parent=11 // pred_region
          %s627 = ssub.s32 16, 16
          %628 = vsyncadd [#allocation18], %s627
          %s630 = sshll.u32 [#allocation19], 4
          %s631 = int_to_ptr.vmem [resolvable:$true] %s630
          %633 = dma.hbm_to_vmem [thread:$0]  %s16, 16, %s631, [#allocation18]
        $region76: #{medium_classifier.1} parent=11 // pred_fallthru
          _
        // Predicated region
        $region77: #{medium_classifier.1} parent=11 // pred_check
          %p634 = pneg %p418
        $region78: #{medium_classifier.1} parent=11 // pred_check_branch
          %636 = sbr.rel (%p634) target = $region80
        $region79: #{medium_classifier.1} parent=11 // pred_region
          %s638 = ssub.s32 3200, 3200
          %639 = vsyncadd [#allocation21], %s638
          %s640 = sshll.u32 [#allocation20], 4
          %s641 = int_to_ptr.vmem [resolvable:$true] %s640
          %646 = dma.hbm_to_vmem [thread:$0]  %s17, 3200, %s641, [#allocation21], 320, 320, 20
        $region80: #{medium_classifier.1} parent=11 // pred_fallthru
          _
        // Predicated region
        $region81: #{medium_classifier.1} parent=11 // pred_check
          %p647 = pneg %p439
        $region82: #{medium_classifier.1} parent=11 // pred_check_branch
          %649 = sbr.rel (%p647) target = $region84
        $region83: #{medium_classifier.1} parent=11 // pred_region
          %s651 = ssub.s32 80, 80
          %652 = vsyncadd [#allocation21], %s651
          %s654 = sshll.u32 [#allocation22], 4
          %s655 = int_to_ptr.vmem [resolvable:$true] %s654
          %657 = dma.hbm_to_vmem [thread:$0]  %s18, 80, %s655, [#allocation21]
        $region84: #{medium_classifier.1} parent=11 // pred_fallthru
          _
      $region12: #{medium_classifier.1} parent=5 // pred_fallthru
        _
      %p658 = scmp.lt.s32.totalorder %s35, 2
      // Predicated region
      $region85: #{medium_classifier.1} parent=5 // pred_check
        %p659 = pneg %p658
      $region86: #{medium_classifier.1} parent=5 // pred_check_branch
        %661 = sbr.rel (%p659) target = $region88
      $region87: #{medium_classifier.1} parent=5 // pred_region
        // Predicated region
        $region89: #{medium_classifier.1} parent=87 // pred_check
          %p662 = pneg %p55
        $region90: #{medium_classifier.1} parent=87 // pred_check_branch
          %664 = sbr.rel (%p662) target = $region92
        $region91: #{medium_classifier.1} parent=87 // pred_region
          %s665 = smul.u32 8, %s35
          %p666 = scmp.lt.s32.totalorder %s665, 15
          %s667 = scalar_select %p666, %s665, 15
          %s668 = smul.addr %s667, 2
          %s669 = smul.addr %s668, 8
          %s670 = scalar_lea.vmem %s0, %s669
          %s671 = smul.u32 8, %s35
        $region92: #{medium_classifier.1} parent=87 // pred_fallthru
          _
      $region88: #{medium_classifier.1} parent=5 // pred_fallthru
        _
      %p672 = scmp.le.s32.totalorder 1, %s35
      %p673 = scmp.lt.s32.totalorder %s35, 3
      %p674 = pnand %p672, %p673
      %p675 = pneg %p674
      // Predicated region
      $region93: #{medium_classifier.1} parent=5 // pred_check
        _
      $region94: #{medium_classifier.1} parent=5 // pred_check_branch
        %677 = sbr.rel (%p674) target = $region96
      $region95: #{medium_classifier.1} parent=5 // pred_region
        %s678 = ssub.s32 %s35, 1
        // Predicated region
        $region97: #{medium_classifier.1} parent=95 // pred_check
          %p679 = pneg %p82
        $region98: #{medium_classifier.1} parent=95 // pred_check_branch
          %681 = sbr.rel (%p679) target = $region100
        $region99: #{medium_classifier.1} parent=95 // pred_region
          %682 = dma.done [#allocation3], 320
        $region100: #{medium_classifier.1} parent=95 // pred_fallthru
          _
        // Predicated region
        $region101: #{medium_classifier.1} parent=95 // pred_check
          %p683 = pneg %p103
        $region102: #{medium_classifier.1} parent=95 // pred_check_branch
          %685 = sbr.rel (%p683) target = $region104
        $region103: #{medium_classifier.1} parent=95 // pred_region
          %686 = dma.done [#allocation6], 16
        $region104: #{medium_classifier.1} parent=95 // pred_fallthru
          _
        // Predicated region
        $region105: #{medium_classifier.1} parent=95 // pred_check
          %p687 = pneg %p145
        $region106: #{medium_classifier.1} parent=95 // pred_check_branch
          %689 = sbr.rel (%p687) target = $region108
        $region107: #{medium_classifier.1} parent=95 // pred_region
          %690 = dma.done [#allocation6], 192
        $region108: #{medium_classifier.1} parent=95 // pred_fallthru
          _
        // Predicated region
        $region109: #{medium_classifier.1} parent=95 // pred_check
          %p691 = pneg %p187
        $region110: #{medium_classifier.1} parent=95 // pred_check_branch
          %693 = sbr.rel (%p691) target = $region112
        $region111: #{medium_classifier.1} parent=95 // pred_region
          %694 = dma.done [#allocation9], 32
        $region112: #{medium_classifier.1} parent=95 // pred_fallthru
          _
        // Predicated region
        $region113: #{medium_classifier.1} parent=95 // pred_check
          %p695 = pneg %p208
        $region114: #{medium_classifier.1} parent=95 // pred_check_branch
          %697 = sbr.rel (%p695) target = $region116
        $region115: #{medium_classifier.1} parent=95 // pred_region
          %698 = dma.done [#allocation9], 32
        $region116: #{medium_classifier.1} parent=95 // pred_fallthru
          _
        // Predicated region
        $region117: #{medium_classifier.1} parent=95 // pred_check
          %p699 = pneg %p229
        $region118: #{medium_classifier.1} parent=95 // pred_check_branch
          %701 = sbr.rel (%p699) target = $region120
        $region119: #{medium_classifier.1} parent=95 // pred_region
          %702 = dma.done [#allocation12], 32
        $region120: #{medium_classifier.1} parent=95 // pred_fallthru
          _
        // Predicated region
        $region121: #{medium_classifier.1} parent=95 // pred_check
          %p703 = pneg %p313
        $region122: #{medium_classifier.1} parent=95 // pred_check_branch
          %705 = sbr.rel (%p703) target = $region124
        $region123: #{medium_classifier.1} parent=95 // pred_region
          %706 = dma.done [#allocation12], 32
        $region124: #{medium_classifier.1} parent=95 // pred_fallthru
          _
        // Predicated region
        $region125: #{medium_classifier.1} parent=95 // pred_check
          %p707 = pneg %p334
        $region126: #{medium_classifier.1} parent=95 // pred_check_branch
          %709 = sbr.rel (%p707) target = $region128
        $region127: #{medium_classifier.1} parent=95 // pred_region
          %710 = dma.done [#allocation15], 32
        $region128: #{medium_classifier.1} parent=95 // pred_fallthru
          _
        // Predicated region
        $region129: #{medium_classifier.1} parent=95 // pred_check
          %p711 = pneg %p355
        $region130: #{medium_classifier.1} parent=95 // pred_check_branch
          %713 = sbr.rel (%p711) target = $region132
        $region131: #{medium_classifier.1} parent=95 // pred_region
          %714 = dma.done [#allocation15], 32
        $region132: #{medium_classifier.1} parent=95 // pred_fallthru
          _
        // Predicated region
        $region133: #{medium_classifier.1} parent=95 // pred_check
          %p715 = pneg %p376
        $region134: #{medium_classifier.1} parent=95 // pred_check_branch
          %717 = sbr.rel (%p715) target = $region136
        $region135: #{medium_classifier.1} parent=95 // pred_region
          %718 = dma.done [#allocation18], 640
        $region136: #{medium_classifier.1} parent=95 // pred_fallthru
          _
        // Predicated region
        $region137: #{medium_classifier.1} parent=95 // pred_check
          %p719 = pneg %p397
        $region138: #{medium_classifier.1} parent=95 // pred_check_branch
          %721 = sbr.rel (%p719) target = $region140
        $region139: #{medium_classifier.1} parent=95 // pred_region
          %722 = dma.done [#allocation18], 16
        $region140: #{medium_classifier.1} parent=95 // pred_fallthru
          _
        // Predicated region
        $region141: #{medium_classifier.1} parent=95 // pred_check
          %p723 = pneg %p418
        $region142: #{medium_classifier.1} parent=95 // pred_check_branch
          %725 = sbr.rel (%p723) target = $region144
        $region143: #{medium_classifier.1} parent=95 // pred_region
          %726 = dma.done [#allocation21], 3200
        $region144: #{medium_classifier.1} parent=95 // pred_fallthru
          _
        // Predicated region
        $region145: #{medium_classifier.1} parent=95 // pred_check
          %p727 = pneg %p439
        $region146: #{medium_classifier.1} parent=95 // pred_check_branch
          %729 = sbr.rel (%p727) target = $region148
        $region147: #{medium_classifier.1} parent=95 // pred_region
          %730 = dma.done [#allocation21], 80
        $region148: #{medium_classifier.1} parent=95 // pred_fallthru
          _
        %s731 = smul.u32 8, %s40
        %p732 = scmp.lt.s32.totalorder %s731, 15
        %s733 = scalar_select %p732, %s731, 15
        %s734 = smul.addr %s733, 2
        %s735 = smul.addr %s734, 8
        %s736 = scalar_lea.vmem %s0, %s735
        %p737 = pneg %p61
        %p738 = pneg %p58
        %p739 = pneg %p82
        %p740 = pneg %p79
        %p741 = pneg %p103
        %p742 = pneg %p100
        %p743 = pneg %p124
        %p744 = pneg %p121
        %p745 = pneg %p145
        %p746 = pneg %p142
        %p747 = pneg %p166
        %p748 = pneg %p163
        %p749 = pneg %p187
        %p750 = pneg %p184
        %p751 = pneg %p208
        %p752 = pneg %p205
        %p753 = pneg %p229
        %p754 = pneg %p226
        %p755 = pneg %p250
        %p756 = pneg %p247
        %p757 = pneg %p271
        %p758 = pneg %p268
        %p759 = pneg %p292
        %p760 = pneg %p289
        %p761 = pneg %p313
        %p762 = pneg %p310
        %p763 = pneg %p334
        %p764 = pneg %p331
        %p765 = pneg %p355
        %p766 = pneg %p352
        %p767 = pneg %p376
        %p768 = pneg %p373
        %p769 = pneg %p397
        %p770 = pneg %p394
        %p771 = pneg %p418
        %p772 = pneg %p415
        %p773 = pneg %p439
        %p774 = pneg %p436
        %p775 = pneg %p465
        %p776 = pneg %p462
        %s777 = sand.u32 %s452, 1
        %s778 = scalar_lea.sflag [#allocation4], %s777
        %s779 = sand.u32 %s452, 1
        %s780 = smul.addr %s779, 40
        %s781 = scalar_lea.vmem [#allocation23], %s780
        %s782 = smul.u32 8, %s40
        %p783 = scmp.lt.s32.totalorder %s782, 15
        %s784 = scalar_select %p783, %s782, 15
        %s785 = smul.addr %s784, 2
        %s786 = smul.addr %s785, 8
        %s787 = scalar_lea.vmem %s0, %s786
        %s788 = smul.u32 8, %s40
        %v790 = vld [vmem:[%s787] sm:$0xff]
        %v791 = vld [vmem:[%s787 + $0x8] sm:$0xff]
        %v792 = vld [vmem:[%s787 + $0x10] sm:$0xff]
        %v793 = vld [vmem:[%s787 + $0x18] sm:$0xff]
        %v794 = vld [vmem:[%s787 + $0x20] sm:$0xff]
        %v795 = vld [vmem:[%s787 + $0x28] sm:$0xff]
        %v796 = vld [vmem:[%s787 + $0x30] sm:$0xff]
        %v797 = vld [vmem:[%s787 + $0x38] sm:$0xff]
        %v798 = vld [vmem:[%s787 + $0x40] sm:$0xff]
        %v799 = vld [vmem:[%s787 + $0x48] sm:$0xff]
        %v800 = vld [vmem:[%s787 + $0x50] sm:$0xff]
        %v801 = vld [vmem:[%s787 + $0x58] sm:$0xff]
        %v802 = vld [vmem:[%s787 + $0x60] sm:$0xff]
        %v803 = vld [vmem:[%s787 + $0x68] sm:$0xff]
        %v804 = vld [vmem:[%s787 + $0x70] sm:$0xff]
        %v805 = vld [vmem:[%s787 + $0x78] sm:$0xff]
        %v806 = vpack.c.bf16 %v791, %v790
        %v807 = vpack.c.bf16 %v793, %v792
        %v808 = vpack.c.bf16 %v795, %v794
        %v809 = vpack.c.bf16 %v797, %v796
        %v810 = vpack.c.bf16 %v799, %v798
        %v811 = vpack.c.bf16 %v801, %v800
        %v812 = vpack.c.bf16 %v803, %v802
        %v813 = vpack.c.bf16 %v805, %v804
        %v814 = vld [vmem:[#allocation2] sm:$0xf]
        %v815 = vld [vmem:[#allocation2 + $0x4] sm:$0xf]
        %v816 = vld [vmem:[#allocation2 + $0x8] sm:$0xf]
        %v817 = vld [vmem:[#allocation2 + $0xc] sm:$0xf]
        %v818 = vld [vmem:[#allocation2 + $0x10] sm:$0xf]
        %v819 = vld [vmem:[#allocation5] sm:$0x1]
        %v821 = vlaneseq
        %v822 = vshrl.u32 %v821, 7
        %v823 = vsub.s32 0, %v822
        %v824 = vrot.slane %v819, %v823
        %v831 = vunpack.c.l.b16 %v814
        %v832 = vunpack.c.l.b16 %v815
        %v833 = vunpack.c.l.b16 %v816
        %v834 = vunpack.c.l.b16 %v817
        %v835 = vunpack.c.l.b16 %v818
        %v836 = vpack.c.b16 %v832, %v831
        %v837 = vpack.c.b16 %v834, %v833
        %v838 = vpack.c.b16 %v835, %v835
        %vm841 = vcmask 326656
        %v843 = vsel %vm841, %v806, 0
        %v846 = vsel %vm841, %v807, 0
        %v849 = vsel %vm841, %v808, 0
        %v852 = vsel %vm841, %v809, 0
        %v855 = vsel %vm841, %v810, 0
        %v858 = vsel %vm841, %v811, 0
        %v861 = vsel %vm841, %v812, 0
        %v864 = vsel %vm841, %v813, 0
        %vm866 = vcmask 1043456
        %v868 = vsel %vm866, %v838, 0
        %870 = vmatprep.subr.bf16.mxu0 0
        %871 = vmatpush1.bf16.msra.mxu0 %v836
        %872 = vmatprep.subr.bf16.mxu0 0
        %873 = vmatpush1.bf16.msra.mxu0 %v837
        %874 = vmatprep.subr.bf16.mxu0 0
        %875 = vmatpush1.bf16.msra.mxu0 %v868
        %876 = vmatprep.subr.bf16.mxu0 0
        %877 = vmatpush1.bf16.msra.mxu0 0
        %878 = vmatprep.subr.bf16.mxu0 0
        %879 = vmatpush1.bf16.msra.mxu0 0
        %880 = vmatprep.subr.bf16.mxu0 0
        %881 = vmatpush1.bf16.msra.mxu0 0
        %882 = vmatprep.subr.bf16.mxu0 0
        %883 = vmatpush1.bf16.msra.mxu0 0
        %884 = vmatprep.subr.bf16.mxu0 0
        %885 = vmatpush1.bf16.msra.mxu0 0
        %886 = vmatprep.subr.bf16.mxu0 0
        %887 = vmatpush1.bf16.msra.mxu0 0
        %888 = vmatprep.subr.bf16.mxu0 0
        %889 = vmatpush1.bf16.msra.mxu0 0
        %890 = vmatprep.subr.bf16.mxu0 0
        %891 = vmatpush1.bf16.msra.mxu0 0
        %892 = vmatprep.subr.bf16.mxu0 0
        %893 = vmatpush1.bf16.msra.mxu0 0
        %894 = vmatprep.subr.bf16.mxu0 0
        %895 = vmatpush1.bf16.msra.mxu0 0
        %896 = vmatprep.subr.bf16.mxu0 0
        %897 = vmatpush1.bf16.msra.mxu0 0
        %898 = vmatprep.subr.bf16.mxu0 0
        %899 = vmatpush1.bf16.msra.mxu0 0
        %900 = vmatprep.subr.bf16.mxu0 0
        %901 = vmatpush1.bf16.msra.mxu0 0
        %902 = vmatprep.mubr.bf16.mxu0 0
        %903 = vmatmul.mubr.bf16.gmra.mrb[0].mxu0 %v843
        %v904 = vpop.f32.mrb[0].mxu0
        %v905 = vadd.f32 %v824, %v904
        %v906 = vpop.f32.mrb[0].mxu0
        %v907 = vpop.f32.mrb[0].mxu0
        %v908 = vadd.f32 %v824, %v907
        %v909 = vpop.f32.mrb[0].mxu0
        %910 = vmatprep.mubr.bf16.mxu0 0
        %911 = vmatmul.mubr.bf16.gmra.mrb[0].mxu0 %v846
        %v912 = vpop.f32.mrb[0].mxu0
        %v913 = vadd.f32 %v824, %v912
        %v914 = vpop.f32.mrb[0].mxu0
        %v915 = vpop.f32.mrb[0].mxu0
        %v916 = vadd.f32 %v824, %v915
        %v917 = vpop.f32.mrb[0].mxu0
        %918 = vmatprep.mubr.bf16.mxu0 0
        %919 = vmatmul.mubr.bf16.gmra.mrb[0].mxu0 %v849
        %v920 = vpop.f32.mrb[0].mxu0
        %v921 = vadd.f32 %v824, %v920
        %v922 = vpop.f32.mrb[0].mxu0
        %v923 = vpop.f32.mrb[0].mxu0
        %v924 = vadd.f32 %v824, %v923
        %v925 = vpop.f32.mrb[0].mxu0
        %926 = vmatprep.mubr.bf16.mxu0 0
        %927 = vmatmul.mubr.bf16.gmra.mrb[0].mxu0 %v852
        %v928 = vpop.f32.mrb[0].mxu0
        %v929 = vadd.f32 %v824, %v928
        %v930 = vpop.f32.mrb[0].mxu0
        %v931 = vpop.f32.mrb[0].mxu0
        %v932 = vadd.f32 %v824, %v931
        %v933 = vpop.f32.mrb[0].mxu0
        %934 = vmatprep.mubr.bf16.mxu0 0
        %935 = vmatmul.mubr.bf16.gmra.mrb[0].mxu0 %v855
        %v936 = vpop.f32.mrb[0].mxu0
        %v937 = vadd.f32 %v824, %v936
        %v938 = vpop.f32.mrb[0].mxu0
        %v939 = vpop.f32.mrb[0].mxu0
        %v940 = vadd.f32 %v824, %v939
        %v941 = vpop.f32.mrb[0].mxu0
        %942 = vmatprep.mubr.bf16.mxu0 0
        %943 = vmatmul.mubr.bf16.gmra.mrb[0].mxu0 %v858
        %v944 = vpop.f32.mrb[0].mxu0
        %v945 = vadd.f32 %v824, %v944
        %v946 = vpop.f32.mrb[0].mxu0
        %v947 = vpop.f32.mrb[0].mxu0
        %v948 = vadd.f32 %v824, %v947
        %v949 = vpop.f32.mrb[0].mxu0
        %950 = vmatprep.mubr.bf16.mxu0 0
        %951 = vmatmul.mubr.bf16.gmra.mrb[0].mxu0 %v861
        %v952 = vpop.f32.mrb[0].mxu0
        %v953 = vadd.f32 %v824, %v952
        %v954 = vpop.f32.mrb[0].mxu0
        %v955 = vpop.f32.mrb[0].mxu0
        %v956 = vadd.f32 %v824, %v955
        %v957 = vpop.f32.mrb[0].mxu0
        %958 = vmatprep.mubr.bf16.mxu0 0
        %959 = vmatmul.mubr.bf16.gmra.mrb[0].mxu0 %v864
        %v960 = vpop.f32.mrb[0].mxu0
        %v961 = vadd.f32 %v824, %v960
        %v962 = vpop.f32.mrb[0].mxu0
        %v963 = vpop.f32.mrb[0].mxu0
        %v964 = vadd.f32 %v824, %v963
        %v965 = vpop.f32.mrb[0].mxu0
        %966 = vdwg.mxu0
        %v967 = vpack.c.bf16 %v908, %v905
        %v968 = vpack.c.bf16 %v916, %v913
        %v969 = vpack.c.bf16 %v924, %v921
        %v970 = vpack.c.bf16 %v932, %v929
        %v971 = vpack.c.bf16 %v940, %v937
        %v972 = vpack.c.bf16 %v948, %v945
        %v973 = vpack.c.bf16 %v956, %v953
        %v974 = vpack.c.bf16 %v964, %v961
        %v975 = vld [vmem:[%s3] sm:$0xff]
        %v976 = vld [vmem:[%s3 + $0x8] sm:$0xff]
        %v977 = vld [vmem:[%s3 + $0x10] sm:$0xff]
        %v978 = vld [vmem:[%s3 + $0x18] sm:$0xff]
        %v979 = vld [vmem:[%s3 + $0x20] sm:$0xff]
        %v980 = vld [vmem:[%s3 + $0x28] sm:$0xff]
        %v981 = vld [vmem:[%s3 + $0x30] sm:$0xff]
        %v982 = vld [vmem:[%s3 + $0x38] sm:$0xff]
        %v983 = vld [vmem:[%s3 + $0x40] sm:$0xff]
        %v984 = vld [vmem:[%s3 + $0x48] sm:$0xff]
        %v985 = vld [vmem:[%s3 + $0x50] sm:$0xff]
        %v986 = vld [vmem:[%s3 + $0x58] sm:$0xff]
        %v987 = vld [vmem:[%s3 + $0x60] sm:$0xff]
        %v988 = vld [vmem:[%s3 + $0x68] sm:$0xff]
        %v989 = vld [vmem:[%s3 + $0x70] sm:$0xff]
        %v990 = vld [vmem:[%s3 + $0x78] sm:$0xff]
        %v991 = vld [vmem:[%s3 + $0x80] sm:$0xff]
        %v992 = vld [vmem:[%s3 + $0x88] sm:$0xff]
        %v993 = vld [vmem:[%s3 + $0x90] sm:$0xff]
        %v994 = vld [vmem:[%s3 + $0x98] sm:$0xff]
        %v995 = vld [vmem:[%s3 + $0xa0] sm:$0xff]
        %v996 = vld [vmem:[%s3 + $0xa8] sm:$0xff]
        %v997 = vld [vmem:[%s3 + $0xb0] sm:$0xff]
        %v998 = vld [vmem:[%s3 + $0xb8] sm:$0xff]
        %v999 = vld [vmem:[%s3 + $0xc0] sm:$0xff]
        %v1000 = vld [vmem:[%s3 + $0xc8] sm:$0xff]
        %v1001 = vld [vmem:[%s3 + $0xd0] sm:$0xff]
        %v1002 = vld [vmem:[%s3 + $0xd8] sm:$0xff]
        %v1003 = vld [vmem:[%s3 + $0xe0] sm:$0xff]
        %v1004 = vld [vmem:[%s3 + $0xe8] sm:$0xff]
        %v1005 = vld [vmem:[#allocation7] sm:$0x3f]
        %v1007 = vlaneseq
        %v1008 = vshrl.u32 %v1007, 7
        %v1009 = vsub.s32 0, %v1008
        %v1010 = vrot.slane %v1005, %v1009
        %v1011 = vlaneseq
        %v1012 = vshrl.u32 %v1011, 7
        %v1013 = vsub.s32 1, %v1012
        %v1014 = vrot.slane %v1005, %v1013
        %v1015 = vlaneseq
        %v1016 = vshrl.u32 %v1015, 7
        %v1017 = vsub.s32 2, %v1016
        %v1018 = vrot.slane %v1005, %v1017
        %v1019 = vlaneseq
        %v1020 = vshrl.u32 %v1019, 7
        %v1021 = vsub.s32 3, %v1020
        %v1022 = vrot.slane %v1005, %v1021
        %v1023 = vlaneseq
        %v1024 = vshrl.u32 %v1023, 7
        %v1025 = vsub.s32 4, %v1024
        %v1026 = vrot.slane %v1005, %v1025
        %v1027 = vlaneseq
        %v1028 = vshrl.u32 %v1027, 7
        %v1029 = vsub.s32 5, %v1028
        %v1030 = vrot.slane %v1005, %v1029
        %v1067 = vunpack.c.l.b16 %v975
        %v1068 = vunpack.c.h.b16 %v975
        %v1069 = vunpack.c.l.b16 %v976
        %v1070 = vunpack.c.h.b16 %v976
        %v1071 = vunpack.c.l.b16 %v977
        %v1072 = vunpack.c.h.b16 %v977
        %v1073 = vunpack.c.l.b16 %v978
        %v1074 = vunpack.c.h.b16 %v978
        %v1075 = vunpack.c.l.b16 %v979
        %v1076 = vunpack.c.h.b16 %v979
        %v1077 = vunpack.c.l.b16 %v980
        %v1078 = vunpack.c.h.b16 %v980
        %v1079 = vunpack.c.l.b16 %v981
        %v1080 = vunpack.c.h.b16 %v981
        %v1081 = vunpack.c.l.b16 %v982
        %v1082 = vunpack.c.h.b16 %v982
        %v1083 = vunpack.c.l.b16 %v983
        %v1084 = vunpack.c.h.b16 %v983
        %v1085 = vunpack.c.l.b16 %v984
        %v1086 = vunpack.c.h.b16 %v984
        %v1087 = vunpack.c.l.b16 %v985
        %v1088 = vunpack.c.h.b16 %v985
        %v1089 = vunpack.c.l.b16 %v986
        %v1090 = vunpack.c.h.b16 %v986
        %v1091 = vunpack.c.l.b16 %v987
        %v1092 = vunpack.c.h.b16 %v987
        %v1093 = vunpack.c.l.b16 %v988
        %v1094 = vunpack.c.h.b16 %v988
        %v1095 = vunpack.c.l.b16 %v989
        %v1096 = vunpack.c.h.b16 %v989
        %v1097 = vunpack.c.l.b16 %v990
        %v1098 = vunpack.c.h.b16 %v990
        %v1099 = vunpack.c.l.b16 %v991
        %v1100 = vunpack.c.h.b16 %v991
        %v1101 = vunpack.c.l.b16 %v992
        %v1102 = vunpack.c.h.b16 %v992
        %v1103 = vunpack.c.l.b16 %v993
        %v1104 = vunpack.c.h.b16 %v993
        %v1105 = vunpack.c.l.b16 %v994
        %v1106 = vunpack.c.h.b16 %v994
        %v1107 = vunpack.c.l.b16 %v995
        %v1108 = vunpack.c.h.b16 %v995
        %v1109 = vunpack.c.l.b16 %v996
        %v1110 = vunpack.c.h.b16 %v996
        %v1111 = vunpack.c.l.b16 %v997
        %v1112 = vunpack.c.h.b16 %v997
        %v1113 = vunpack.c.l.b16 %v998
        %v1114 = vunpack.c.h.b16 %v998
        %v1115 = vunpack.c.l.b16 %v999
        %v1116 = vunpack.c.h.b16 %v999
        %v1117 = vunpack.c.l.b16 %v1000
        %v1118 = vunpack.c.h.b16 %v1000
        %v1119 = vunpack.c.l.b16 %v1001
        %v1120 = vunpack.c.h.b16 %v1001
        %v1121 = vunpack.c.l.b16 %v1002
        %v1122 = vunpack.c.h.b16 %v1002
        %v1123 = vunpack.c.l.b16 %v1003
        %v1124 = vunpack.c.h.b16 %v1003
        %v1125 = vunpack.c.l.b16 %v1004
        %v1126 = vunpack.c.h.b16 %v1004
        %v1127 = vpack.c.b16 %v1073, %v1067
        %v1128 = vpack.c.b16 %v1074, %v1068
        %v1129 = vpack.c.b16 %v1075, %v1069
        %v1130 = vpack.c.b16 %v1076, %v1070
        %v1131 = vpack.c.b16 %v1077, %v1071
        %v1132 = vpack.c.b16 %v1078, %v1072
        %v1133 = vpack.c.b16 %v1085, %v1079
        %v1134 = vpack.c.b16 %v1086, %v1080
        %v1135 = vpack.c.b16 %v1087, %v1081
        %v1136 = vpack.c.b16 %v1088, %v1082
        %v1137 = vpack.c.b16 %v1089, %v1083
        %v1138 = vpack.c.b16 %v1090, %v1084
        %v1139 = vpack.c.b16 %v1097, %v1091
        %v1140 = vpack.c.b16 %v1098, %v1092
        %v1141 = vpack.c.b16 %v1099, %v1093
        %v1142 = vpack.c.b16 %v1100, %v1094
        %v1143 = vpack.c.b16 %v1101, %v1095
        %v1144 = vpack.c.b16 %v1102, %v1096
        %v1145 = vpack.c.b16 %v1109, %v1103
        %v1146 = vpack.c.b16 %v1110, %v1104
        %v1147 = vpack.c.b16 %v1111, %v1105
        %v1148 = vpack.c.b16 %v1112, %v1106
        %v1149 = vpack.c.b16 %v1113, %v1107
        %v1150 = vpack.c.b16 %v1114, %v1108
        %v1151 = vpack.c.b16 %v1121, %v1115
        %v1152 = vpack.c.b16 %v1122, %v1116
        %v1153 = vpack.c.b16 %v1123, %v1117
        %v1154 = vpack.c.b16 %v1124, %v1118
        %v1155 = vpack.c.b16 %v1125, %v1119
        %v1156 = vpack.c.b16 %v1126, %v1120
        %vm1187 = vcmask 654336
        %v1189 = vsel %vm1187, %v967, 0
        %v1192 = vsel %vm1187, %v968, 0
        %v1195 = vsel %vm1187, %v969, 0
        %v1198 = vsel %vm1187, %v970, 0
        %v1201 = vsel %vm1187, %v971, 0
        %v1204 = vsel %vm1187, %v972, 0
        %v1207 = vsel %vm1187, %v973, 0
        %v1210 = vsel %vm1187, %v974, 0
        %1212 = vmatprep.subr.bf16.mxu0 %v1128
        %1213 = vmatpush1.bf16.msra.mxu0 %v1127
        %1214 = vmatprep.subr.bf16.mxu0 %v1134
        %1215 = vmatpush1.bf16.msra.mxu0 %v1133
        %1216 = vmatprep.subr.bf16.mxu0 %v1140
        %1217 = vmatpush1.bf16.msra.mxu0 %v1139
        %1218 = vmatprep.subr.bf16.mxu0 %v1146
        %1219 = vmatpush1.bf16.msra.mxu0 %v1145
        %1220 = vmatprep.subr.bf16.mxu0 %v1152
        %1221 = vmatpush1.bf16.msra.mxu0 %v1151
        %1222 = vmatprep.subr.bf16.mxu0 0
        %1223 = vmatpush1.bf16.msra.mxu0 0
        %1224 = vmatprep.subr.bf16.mxu0 0
        %1225 = vmatpush1.bf16.msra.mxu0 0
        %1226 = vmatprep.subr.bf16.mxu0 0
        %1227 = vmatpush1.bf16.msra.mxu0 0
        %1228 = vmatprep.subr.bf16.mxu0 0
        %1229 = vmatpush1.bf16.msra.mxu0 0
        %1230 = vmatprep.subr.bf16.mxu0 0
        %1231 = vmatpush1.bf16.msra.mxu0 0
        %1232 = vmatprep.subr.bf16.mxu0 0
        %1233 = vmatpush1.bf16.msra.mxu0 0
        %1234 = vmatprep.subr.bf16.mxu0 0
        %1235 = vmatpush1.bf16.msra.mxu0 0
        %1236 = vmatprep.subr.bf16.mxu0 0
        %1237 = vmatpush1.bf16.msra.mxu0 0
        %1238 = vmatprep.subr.bf16.mxu0 0
        %1239 = vmatpush1.bf16.msra.mxu0 0
        %1240 = vmatprep.subr.bf16.mxu0 0
        %1241 = vmatpush1.bf16.msra.mxu0 0
        %1242 = vmatprep.subr.bf16.mxu0 0
        %1243 = vmatpush1.bf16.msra.mxu0 0
        %1244 = vmatprep.mubr.bf16.mxu0 0
        %1245 = vmatmul.mubr.bf16.gmra.mrb[0].mxu0 %v1189
        %v1246 = vpop.f32.mrb[0].mxu0
        %v1247 = vadd.f32 %v1010, %v1246
        %v1248 = vpop.f32.mrb[0].mxu0
        %v1249 = vadd.f32 %v1014, %v1248
        %v1250 = vpop.f32.mrb[0].mxu0
        %v1251 = vadd.f32 %v1010, %v1250
        %v1252 = vpop.f32.mrb[0].mxu0
        %v1253 = vadd.f32 %v1014, %v1252
        %1254 = vmatprep.mubr.bf16.mxu0 0
        %1255 = vmatmul.mubr.bf16.gmra.mrb[0].mxu0 %v1192
        %v1256 = vpop.f32.mrb[0].mxu0
        %v1257 = vadd.f32 %v1010, %v1256
        %v1258 = vpop.f32.mrb[0].mxu0
        %v1259 = vadd.f32 %v1014, %v1258
        %v1260 = vpop.f32.mrb[0].mxu0
        %v1261 = vadd.f32 %v1010, %v1260
        %v1262 = vpop.f32.mrb[0].mxu0
        %v1263 = vadd.f32 %v1014, %v1262
        %1264 = vmatprep.mubr.bf16.mxu0 0
        %1265 = vmatmul.mubr.bf16.gmra.mrb[0].mxu0 %v1195
        %v1266 = vpop.f32.mrb[0].mxu0
        %v1267 = vadd.f32 %v1010, %v1266
        %v1268 = vpop.f32.mrb[0].mxu0
        %v1269 = vadd.f32 %v1014, %v1268
        %v1270 = vpop.f32.mrb[0].mxu0
        %v1271 = vadd.f32 %v1010, %v1270
        %v1272 = vpop.f32.mrb[0].mxu0
        %v1273 = vadd.f32 %v1014, %v1272
        %1274 = vmatprep.mubr.bf16.mxu0 0
        %1275 = vmatmul.mubr.bf16.gmra.mrb[0].mxu0 %v1198
        %v1276 = vpop.f32.mrb[0].mxu0
        %v1277 = vadd.f32 %v1010, %v1276
        %v1278 = vpop.f32.mrb[0].mxu0
        %v1279 = vadd.f32 %v1014, %v1278
        %v1280 = vpop.f32.mrb[0].mxu0
        %v1281 = vadd.f32 %v1010, %v1280
        %v1282 = vpop.f32.mrb[0].mxu0
        %v1283 = vadd.f32 %v1014, %v1282
        %1284 = vmatprep.mubr.bf16.mxu0 0
        %1285 = vmatmul.mubr.bf16.gmra.mrb[0].mxu0 %v1201
        %v1286 = vpop.f32.mrb[0].mxu0
        %v1287 = vadd.f32 %v1010, %v1286
        %v1288 = vpop.f32.mrb[0].mxu0
        %v1289 = vadd.f32 %v1014, %v1288
        %v1290 = vpop.f32.mrb[0].mxu0
        %v1291 = vadd.f32 %v1010, %v1290
        %v1292 = vpop.f32.mrb[0].mxu0
        %v1293 = vadd.f32 %v1014, %v1292
        %1294 = vmatprep.mubr.bf16.mxu0 0
        %1295 = vmatmul.mubr.bf16.gmra.mrb[0].mxu0 %v1204
        %v1296 = vpop.f32.mrb[0].mxu0
        %v1297 = vadd.f32 %v1010, %v1296
        %v1298 = vpop.f32.mrb[0].mxu0
        %v1299 = vadd.f32 %v1014, %v1298
        %v1300 = vpop.f32.mrb[0].mxu0
        %v1301 = vadd.f32 %v1010, %v1300
        %v1302 = vpop.f32.mrb[0].mxu0
        %v1303 = vadd.f32 %v1014, %v1302
        %1304 = vmatprep.mubr.bf16.mxu0 0
        %1305 = vmatmul.mubr.bf16.gmra.mrb[0].mxu0 %v1207
        %v1306 = vpop.f32.mrb[0].mxu0
        %v1307 = vadd.f32 %v1010, %v1306
        %v1308 = vpop.f32.mrb[0].mxu0
        %v1309 = vadd.f32 %v1014, %v1308
        %v1310 = vpop.f32.mrb[0].mxu0
        %v1311 = vadd.f32 %v1010, %v1310
        %v1312 = vpop.f32.mrb[0].mxu0
        %v1313 = vadd.f32 %v1014, %v1312
        %1314 = vmatprep.mubr.bf16.mxu0 0
        %1315 = vmatmul.mubr.bf16.gmra.mrb[0].mxu0 %v1210
        %v1316 = vpop.f32.mrb[0].mxu0
        %v1317 = vadd.f32 %v1010, %v1316
        %v1318 = vpop.f32.mrb[0].mxu0
        %v1319 = vadd.f32 %v1014, %v1318
        %v1320 = vpop.f32.mrb[0].mxu0
        %v1321 = vadd.f32 %v1010, %v1320
        %v1322 = vpop.f32.mrb[0].mxu0
        %v1323 = vadd.f32 %v1014, %v1322
        %1324 = vdwg.mxu0
        %1325 = vmatprep.subr.bf16.mxu0 %v1130
        %1326 = vmatpush1.bf16.msra.mxu0 %v1129
        %1327 = vmatprep.subr.bf16.mxu0 %v1136
        %1328 = vmatpush1.bf16.msra.mxu0 %v1135
        %1329 = vmatprep.subr.bf16.mxu0 %v1142
        %1330 = vmatpush1.bf16.msra.mxu0 %v1141
        %1331 = vmatprep.subr.bf16.mxu0 %v1148
        %1332 = vmatpush1.bf16.msra.mxu0 %v1147
        %1333 = vmatprep.subr.bf16.mxu0 %v1154
        %1334 = vmatpush1.bf16.msra.mxu0 %v1153
        %1335 = vmatprep.subr.bf16.mxu0 0
        %1336 = vmatpush1.bf16.msra.mxu0 0
        %1337 = vmatprep.subr.bf16.mxu0 0
        %1338 = vmatpush1.bf16.msra.mxu0 0
        %1339 = vmatprep.subr.bf16.mxu0 0
        %1340 = vmatpush1.bf16.msra.mxu0 0
        %1341 = vmatprep.subr.bf16.mxu0 0
        %1342 = vmatpush1.bf16.msra.mxu0 0
        %1343 = vmatprep.subr.bf16.mxu0 0
        %1344 = vmatpush1.bf16.msra.mxu0 0
        %1345 = vmatprep.subr.bf16.mxu0 0
        %1346 = vmatpush1.bf16.msra.mxu0 0
        %1347 = vmatprep.subr.bf16.mxu0 0
        %1348 = vmatpush1.bf16.msra.mxu0 0
        %1349 = vmatprep.subr.bf16.mxu0 0
        %1350 = vmatpush1.bf16.msra.mxu0 0
        %1351 = vmatprep.subr.bf16.mxu0 0
        %1352 = vmatpush1.bf16.msra.mxu0 0
        %1353 = vmatprep.subr.bf16.mxu0 0
        %1354 = vmatpush1.bf16.msra.mxu0 0
        %1355 = vmatprep.subr.bf16.mxu0 0
        %1356 = vmatpush1.bf16.msra.mxu0 0
        %1357 = vmatprep.mubr.bf16.mxu0 0
        %1358 = vmatmul.mubr.bf16.gmra.mrb[0].mxu0 %v1189
        %v1359 = vpop.f32.mrb[0].mxu0
        %v1360 = vadd.f32 %v1018, %v1359
        %v1361 = vpop.f32.mrb[0].mxu0
        %v1362 = vadd.f32 %v1022, %v1361
        %v1363 = vpop.f32.mrb[0].mxu0
        %v1364 = vadd.f32 %v1018, %v1363
        %v1365 = vpop.f32.mrb[0].mxu0
        %v1366 = vadd.f32 %v1022, %v1365
        %1367 = vmatprep.mubr.bf16.mxu0 0
        %1368 = vmatmul.mubr.bf16.gmra.mrb[0].mxu0 %v1192
        %v1369 = vpop.f32.mrb[0].mxu0
        %v1370 = vadd.f32 %v1018, %v1369
        %v1371 = vpop.f32.mrb[0].mxu0
        %v1372 = vadd.f32 %v1022, %v1371
        %v1373 = vpop.f32.mrb[0].mxu0
        %v1374 = vadd.f32 %v1018, %v1373
        %v1375 = vpop.f32.mrb[0].mxu0
        %v1376 = vadd.f32 %v1022, %v1375
        %1377 = vmatprep.mubr.bf16.mxu0 0
        %1378 = vmatmul.mubr.bf16.gmra.mrb[0].mxu0 %v1195
        %v1379 = vpop.f32.mrb[0].mxu0
        %v1380 = vadd.f32 %v1018, %v1379
        %v1381 = vpop.f32.mrb[0].mxu0
        %v1382 = vadd.f32 %v1022, %v1381
        %v1383 = vpop.f32.mrb[0].mxu0
        %v1384 = vadd.f32 %v1018, %v1383
        %v1385 = vpop.f32.mrb[0].mxu0
        %v1386 = vadd.f32 %v1022, %v1385
        %1387 = vmatprep.mubr.bf16.mxu0 0
        %1388 = vmatmul.mubr.bf16.gmra.mrb[0].mxu0 %v1198
        %v1389 = vpop.f32.mrb[0].mxu0
        %v1390 = vadd.f32 %v1018, %v1389
        %v1391 = vpop.f32.mrb[0].mxu0
        %v1392 = vadd.f32 %v1022, %v1391
        %v1393 = vpop.f32.mrb[0].mxu0
        %v1394 = vadd.f32 %v1018, %v1393
        %v1395 = vpop.f32.mrb[0].mxu0
        %v1396 = vadd.f32 %v1022, %v1395
        %1397 = vmatprep.mubr.bf16.mxu0 0
        %1398 = vmatmul.mubr.bf16.gmra.mrb[0].mxu0 %v1201
        %v1399 = vpop.f32.mrb[0].mxu0
        %v1400 = vadd.f32 %v1018, %v1399
        %v1401 = vpop.f32.mrb[0].mxu0
        %v1402 = vadd.f32 %v1022, %v1401
        %v1403 = vpop.f32.mrb[0].mxu0
        %v1404 = vadd.f32 %v1018, %v1403
        %v1405 = vpop.f32.mrb[0].mxu0
        %v1406 = vadd.f32 %v1022, %v1405
        %1407 = vmatprep.mubr.bf16.mxu0 0
        %1408 = vmatmul.mubr.bf16.gmra.mrb[0].mxu0 %v1204
        %v1409 = vpop.f32.mrb[0].mxu0
        %v1410 = vadd.f32 %v1018, %v1409
        %v1411 = vpop.f32.mrb[0].mxu0
        %v1412 = vadd.f32 %v1022, %v1411
        %v1413 = vpop.f32.mrb[0].mxu0
        %v1414 = vadd.f32 %v1018, %v1413
        %v1415 = vpop.f32.mrb[0].mxu0
        %v1416 = vadd.f32 %v1022, %v1415
        %1417 = vmatprep.mubr.bf16.mxu0 0
        %1418 = vmatmul.mubr.bf16.gmra.mrb[0].mxu0 %v1207
        %v1419 = vpop.f32.mrb[0].mxu0
        %v1420 = vadd.f32 %v1018, %v1419
        %v1421 = vpop.f32.mrb[0].mxu0
        %v1422 = vadd.f32 %v1022, %v1421
        %v1423 = vpop.f32.mrb[0].mxu0
        %v1424 = vadd.f32 %v1018, %v1423
        %v1425 = vpop.f32.mrb[0].mxu0
        %v1426 = vadd.f32 %v1022, %v1425
        %1427 = vmatprep.mubr.bf16.mxu0 0
        %1428 = vmatmul.mubr.bf16.gmra.mrb[0].mxu0 %v1210
        %v1429 = vpop.f32.mrb[0].mxu0
        %v1430 = vadd.f32 %v1018, %v1429
        %v1431 = vpop.f32.mrb[0].mxu0
        %v1432 = vadd.f32 %v1022, %v1431
        %v1433 = vpop.f32.mrb[0].mxu0
        %v1434 = vadd.f32 %v1018, %v1433
        %v1435 = vpop.f32.mrb[0].mxu0
        %v1436 = vadd.f32 %v1022, %v1435
        %1437 = vdwg.mxu0
        %1438 = vmatprep.subr.bf16.mxu0 %v1132
        %1439 = vmatpush1.bf16.msra.mxu0 %v1131
        %1440 = vmatprep.subr.bf16.mxu0 %v1138
        %1441 = vmatpush1.bf16.msra.mxu0 %v1137
        %1442 = vmatprep.subr.bf16.mxu0 %v1144
        %1443 = vmatpush1.bf16.msra.mxu0 %v1143
        %1444 = vmatprep.subr.bf16.mxu0 %v1150
        %1445 = vmatpush1.bf16.msra.mxu0 %v1149
        %1446 = vmatprep.subr.bf16.mxu0 %v1156
        %1447 = vmatpush1.bf16.msra.mxu0 %v1155
        %1448 = vmatprep.subr.bf16.mxu0 0
        %1449 = vmatpush1.bf16.msra.mxu0 0
        %1450 = vmatprep.subr.bf16.mxu0 0
        %1451 = vmatpush1.bf16.msra.mxu0 0
        %1452 = vmatprep.subr.bf16.mxu0 0
        %1453 = vmatpush1.bf16.msra.mxu0 0
        %1454 = vmatprep.subr.bf16.mxu0 0
        %1455 = vmatpush1.bf16.msra.mxu0 0
        %1456 = vmatprep.subr.bf16.mxu0 0
        %1457 = vmatpush1.bf16.msra.mxu0 0
        %1458 = vmatprep.subr.bf16.mxu0 0
        %1459 = vmatpush1.bf16.msra.mxu0 0
        %1460 = vmatprep.subr.bf16.mxu0 0
        %1461 = vmatpush1.bf16.msra.mxu0 0
        %1462 = vmatprep.subr.bf16.mxu0 0
        %1463 = vmatpush1.bf16.msra.mxu0 0
        %1464 = vmatprep.subr.bf16.mxu0 0
        %1465 = vmatpush1.bf16.msra.mxu0 0
        %1466 = vmatprep.subr.bf16.mxu0 0
        %1467 = vmatpush1.bf16.msra.mxu0 0
        %1468 = vmatprep.subr.bf16.mxu0 0
        %1469 = vmatpush1.bf16.msra.mxu0 0
        %1470 = vmatprep.mubr.bf16.mxu0 0
        %1471 = vmatmul.mubr.bf16.gmra.mrb[0].mxu0 %v1189
        %v1472 = vpop.f32.mrb[0].mxu0
        %v1473 = vadd.f32 %v1026, %v1472
        %v1474 = vpop.f32.mrb[0].mxu0
        %v1475 = vadd.f32 %v1030, %v1474
        %v1476 = vpop.f32.mrb[0].mxu0
        %v1477 = vadd.f32 %v1026, %v1476
        %v1478 = vpop.f32.mrb[0].mxu0
        %v1479 = vadd.f32 %v1030, %v1478
        %1480 = vmatprep.mubr.bf16.mxu0 0
        %1481 = vmatmul.mubr.bf16.gmra.mrb[0].mxu0 %v1192
        %v1482 = vpop.f32.mrb[0].mxu0
        %v1483 = vadd.f32 %v1026, %v1482
        %v1484 = vpop.f32.mrb[0].mxu0
        %v1485 = vadd.f32 %v1030, %v1484
        %v1486 = vpop.f32.mrb[0].mxu0
        %v1487 = vadd.f32 %v1026, %v1486
        %v1488 = vpop.f32.mrb[0].mxu0
        %v1489 = vadd.f32 %v1030, %v1488
        %1490 = vmatprep.mubr.bf16.mxu0 0
        %1491 = vmatmul.mubr.bf16.gmra.mrb[0].mxu0 %v1195
        %v1492 = vpop.f32.mrb[0].mxu0
        %v1493 = vadd.f32 %v1026, %v1492
        %v1494 = vpop.f32.mrb[0].mxu0
        %v1495 = vadd.f32 %v1030, %v1494
        %v1496 = vpop.f32.mrb[0].mxu0
        %v1497 = vadd.f32 %v1026, %v1496
        %v1498 = vpop.f32.mrb[0].mxu0
        %v1499 = vadd.f32 %v1030, %v1498
        %1500 = vmatprep.mubr.bf16.mxu0 0
        %1501 = vmatmul.mubr.bf16.gmra.mrb[0].mxu0 %v1198
        %v1502 = vpop.f32.mrb[0].mxu0
        %v1503 = vadd.f32 %v1026, %v1502
        %v1504 = vpop.f32.mrb[0].mxu0
        %v1505 = vadd.f32 %v1030, %v1504
        %v1506 = vpop.f32.mrb[0].mxu0
        %v1507 = vadd.f32 %v1026, %v1506
        %v1508 = vpop.f32.mrb[0].mxu0
        %v1509 = vadd.f32 %v1030, %v1508
        %1510 = vmatprep.mubr.bf16.mxu0 0
        %1511 = vmatmul.mubr.bf16.gmra.mrb[0].mxu0 %v1201
        %v1512 = vpop.f32.mrb[0].mxu0
        %v1513 = vadd.f32 %v1026, %v1512
        %v1514 = vpop.f32.mrb[0].mxu0
        %v1515 = vadd.f32 %v1030, %v1514
        %v1516 = vpop.f32.mrb[0].mxu0
        %v1517 = vadd.f32 %v1026, %v1516
        %v1518 = vpop.f32.mrb[0].mxu0
        %v1519 = vadd.f32 %v1030, %v1518
        %1520 = vmatprep.mubr.bf16.mxu0 0
        %1521 = vmatmul.mubr.bf16.gmra.mrb[0].mxu0 %v1204
        %v1522 = vpop.f32.mrb[0].mxu0
        %v1523 = vadd.f32 %v1026, %v1522
        %v1524 = vpop.f32.mrb[0].mxu0
        %v1525 = vadd.f32 %v1030, %v1524
        %v1526 = vpop.f32.mrb[0].mxu0
        %v1527 = vadd.f32 %v1026, %v1526
        %v1528 = vpop.f32.mrb[0].mxu0
        %v1529 = vadd.f32 %v1030, %v1528
        %1530 = vmatprep.mubr.bf16.mxu0 0
        %1531 = vmatmul.mubr.bf16.gmra.mrb[0].mxu0 %v1207
        %v1532 = vpop.f32.mrb[0].mxu0
        %v1533 = vadd.f32 %v1026, %v1532
        %v1534 = vpop.f32.mrb[0].mxu0
        %v1535 = vadd.f32 %v1030, %v1534
        %v1536 = vpop.f32.mrb[0].mxu0
        %v1537 = vadd.f32 %v1026, %v1536
        %v1538 = vpop.f32.mrb[0].mxu0
        %v1539 = vadd.f32 %v1030, %v1538
        %1540 = vmatprep.mubr.bf16.mxu0 0
        %1541 = vmatmul.mubr.bf16.gmra.mrb[0].mxu0 %v1210
        %v1542 = vpop.f32.mrb[0].mxu0
        %v1543 = vadd.f32 %v1026, %v1542
        %v1544 = vpop.f32.mrb[0].mxu0
        %v1545 = vadd.f32 %v1030, %v1544
        %v1546 = vpop.f32.mrb[0].mxu0
        %v1547 = vadd.f32 %v1026, %v1546
        %v1548 = vpop.f32.mrb[0].mxu0
        %v1549 = vadd.f32 %v1030, %v1548
        %1550 = vdwg.mxu0
        %v1551 = vld [vmem:[#allocation8] sm:$0x1]
        %v1552 = vpack.c.bf16 %v1251, %v1247
        %v1553 = vpack.c.bf16 %v1261, %v1257
        %v1554 = vpack.c.bf16 %v1271, %v1267
        %v1555 = vpack.c.bf16 %v1281, %v1277
        %v1556 = vpack.c.bf16 %v1291, %v1287
        %v1557 = vpack.c.bf16 %v1301, %v1297
        %v1558 = vpack.c.bf16 %v1311, %v1307
        %v1559 = vpack.c.bf16 %v1321, %v1317
        %v1560 = vpack.c.bf16 %v1364, %v1360
        %v1561 = vpack.c.bf16 %v1374, %v1370
        %v1562 = vpack.c.bf16 %v1384, %v1380
        %v1563 = vpack.c.bf16 %v1394, %v1390
        %v1564 = vpack.c.bf16 %v1404, %v1400
        %v1565 = vpack.c.bf16 %v1414, %v1410
        %v1566 = vpack.c.bf16 %v1424, %v1420
        %v1567 = vpack.c.bf16 %v1434, %v1430
        %v1568 = vpack.c.bf16 %v1477, %v1473
        %v1569 = vpack.c.bf16 %v1487, %v1483
        %v1570 = vpack.c.bf16 %v1497, %v1493
        %v1571 = vpack.c.bf16 %v1507, %v1503
        %v1572 = vpack.c.bf16 %v1517, %v1513
        %v1573 = vpack.c.bf16 %v1527, %v1523
        %v1574 = vpack.c.bf16 %v1537, %v1533
        %v1575 = vpack.c.bf16 %v1547, %v1543
        %1576 = vmatprep.subr.bf16.mxu0 0
        %1577 = vmatpush1.bf16.xpose.msra.mxu0 %v1560
        %1578 = vmatprep.subr.bf16.mxu0 0
        %1579 = vmatpush1.bf16.xpose.msra.mxu0 0
        %1580 = vmatprep.subr.bf16.mxu0 0
        %1581 = vmatpush1.bf16.xpose.msra.mxu0 0
        %1582 = vmatprep.subr.bf16.mxu0 0
        %1583 = vmatpush1.bf16.xpose.msra.mxu0 0
        %1584 = vmatprep.subr.bf16.mxu0 0
        %1585 = vmatpush1.bf16.xpose.msra.mxu0 0
        %1586 = vmatprep.subr.bf16.mxu0 0
        %1587 = vmatpush1.bf16.xpose.msra.mxu0 0
        %1588 = vmatprep.subr.bf16.mxu0 0
        %1589 = vmatpush1.bf16.xpose.msra.mxu0 0
        %1590 = vmatprep.subr.bf16.mxu0 0
        %1591 = vmatpush1.bf16.xpose.msra.mxu0 0
        %1592 = vmatprep.subr.bf16.mxu0 0
        %1593 = vmatpush1.bf16.xpose.msra.mxu0 0
        %1594 = vmatprep.subr.bf16.mxu0 0
        %1595 = vmatpush1.bf16.xpose.msra.mxu0 0
        %1596 = vmatprep.subr.bf16.mxu0 0
        %1597 = vmatpush1.bf16.xpose.msra.mxu0 0
        %1598 = vmatprep.subr.bf16.mxu0 0
        %1599 = vmatpush1.bf16.xpose.msra.mxu0 0
        %1600 = vmatprep.subr.bf16.mxu0 0
        %1601 = vmatpush1.bf16.xpose.msra.mxu0 0
        %1602 = vmatprep.subr.bf16.mxu0 0
        %1603 = vmatpush1.bf16.xpose.msra.mxu0 0
        %1604 = vmatprep.subr.bf16.mxu0 0
        %1605 = vmatpush1.bf16.xpose.msra.mxu0 0
        %1606 = vmatprep.subr.bf16.mxu0 0
        %1607 = vmatpush1.bf16.xpose.msra.mxu0 0
        %1608 = vmatprep.mubr.bf16.mxu0 0
        %1609 = vmatmul.mubr.bf16.gmra.mrb[0].mxu0 %v1552
        %v1610 = vpop.f32.mrb[0].mxu0
        %v1611 = vadd.f32 0.0, %v1610
        %v1612 = vpop.f32.mrb[0].mxu0
        %v1613 = vpop.f32.mrb[0].mxu0
        %v1614 = vadd.f32 0.0, %v1613
        %v1615 = vpop.f32.mrb[0].mxu0
        %1616 = vdwg.mxu0
        %1617 = vmatprep.subr.bf16.mxu0 0
        %1618 = vmatpush1.bf16.xpose.msra.mxu0 %v1561
        %1619 = vmatprep.subr.bf16.mxu0 0
        %1620 = vmatpush1.bf16.xpose.msra.mxu0 0
        %1621 = vmatprep.subr.bf16.mxu0 0
        %1622 = vmatpush1.bf16.xpose.msra.mxu0 0
        %1623 = vmatprep.subr.bf16.mxu0 0
        %1624 = vmatpush1.bf16.xpose.msra.mxu0 0
        %1625 = vmatprep.subr.bf16.mxu0 0
        %1626 = vmatpush1.bf16.xpose.msra.mxu0 0
        %1627 = vmatprep.subr.bf16.mxu0 0
        %1628 = vmatpush1.bf16.xpose.msra.mxu0 0
        %1629 = vmatprep.subr.bf16.mxu0 0
        %1630 = vmatpush1.bf16.xpose.msra.mxu0 0
        %1631 = vmatprep.subr.bf16.mxu0 0
        %1632 = vmatpush1.bf16.xpose.msra.mxu0 0
        %1633 = vmatprep.subr.bf16.mxu0 0
        %1634 = vmatpush1.bf16.xpose.msra.mxu0 0
        %1635 = vmatprep.subr.bf16.mxu0 0
        %1636 = vmatpush1.bf16.xpose.msra.mxu0 0
        %1637 = vmatprep.subr.bf16.mxu0 0
        %1638 = vmatpush1.bf16.xpose.msra.mxu0 0
        %1639 = vmatprep.subr.bf16.mxu0 0
        %1640 = vmatpush1.bf16.xpose.msra.mxu0 0
        %1641 = vmatprep.subr.bf16.mxu0 0
        %1642 = vmatpush1.bf16.xpose.msra.mxu0 0
        %1643 = vmatprep.subr.bf16.mxu0 0
        %1644 = vmatpush1.bf16.xpose.msra.mxu0 0
        %1645 = vmatprep.subr.bf16.mxu0 0
        %1646 = vmatpush1.bf16.xpose.msra.mxu0 0
        %1647 = vmatprep.subr.bf16.mxu0 0
        %1648 = vmatpush1.bf16.xpose.msra.mxu0 0
        %1649 = vmatprep.mubr.bf16.mxu0 0
        %1650 = vmatmul.mubr.bf16.gmra.mrb[0].mxu0 %v1553
        %v1651 = vpop.f32.mrb[0].mxu0
        %v1652 = vadd.f32 0.0, %v1651
        %v1653 = vpop.f32.mrb[0].mxu0
        %v1654 = vpop.f32.mrb[0].mxu0
        %v1655 = vadd.f32 0.0, %v1654
        %v1656 = vpop.f32.mrb[0].mxu0
        %1657 = vdwg.mxu0
        %1658 = vmatprep.subr.bf16.mxu0 0
        %1659 = vmatpush1.bf16.xpose.msra.mxu0 %v1562
        %1660 = vmatprep.subr.bf16.mxu0 0
        %1661 = vmatpush1.bf16.xpose.msra.mxu0 0
        %1662 = vmatprep.subr.bf16.mxu0 0
        %1663 = vmatpush1.bf16.xpose.msra.mxu0 0
        %1664 = vmatprep.subr.bf16.mxu0 0
        %1665 = vmatpush1.bf16.xpose.msra.mxu0 0
        %1666 = vmatprep.subr.bf16.mxu0 0
        %1667 = vmatpush1.bf16.xpose.msra.mxu0 0
        %1668 = vmatprep.subr.bf16.mxu0 0
        %1669 = vmatpush1.bf16.xpose.msra.mxu0 0
        %1670 = vmatprep.subr.bf16.mxu0 0
        %1671 = vmatpush1.bf16.xpose.msra.mxu0 0
        %1672 = vmatprep.subr.bf16.mxu0 0
        %1673 = vmatpush1.bf16.xpose.msra.mxu0 0
        %1674 = vmatprep.subr.bf16.mxu0 0
        %1675 = vmatpush1.bf16.xpose.msra.mxu0 0
        %1676 = vmatprep.subr.bf16.mxu0 0
        %1677 = vmatpush1.bf16.xpose.msra.mxu0 0
        %1678 = vmatprep.subr.bf16.mxu0 0
        %1679 = vmatpush1.bf16.xpose.msra.mxu0 0
        %1680 = vmatprep.subr.bf16.mxu0 0
        %1681 = vmatpush1.bf16.xpose.msra.mxu0 0
        %1682 = vmatprep.subr.bf16.mxu0 0
        %1683 = vmatpush1.bf16.xpose.msra.mxu0 0
        %1684 = vmatprep.subr.bf16.mxu0 0
        %1685 = vmatpush1.bf16.xpose.msra.mxu0 0
        %1686 = vmatprep.subr.bf16.mxu0 0
        %1687 = vmatpush1.bf16.xpose.msra.mxu0 0
        %1688 = vmatprep.subr.bf16.mxu0 0
        %1689 = vmatpush1.bf16.xpose.msra.mxu0 0
        %1690 = vmatprep.mubr.bf16.mxu0 0
        %1691 = vmatmul.mubr.bf16.gmra.mrb[0].mxu0 %v1554
        %v1692 = vpop.f32.mrb[0].mxu0
        %v1693 = vadd.f32 0.0, %v1692
        %v1694 = vpop.f32.mrb[0].mxu0
        %v1695 = vpop.f32.mrb[0].mxu0
        %v1696 = vadd.f32 0.0, %v1695
        %v1697 = vpop.f32.mrb[0].mxu0
        %1698 = vdwg.mxu0
        %1699 = vmatprep.subr.bf16.mxu0 0
        %1700 = vmatpush1.bf16.xpose.msra.mxu0 %v1563
        %1701 = vmatprep.subr.bf16.mxu0 0
        %1702 = vmatpush1.bf16.xpose.msra.mxu0 0
        %1703 = vmatprep.subr.bf16.mxu0 0
        %1704 = vmatpush1.bf16.xpose.msra.mxu0 0
        %1705 = vmatprep.subr.bf16.mxu0 0
        %1706 = vmatpush1.bf16.xpose.msra.mxu0 0
        %1707 = vmatprep.subr.bf16.mxu0 0
        %1708 = vmatpush1.bf16.xpose.msra.mxu0 0
        %1709 = vmatprep.subr.bf16.mxu0 0
        %1710 = vmatpush1.bf16.xpose.msra.mxu0 0
        %1711 = vmatprep.subr.bf16.mxu0 0
        %1712 = vmatpush1.bf16.xpose.msra.mxu0 0
        %1713 = vmatprep.subr.bf16.mxu0 0
        %1714 = vmatpush1.bf16.xpose.msra.mxu0 0
        %1715 = vmatprep.subr.bf16.mxu0 0
        %1716 = vmatpush1.bf16.xpose.msra.mxu0 0
        %1717 = vmatprep.subr.bf16.mxu0 0
        %1718 = vmatpush1.bf16.xpose.msra.mxu0 0
        %1719 = vmatprep.subr.bf16.mxu0 0
        %1720 = vmatpush1.bf16.xpose.msra.mxu0 0
        %1721 = vmatprep.subr.bf16.mxu0 0
        %1722 = vmatpush1.bf16.xpose.msra.mxu0 0
        %1723 = vmatprep.subr.bf16.mxu0 0
        %1724 = vmatpush1.bf16.xpose.msra.mxu0 0
        %1725 = vmatprep.subr.bf16.mxu0 0
        %1726 = vmatpush1.bf16.xpose.msra.mxu0 0
        %1727 = vmatprep.subr.bf16.mxu0 0
        %1728 = vmatpush1.bf16.xpose.msra.mxu0 0
        %1729 = vmatprep.subr.bf16.mxu0 0
        %1730 = vmatpush1.bf16.xpose.msra.mxu0 0
        %1731 = vmatprep.mubr.bf16.mxu0 0
        %1732 = vmatmul.mubr.bf16.gmra.mrb[0].mxu0 %v1555
        %v1733 = vpop.f32.mrb[0].mxu0
        %v1734 = vadd.f32 0.0, %v1733
        %v1735 = vpop.f32.mrb[0].mxu0
        %v1736 = vpop.f32.mrb[0].mxu0
        %v1737 = vadd.f32 0.0, %v1736
        %v1738 = vpop.f32.mrb[0].mxu0
        %1739 = vdwg.mxu0
        %1740 = vmatprep.subr.bf16.mxu0 0
        %1741 = vmatpush1.bf16.xpose.msra.mxu0 %v1564
        %1742 = vmatprep.subr.bf16.mxu0 0
        %1743 = vmatpush1.bf16.xpose.msra.mxu0 0
        %1744 = vmatprep.subr.bf16.mxu0 0
        %1745 = vmatpush1.bf16.xpose.msra.mxu0 0
        %1746 = vmatprep.subr.bf16.mxu0 0
        %1747 = vmatpush1.bf16.xpose.msra.mxu0 0
        %1748 = vmatprep.subr.bf16.mxu0 0
        %1749 = vmatpush1.bf16.xpose.msra.mxu0 0
        %1750 = vmatprep.subr.bf16.mxu0 0
        %1751 = vmatpush1.bf16.xpose.msra.mxu0 0
        %1752 = vmatprep.subr.bf16.mxu0 0
        %1753 = vmatpush1.bf16.xpose.msra.mxu0 0
        %1754 = vmatprep.subr.bf16.mxu0 0
        %1755 = vmatpush1.bf16.xpose.msra.mxu0 0
        %1756 = vmatprep.subr.bf16.mxu0 0
        %1757 = vmatpush1.bf16.xpose.msra.mxu0 0
        %1758 = vmatprep.subr.bf16.mxu0 0
        %1759 = vmatpush1.bf16.xpose.msra.mxu0 0
        %1760 = vmatprep.subr.bf16.mxu0 0
        %1761 = vmatpush1.bf16.xpose.msra.mxu0 0
        %1762 = vmatprep.subr.bf16.mxu0 0
        %1763 = vmatpush1.bf16.xpose.msra.mxu0 0
        %1764 = vmatprep.subr.bf16.mxu0 0
        %1765 = vmatpush1.bf16.xpose.msra.mxu0 0
        %1766 = vmatprep.subr.bf16.mxu0 0
        %1767 = vmatpush1.bf16.xpose.msra.mxu0 0
        %1768 = vmatprep.subr.bf16.mxu0 0
        %1769 = vmatpush1.bf16.xpose.msra.mxu0 0
        %1770 = vmatprep.subr.bf16.mxu0 0
        %1771 = vmatpush1.bf16.xpose.msra.mxu0 0
        %1772 = vmatprep.mubr.bf16.mxu0 0
        %1773 = vmatmul.mubr.bf16.gmra.mrb[0].mxu0 %v1556
        %v1774 = vpop.f32.mrb[0].mxu0
        %v1775 = vadd.f32 0.0, %v1774
        %v1776 = vpop.f32.mrb[0].mxu0
        %v1777 = vpop.f32.mrb[0].mxu0
        %v1778 = vadd.f32 0.0, %v1777
        %v1779 = vpop.f32.mrb[0].mxu0
        %1780 = vdwg.mxu0
        %1781 = vmatprep.subr.bf16.mxu0 0
        %1782 = vmatpush1.bf16.xpose.msra.mxu0 %v1565
        %1783 = vmatprep.subr.bf16.mxu0 0
        %1784 = vmatpush1.bf16.xpose.msra.mxu0 0
        %1785 = vmatprep.subr.bf16.mxu0 0
        %1786 = vmatpush1.bf16.xpose.msra.mxu0 0
        %1787 = vmatprep.subr.bf16.mxu0 0
        %1788 = vmatpush1.bf16.xpose.msra.mxu0 0
        %1789 = vmatprep.subr.bf16.mxu0 0
        %1790 = vmatpush1.bf16.xpose.msra.mxu0 0
        %1791 = vmatprep.subr.bf16.mxu0 0
        %1792 = vmatpush1.bf16.xpose.msra.mxu0 0
        %1793 = vmatprep.subr.bf16.mxu0 0
        %1794 = vmatpush1.bf16.xpose.msra.mxu0 0
        %1795 = vmatprep.subr.bf16.mxu0 0
        %1796 = vmatpush1.bf16.xpose.msra.mxu0 0
        %1797 = vmatprep.subr.bf16.mxu0 0
        %1798 = vmatpush1.bf16.xpose.msra.mxu0 0
        %1799 = vmatprep.subr.bf16.mxu0 0
        %1800 = vmatpush1.bf16.xpose.msra.mxu0 0
        %1801 = vmatprep.subr.bf16.mxu0 0
        %1802 = vmatpush1.bf16.xpose.msra.mxu0 0
        %1803 = vmatprep.subr.bf16.mxu0 0
        %1804 = vmatpush1.bf16.xpose.msra.mxu0 0
        %1805 = vmatprep.subr.bf16.mxu0 0
        %1806 = vmatpush1.bf16.xpose.msra.mxu0 0
        %1807 = vmatprep.subr.bf16.mxu0 0
        %1808 = vmatpush1.bf16.xpose.msra.mxu0 0
        %1809 = vmatprep.subr.bf16.mxu0 0
        %1810 = vmatpush1.bf16.xpose.msra.mxu0 0
        %1811 = vmatprep.subr.bf16.mxu0 0
        %1812 = vmatpush1.bf16.xpose.msra.mxu0 0
        %1813 = vmatprep.mubr.bf16.mxu0 0
        %1814 = vmatmul.mubr.bf16.gmra.mrb[0].mxu0 %v1557
        %v1815 = vpop.f32.mrb[0].mxu0
        %v1816 = vadd.f32 0.0, %v1815
        %v1817 = vpop.f32.mrb[0].mxu0
        %v1818 = vpop.f32.mrb[0].mxu0
        %v1819 = vadd.f32 0.0, %v1818
        %v1820 = vpop.f32.mrb[0].mxu0
        %1821 = vdwg.mxu0
        %1822 = vmatprep.subr.bf16.mxu0 0
        %1823 = vmatpush1.bf16.xpose.msra.mxu0 %v1566
        %1824 = vmatprep.subr.bf16.mxu0 0
        %1825 = vmatpush1.bf16.xpose.msra.mxu0 0
        %1826 = vmatprep.subr.bf16.mxu0 0
        %1827 = vmatpush1.bf16.xpose.msra.mxu0 0
        %1828 = vmatprep.subr.bf16.mxu0 0
        %1829 = vmatpush1.bf16.xpose.msra.mxu0 0
        %1830 = vmatprep.subr.bf16.mxu0 0
        %1831 = vmatpush1.bf16.xpose.msra.mxu0 0
        %1832 = vmatprep.subr.bf16.mxu0 0
        %1833 = vmatpush1.bf16.xpose.msra.mxu0 0
        %1834 = vmatprep.subr.bf16.mxu0 0
        %1835 = vmatpush1.bf16.xpose.msra.mxu0 0
        %1836 = vmatprep.subr.bf16.mxu0 0
        %1837 = vmatpush1.bf16.xpose.msra.mxu0 0
        %1838 = vmatprep.subr.bf16.mxu0 0
        %1839 = vmatpush1.bf16.xpose.msra.mxu0 0
        %1840 = vmatprep.subr.bf16.mxu0 0
        %1841 = vmatpush1.bf16.xpose.msra.mxu0 0
        %1842 = vmatprep.subr.bf16.mxu0 0
        %1843 = vmatpush1.bf16.xpose.msra.mxu0 0
        %1844 = vmatprep.subr.bf16.mxu0 0
        %1845 = vmatpush1.bf16.xpose.msra.mxu0 0
        %1846 = vmatprep.subr.bf16.mxu0 0
        %1847 = vmatpush1.bf16.xpose.msra.mxu0 0
        %1848 = vmatprep.subr.bf16.mxu0 0
        %1849 = vmatpush1.bf16.xpose.msra.mxu0 0
        %1850 = vmatprep.subr.bf16.mxu0 0
        %1851 = vmatpush1.bf16.xpose.msra.mxu0 0
        %1852 = vmatprep.subr.bf16.mxu0 0
        %1853 = vmatpush1.bf16.xpose.msra.mxu0 0
        %1854 = vmatprep.mubr.bf16.mxu0 0
        %1855 = vmatmul.mubr.bf16.gmra.mrb[0].mxu0 %v1558
        %v1856 = vpop.f32.mrb[0].mxu0
        %v1857 = vadd.f32 0.0, %v1856
        %v1858 = vpop.f32.mrb[0].mxu0
        %v1859 = vpop.f32.mrb[0].mxu0
        %v1860 = vadd.f32 0.0, %v1859
        %v1861 = vpop.f32.mrb[0].mxu0
        %1862 = vdwg.mxu0
        %1863 = vmatprep.subr.bf16.mxu0 0
        %1864 = vmatpush1.bf16.xpose.msra.mxu0 %v1567
        %1865 = vmatprep.subr.bf16.mxu0 0
        %1866 = vmatpush1.bf16.xpose.msra.mxu0 0
        %1867 = vmatprep.subr.bf16.mxu0 0
        %1868 = vmatpush1.bf16.xpose.msra.mxu0 0
        %1869 = vmatprep.subr.bf16.mxu0 0
        %1870 = vmatpush1.bf16.xpose.msra.mxu0 0
        %1871 = vmatprep.subr.bf16.mxu0 0
        %1872 = vmatpush1.bf16.xpose.msra.mxu0 0
        %1873 = vmatprep.subr.bf16.mxu0 0
        %1874 = vmatpush1.bf16.xpose.msra.mxu0 0
        %1875 = vmatprep.subr.bf16.mxu0 0
        %1876 = vmatpush1.bf16.xpose.msra.mxu0 0
        %1877 = vmatprep.subr.bf16.mxu0 0
        %1878 = vmatpush1.bf16.xpose.msra.mxu0 0
        %1879 = vmatprep.subr.bf16.mxu0 0
        %1880 = vmatpush1.bf16.xpose.msra.mxu0 0
        %1881 = vmatprep.subr.bf16.mxu0 0
        %1882 = vmatpush1.bf16.xpose.msra.mxu0 0
        %1883 = vmatprep.subr.bf16.mxu0 0
        %1884 = vmatpush1.bf16.xpose.msra.mxu0 0
        %1885 = vmatprep.subr.bf16.mxu0 0
        %1886 = vmatpush1.bf16.xpose.msra.mxu0 0
        %1887 = vmatprep.subr.bf16.mxu0 0
        %1888 = vmatpush1.bf16.xpose.msra.mxu0 0
        %1889 = vmatprep.subr.bf16.mxu0 0
        %1890 = vmatpush1.bf16.xpose.msra.mxu0 0
        %1891 = vmatprep.subr.bf16.mxu0 0
        %1892 = vmatpush1.bf16.xpose.msra.mxu0 0
        %1893 = vmatprep.subr.bf16.mxu0 0
        %1894 = vmatpush1.bf16.xpose.msra.mxu0 0
        %1895 = vmatprep.mubr.bf16.mxu0 0
        %1896 = vmatmul.mubr.bf16.gmra.mrb[0].mxu0 %v1559
        %v1897 = vpop.f32.mrb[0].mxu0
        %v1898 = vadd.f32 0.0, %v1897
        %v1899 = vpop.f32.mrb[0].mxu0
        %v1900 = vpop.f32.mrb[0].mxu0
        %v1901 = vadd.f32 0.0, %v1900
        %v1902 = vpop.f32.mrb[0].mxu0
        %1903 = vdwg.mxu0
        %vm1904 = vcmask 130048
        %v1905 = vsel %vm1904, %v1611, -inf
        %1906 = vmax.xlane.f32.xlu0 %v1905
        %v1907 = vpop.xlane.xlu0 %1906
        %v1908 = vsel %vm1904, %v1614, -inf
        %1909 = vmax.xlane.f32.xlu0 %v1908
        %v1910 = vpop.xlane.xlu0 %1909
        %v1911 = vsel %vm1904, %v1652, -inf
        %1912 = vmax.xlane.f32.xlu0 %v1911
        %v1913 = vpop.xlane.xlu0 %1912
        %v1914 = vsel %vm1904, %v1655, -inf
        %1915 = vmax.xlane.f32.xlu0 %v1914
        %v1916 = vpop.xlane.xlu0 %1915
        %v1917 = vsel %vm1904, %v1693, -inf
        %1918 = vmax.xlane.f32.xlu0 %v1917
        %v1919 = vpop.xlane.xlu0 %1918
        %v1920 = vsel %vm1904, %v1696, -inf
        %1921 = vmax.xlane.f32.xlu0 %v1920
        %v1922 = vpop.xlane.xlu0 %1921
        %v1923 = vsel %vm1904, %v1734, -inf
        %1924 = vmax.xlane.f32.xlu0 %v1923
        %v1925 = vpop.xlane.xlu0 %1924
        %v1926 = vsel %vm1904, %v1737, -inf
        %1927 = vmax.xlane.f32.xlu0 %v1926
        %v1928 = vpop.xlane.xlu0 %1927
        %v1929 = vsel %vm1904, %v1775, -inf
        %1930 = vmax.xlane.f32.xlu0 %v1929
        %v1931 = vpop.xlane.xlu0 %1930
        %v1932 = vsel %vm1904, %v1778, -inf
        %1933 = vmax.xlane.f32.xlu0 %v1932
        %v1934 = vpop.xlane.xlu0 %1933
        %v1935 = vsel %vm1904, %v1816, -inf
        %1936 = vmax.xlane.f32.xlu0 %v1935
        %v1937 = vpop.xlane.xlu0 %1936
        %v1938 = vsel %vm1904, %v1819, -inf
        %1939 = vmax.xlane.f32.xlu0 %v1938
        %v1940 = vpop.xlane.xlu0 %1939
        %v1941 = vsel %vm1904, %v1857, -inf
        %1942 = vmax.xlane.f32.xlu0 %v1941
        %v1943 = vpop.xlane.xlu0 %1942
        %v1944 = vsel %vm1904, %v1860, -inf
        %1945 = vmax.xlane.f32.xlu0 %v1944
        %v1946 = vpop.xlane.xlu0 %1945
        %v1947 = vsel %vm1904, %v1898, -inf
        %1948 = vmax.xlane.f32.xlu0 %v1947
        %v1949 = vpop.xlane.xlu0 %1948
        %v1950 = vsel %vm1904, %v1901, -inf
        %1951 = vmax.xlane.f32.xlu0 %v1950
        %v1952 = vpop.xlane.xlu0 %1951
        %v1953 = vsub.f32 %v1611, %v1907
        %v1954 = vsub.f32 %v1614, %v1910
        %v1955 = vsub.f32 %v1652, %v1913
        %v1956 = vsub.f32 %v1655, %v1916
        %v1957 = vsub.f32 %v1693, %v1919
        %v1958 = vsub.f32 %v1696, %v1922
        %v1959 = vsub.f32 %v1734, %v1925
        %v1960 = vsub.f32 %v1737, %v1928
        %v1961 = vsub.f32 %v1775, %v1931
        %v1962 = vsub.f32 %v1778, %v1934
        %v1963 = vsub.f32 %v1816, %v1937
        %v1964 = vsub.f32 %v1819, %v1940
        %v1965 = vsub.f32 %v1857, %v1943
        %v1966 = vsub.f32 %v1860, %v1946
        %v1967 = vsub.f32 %v1898, %v1949
        %v1968 = vsub.f32 %v1901, %v1952
        %v1969 = vmul.f32 %v1953, 1.442695
        %v1970 = vpow.pop %v1969
        %v1971 = vmul.f32 %v1954, 1.442695
        %v1972 = vpow.pop %v1971
        %v1973 = vmul.f32 %v1955, 1.442695
        %v1974 = vpow.pop %v1973
        %v1975 = vmul.f32 %v1956, 1.442695
        %v1976 = vpow.pop %v1975
        %v1977 = vmul.f32 %v1957, 1.442695
        %v1978 = vpow.pop %v1977
        %v1979 = vmul.f32 %v1958, 1.442695
        %v1980 = vpow.pop %v1979
        %v1981 = vmul.f32 %v1959, 1.442695
        %v1982 = vpow.pop %v1981
        %v1983 = vmul.f32 %v1960, 1.442695
        %v1984 = vpow.pop %v1983
        %v1985 = vmul.f32 %v1961, 1.442695
        %v1986 = vpow.pop %v1985
        %v1987 = vmul.f32 %v1962, 1.442695
        %v1988 = vpow.pop %v1987
        %v1989 = vmul.f32 %v1963, 1.442695
        %v1990 = vpow.pop %v1989
        %v1991 = vmul.f32 %v1964, 1.442695
        %v1992 = vpow.pop %v1991
        %v1993 = vmul.f32 %v1965, 1.442695
        %v1994 = vpow.pop %v1993
        %v1995 = vmul.f32 %v1966, 1.442695
        %v1996 = vpow.pop %v1995
        %v1997 = vmul.f32 %v1967, 1.442695
        %v1998 = vpow.pop %v1997
        %v1999 = vmul.f32 %v1968, 1.442695
        %v2000 = vpow.pop %v1999
        %v2001 = vsel %vm1904, %v1970, 0.0
        %2002 = vadd.xlane.f32.xlu0 %v2001
        %v2003 = vpop.xlane.xlu0 %2002
        %v2004 = vsel %vm1904, %v1972, 0.0
        %2005 = vadd.xlane.f32.xlu0 %v2004
        %v2006 = vpop.xlane.xlu0 %2005
        %v2007 = vsel %vm1904, %v1974, 0.0
        %2008 = vadd.xlane.f32.xlu0 %v2007
        %v2009 = vpop.xlane.xlu0 %2008
        %v2010 = vsel %vm1904, %v1976, 0.0
        %2011 = vadd.xlane.f32.xlu0 %v2010
        %v2012 = vpop.xlane.xlu0 %2011
        %v2013 = vsel %vm1904, %v1978, 0.0
        %2014 = vadd.xlane.f32.xlu0 %v2013
        %v2015 = vpop.xlane.xlu0 %2014
        %v2016 = vsel %vm1904, %v1980, 0.0
        %2017 = vadd.xlane.f32.xlu0 %v2016
        %v2018 = vpop.xlane.xlu0 %2017
        %v2019 = vsel %vm1904, %v1982, 0.0
        %2020 = vadd.xlane.f32.xlu0 %v2019
        %v2021 = vpop.xlane.xlu0 %2020
        %v2022 = vsel %vm1904, %v1984, 0.0
        %2023 = vadd.xlane.f32.xlu0 %v2022
        %v2024 = vpop.xlane.xlu0 %2023
        %v2025 = vsel %vm1904, %v1986, 0.0
        %2026 = vadd.xlane.f32.xlu0 %v2025
        %v2027 = vpop.xlane.xlu0 %2026
        %v2028 = vsel %vm1904, %v1988, 0.0
        %2029 = vadd.xlane.f32.xlu0 %v2028
        %v2030 = vpop.xlane.xlu0 %2029
        %v2031 = vsel %vm1904, %v1990, 0.0
        %2032 = vadd.xlane.f32.xlu0 %v2031
        %v2033 = vpop.xlane.xlu0 %2032
        %v2034 = vsel %vm1904, %v1992, 0.0
        %2035 = vadd.xlane.f32.xlu0 %v2034
        %v2036 = vpop.xlane.xlu0 %2035
        %v2037 = vsel %vm1904, %v1994, 0.0
        %2038 = vadd.xlane.f32.xlu0 %v2037
        %v2039 = vpop.xlane.xlu0 %2038
        %v2040 = vsel %vm1904, %v1996, 0.0
        %2041 = vadd.xlane.f32.xlu0 %v2040
        %v2042 = vpop.xlane.xlu0 %2041
        %v2043 = vsel %vm1904, %v1998, 0.0
        %2044 = vadd.xlane.f32.xlu0 %v2043
        %v2045 = vpop.xlane.xlu0 %2044
        %v2046 = vsel %vm1904, %v2000, 0.0
        %2047 = vadd.xlane.f32.xlu0 %v2046
        %v2048 = vpop.xlane.xlu0 %2047
        %v2049 = vrcp.pop %v2003
        %v2050 = vrcp.pop %v2006
        %v2051 = vrcp.pop %v2009
        %v2052 = vrcp.pop %v2012
        %v2053 = vrcp.pop %v2015
        %v2054 = vrcp.pop %v2018
        %v2055 = vrcp.pop %v2021
        %v2056 = vrcp.pop %v2024
        %v2057 = vrcp.pop %v2027
        %v2058 = vrcp.pop %v2030
        %v2059 = vrcp.pop %v2033
        %v2060 = vrcp.pop %v2036
        %v2061 = vrcp.pop %v2039
        %v2062 = vrcp.pop %v2042
        %v2063 = vrcp.pop %v2045
        %v2064 = vrcp.pop %v2048
        %v2065 = vmul.f32 %v1970, %v2049
        %v2066 = vmul.f32 %v1972, %v2050
        %v2067 = vmul.f32 %v1974, %v2051
        %v2068 = vmul.f32 %v1976, %v2052
        %v2069 = vmul.f32 %v1978, %v2053
        %v2070 = vmul.f32 %v1980, %v2054
        %v2071 = vmul.f32 %v1982, %v2055
        %v2072 = vmul.f32 %v1984, %v2056
        %v2073 = vmul.f32 %v1986, %v2057
        %v2074 = vmul.f32 %v1988, %v2058
        %v2075 = vmul.f32 %v1990, %v2059
        %v2076 = vmul.f32 %v1992, %v2060
        %v2077 = vmul.f32 %v1994, %v2061
        %v2078 = vmul.f32 %v1996, %v2062
        %v2079 = vmul.f32 %v1998, %v2063
        %v2080 = vmul.f32 %v2000, %v2064
        %v2081 = vpack.c.bf16 %v2066, %v2065
        %v2082 = vpack.c.bf16 %v2068, %v2067
        %v2083 = vpack.c.bf16 %v2070, %v2069
        %v2084 = vpack.c.bf16 %v2072, %v2071
        %v2085 = vpack.c.bf16 %v2074, %v2073
        %v2086 = vpack.c.bf16 %v2076, %v2075
        %v2087 = vpack.c.bf16 %v2078, %v2077
        %v2088 = vpack.c.bf16 %v2080, %v2079
        %v2090 = vsel %vm1904, %v2081, 0
        %2092 = vmatprep.subr.bf16.mxu0 0
        %2093 = vmatpush1.bf16.msra.mxu0 %v1568
        %2094 = vmatprep.subr.bf16.mxu0 0
        %2095 = vmatpush1.bf16.msra.mxu0 0
        %2096 = vmatprep.subr.bf16.mxu0 0
        %2097 = vmatpush1.bf16.msra.mxu0 0
        %2098 = vmatprep.subr.bf16.mxu0 0
        %2099 = vmatpush1.bf16.msra.mxu0 0
        %2100 = vmatprep.subr.bf16.mxu0 0
        %2101 = vmatpush1.bf16.msra.mxu0 0
        %2102 = vmatprep.subr.bf16.mxu0 0
        %2103 = vmatpush1.bf16.msra.mxu0 0
        %2104 = vmatprep.subr.bf16.mxu0 0
        %2105 = vmatpush1.bf16.msra.mxu0 0
        %2106 = vmatprep.subr.bf16.mxu0 0
        %2107 = vmatpush1.bf16.msra.mxu0 0
        %2108 = vmatprep.subr.bf16.mxu0 0
        %2109 = vmatpush1.bf16.msra.mxu0 0
        %2110 = vmatprep.subr.bf16.mxu0 0
        %2111 = vmatpush1.bf16.msra.mxu0 0
        %2112 = vmatprep.subr.bf16.mxu0 0
        %2113 = vmatpush1.bf16.msra.mxu0 0
        %2114 = vmatprep.subr.bf16.mxu0 0
        %2115 = vmatpush1.bf16.msra.mxu0 0
        %2116 = vmatprep.subr.bf16.mxu0 0
        %2117 = vmatpush1.bf16.msra.mxu0 0
        %2118 = vmatprep.subr.bf16.mxu0 0
        %2119 = vmatpush1.bf16.msra.mxu0 0
        %2120 = vmatprep.subr.bf16.mxu0 0
        %2121 = vmatpush1.bf16.msra.mxu0 0
        %2122 = vmatprep.subr.bf16.mxu0 0
        %2123 = vmatpush1.bf16.msra.mxu0 0
        %2124 = vmatprep.mubr.bf16.mxu0 0
        %2125 = vmatmul.mubr.bf16.gmra.mrb[0].mxu0 %v2090
        %v2126 = vpop.f32.mrb[0].mxu0
        %v2127 = vadd.f32 0.0, %v2126
        %v2128 = vpop.f32.mrb[0].mxu0
        %v2129 = vpop.f32.mrb[0].mxu0
        %v2130 = vadd.f32 0.0, %v2129
        %v2131 = vpop.f32.mrb[0].mxu0
        %2132 = vdwg.mxu0
        %v2134 = vsel %vm1904, %v2082, 0
        %2136 = vmatprep.subr.bf16.mxu0 0
        %2137 = vmatpush1.bf16.msra.mxu0 %v1569
        %2138 = vmatprep.subr.bf16.mxu0 0
        %2139 = vmatpush1.bf16.msra.mxu0 0
        %2140 = vmatprep.subr.bf16.mxu0 0
        %2141 = vmatpush1.bf16.msra.mxu0 0
        %2142 = vmatprep.subr.bf16.mxu0 0
        %2143 = vmatpush1.bf16.msra.mxu0 0
        %2144 = vmatprep.subr.bf16.mxu0 0
        %2145 = vmatpush1.bf16.msra.mxu0 0
        %2146 = vmatprep.subr.bf16.mxu0 0
        %2147 = vmatpush1.bf16.msra.mxu0 0
        %2148 = vmatprep.subr.bf16.mxu0 0
        %2149 = vmatpush1.bf16.msra.mxu0 0
        %2150 = vmatprep.subr.bf16.mxu0 0
        %2151 = vmatpush1.bf16.msra.mxu0 0
        %2152 = vmatprep.subr.bf16.mxu0 0
        %2153 = vmatpush1.bf16.msra.mxu0 0
        %2154 = vmatprep.subr.bf16.mxu0 0
        %2155 = vmatpush1.bf16.msra.mxu0 0
        %2156 = vmatprep.subr.bf16.mxu0 0
        %2157 = vmatpush1.bf16.msra.mxu0 0
        %2158 = vmatprep.subr.bf16.mxu0 0
        %2159 = vmatpush1.bf16.msra.mxu0 0
        %2160 = vmatprep.subr.bf16.mxu0 0
        %2161 = vmatpush1.bf16.msra.mxu0 0
        %2162 = vmatprep.subr.bf16.mxu0 0
        %2163 = vmatpush1.bf16.msra.mxu0 0
        %2164 = vmatprep.subr.bf16.mxu0 0
        %2165 = vmatpush1.bf16.msra.mxu0 0
        %2166 = vmatprep.subr.bf16.mxu0 0
        %2167 = vmatpush1.bf16.msra.mxu0 0
        %2168 = vmatprep.mubr.bf16.mxu0 0
        %2169 = vmatmul.mubr.bf16.gmra.mrb[0].mxu0 %v2134
        %v2170 = vpop.f32.mrb[0].mxu0
        %v2171 = vadd.f32 0.0, %v2170
        %v2172 = vpop.f32.mrb[0].mxu0
        %v2173 = vpop.f32.mrb[0].mxu0
        %v2174 = vadd.f32 0.0, %v2173
        %v2175 = vpop.f32.mrb[0].mxu0
        %2176 = vdwg.mxu0
        %v2178 = vsel %vm1904, %v2083, 0
        %2180 = vmatprep.subr.bf16.mxu0 0
        %2181 = vmatpush1.bf16.msra.mxu0 %v1570
        %2182 = vmatprep.subr.bf16.mxu0 0
        %2183 = vmatpush1.bf16.msra.mxu0 0
        %2184 = vmatprep.subr.bf16.mxu0 0
        %2185 = vmatpush1.bf16.msra.mxu0 0
        %2186 = vmatprep.subr.bf16.mxu0 0
        %2187 = vmatpush1.bf16.msra.mxu0 0
        %2188 = vmatprep.subr.bf16.mxu0 0
        %2189 = vmatpush1.bf16.msra.mxu0 0
        %2190 = vmatprep.subr.bf16.mxu0 0
        %2191 = vmatpush1.bf16.msra.mxu0 0
        %2192 = vmatprep.subr.bf16.mxu0 0
        %2193 = vmatpush1.bf16.msra.mxu0 0
        %2194 = vmatprep.subr.bf16.mxu0 0
        %2195 = vmatpush1.bf16.msra.mxu0 0
        %2196 = vmatprep.subr.bf16.mxu0 0
        %2197 = vmatpush1.bf16.msra.mxu0 0
        %2198 = vmatprep.subr.bf16.mxu0 0
        %2199 = vmatpush1.bf16.msra.mxu0 0
        %2200 = vmatprep.subr.bf16.mxu0 0
        %2201 = vmatpush1.bf16.msra.mxu0 0
        %2202 = vmatprep.subr.bf16.mxu0 0
        %2203 = vmatpush1.bf16.msra.mxu0 0
        %2204 = vmatprep.subr.bf16.mxu0 0
        %2205 = vmatpush1.bf16.msra.mxu0 0
        %2206 = vmatprep.subr.bf16.mxu0 0
        %2207 = vmatpush1.bf16.msra.mxu0 0
        %2208 = vmatprep.subr.bf16.mxu0 0
        %2209 = vmatpush1.bf16.msra.mxu0 0
        %2210 = vmatprep.subr.bf16.mxu0 0
        %2211 = vmatpush1.bf16.msra.mxu0 0
        %2212 = vmatprep.mubr.bf16.mxu0 0
        %2213 = vmatmul.mubr.bf16.gmra.mrb[0].mxu0 %v2178
        %v2214 = vpop.f32.mrb[0].mxu0
        %v2215 = vadd.f32 0.0, %v2214
        %v2216 = vpop.f32.mrb[0].mxu0
        %v2217 = vpop.f32.mrb[0].mxu0
        %v2218 = vadd.f32 0.0, %v2217
        %v2219 = vpop.f32.mrb[0].mxu0
        %2220 = vdwg.mxu0
        %v2222 = vsel %vm1904, %v2084, 0
        %2224 = vmatprep.subr.bf16.mxu0 0
        %2225 = vmatpush1.bf16.msra.mxu0 %v1571
        %2226 = vmatprep.subr.bf16.mxu0 0
        %2227 = vmatpush1.bf16.msra.mxu0 0
        %2228 = vmatprep.subr.bf16.mxu0 0
        %2229 = vmatpush1.bf16.msra.mxu0 0
        %2230 = vmatprep.subr.bf16.mxu0 0
        %2231 = vmatpush1.bf16.msra.mxu0 0
        %2232 = vmatprep.subr.bf16.mxu0 0
        %2233 = vmatpush1.bf16.msra.mxu0 0
        %2234 = vmatprep.subr.bf16.mxu0 0
        %2235 = vmatpush1.bf16.msra.mxu0 0
        %2236 = vmatprep.subr.bf16.mxu0 0
        %2237 = vmatpush1.bf16.msra.mxu0 0
        %2238 = vmatprep.subr.bf16.mxu0 0
        %2239 = vmatpush1.bf16.msra.mxu0 0
        %2240 = vmatprep.subr.bf16.mxu0 0
        %2241 = vmatpush1.bf16.msra.mxu0 0
        %2242 = vmatprep.subr.bf16.mxu0 0
        %2243 = vmatpush1.bf16.msra.mxu0 0
        %2244 = vmatprep.subr.bf16.mxu0 0
        %2245 = vmatpush1.bf16.msra.mxu0 0
        %2246 = vmatprep.subr.bf16.mxu0 0
        %2247 = vmatpush1.bf16.msra.mxu0 0
        %2248 = vmatprep.subr.bf16.mxu0 0
        %2249 = vmatpush1.bf16.msra.mxu0 0
        %2250 = vmatprep.subr.bf16.mxu0 0
        %2251 = vmatpush1.bf16.msra.mxu0 0
        %2252 = vmatprep.subr.bf16.mxu0 0
        %2253 = vmatpush1.bf16.msra.mxu0 0
        %2254 = vmatprep.subr.bf16.mxu0 0
        %2255 = vmatpush1.bf16.msra.mxu0 0
        %2256 = vmatprep.mubr.bf16.mxu0 0
        %2257 = vmatmul.mubr.bf16.gmra.mrb[0].mxu0 %v2222
        %v2258 = vpop.f32.mrb[0].mxu0
        %v2259 = vadd.f32 0.0, %v2258
        %v2260 = vpop.f32.mrb[0].mxu0
        %v2261 = vpop.f32.mrb[0].mxu0
        %v2262 = vadd.f32 0.0, %v2261
        %v2263 = vpop.f32.mrb[0].mxu0
        %2264 = vdwg.mxu0
        %v2266 = vsel %vm1904, %v2085, 0
        %2268 = vmatprep.subr.bf16.mxu0 0
        %2269 = vmatpush1.bf16.msra.mxu0 %v1572
        %2270 = vmatprep.subr.bf16.mxu0 0
        %2271 = vmatpush1.bf16.msra.mxu0 0
        %2272 = vmatprep.subr.bf16.mxu0 0
        %2273 = vmatpush1.bf16.msra.mxu0 0
        %2274 = vmatprep.subr.bf16.mxu0 0
        %2275 = vmatpush1.bf16.msra.mxu0 0
        %2276 = vmatprep.subr.bf16.mxu0 0
        %2277 = vmatpush1.bf16.msra.mxu0 0
        %2278 = vmatprep.subr.bf16.mxu0 0
        %2279 = vmatpush1.bf16.msra.mxu0 0
        %2280 = vmatprep.subr.bf16.mxu0 0
        %2281 = vmatpush1.bf16.msra.mxu0 0
        %2282 = vmatprep.subr.bf16.mxu0 0
        %2283 = vmatpush1.bf16.msra.mxu0 0
        %2284 = vmatprep.subr.bf16.mxu0 0
        %2285 = vmatpush1.bf16.msra.mxu0 0
        %2286 = vmatprep.subr.bf16.mxu0 0
        %2287 = vmatpush1.bf16.msra.mxu0 0
        %2288 = vmatprep.subr.bf16.mxu0 0
        %2289 = vmatpush1.bf16.msra.mxu0 0
        %2290 = vmatprep.subr.bf16.mxu0 0
        %2291 = vmatpush1.bf16.msra.mxu0 0
        %2292 = vmatprep.subr.bf16.mxu0 0
        %2293 = vmatpush1.bf16.msra.mxu0 0
        %2294 = vmatprep.subr.bf16.mxu0 0
        %2295 = vmatpush1.bf16.msra.mxu0 0
        %2296 = vmatprep.subr.bf16.mxu0 0
        %2297 = vmatpush1.bf16.msra.mxu0 0
        %2298 = vmatprep.subr.bf16.mxu0 0
        %2299 = vmatpush1.bf16.msra.mxu0 0
        %2300 = vmatprep.mubr.bf16.mxu0 0
        %2301 = vmatmul.mubr.bf16.gmra.mrb[0].mxu0 %v2266
        %v2302 = vpop.f32.mrb[0].mxu0
        %v2303 = vadd.f32 0.0, %v2302
        %v2304 = vpop.f32.mrb[0].mxu0
        %v2305 = vpop.f32.mrb[0].mxu0
        %v2306 = vadd.f32 0.0, %v2305
        %v2307 = vpop.f32.mrb[0].mxu0
        %2308 = vdwg.mxu0
        %v2310 = vsel %vm1904, %v2086, 0
        %2312 = vmatprep.subr.bf16.mxu0 0
        %2313 = vmatpush1.bf16.msra.mxu0 %v1573
        %2314 = vmatprep.subr.bf16.mxu0 0
        %2315 = vmatpush1.bf16.msra.mxu0 0
        %2316 = vmatprep.subr.bf16.mxu0 0
        %2317 = vmatpush1.bf16.msra.mxu0 0
        %2318 = vmatprep.subr.bf16.mxu0 0
        %2319 = vmatpush1.bf16.msra.mxu0 0
        %2320 = vmatprep.subr.bf16.mxu0 0
        %2321 = vmatpush1.bf16.msra.mxu0 0
        %2322 = vmatprep.subr.bf16.mxu0 0
        %2323 = vmatpush1.bf16.msra.mxu0 0
        %2324 = vmatprep.subr.bf16.mxu0 0
        %2325 = vmatpush1.bf16.msra.mxu0 0
        %2326 = vmatprep.subr.bf16.mxu0 0
        %2327 = vmatpush1.bf16.msra.mxu0 0
        %2328 = vmatprep.subr.bf16.mxu0 0
        %2329 = vmatpush1.bf16.msra.mxu0 0
        %2330 = vmatprep.subr.bf16.mxu0 0
        %2331 = vmatpush1.bf16.msra.mxu0 0
        %2332 = vmatprep.subr.bf16.mxu0 0
        %2333 = vmatpush1.bf16.msra.mxu0 0
        %2334 = vmatprep.subr.bf16.mxu0 0
        %2335 = vmatpush1.bf16.msra.mxu0 0
        %2336 = vmatprep.subr.bf16.mxu0 0
        %2337 = vmatpush1.bf16.msra.mxu0 0
        %2338 = vmatprep.subr.bf16.mxu0 0
        %2339 = vmatpush1.bf16.msra.mxu0 0
        %2340 = vmatprep.subr.bf16.mxu0 0
        %2341 = vmatpush1.bf16.msra.mxu0 0
        %2342 = vmatprep.subr.bf16.mxu0 0
        %2343 = vmatpush1.bf16.msra.mxu0 0
        %2344 = vmatprep.mubr.bf16.mxu0 0
        %2345 = vmatmul.mubr.bf16.gmra.mrb[0].mxu0 %v2310
        %v2346 = vpop.f32.mrb[0].mxu0
        %v2347 = vadd.f32 0.0, %v2346
        %v2348 = vpop.f32.mrb[0].mxu0
        %v2349 = vpop.f32.mrb[0].mxu0
        %v2350 = vadd.f32 0.0, %v2349
        %v2351 = vpop.f32.mrb[0].mxu0
        %2352 = vdwg.mxu0
        %v2354 = vsel %vm1904, %v2087, 0
        %2356 = vmatprep.subr.bf16.mxu0 0
        %2357 = vmatpush1.bf16.msra.mxu0 %v1574
        %2358 = vmatprep.subr.bf16.mxu0 0
        %2359 = vmatpush1.bf16.msra.mxu0 0
        %2360 = vmatprep.subr.bf16.mxu0 0
        %2361 = vmatpush1.bf16.msra.mxu0 0
        %2362 = vmatprep.subr.bf16.mxu0 0
        %2363 = vmatpush1.bf16.msra.mxu0 0
        %2364 = vmatprep.subr.bf16.mxu0 0
        %2365 = vmatpush1.bf16.msra.mxu0 0
        %2366 = vmatprep.subr.bf16.mxu0 0
        %2367 = vmatpush1.bf16.msra.mxu0 0
        %2368 = vmatprep.subr.bf16.mxu0 0
        %2369 = vmatpush1.bf16.msra.mxu0 0
        %2370 = vmatprep.subr.bf16.mxu0 0
        %2371 = vmatpush1.bf16.msra.mxu0 0
        %2372 = vmatprep.subr.bf16.mxu0 0
        %2373 = vmatpush1.bf16.msra.mxu0 0
        %2374 = vmatprep.subr.bf16.mxu0 0
        %2375 = vmatpush1.bf16.msra.mxu0 0
        %2376 = vmatprep.subr.bf16.mxu0 0
        %2377 = vmatpush1.bf16.msra.mxu0 0
        %2378 = vmatprep.subr.bf16.mxu0 0
        %2379 = vmatpush1.bf16.msra.mxu0 0
        %2380 = vmatprep.subr.bf16.mxu0 0
        %2381 = vmatpush1.bf16.msra.mxu0 0
        %2382 = vmatprep.subr.bf16.mxu0 0
        %2383 = vmatpush1.bf16.msra.mxu0 0
        %2384 = vmatprep.subr.bf16.mxu0 0
        %2385 = vmatpush1.bf16.msra.mxu0 0
        %2386 = vmatprep.subr.bf16.mxu0 0
        %2387 = vmatpush1.bf16.msra.mxu0 0
        %2388 = vmatprep.mubr.bf16.mxu0 0
        %2389 = vmatmul.mubr.bf16.gmra.mrb[0].mxu0 %v2354
        %v2390 = vpop.f32.mrb[0].mxu0
        %v2391 = vadd.f32 0.0, %v2390
        %v2392 = vpop.f32.mrb[0].mxu0
        %v2393 = vpop.f32.mrb[0].mxu0
        %v2394 = vadd.f32 0.0, %v2393
        %v2395 = vpop.f32.mrb[0].mxu0
        %2396 = vdwg.mxu0
        %v2398 = vsel %vm1904, %v2088, 0
        %2400 = vmatprep.subr.bf16.mxu0 0
        %2401 = vmatpush1.bf16.msra.mxu0 %v1575
        %2402 = vmatprep.subr.bf16.mxu0 0
        %2403 = vmatpush1.bf16.msra.mxu0 0
        %2404 = vmatprep.subr.bf16.mxu0 0
        %2405 = vmatpush1.bf16.msra.mxu0 0
        %2406 = vmatprep.subr.bf16.mxu0 0
        %2407 = vmatpush1.bf16.msra.mxu0 0
        %2408 = vmatprep.subr.bf16.mxu0 0
        %2409 = vmatpush1.bf16.msra.mxu0 0
        %2410 = vmatprep.subr.bf16.mxu0 0
        %2411 = vmatpush1.bf16.msra.mxu0 0
        %2412 = vmatprep.subr.bf16.mxu0 0
        %2413 = vmatpush1.bf16.msra.mxu0 0
        %2414 = vmatprep.subr.bf16.mxu0 0
        %2415 = vmatpush1.bf16.msra.mxu0 0
        %2416 = vmatprep.subr.bf16.mxu0 0
        %2417 = vmatpush1.bf16.msra.mxu0 0
        %2418 = vmatprep.subr.bf16.mxu0 0
        %2419 = vmatpush1.bf16.msra.mxu0 0
        %2420 = vmatprep.subr.bf16.mxu0 0
        %2421 = vmatpush1.bf16.msra.mxu0 0
        %2422 = vmatprep.subr.bf16.mxu0 0
        %2423 = vmatpush1.bf16.msra.mxu0 0
        %2424 = vmatprep.subr.bf16.mxu0 0
        %2425 = vmatpush1.bf16.msra.mxu0 0
        %2426 = vmatprep.subr.bf16.mxu0 0
        %2427 = vmatpush1.bf16.msra.mxu0 0
        %2428 = vmatprep.subr.bf16.mxu0 0
        %2429 = vmatpush1.bf16.msra.mxu0 0
        %2430 = vmatprep.subr.bf16.mxu0 0
        %2431 = vmatpush1.bf16.msra.mxu0 0
        %2432 = vmatprep.mubr.bf16.mxu0 0
        %2433 = vmatmul.mubr.bf16.gmra.mrb[0].mxu0 %v2398
        %v2434 = vpop.f32.mrb[0].mxu0
        %v2435 = vadd.f32 0.0, %v2434
        %v2436 = vpop.f32.mrb[0].mxu0
        %v2437 = vpop.f32.mrb[0].mxu0
        %v2438 = vadd.f32 0.0, %v2437
        %v2439 = vpop.f32.mrb[0].mxu0
        %2440 = vdwg.mxu0
        %v2441 = vpack.c.bf16 %v2130, %v2127
        %v2442 = vpack.c.bf16 %v2174, %v2171
        %v2443 = vpack.c.bf16 %v2218, %v2215
        %v2444 = vpack.c.bf16 %v2262, %v2259
        %v2445 = vpack.c.bf16 %v2306, %v2303
        %v2446 = vpack.c.bf16 %v2350, %v2347
        %v2447 = vpack.c.bf16 %v2394, %v2391
        %v2448 = vpack.c.bf16 %v2438, %v2435
        %v2449 = vld [vmem:[%s5] sm:$0xf]
        %v2450 = vld [vmem:[%s5 + $0x4] sm:$0xf]
        %v2451 = vld [vmem:[%s5 + $0x8] sm:$0xf]
        %v2452 = vld [vmem:[%s5 + $0xc] sm:$0xf]
        %v2453 = vld [vmem:[%s5 + $0x10] sm:$0xf]
        %v2454 = vld [vmem:[%s5 + $0x14] sm:$0xf]
        %v2455 = vld [vmem:[%s5 + $0x18] sm:$0xf]
        %v2456 = vld [vmem:[%s5 + $0x1c] sm:$0xf]
        %v2457 = vld [vmem:[%s5 + $0x20] sm:$0xf]
        %v2458 = vld [vmem:[%s5 + $0x24] sm:$0xf]
        %v2459 = vld [vmem:[%s5 + $0x28] sm:$0xf]
        %v2460 = vld [vmem:[%s5 + $0x2c] sm:$0xf]
        %v2461 = vld [vmem:[%s5 + $0x30] sm:$0xf]
        %v2462 = vld [vmem:[%s5 + $0x34] sm:$0xf]
        %v2463 = vld [vmem:[%s5 + $0x38] sm:$0xf]
        %v2464 = vld [vmem:[%s5 + $0x3c] sm:$0xf]
        %v2481 = vunpack.c.l.b16 %v2449
        %v2482 = vunpack.c.l.b16 %v2450
        %v2483 = vunpack.c.l.b16 %v2451
        %v2484 = vunpack.c.l.b16 %v2452
        %v2485 = vunpack.c.l.b16 %v2453
        %v2486 = vunpack.c.l.b16 %v2454
        %v2487 = vunpack.c.l.b16 %v2455
        %v2488 = vunpack.c.l.b16 %v2456
        %v2489 = vunpack.c.l.b16 %v2457
        %v2490 = vunpack.c.l.b16 %v2458
        %v2491 = vunpack.c.l.b16 %v2459
        %v2492 = vunpack.c.l.b16 %v2460
        %v2493 = vunpack.c.l.b16 %v2461
        %v2494 = vunpack.c.l.b16 %v2462
        %v2495 = vunpack.c.l.b16 %v2463
        %v2496 = vunpack.c.l.b16 %v2464
        %v2497 = vpack.c.b16 %v2482, %v2481
        %v2498 = vpack.c.b16 %v2484, %v2483
        %v2499 = vpack.c.b16 %v2486, %v2485
        %v2500 = vpack.c.b16 %v2488, %v2487
        %v2501 = vpack.c.b16 %v2490, %v2489
        %v2502 = vpack.c.b16 %v2492, %v2491
        %v2503 = vpack.c.b16 %v2494, %v2493
        %v2504 = vpack.c.b16 %v2496, %v2495
        %2513 = vmatprep.subr.bf16.mxu0 0
        %2514 = vmatpush1.bf16.msra.mxu0 %v2497
        %2515 = vmatprep.subr.bf16.mxu0 0
        %2516 = vmatpush1.bf16.msra.mxu0 %v2498
        %2517 = vmatprep.subr.bf16.mxu0 0
        %2518 = vmatpush1.bf16.msra.mxu0 %v2499
        %2519 = vmatprep.subr.bf16.mxu0 0
        %2520 = vmatpush1.bf16.msra.mxu0 %v2500
        %2521 = vmatprep.subr.bf16.mxu0 0
        %2522 = vmatpush1.bf16.msra.mxu0 %v2501
        %2523 = vmatprep.subr.bf16.mxu0 0
        %2524 = vmatpush1.bf16.msra.mxu0 %v2502
        %2525 = vmatprep.subr.bf16.mxu0 0
        %2526 = vmatpush1.bf16.msra.mxu0 %v2503
        %2527 = vmatprep.subr.bf16.mxu0 0
        %2528 = vmatpush1.bf16.msra.mxu0 %v2504
        %2529 = vmatprep.subr.bf16.mxu0 0
        %2530 = vmatpush1.bf16.msra.mxu0 0
        %2531 = vmatprep.subr.bf16.mxu0 0
        %2532 = vmatpush1.bf16.msra.mxu0 0
        %2533 = vmatprep.subr.bf16.mxu0 0
        %2534 = vmatpush1.bf16.msra.mxu0 0
        %2535 = vmatprep.subr.bf16.mxu0 0
        %2536 = vmatpush1.bf16.msra.mxu0 0
        %2537 = vmatprep.subr.bf16.mxu0 0
        %2538 = vmatpush1.bf16.msra.mxu0 0
        %2539 = vmatprep.subr.bf16.mxu0 0
        %2540 = vmatpush1.bf16.msra.mxu0 0
        %2541 = vmatprep.subr.bf16.mxu0 0
        %2542 = vmatpush1.bf16.msra.mxu0 0
        %2543 = vmatprep.subr.bf16.mxu0 0
        %2544 = vmatpush1.bf16.msra.mxu0 0
        %2545 = vmatprep.mubr.bf16.mxu0 0
        %2546 = vmatmul.mubr.bf16.gmra.mrb[0].mxu0 %v2441
        %v2547 = vpop.f32.mrb[0].mxu0
        %v2548 = vadd.f32 0.0, %v2547
        %v2549 = vpop.f32.mrb[0].mxu0
        %v2550 = vpop.f32.mrb[0].mxu0
        %v2551 = vadd.f32 0.0, %v2550
        %v2552 = vpop.f32.mrb[0].mxu0
        %2553 = vmatprep.mubr.bf16.mxu0 0
        %2554 = vmatmul.mubr.bf16.gmra.mrb[0].mxu0 %v2442
        %v2555 = vpop.f32.mrb[0].mxu0
        %v2556 = vadd.f32 0.0, %v2555
        %v2557 = vpop.f32.mrb[0].mxu0
        %v2558 = vpop.f32.mrb[0].mxu0
        %v2559 = vadd.f32 0.0, %v2558
        %v2560 = vpop.f32.mrb[0].mxu0
        %2561 = vmatprep.mubr.bf16.mxu0 0
        %2562 = vmatmul.mubr.bf16.gmra.mrb[0].mxu0 %v2443
        %v2563 = vpop.f32.mrb[0].mxu0
        %v2564 = vadd.f32 0.0, %v2563
        %v2565 = vpop.f32.mrb[0].mxu0
        %v2566 = vpop.f32.mrb[0].mxu0
        %v2567 = vadd.f32 0.0, %v2566
        %v2568 = vpop.f32.mrb[0].mxu0
        %2569 = vmatprep.mubr.bf16.mxu0 0
        %2570 = vmatmul.mubr.bf16.gmra.mrb[0].mxu0 %v2444
        %v2571 = vpop.f32.mrb[0].mxu0
        %v2572 = vadd.f32 0.0, %v2571
        %v2573 = vpop.f32.mrb[0].mxu0
        %v2574 = vpop.f32.mrb[0].mxu0
        %v2575 = vadd.f32 0.0, %v2574
        %v2576 = vpop.f32.mrb[0].mxu0
        %2577 = vmatprep.mubr.bf16.mxu0 0
        %2578 = vmatmul.mubr.bf16.gmra.mrb[0].mxu0 %v2445
        %v2579 = vpop.f32.mrb[0].mxu0
        %v2580 = vadd.f32 0.0, %v2579
        %v2581 = vpop.f32.mrb[0].mxu0
        %v2582 = vpop.f32.mrb[0].mxu0
        %v2583 = vadd.f32 0.0, %v2582
        %v2584 = vpop.f32.mrb[0].mxu0
        %2585 = vmatprep.mubr.bf16.mxu0 0
        %2586 = vmatmul.mubr.bf16.gmra.mrb[0].mxu0 %v2446
        %v2587 = vpop.f32.mrb[0].mxu0
        %v2588 = vadd.f32 0.0, %v2587
        %v2589 = vpop.f32.mrb[0].mxu0
        %v2590 = vpop.f32.mrb[0].mxu0
        %v2591 = vadd.f32 0.0, %v2590
        %v2592 = vpop.f32.mrb[0].mxu0
        %2593 = vmatprep.mubr.bf16.mxu0 0
        %2594 = vmatmul.mubr.bf16.gmra.mrb[0].mxu0 %v2447
        %v2595 = vpop.f32.mrb[0].mxu0
        %v2596 = vadd.f32 0.0, %v2595
        %v2597 = vpop.f32.mrb[0].mxu0
        %v2598 = vpop.f32.mrb[0].mxu0
        %v2599 = vadd.f32 0.0, %v2598
        %v2600 = vpop.f32.mrb[0].mxu0
        %2601 = vmatprep.mubr.bf16.mxu0 0
        %2602 = vmatmul.mubr.bf16.gmra.mrb[0].mxu0 %v2448
        %v2603 = vpop.f32.mrb[0].mxu0
        %v2604 = vadd.f32 0.0, %v2603
        %v2605 = vpop.f32.mrb[0].mxu0
        %v2606 = vpop.f32.mrb[0].mxu0
        %v2607 = vadd.f32 0.0, %v2606
        %v2608 = vpop.f32.mrb[0].mxu0
        %2609 = vdwg.mxu0
        %v2611 = vlaneseq
        %v2612 = vshrl.u32 %v2611, 7
        %v2613 = vsub.s32 0, %v2612
        %v2614 = vrot.slane %v1551, %v2613
        %v2616 = vadd.f32 %v2614, %v2548
        %v2617 = vadd.f32 %v2614, %v2551
        %v2618 = vadd.f32 %v2614, %v2556
        %v2619 = vadd.f32 %v2614, %v2559
        %v2620 = vadd.f32 %v2614, %v2564
        %v2621 = vadd.f32 %v2614, %v2567
        %v2622 = vadd.f32 %v2614, %v2572
        %v2623 = vadd.f32 %v2614, %v2575
        %v2624 = vadd.f32 %v2614, %v2580
        %v2625 = vadd.f32 %v2614, %v2583
        %v2626 = vadd.f32 %v2614, %v2588
        %v2627 = vadd.f32 %v2614, %v2591
        %v2628 = vadd.f32 %v2614, %v2596
        %v2629 = vadd.f32 %v2614, %v2599
        %v2630 = vadd.f32 %v2614, %v2604
        %v2631 = vadd.f32 %v2614, %v2607
        %v2632 = vpack.c.bf16 %v1253, %v1249
        %v2633 = vpack.c.bf16 %v1263, %v1259
        %v2634 = vpack.c.bf16 %v1273, %v1269
        %v2635 = vpack.c.bf16 %v1283, %v1279
        %v2636 = vpack.c.bf16 %v1293, %v1289
        %v2637 = vpack.c.bf16 %v1303, %v1299
        %v2638 = vpack.c.bf16 %v1313, %v1309
        %v2639 = vpack.c.bf16 %v1323, %v1319
        %v2640 = vpack.c.bf16 %v1366, %v1362
        %v2641 = vpack.c.bf16 %v1376, %v1372
        %v2642 = vpack.c.bf16 %v1386, %v1382
        %v2643 = vpack.c.bf16 %v1396, %v1392
        %v2644 = vpack.c.bf16 %v1406, %v1402
        %v2645 = vpack.c.bf16 %v1416, %v1412
        %v2646 = vpack.c.bf16 %v1426, %v1422
        %v2647 = vpack.c.bf16 %v1436, %v1432
        %v2648 = vpack.c.bf16 %v1479, %v1475
        %v2649 = vpack.c.bf16 %v1489, %v1485
        %v2650 = vpack.c.bf16 %v1499, %v1495
        %v2651 = vpack.c.bf16 %v1509, %v1505
        %v2652 = vpack.c.bf16 %v1519, %v1515
        %v2653 = vpack.c.bf16 %v1529, %v1525
        %v2654 = vpack.c.bf16 %v1539, %v1535
        %v2655 = vpack.c.bf16 %v1549, %v1545
        %2656 = vmatprep.subr.bf16.mxu0 0
        %2657 = vmatpush1.bf16.xpose.msra.mxu0 %v2640
        %2658 = vmatprep.subr.bf16.mxu0 0
        %2659 = vmatpush1.bf16.xpose.msra.mxu0 0
        %2660 = vmatprep.subr.bf16.mxu0 0
        %2661 = vmatpush1.bf16.xpose.msra.mxu0 0
        %2662 = vmatprep.subr.bf16.mxu0 0
        %2663 = vmatpush1.bf16.xpose.msra.mxu0 0
        %2664 = vmatprep.subr.bf16.mxu0 0
        %2665 = vmatpush1.bf16.xpose.msra.mxu0 0
        %2666 = vmatprep.subr.bf16.mxu0 0
        %2667 = vmatpush1.bf16.xpose.msra.mxu0 0
        %2668 = vmatprep.subr.bf16.mxu0 0
        %2669 = vmatpush1.bf16.xpose.msra.mxu0 0
        %2670 = vmatprep.subr.bf16.mxu0 0
        %2671 = vmatpush1.bf16.xpose.msra.mxu0 0
        %2672 = vmatprep.subr.bf16.mxu0 0
        %2673 = vmatpush1.bf16.xpose.msra.mxu0 0
        %2674 = vmatprep.subr.bf16.mxu0 0
        %2675 = vmatpush1.bf16.xpose.msra.mxu0 0
        %2676 = vmatprep.subr.bf16.mxu0 0
        %2677 = vmatpush1.bf16.xpose.msra.mxu0 0
        %2678 = vmatprep.subr.bf16.mxu0 0
        %2679 = vmatpush1.bf16.xpose.msra.mxu0 0
        %2680 = vmatprep.subr.bf16.mxu0 0
        %2681 = vmatpush1.bf16.xpose.msra.mxu0 0
        %2682 = vmatprep.subr.bf16.mxu0 0
        %2683 = vmatpush1.bf16.xpose.msra.mxu0 0
        %2684 = vmatprep.subr.bf16.mxu0 0
        %2685 = vmatpush1.bf16.xpose.msra.mxu0 0
        %2686 = vmatprep.subr.bf16.mxu0 0
        %2687 = vmatpush1.bf16.xpose.msra.mxu0 0
        %2688 = vmatprep.mubr.bf16.mxu0 0
        %2689 = vmatmul.mubr.bf16.gmra.mrb[0].mxu0 %v2632
        %v2690 = vpop.f32.mrb[0].mxu0
        %v2691 = vadd.f32 0.0, %v2690
        %v2692 = vpop.f32.mrb[0].mxu0
        %v2693 = vpop.f32.mrb[0].mxu0
        %v2694 = vadd.f32 0.0, %v2693
        %v2695 = vpop.f32.mrb[0].mxu0
        %2696 = vdwg.mxu0
        %2697 = vmatprep.subr.bf16.mxu0 0
        %2698 = vmatpush1.bf16.xpose.msra.mxu0 %v2641
        %2699 = vmatprep.subr.bf16.mxu0 0
        %2700 = vmatpush1.bf16.xpose.msra.mxu0 0
        %2701 = vmatprep.subr.bf16.mxu0 0
        %2702 = vmatpush1.bf16.xpose.msra.mxu0 0
        %2703 = vmatprep.subr.bf16.mxu0 0
        %2704 = vmatpush1.bf16.xpose.msra.mxu0 0
        %2705 = vmatprep.subr.bf16.mxu0 0
        %2706 = vmatpush1.bf16.xpose.msra.mxu0 0
        %2707 = vmatprep.subr.bf16.mxu0 0
        %2708 = vmatpush1.bf16.xpose.msra.mxu0 0
        %2709 = vmatprep.subr.bf16.mxu0 0
        %2710 = vmatpush1.bf16.xpose.msra.mxu0 0
        %2711 = vmatprep.subr.bf16.mxu0 0
        %2712 = vmatpush1.bf16.xpose.msra.mxu0 0
        %2713 = vmatprep.subr.bf16.mxu0 0
        %2714 = vmatpush1.bf16.xpose.msra.mxu0 0
        %2715 = vmatprep.subr.bf16.mxu0 0
        %2716 = vmatpush1.bf16.xpose.msra.mxu0 0
        %2717 = vmatprep.subr.bf16.mxu0 0
        %2718 = vmatpush1.bf16.xpose.msra.mxu0 0
        %2719 = vmatprep.subr.bf16.mxu0 0
        %2720 = vmatpush1.bf16.xpose.msra.mxu0 0
        %2721 = vmatprep.subr.bf16.mxu0 0
        %2722 = vmatpush1.bf16.xpose.msra.mxu0 0
        %2723 = vmatprep.subr.bf16.mxu0 0
        %2724 = vmatpush1.bf16.xpose.msra.mxu0 0
        %2725 = vmatprep.subr.bf16.mxu0 0
        %2726 = vmatpush1.bf16.xpose.msra.mxu0 0
        %2727 = vmatprep.subr.bf16.mxu0 0
        %2728 = vmatpush1.bf16.xpose.msra.mxu0 0
        %2729 = vmatprep.mubr.bf16.mxu0 0
        %2730 = vmatmul.mubr.bf16.gmra.mrb[0].mxu0 %v2633
        %v2731 = vpop.f32.mrb[0].mxu0
        %v2732 = vadd.f32 0.0, %v2731
        %v2733 = vpop.f32.mrb[0].mxu0
        %v2734 = vpop.f32.mrb[0].mxu0
        %v2735 = vadd.f32 0.0, %v2734
        %v2736 = vpop.f32.mrb[0].mxu0
        %2737 = vdwg.mxu0
        %2738 = vmatprep.subr.bf16.mxu0 0
        %2739 = vmatpush1.bf16.xpose.msra.mxu0 %v2642
        %2740 = vmatprep.subr.bf16.mxu0 0
        %2741 = vmatpush1.bf16.xpose.msra.mxu0 0
        %2742 = vmatprep.subr.bf16.mxu0 0
        %2743 = vmatpush1.bf16.xpose.msra.mxu0 0
        %2744 = vmatprep.subr.bf16.mxu0 0
        %2745 = vmatpush1.bf16.xpose.msra.mxu0 0
        %2746 = vmatprep.subr.bf16.mxu0 0
        %2747 = vmatpush1.bf16.xpose.msra.mxu0 0
        %2748 = vmatprep.subr.bf16.mxu0 0
        %2749 = vmatpush1.bf16.xpose.msra.mxu0 0
        %2750 = vmatprep.subr.bf16.mxu0 0
        %2751 = vmatpush1.bf16.xpose.msra.mxu0 0
        %2752 = vmatprep.subr.bf16.mxu0 0
        %2753 = vmatpush1.bf16.xpose.msra.mxu0 0
        %2754 = vmatprep.subr.bf16.mxu0 0
        %2755 = vmatpush1.bf16.xpose.msra.mxu0 0
        %2756 = vmatprep.subr.bf16.mxu0 0
        %2757 = vmatpush1.bf16.xpose.msra.mxu0 0
        %2758 = vmatprep.subr.bf16.mxu0 0
        %2759 = vmatpush1.bf16.xpose.msra.mxu0 0
        %2760 = vmatprep.subr.bf16.mxu0 0
        %2761 = vmatpush1.bf16.xpose.msra.mxu0 0
        %2762 = vmatprep.subr.bf16.mxu0 0
        %2763 = vmatpush1.bf16.xpose.msra.mxu0 0
        %2764 = vmatprep.subr.bf16.mxu0 0
        %2765 = vmatpush1.bf16.xpose.msra.mxu0 0
        %2766 = vmatprep.subr.bf16.mxu0 0
        %2767 = vmatpush1.bf16.xpose.msra.mxu0 0
        %2768 = vmatprep.subr.bf16.mxu0 0
        %2769 = vmatpush1.bf16.xpose.msra.mxu0 0
        %2770 = vmatprep.mubr.bf16.mxu0 0
        %2771 = vmatmul.mubr.bf16.gmra.mrb[0].mxu0 %v2634
        %v2772 = vpop.f32.mrb[0].mxu0
        %v2773 = vadd.f32 0.0, %v2772
        %v2774 = vpop.f32.mrb[0].mxu0
        %v2775 = vpop.f32.mrb[0].mxu0
        %v2776 = vadd.f32 0.0, %v2775
        %v2777 = vpop.f32.mrb[0].mxu0
        %2778 = vdwg.mxu0
        %2779 = vmatprep.subr.bf16.mxu0 0
        %2780 = vmatpush1.bf16.xpose.msra.mxu0 %v2643
        %2781 = vmatprep.subr.bf16.mxu0 0
        %2782 = vmatpush1.bf16.xpose.msra.mxu0 0
        %2783 = vmatprep.subr.bf16.mxu0 0
        %2784 = vmatpush1.bf16.xpose.msra.mxu0 0
        %2785 = vmatprep.subr.bf16.mxu0 0
        %2786 = vmatpush1.bf16.xpose.msra.mxu0 0
        %2787 = vmatprep.subr.bf16.mxu0 0
        %2788 = vmatpush1.bf16.xpose.msra.mxu0 0
        %2789 = vmatprep.subr.bf16.mxu0 0
        %2790 = vmatpush1.bf16.xpose.msra.mxu0 0
        %2791 = vmatprep.subr.bf16.mxu0 0
        %2792 = vmatpush1.bf16.xpose.msra.mxu0 0
        %2793 = vmatprep.subr.bf16.mxu0 0
        %2794 = vmatpush1.bf16.xpose.msra.mxu0 0
        %2795 = vmatprep.subr.bf16.mxu0 0
        %2796 = vmatpush1.bf16.xpose.msra.mxu0 0
        %2797 = vmatprep.subr.bf16.mxu0 0
        %2798 = vmatpush1.bf16.xpose.msra.mxu0 0
        %2799 = vmatprep.subr.bf16.mxu0 0
        %2800 = vmatpush1.bf16.xpose.msra.mxu0 0
        %2801 = vmatprep.subr.bf16.mxu0 0
        %2802 = vmatpush1.bf16.xpose.msra.mxu0 0
        %2803 = vmatprep.subr.bf16.mxu0 0
        %2804 = vmatpush1.bf16.xpose.msra.mxu0 0
        %2805 = vmatprep.subr.bf16.mxu0 0
        %2806 = vmatpush1.bf16.xpose.msra.mxu0 0
        %2807 = vmatprep.subr.bf16.mxu0 0
        %2808 = vmatpush1.bf16.xpose.msra.mxu0 0
        %2809 = vmatprep.subr.bf16.mxu0 0
        %2810 = vmatpush1.bf16.xpose.msra.mxu0 0
        %2811 = vmatprep.mubr.bf16.mxu0 0
        %2812 = vmatmul.mubr.bf16.gmra.mrb[0].mxu0 %v2635
        %v2813 = vpop.f32.mrb[0].mxu0
        %v2814 = vadd.f32 0.0, %v2813
        %v2815 = vpop.f32.mrb[0].mxu0
        %v2816 = vpop.f32.mrb[0].mxu0
        %v2817 = vadd.f32 0.0, %v2816
        %v2818 = vpop.f32.mrb[0].mxu0
        %2819 = vdwg.mxu0
        %2820 = vmatprep.subr.bf16.mxu0 0
        %2821 = vmatpush1.bf16.xpose.msra.mxu0 %v2644
        %2822 = vmatprep.subr.bf16.mxu0 0
        %2823 = vmatpush1.bf16.xpose.msra.mxu0 0
        %2824 = vmatprep.subr.bf16.mxu0 0
        %2825 = vmatpush1.bf16.xpose.msra.mxu0 0
        %2826 = vmatprep.subr.bf16.mxu0 0
        %2827 = vmatpush1.bf16.xpose.msra.mxu0 0
        %2828 = vmatprep.subr.bf16.mxu0 0
        %2829 = vmatpush1.bf16.xpose.msra.mxu0 0
        %2830 = vmatprep.subr.bf16.mxu0 0
        %2831 = vmatpush1.bf16.xpose.msra.mxu0 0
        %2832 = vmatprep.subr.bf16.mxu0 0
        %2833 = vmatpush1.bf16.xpose.msra.mxu0 0
        %2834 = vmatprep.subr.bf16.mxu0 0
        %2835 = vmatpush1.bf16.xpose.msra.mxu0 0
        %2836 = vmatprep.subr.bf16.mxu0 0
        %2837 = vmatpush1.bf16.xpose.msra.mxu0 0
        %2838 = vmatprep.subr.bf16.mxu0 0
        %2839 = vmatpush1.bf16.xpose.msra.mxu0 0
        %2840 = vmatprep.subr.bf16.mxu0 0
        %2841 = vmatpush1.bf16.xpose.msra.mxu0 0
        %2842 = vmatprep.subr.bf16.mxu0 0
        %2843 = vmatpush1.bf16.xpose.msra.mxu0 0
        %2844 = vmatprep.subr.bf16.mxu0 0
        %2845 = vmatpush1.bf16.xpose.msra.mxu0 0
        %2846 = vmatprep.subr.bf16.mxu0 0
        %2847 = vmatpush1.bf16.xpose.msra.mxu0 0
        %2848 = vmatprep.subr.bf16.mxu0 0
        %2849 = vmatpush1.bf16.xpose.msra.mxu0 0
        %2850 = vmatprep.subr.bf16.mxu0 0
        %2851 = vmatpush1.bf16.xpose.msra.mxu0 0
        %2852 = vmatprep.mubr.bf16.mxu0 0
        %2853 = vmatmul.mubr.bf16.gmra.mrb[0].mxu0 %v2636
        %v2854 = vpop.f32.mrb[0].mxu0
        %v2855 = vadd.f32 0.0, %v2854
        %v2856 = vpop.f32.mrb[0].mxu0
        %v2857 = vpop.f32.mrb[0].mxu0
        %v2858 = vadd.f32 0.0, %v2857
        %v2859 = vpop.f32.mrb[0].mxu0
        %2860 = vdwg.mxu0
        %2861 = vmatprep.subr.bf16.mxu0 0
        %2862 = vmatpush1.bf16.xpose.msra.mxu0 %v2645
        %2863 = vmatprep.subr.bf16.mxu0 0
        %2864 = vmatpush1.bf16.xpose.msra.mxu0 0
        %2865 = vmatprep.subr.bf16.mxu0 0
        %2866 = vmatpush1.bf16.xpose.msra.mxu0 0
        %2867 = vmatprep.subr.bf16.mxu0 0
        %2868 = vmatpush1.bf16.xpose.msra.mxu0 0
        %2869 = vmatprep.subr.bf16.mxu0 0
        %2870 = vmatpush1.bf16.xpose.msra.mxu0 0
        %2871 = vmatprep.subr.bf16.mxu0 0
        %2872 = vmatpush1.bf16.xpose.msra.mxu0 0
        %2873 = vmatprep.subr.bf16.mxu0 0
        %2874 = vmatpush1.bf16.xpose.msra.mxu0 0
        %2875 = vmatprep.subr.bf16.mxu0 0
        %2876 = vmatpush1.bf16.xpose.msra.mxu0 0
        %2877 = vmatprep.subr.bf16.mxu0 0
        %2878 = vmatpush1.bf16.xpose.msra.mxu0 0
        %2879 = vmatprep.subr.bf16.mxu0 0
        %2880 = vmatpush1.bf16.xpose.msra.mxu0 0
        %2881 = vmatprep.subr.bf16.mxu0 0
        %2882 = vmatpush1.bf16.xpose.msra.mxu0 0
        %2883 = vmatprep.subr.bf16.mxu0 0
        %2884 = vmatpush1.bf16.xpose.msra.mxu0 0
        %2885 = vmatprep.subr.bf16.mxu0 0
        %2886 = vmatpush1.bf16.xpose.msra.mxu0 0
        %2887 = vmatprep.subr.bf16.mxu0 0
        %2888 = vmatpush1.bf16.xpose.msra.mxu0 0
        %2889 = vmatprep.subr.bf16.mxu0 0
        %2890 = vmatpush1.bf16.xpose.msra.mxu0 0
        %2891 = vmatprep.subr.bf16.mxu0 0
        %2892 = vmatpush1.bf16.xpose.msra.mxu0 0
        %2893 = vmatprep.mubr.bf16.mxu0 0
        %2894 = vmatmul.mubr.bf16.gmra.mrb[0].mxu0 %v2637
        %v2895 = vpop.f32.mrb[0].mxu0
        %v2896 = vadd.f32 0.0, %v2895
        %v2897 = vpop.f32.mrb[0].mxu0
        %v2898 = vpop.f32.mrb[0].mxu0
        %v2899 = vadd.f32 0.0, %v2898
        %v2900 = vpop.f32.mrb[0].mxu0
        %2901 = vdwg.mxu0
        %2902 = vmatprep.subr.bf16.mxu0 0
        %2903 = vmatpush1.bf16.xpose.msra.mxu0 %v2646
        %2904 = vmatprep.subr.bf16.mxu0 0
        %2905 = vmatpush1.bf16.xpose.msra.mxu0 0
        %2906 = vmatprep.subr.bf16.mxu0 0
        %2907 = vmatpush1.bf16.xpose.msra.mxu0 0
        %2908 = vmatprep.subr.bf16.mxu0 0
        %2909 = vmatpush1.bf16.xpose.msra.mxu0 0
        %2910 = vmatprep.subr.bf16.mxu0 0
        %2911 = vmatpush1.bf16.xpose.msra.mxu0 0
        %2912 = vmatprep.subr.bf16.mxu0 0
        %2913 = vmatpush1.bf16.xpose.msra.mxu0 0
        %2914 = vmatprep.subr.bf16.mxu0 0
        %2915 = vmatpush1.bf16.xpose.msra.mxu0 0
        %2916 = vmatprep.subr.bf16.mxu0 0
        %2917 = vmatpush1.bf16.xpose.msra.mxu0 0
        %2918 = vmatprep.subr.bf16.mxu0 0
        %2919 = vmatpush1.bf16.xpose.msra.mxu0 0
        %2920 = vmatprep.subr.bf16.mxu0 0
        %2921 = vmatpush1.bf16.xpose.msra.mxu0 0
        %2922 = vmatprep.subr.bf16.mxu0 0
        %2923 = vmatpush1.bf16.xpose.msra.mxu0 0
        %2924 = vmatprep.subr.bf16.mxu0 0
        %2925 = vmatpush1.bf16.xpose.msra.mxu0 0
        %2926 = vmatprep.subr.bf16.mxu0 0
        %2927 = vmatpush1.bf16.xpose.msra.mxu0 0
        %2928 = vmatprep.subr.bf16.mxu0 0
        %2929 = vmatpush1.bf16.xpose.msra.mxu0 0
        %2930 = vmatprep.subr.bf16.mxu0 0
        %2931 = vmatpush1.bf16.xpose.msra.mxu0 0
        %2932 = vmatprep.subr.bf16.mxu0 0
        %2933 = vmatpush1.bf16.xpose.msra.mxu0 0
        %2934 = vmatprep.mubr.bf16.mxu0 0
        %2935 = vmatmul.mubr.bf16.gmra.mrb[0].mxu0 %v2638
        %v2936 = vpop.f32.mrb[0].mxu0
        %v2937 = vadd.f32 0.0, %v2936
        %v2938 = vpop.f32.mrb[0].mxu0
        %v2939 = vpop.f32.mrb[0].mxu0
        %v2940 = vadd.f32 0.0, %v2939
        %v2941 = vpop.f32.mrb[0].mxu0
        %2942 = vdwg.mxu0
        %2943 = vmatprep.subr.bf16.mxu0 0
        %2944 = vmatpush1.bf16.xpose.msra.mxu0 %v2647
        %2945 = vmatprep.subr.bf16.mxu0 0
        %2946 = vmatpush1.bf16.xpose.msra.mxu0 0
        %2947 = vmatprep.subr.bf16.mxu0 0
        %2948 = vmatpush1.bf16.xpose.msra.mxu0 0
        %2949 = vmatprep.subr.bf16.mxu0 0
        %2950 = vmatpush1.bf16.xpose.msra.mxu0 0
        %2951 = vmatprep.subr.bf16.mxu0 0
        %2952 = vmatpush1.bf16.xpose.msra.mxu0 0
        %2953 = vmatprep.subr.bf16.mxu0 0
        %2954 = vmatpush1.bf16.xpose.msra.mxu0 0
        %2955 = vmatprep.subr.bf16.mxu0 0
        %2956 = vmatpush1.bf16.xpose.msra.mxu0 0
        %2957 = vmatprep.subr.bf16.mxu0 0
        %2958 = vmatpush1.bf16.xpose.msra.mxu0 0
        %2959 = vmatprep.subr.bf16.mxu0 0
        %2960 = vmatpush1.bf16.xpose.msra.mxu0 0
        %2961 = vmatprep.subr.bf16.mxu0 0
        %2962 = vmatpush1.bf16.xpose.msra.mxu0 0
        %2963 = vmatprep.subr.bf16.mxu0 0
        %2964 = vmatpush1.bf16.xpose.msra.mxu0 0
        %2965 = vmatprep.subr.bf16.mxu0 0
        %2966 = vmatpush1.bf16.xpose.msra.mxu0 0
        %2967 = vmatprep.subr.bf16.mxu0 0
        %2968 = vmatpush1.bf16.xpose.msra.mxu0 0
        %2969 = vmatprep.subr.bf16.mxu0 0
        %2970 = vmatpush1.bf16.xpose.msra.mxu0 0
        %2971 = vmatprep.subr.bf16.mxu0 0
        %2972 = vmatpush1.bf16.xpose.msra.mxu0 0
        %2973 = vmatprep.subr.bf16.mxu0 0
        %2974 = vmatpush1.bf16.xpose.msra.mxu0 0
        %2975 = vmatprep.mubr.bf16.mxu0 0
        %2976 = vmatmul.mubr.bf16.gmra.mrb[0].mxu0 %v2639
        %v2977 = vpop.f32.mrb[0].mxu0
        %v2978 = vadd.f32 0.0, %v2977
        %v2979 = vpop.f32.mrb[0].mxu0
        %v2980 = vpop.f32.mrb[0].mxu0
        %v2981 = vadd.f32 0.0, %v2980
        %v2982 = vpop.f32.mrb[0].mxu0
        %2983 = vdwg.mxu0
        %v2984 = vsel %vm1904, %v2691, -inf
        %2985 = vmax.xlane.f32.xlu0 %v2984
        %v2986 = vpop.xlane.xlu0 %2985
        %v2987 = vsel %vm1904, %v2694, -inf
        %2988 = vmax.xlane.f32.xlu0 %v2987
        %v2989 = vpop.xlane.xlu0 %2988
        %v2990 = vsel %vm1904, %v2732, -inf
        %2991 = vmax.xlane.f32.xlu0 %v2990
        %v2992 = vpop.xlane.xlu0 %2991
        %v2993 = vsel %vm1904, %v2735, -inf
        %2994 = vmax.xlane.f32.xlu0 %v2993
        %v2995 = vpop.xlane.xlu0 %2994
        %v2996 = vsel %vm1904, %v2773, -inf
        %2997 = vmax.xlane.f32.xlu0 %v2996
        %v2998 = vpop.xlane.xlu0 %2997
        %v2999 = vsel %vm1904, %v2776, -inf
        %3000 = vmax.xlane.f32.xlu0 %v2999
        %v3001 = vpop.xlane.xlu0 %3000
        %v3002 = vsel %vm1904, %v2814, -inf
        %3003 = vmax.xlane.f32.xlu0 %v3002
        %v3004 = vpop.xlane.xlu0 %3003
        %v3005 = vsel %vm1904, %v2817, -inf
        %3006 = vmax.xlane.f32.xlu0 %v3005
        %v3007 = vpop.xlane.xlu0 %3006
        %v3008 = vsel %vm1904, %v2855, -inf
        %3009 = vmax.xlane.f32.xlu0 %v3008
        %v3010 = vpop.xlane.xlu0 %3009
        %v3011 = vsel %vm1904, %v2858, -inf
        %3012 = vmax.xlane.f32.xlu0 %v3011
        %v3013 = vpop.xlane.xlu0 %3012
        %v3014 = vsel %vm1904, %v2896, -inf
        %3015 = vmax.xlane.f32.xlu0 %v3014
        %v3016 = vpop.xlane.xlu0 %3015
        %v3017 = vsel %vm1904, %v2899, -inf
        %3018 = vmax.xlane.f32.xlu0 %v3017
        %v3019 = vpop.xlane.xlu0 %3018
        %v3020 = vsel %vm1904, %v2937, -inf
        %3021 = vmax.xlane.f32.xlu0 %v3020
        %v3022 = vpop.xlane.xlu0 %3021
        %v3023 = vsel %vm1904, %v2940, -inf
        %3024 = vmax.xlane.f32.xlu0 %v3023
        %v3025 = vpop.xlane.xlu0 %3024
        %v3026 = vsel %vm1904, %v2978, -inf
        %3027 = vmax.xlane.f32.xlu0 %v3026
        %v3028 = vpop.xlane.xlu0 %3027
        %v3029 = vsel %vm1904, %v2981, -inf
        %3030 = vmax.xlane.f32.xlu0 %v3029
        %v3031 = vpop.xlane.xlu0 %3030
        %v3032 = vsub.f32 %v2691, %v2986
        %v3033 = vsub.f32 %v2694, %v2989
        %v3034 = vsub.f32 %v2732, %v2992
        %v3035 = vsub.f32 %v2735, %v2995
        %v3036 = vsub.f32 %v2773, %v2998
        %v3037 = vsub.f32 %v2776, %v3001
        %v3038 = vsub.f32 %v2814, %v3004
        %v3039 = vsub.f32 %v2817, %v3007
        %v3040 = vsub.f32 %v2855, %v3010
        %v3041 = vsub.f32 %v2858, %v3013
        %v3042 = vsub.f32 %v2896, %v3016
        %v3043 = vsub.f32 %v2899, %v3019
        %v3044 = vsub.f32 %v2937, %v3022
        %v3045 = vsub.f32 %v2940, %v3025
        %v3046 = vsub.f32 %v2978, %v3028
        %v3047 = vsub.f32 %v2981, %v3031
        %v3048 = vmul.f32 %v3032, 1.442695
        %v3049 = vpow.pop %v3048
        %v3050 = vmul.f32 %v3033, 1.442695
        %v3051 = vpow.pop %v3050
        %v3052 = vmul.f32 %v3034, 1.442695
        %v3053 = vpow.pop %v3052
        %v3054 = vmul.f32 %v3035, 1.442695
        %v3055 = vpow.pop %v3054
        %v3056 = vmul.f32 %v3036, 1.442695
        %v3057 = vpow.pop %v3056
        %v3058 = vmul.f32 %v3037, 1.442695
        %v3059 = vpow.pop %v3058
        %v3060 = vmul.f32 %v3038, 1.442695
        %v3061 = vpow.pop %v3060
        %v3062 = vmul.f32 %v3039, 1.442695
        %v3063 = vpow.pop %v3062
        %v3064 = vmul.f32 %v3040, 1.442695
        %v3065 = vpow.pop %v3064
        %v3066 = vmul.f32 %v3041, 1.442695
        %v3067 = vpow.pop %v3066
        %v3068 = vmul.f32 %v3042, 1.442695
        %v3069 = vpow.pop %v3068
        %v3070 = vmul.f32 %v3043, 1.442695
        %v3071 = vpow.pop %v3070
        %v3072 = vmul.f32 %v3044, 1.442695
        %v3073 = vpow.pop %v3072
        %v3074 = vmul.f32 %v3045, 1.442695
        %v3075 = vpow.pop %v3074
        %v3076 = vmul.f32 %v3046, 1.442695
        %v3077 = vpow.pop %v3076
        %v3078 = vmul.f32 %v3047, 1.442695
        %v3079 = vpow.pop %v3078
        %v3080 = vsel %vm1904, %v3049, 0.0
        %3081 = vadd.xlane.f32.xlu0 %v3080
        %v3082 = vpop.xlane.xlu0 %3081
        %v3083 = vsel %vm1904, %v3051, 0.0
        %3084 = vadd.xlane.f32.xlu0 %v3083
        %v3085 = vpop.xlane.xlu0 %3084
        %v3086 = vsel %vm1904, %v3053, 0.0
        %3087 = vadd.xlane.f32.xlu0 %v3086
        %v3088 = vpop.xlane.xlu0 %3087
        %v3089 = vsel %vm1904, %v3055, 0.0
        %3090 = vadd.xlane.f32.xlu0 %v3089
        %v3091 = vpop.xlane.xlu0 %3090
        %v3092 = vsel %vm1904, %v3057, 0.0
        %3093 = vadd.xlane.f32.xlu0 %v3092
        %v3094 = vpop.xlane.xlu0 %3093
        %v3095 = vsel %vm1904, %v3059, 0.0
        %3096 = vadd.xlane.f32.xlu0 %v3095
        %v3097 = vpop.xlane.xlu0 %3096
        %v3098 = vsel %vm1904, %v3061, 0.0
        %3099 = vadd.xlane.f32.xlu0 %v3098
        %v3100 = vpop.xlane.xlu0 %3099
        %v3101 = vsel %vm1904, %v3063, 0.0
        %3102 = vadd.xlane.f32.xlu0 %v3101
        %v3103 = vpop.xlane.xlu0 %3102
        %v3104 = vsel %vm1904, %v3065, 0.0
        %3105 = vadd.xlane.f32.xlu0 %v3104
        %v3106 = vpop.xlane.xlu0 %3105
        %v3107 = vsel %vm1904, %v3067, 0.0
        %3108 = vadd.xlane.f32.xlu0 %v3107
        %v3109 = vpop.xlane.xlu0 %3108
        %v3110 = vsel %vm1904, %v3069, 0.0
        %3111 = vadd.xlane.f32.xlu0 %v3110
        %v3112 = vpop.xlane.xlu0 %3111
        %v3113 = vsel %vm1904, %v3071, 0.0
        %3114 = vadd.xlane.f32.xlu0 %v3113
        %v3115 = vpop.xlane.xlu0 %3114
        %v3116 = vsel %vm1904, %v3073, 0.0
        %3117 = vadd.xlane.f32.xlu0 %v3116
        %v3118 = vpop.xlane.xlu0 %3117
        %v3119 = vsel %vm1904, %v3075, 0.0
        %3120 = vadd.xlane.f32.xlu0 %v3119
        %v3121 = vpop.xlane.xlu0 %3120
        %v3122 = vsel %vm1904, %v3077, 0.0
        %3123 = vadd.xlane.f32.xlu0 %v3122
        %v3124 = vpop.xlane.xlu0 %3123
        %v3125 = vsel %vm1904, %v3079, 0.0
        %3126 = vadd.xlane.f32.xlu0 %v3125
        %v3127 = vpop.xlane.xlu0 %3126
        %v3128 = vrcp.pop %v3082
        %v3129 = vrcp.pop %v3085
        %v3130 = vrcp.pop %v3088
        %v3131 = vrcp.pop %v3091
        %v3132 = vrcp.pop %v3094
        %v3133 = vrcp.pop %v3097
        %v3134 = vrcp.pop %v3100
        %v3135 = vrcp.pop %v3103
        %v3136 = vrcp.pop %v3106
        %v3137 = vrcp.pop %v3109
        %v3138 = vrcp.pop %v3112
        %v3139 = vrcp.pop %v3115
        %v3140 = vrcp.pop %v3118
        %v3141 = vrcp.pop %v3121
        %v3142 = vrcp.pop %v3124
        %v3143 = vrcp.pop %v3127
        %v3144 = vmul.f32 %v3049, %v3128
        %v3145 = vmul.f32 %v3051, %v3129
        %v3146 = vmul.f32 %v3053, %v3130
        %v3147 = vmul.f32 %v3055, %v3131
        %v3148 = vmul.f32 %v3057, %v3132
        %v3149 = vmul.f32 %v3059, %v3133
        %v3150 = vmul.f32 %v3061, %v3134
        %v3151 = vmul.f32 %v3063, %v3135
        %v3152 = vmul.f32 %v3065, %v3136
        %v3153 = vmul.f32 %v3067, %v3137
        %v3154 = vmul.f32 %v3069, %v3138
        %v3155 = vmul.f32 %v3071, %v3139
        %v3156 = vmul.f32 %v3073, %v3140
        %v3157 = vmul.f32 %v3075, %v3141
        %v3158 = vmul.f32 %v3077, %v3142
        %v3159 = vmul.f32 %v3079, %v3143
        %v3160 = vpack.c.bf16 %v3145, %v3144
        %v3161 = vpack.c.bf16 %v3147, %v3146
        %v3162 = vpack.c.bf16 %v3149, %v3148
        %v3163 = vpack.c.bf16 %v3151, %v3150
        %v3164 = vpack.c.bf16 %v3153, %v3152
        %v3165 = vpack.c.bf16 %v3155, %v3154
        %v3166 = vpack.c.bf16 %v3157, %v3156
        %v3167 = vpack.c.bf16 %v3159, %v3158
        %v3169 = vsel %vm1904, %v3160, 0
        %3171 = vmatprep.subr.bf16.mxu0 0
        %3172 = vmatpush1.bf16.msra.mxu0 %v2648
        %3173 = vmatprep.subr.bf16.mxu0 0
        %3174 = vmatpush1.bf16.msra.mxu0 0
        %3175 = vmatprep.subr.bf16.mxu0 0
        %3176 = vmatpush1.bf16.msra.mxu0 0
        %3177 = vmatprep.subr.bf16.mxu0 0
        %3178 = vmatpush1.bf16.msra.mxu0 0
        %3179 = vmatprep.subr.bf16.mxu0 0
        %3180 = vmatpush1.bf16.msra.mxu0 0
        %3181 = vmatprep.subr.bf16.mxu0 0
        %3182 = vmatpush1.bf16.msra.mxu0 0
        %3183 = vmatprep.subr.bf16.mxu0 0
        %3184 = vmatpush1.bf16.msra.mxu0 0
        %3185 = vmatprep.subr.bf16.mxu0 0
        %3186 = vmatpush1.bf16.msra.mxu0 0
        %3187 = vmatprep.subr.bf16.mxu0 0
        %3188 = vmatpush1.bf16.msra.mxu0 0
        %3189 = vmatprep.subr.bf16.mxu0 0
        %3190 = vmatpush1.bf16.msra.mxu0 0
        %3191 = vmatprep.subr.bf16.mxu0 0
        %3192 = vmatpush1.bf16.msra.mxu0 0
        %3193 = vmatprep.subr.bf16.mxu0 0
        %3194 = vmatpush1.bf16.msra.mxu0 0
        %3195 = vmatprep.subr.bf16.mxu0 0
        %3196 = vmatpush1.bf16.msra.mxu0 0
        %3197 = vmatprep.subr.bf16.mxu0 0
        %3198 = vmatpush1.bf16.msra.mxu0 0
        %3199 = vmatprep.subr.bf16.mxu0 0
        %3200 = vmatpush1.bf16.msra.mxu0 0
        %3201 = vmatprep.subr.bf16.mxu0 0
        %3202 = vmatpush1.bf16.msra.mxu0 0
        %3203 = vmatprep.mubr.bf16.mxu0 0
        %3204 = vmatmul.mubr.bf16.gmra.mrb[0].mxu0 %v3169
        %v3205 = vpop.f32.mrb[0].mxu0
        %v3206 = vadd.f32 0.0, %v3205
        %v3207 = vpop.f32.mrb[0].mxu0
        %v3208 = vpop.f32.mrb[0].mxu0
        %v3209 = vadd.f32 0.0, %v3208
        %v3210 = vpop.f32.mrb[0].mxu0
        %3211 = vdwg.mxu0
        %v3213 = vsel %vm1904, %v3161, 0
        %3215 = vmatprep.subr.bf16.mxu0 0
        %3216 = vmatpush1.bf16.msra.mxu0 %v2649
        %3217 = vmatprep.subr.bf16.mxu0 0
        %3218 = vmatpush1.bf16.msra.mxu0 0
        %3219 = vmatprep.subr.bf16.mxu0 0
        %3220 = vmatpush1.bf16.msra.mxu0 0
        %3221 = vmatprep.subr.bf16.mxu0 0
        %3222 = vmatpush1.bf16.msra.mxu0 0
        %3223 = vmatprep.subr.bf16.mxu0 0
        %3224 = vmatpush1.bf16.msra.mxu0 0
        %3225 = vmatprep.subr.bf16.mxu0 0
        %3226 = vmatpush1.bf16.msra.mxu0 0
        %3227 = vmatprep.subr.bf16.mxu0 0
        %3228 = vmatpush1.bf16.msra.mxu0 0
        %3229 = vmatprep.subr.bf16.mxu0 0
        %3230 = vmatpush1.bf16.msra.mxu0 0
        %3231 = vmatprep.subr.bf16.mxu0 0
        %3232 = vmatpush1.bf16.msra.mxu0 0
        %3233 = vmatprep.subr.bf16.mxu0 0
        %3234 = vmatpush1.bf16.msra.mxu0 0
        %3235 = vmatprep.subr.bf16.mxu0 0
        %3236 = vmatpush1.bf16.msra.mxu0 0
        %3237 = vmatprep.subr.bf16.mxu0 0
        %3238 = vmatpush1.bf16.msra.mxu0 0
        %3239 = vmatprep.subr.bf16.mxu0 0
        %3240 = vmatpush1.bf16.msra.mxu0 0
        %3241 = vmatprep.subr.bf16.mxu0 0
        %3242 = vmatpush1.bf16.msra.mxu0 0
        %3243 = vmatprep.subr.bf16.mxu0 0
        %3244 = vmatpush1.bf16.msra.mxu0 0
        %3245 = vmatprep.subr.bf16.mxu0 0
        %3246 = vmatpush1.bf16.msra.mxu0 0
        %3247 = vmatprep.mubr.bf16.mxu0 0
        %3248 = vmatmul.mubr.bf16.gmra.mrb[0].mxu0 %v3213
        %v3249 = vpop.f32.mrb[0].mxu0
        %v3250 = vadd.f32 0.0, %v3249
        %v3251 = vpop.f32.mrb[0].mxu0
        %v3252 = vpop.f32.mrb[0].mxu0
        %v3253 = vadd.f32 0.0, %v3252
        %v3254 = vpop.f32.mrb[0].mxu0
        %3255 = vdwg.mxu0
        %v3257 = vsel %vm1904, %v3162, 0
        %3259 = vmatprep.subr.bf16.mxu0 0
        %3260 = vmatpush1.bf16.msra.mxu0 %v2650
        %3261 = vmatprep.subr.bf16.mxu0 0
        %3262 = vmatpush1.bf16.msra.mxu0 0
        %3263 = vmatprep.subr.bf16.mxu0 0
        %3264 = vmatpush1.bf16.msra.mxu0 0
        %3265 = vmatprep.subr.bf16.mxu0 0
        %3266 = vmatpush1.bf16.msra.mxu0 0
        %3267 = vmatprep.subr.bf16.mxu0 0
        %3268 = vmatpush1.bf16.msra.mxu0 0
        %3269 = vmatprep.subr.bf16.mxu0 0
        %3270 = vmatpush1.bf16.msra.mxu0 0
        %3271 = vmatprep.subr.bf16.mxu0 0
        %3272 = vmatpush1.bf16.msra.mxu0 0
        %3273 = vmatprep.subr.bf16.mxu0 0
        %3274 = vmatpush1.bf16.msra.mxu0 0
        %3275 = vmatprep.subr.bf16.mxu0 0
        %3276 = vmatpush1.bf16.msra.mxu0 0
        %3277 = vmatprep.subr.bf16.mxu0 0
        %3278 = vmatpush1.bf16.msra.mxu0 0
        %3279 = vmatprep.subr.bf16.mxu0 0
        %3280 = vmatpush1.bf16.msra.mxu0 0
        %3281 = vmatprep.subr.bf16.mxu0 0
        %3282 = vmatpush1.bf16.msra.mxu0 0
        %3283 = vmatprep.subr.bf16.mxu0 0
        %3284 = vmatpush1.bf16.msra.mxu0 0
        %3285 = vmatprep.subr.bf16.mxu0 0
        %3286 = vmatpush1.bf16.msra.mxu0 0
        %3287 = vmatprep.subr.bf16.mxu0 0
        %3288 = vmatpush1.bf16.msra.mxu0 0
        %3289 = vmatprep.subr.bf16.mxu0 0
        %3290 = vmatpush1.bf16.msra.mxu0 0
        %3291 = vmatprep.mubr.bf16.mxu0 0
        %3292 = vmatmul.mubr.bf16.gmra.mrb[0].mxu0 %v3257
        %v3293 = vpop.f32.mrb[0].mxu0
        %v3294 = vadd.f32 0.0, %v3293
        %v3295 = vpop.f32.mrb[0].mxu0
        %v3296 = vpop.f32.mrb[0].mxu0
        %v3297 = vadd.f32 0.0, %v3296
        %v3298 = vpop.f32.mrb[0].mxu0
        %3299 = vdwg.mxu0
        %v3301 = vsel %vm1904, %v3163, 0
        %3303 = vmatprep.subr.bf16.mxu0 0
        %3304 = vmatpush1.bf16.msra.mxu0 %v2651
        %3305 = vmatprep.subr.bf16.mxu0 0
        %3306 = vmatpush1.bf16.msra.mxu0 0
        %3307 = vmatprep.subr.bf16.mxu0 0
        %3308 = vmatpush1.bf16.msra.mxu0 0
        %3309 = vmatprep.subr.bf16.mxu0 0
        %3310 = vmatpush1.bf16.msra.mxu0 0
        %3311 = vmatprep.subr.bf16.mxu0 0
        %3312 = vmatpush1.bf16.msra.mxu0 0
        %3313 = vmatprep.subr.bf16.mxu0 0
        %3314 = vmatpush1.bf16.msra.mxu0 0
        %3315 = vmatprep.subr.bf16.mxu0 0
        %3316 = vmatpush1.bf16.msra.mxu0 0
        %3317 = vmatprep.subr.bf16.mxu0 0
        %3318 = vmatpush1.bf16.msra.mxu0 0
        %3319 = vmatprep.subr.bf16.mxu0 0
        %3320 = vmatpush1.bf16.msra.mxu0 0
        %3321 = vmatprep.subr.bf16.mxu0 0
        %3322 = vmatpush1.bf16.msra.mxu0 0
        %3323 = vmatprep.subr.bf16.mxu0 0
        %3324 = vmatpush1.bf16.msra.mxu0 0
        %3325 = vmatprep.subr.bf16.mxu0 0
        %3326 = vmatpush1.bf16.msra.mxu0 0
        %3327 = vmatprep.subr.bf16.mxu0 0
        %3328 = vmatpush1.bf16.msra.mxu0 0
        %3329 = vmatprep.subr.bf16.mxu0 0
        %3330 = vmatpush1.bf16.msra.mxu0 0
        %3331 = vmatprep.subr.bf16.mxu0 0
        %3332 = vmatpush1.bf16.msra.mxu0 0
        %3333 = vmatprep.subr.bf16.mxu0 0
        %3334 = vmatpush1.bf16.msra.mxu0 0
        %3335 = vmatprep.mubr.bf16.mxu0 0
        %3336 = vmatmul.mubr.bf16.gmra.mrb[0].mxu0 %v3301
        %v3337 = vpop.f32.mrb[0].mxu0
        %v3338 = vadd.f32 0.0, %v3337
        %v3339 = vpop.f32.mrb[0].mxu0
        %v3340 = vpop.f32.mrb[0].mxu0
        %v3341 = vadd.f32 0.0, %v3340
        %v3342 = vpop.f32.mrb[0].mxu0
        %3343 = vdwg.mxu0
        %v3345 = vsel %vm1904, %v3164, 0
        %3347 = vmatprep.subr.bf16.mxu0 0
        %3348 = vmatpush1.bf16.msra.mxu0 %v2652
        %3349 = vmatprep.subr.bf16.mxu0 0
        %3350 = vmatpush1.bf16.msra.mxu0 0
        %3351 = vmatprep.subr.bf16.mxu0 0
        %3352 = vmatpush1.bf16.msra.mxu0 0
        %3353 = vmatprep.subr.bf16.mxu0 0
        %3354 = vmatpush1.bf16.msra.mxu0 0
        %3355 = vmatprep.subr.bf16.mxu0 0
        %3356 = vmatpush1.bf16.msra.mxu0 0
        %3357 = vmatprep.subr.bf16.mxu0 0
        %3358 = vmatpush1.bf16.msra.mxu0 0
        %3359 = vmatprep.subr.bf16.mxu0 0
        %3360 = vmatpush1.bf16.msra.mxu0 0
        %3361 = vmatprep.subr.bf16.mxu0 0
        %3362 = vmatpush1.bf16.msra.mxu0 0
        %3363 = vmatprep.subr.bf16.mxu0 0
        %3364 = vmatpush1.bf16.msra.mxu0 0
        %3365 = vmatprep.subr.bf16.mxu0 0
        %3366 = vmatpush1.bf16.msra.mxu0 0
        %3367 = vmatprep.subr.bf16.mxu0 0
        %3368 = vmatpush1.bf16.msra.mxu0 0
        %3369 = vmatprep.subr.bf16.mxu0 0
        %3370 = vmatpush1.bf16.msra.mxu0 0
        %3371 = vmatprep.subr.bf16.mxu0 0
        %3372 = vmatpush1.bf16.msra.mxu0 0
        %3373 = vmatprep.subr.bf16.mxu0 0
        %3374 = vmatpush1.bf16.msra.mxu0 0
        %3375 = vmatprep.subr.bf16.mxu0 0
        %3376 = vmatpush1.bf16.msra.mxu0 0
        %3377 = vmatprep.subr.bf16.mxu0 0
        %3378 = vmatpush1.bf16.msra.mxu0 0
        %3379 = vmatprep.mubr.bf16.mxu0 0
        %3380 = vmatmul.mubr.bf16.gmra.mrb[0].mxu0 %v3345
        %v3381 = vpop.f32.mrb[0].mxu0
        %v3382 = vadd.f32 0.0, %v3381
        %v3383 = vpop.f32.mrb[0].mxu0
        %v3384 = vpop.f32.mrb[0].mxu0
        %v3385 = vadd.f32 0.0, %v3384
        %v3386 = vpop.f32.mrb[0].mxu0
        %3387 = vdwg.mxu0
        %v3389 = vsel %vm1904, %v3165, 0
        %3391 = vmatprep.subr.bf16.mxu0 0
        %3392 = vmatpush1.bf16.msra.mxu0 %v2653
        %3393 = vmatprep.subr.bf16.mxu0 0
        %3394 = vmatpush1.bf16.msra.mxu0 0
        %3395 = vmatprep.subr.bf16.mxu0 0
        %3396 = vmatpush1.bf16.msra.mxu0 0
        %3397 = vmatprep.subr.bf16.mxu0 0
        %3398 = vmatpush1.bf16.msra.mxu0 0
        %3399 = vmatprep.subr.bf16.mxu0 0
        %3400 = vmatpush1.bf16.msra.mxu0 0
        %3401 = vmatprep.subr.bf16.mxu0 0
        %3402 = vmatpush1.bf16.msra.mxu0 0
        %3403 = vmatprep.subr.bf16.mxu0 0
        %3404 = vmatpush1.bf16.msra.mxu0 0
        %3405 = vmatprep.subr.bf16.mxu0 0
        %3406 = vmatpush1.bf16.msra.mxu0 0
        %3407 = vmatprep.subr.bf16.mxu0 0
        %3408 = vmatpush1.bf16.msra.mxu0 0
        %3409 = vmatprep.subr.bf16.mxu0 0
        %3410 = vmatpush1.bf16.msra.mxu0 0
        %3411 = vmatprep.subr.bf16.mxu0 0
        %3412 = vmatpush1.bf16.msra.mxu0 0
        %3413 = vmatprep.subr.bf16.mxu0 0
        %3414 = vmatpush1.bf16.msra.mxu0 0
        %3415 = vmatprep.subr.bf16.mxu0 0
        %3416 = vmatpush1.bf16.msra.mxu0 0
        %3417 = vmatprep.subr.bf16.mxu0 0
        %3418 = vmatpush1.bf16.msra.mxu0 0
        %3419 = vmatprep.subr.bf16.mxu0 0
        %3420 = vmatpush1.bf16.msra.mxu0 0
        %3421 = vmatprep.subr.bf16.mxu0 0
        %3422 = vmatpush1.bf16.msra.mxu0 0
        %3423 = vmatprep.mubr.bf16.mxu0 0
        %3424 = vmatmul.mubr.bf16.gmra.mrb[0].mxu0 %v3389
        %v3425 = vpop.f32.mrb[0].mxu0
        %v3426 = vadd.f32 0.0, %v3425
        %v3427 = vpop.f32.mrb[0].mxu0
        %v3428 = vpop.f32.mrb[0].mxu0
        %v3429 = vadd.f32 0.0, %v3428
        %v3430 = vpop.f32.mrb[0].mxu0
        %3431 = vdwg.mxu0
        %v3433 = vsel %vm1904, %v3166, 0
        %3435 = vmatprep.subr.bf16.mxu0 0
        %3436 = vmatpush1.bf16.msra.mxu0 %v2654
        %3437 = vmatprep.subr.bf16.mxu0 0
        %3438 = vmatpush1.bf16.msra.mxu0 0
        %3439 = vmatprep.subr.bf16.mxu0 0
        %3440 = vmatpush1.bf16.msra.mxu0 0
        %3441 = vmatprep.subr.bf16.mxu0 0
        %3442 = vmatpush1.bf16.msra.mxu0 0
        %3443 = vmatprep.subr.bf16.mxu0 0
        %3444 = vmatpush1.bf16.msra.mxu0 0
        %3445 = vmatprep.subr.bf16.mxu0 0
        %3446 = vmatpush1.bf16.msra.mxu0 0
        %3447 = vmatprep.subr.bf16.mxu0 0
        %3448 = vmatpush1.bf16.msra.mxu0 0
        %3449 = vmatprep.subr.bf16.mxu0 0
        %3450 = vmatpush1.bf16.msra.mxu0 0
        %3451 = vmatprep.subr.bf16.mxu0 0
        %3452 = vmatpush1.bf16.msra.mxu0 0
        %3453 = vmatprep.subr.bf16.mxu0 0
        %3454 = vmatpush1.bf16.msra.mxu0 0
        %3455 = vmatprep.subr.bf16.mxu0 0
        %3456 = vmatpush1.bf16.msra.mxu0 0
        %3457 = vmatprep.subr.bf16.mxu0 0
        %3458 = vmatpush1.bf16.msra.mxu0 0
        %3459 = vmatprep.subr.bf16.mxu0 0
        %3460 = vmatpush1.bf16.msra.mxu0 0
        %3461 = vmatprep.subr.bf16.mxu0 0
        %3462 = vmatpush1.bf16.msra.mxu0 0
        %3463 = vmatprep.subr.bf16.mxu0 0
        %3464 = vmatpush1.bf16.msra.mxu0 0
        %3465 = vmatprep.subr.bf16.mxu0 0
        %3466 = vmatpush1.bf16.msra.mxu0 0
        %3467 = vmatprep.mubr.bf16.mxu0 0
        %3468 = vmatmul.mubr.bf16.gmra.mrb[0].mxu0 %v3433
        %v3469 = vpop.f32.mrb[0].mxu0
        %v3470 = vadd.f32 0.0, %v3469
        %v3471 = vpop.f32.mrb[0].mxu0
        %v3472 = vpop.f32.mrb[0].mxu0
        %v3473 = vadd.f32 0.0, %v3472
        %v3474 = vpop.f32.mrb[0].mxu0
        %3475 = vdwg.mxu0
        %v3477 = vsel %vm1904, %v3167, 0
        %3479 = vmatprep.subr.bf16.mxu0 0
        %3480 = vmatpush1.bf16.msra.mxu0 %v2655
        %3481 = vmatprep.subr.bf16.mxu0 0
        %3482 = vmatpush1.bf16.msra.mxu0 0
        %3483 = vmatprep.subr.bf16.mxu0 0
        %3484 = vmatpush1.bf16.msra.mxu0 0
        %3485 = vmatprep.subr.bf16.mxu0 0
        %3486 = vmatpush1.bf16.msra.mxu0 0
        %3487 = vmatprep.subr.bf16.mxu0 0
        %3488 = vmatpush1.bf16.msra.mxu0 0
        %3489 = vmatprep.subr.bf16.mxu0 0
        %3490 = vmatpush1.bf16.msra.mxu0 0
        %3491 = vmatprep.subr.bf16.mxu0 0
        %3492 = vmatpush1.bf16.msra.mxu0 0
        %3493 = vmatprep.subr.bf16.mxu0 0
        %3494 = vmatpush1.bf16.msra.mxu0 0
        %3495 = vmatprep.subr.bf16.mxu0 0
        %3496 = vmatpush1.bf16.msra.mxu0 0
        %3497 = vmatprep.subr.bf16.mxu0 0
        %3498 = vmatpush1.bf16.msra.mxu0 0
        %3499 = vmatprep.subr.bf16.mxu0 0
        %3500 = vmatpush1.bf16.msra.mxu0 0
        %3501 = vmatprep.subr.bf16.mxu0 0
        %3502 = vmatpush1.bf16.msra.mxu0 0
        %3503 = vmatprep.subr.bf16.mxu0 0
        %3504 = vmatpush1.bf16.msra.mxu0 0
        %3505 = vmatprep.subr.bf16.mxu0 0
        %3506 = vmatpush1.bf16.msra.mxu0 0
        %3507 = vmatprep.subr.bf16.mxu0 0
        %3508 = vmatpush1.bf16.msra.mxu0 0
        %3509 = vmatprep.subr.bf16.mxu0 0
        %3510 = vmatpush1.bf16.msra.mxu0 0
        %3511 = vmatprep.mubr.bf16.mxu0 0
        %3512 = vmatmul.mubr.bf16.gmra.mrb[0].mxu0 %v3477
        %v3513 = vpop.f32.mrb[0].mxu0
        %v3514 = vadd.f32 0.0, %v3513
        %v3515 = vpop.f32.mrb[0].mxu0
        %v3516 = vpop.f32.mrb[0].mxu0
        %v3517 = vadd.f32 0.0, %v3516
        %v3518 = vpop.f32.mrb[0].mxu0
        %3519 = vdwg.mxu0
        %v3520 = vpack.c.bf16 %v3209, %v3206
        %v3521 = vpack.c.bf16 %v3253, %v3250
        %v3522 = vpack.c.bf16 %v3297, %v3294
        %v3523 = vpack.c.bf16 %v3341, %v3338
        %v3524 = vpack.c.bf16 %v3385, %v3382
        %v3525 = vpack.c.bf16 %v3429, %v3426
        %v3526 = vpack.c.bf16 %v3473, %v3470
        %v3527 = vpack.c.bf16 %v3517, %v3514
        %s3528 = scalar_lea.vmem %s5, 64
        %v3529 = vld [vmem:[%s3528] sm:$0xf]
        %v3530 = vld [vmem:[%s3528 + $0x4] sm:$0xf]
        %v3531 = vld [vmem:[%s3528 + $0x8] sm:$0xf]
        %v3532 = vld [vmem:[%s3528 + $0xc] sm:$0xf]
        %v3533 = vld [vmem:[%s3528 + $0x10] sm:$0xf]
        %v3534 = vld [vmem:[%s3528 + $0x14] sm:$0xf]
        %v3535 = vld [vmem:[%s3528 + $0x18] sm:$0xf]
        %v3536 = vld [vmem:[%s3528 + $0x1c] sm:$0xf]
        %v3537 = vld [vmem:[%s3528 + $0x20] sm:$0xf]
        %v3538 = vld [vmem:[%s3528 + $0x24] sm:$0xf]
        %v3539 = vld [vmem:[%s3528 + $0x28] sm:$0xf]
        %v3540 = vld [vmem:[%s3528 + $0x2c] sm:$0xf]
        %v3541 = vld [vmem:[%s3528 + $0x30] sm:$0xf]
        %v3542 = vld [vmem:[%s3528 + $0x34] sm:$0xf]
        %v3543 = vld [vmem:[%s3528 + $0x38] sm:$0xf]
        %v3544 = vld [vmem:[%s3528 + $0x3c] sm:$0xf]
        %v3561 = vunpack.c.l.b16 %v3529
        %v3562 = vunpack.c.l.b16 %v3530
        %v3563 = vunpack.c.l.b16 %v3531
        %v3564 = vunpack.c.l.b16 %v3532
        %v3565 = vunpack.c.l.b16 %v3533
        %v3566 = vunpack.c.l.b16 %v3534
        %v3567 = vunpack.c.l.b16 %v3535
        %v3568 = vunpack.c.l.b16 %v3536
        %v3569 = vunpack.c.l.b16 %v3537
        %v3570 = vunpack.c.l.b16 %v3538
        %v3571 = vunpack.c.l.b16 %v3539
        %v3572 = vunpack.c.l.b16 %v3540
        %v3573 = vunpack.c.l.b16 %v3541
        %v3574 = vunpack.c.l.b16 %v3542
        %v3575 = vunpack.c.l.b16 %v3543
        %v3576 = vunpack.c.l.b16 %v3544
        %v3577 = vpack.c.b16 %v3562, %v3561
        %v3578 = vpack.c.b16 %v3564, %v3563
        %v3579 = vpack.c.b16 %v3566, %v3565
        %v3580 = vpack.c.b16 %v3568, %v3567
        %v3581 = vpack.c.b16 %v3570, %v3569
        %v3582 = vpack.c.b16 %v3572, %v3571
        %v3583 = vpack.c.b16 %v3574, %v3573
        %v3584 = vpack.c.b16 %v3576, %v3575
        %3593 = vmatprep.subr.bf16.mxu0 0
        %3594 = vmatpush1.bf16.msra.mxu0 %v3577
        %3595 = vmatprep.subr.bf16.mxu0 0
        %3596 = vmatpush1.bf16.msra.mxu0 %v3578
        %3597 = vmatprep.subr.bf16.mxu0 0
        %3598 = vmatpush1.bf16.msra.mxu0 %v3579
        %3599 = vmatprep.subr.bf16.mxu0 0
        %3600 = vmatpush1.bf16.msra.mxu0 %v3580
        %3601 = vmatprep.subr.bf16.mxu0 0
        %3602 = vmatpush1.bf16.msra.mxu0 %v3581
        %3603 = vmatprep.subr.bf16.mxu0 0
        %3604 = vmatpush1.bf16.msra.mxu0 %v3582
        %3605 = vmatprep.subr.bf16.mxu0 0
        %3606 = vmatpush1.bf16.msra.mxu0 %v3583
        %3607 = vmatprep.subr.bf16.mxu0 0
        %3608 = vmatpush1.bf16.msra.mxu0 %v3584
        %3609 = vmatprep.subr.bf16.mxu0 0
        %3610 = vmatpush1.bf16.msra.mxu0 0
        %3611 = vmatprep.subr.bf16.mxu0 0
        %3612 = vmatpush1.bf16.msra.mxu0 0
        %3613 = vmatprep.subr.bf16.mxu0 0
        %3614 = vmatpush1.bf16.msra.mxu0 0
        %3615 = vmatprep.subr.bf16.mxu0 0
        %3616 = vmatpush1.bf16.msra.mxu0 0
        %3617 = vmatprep.subr.bf16.mxu0 0
        %3618 = vmatpush1.bf16.msra.mxu0 0
        %3619 = vmatprep.subr.bf16.mxu0 0
        %3620 = vmatpush1.bf16.msra.mxu0 0
        %3621 = vmatprep.subr.bf16.mxu0 0
        %3622 = vmatpush1.bf16.msra.mxu0 0
        %3623 = vmatprep.subr.bf16.mxu0 0
        %3624 = vmatpush1.bf16.msra.mxu0 0
        %3625 = vmatprep.mubr.bf16.mxu0 0
        %3626 = vmatmul.mubr.bf16.gmra.mrb[0].mxu0 %v3520
        %v3627 = vpop.f32.mrb[0].mxu0
        %v3628 = vadd.f32 0.0, %v3627
        %v3629 = vpop.f32.mrb[0].mxu0
        %v3630 = vpop.f32.mrb[0].mxu0
        %v3631 = vadd.f32 0.0, %v3630
        %v3632 = vpop.f32.mrb[0].mxu0
        %3633 = vmatprep.mubr.bf16.mxu0 0
        %3634 = vmatmul.mubr.bf16.gmra.mrb[0].mxu0 %v3521
        %v3635 = vpop.f32.mrb[0].mxu0
        %v3636 = vadd.f32 0.0, %v3635
        %v3637 = vpop.f32.mrb[0].mxu0
        %v3638 = vpop.f32.mrb[0].mxu0
        %v3639 = vadd.f32 0.0, %v3638
        %v3640 = vpop.f32.mrb[0].mxu0
        %3641 = vmatprep.mubr.bf16.mxu0 0
        %3642 = vmatmul.mubr.bf16.gmra.mrb[0].mxu0 %v3522
        %v3643 = vpop.f32.mrb[0].mxu0
        %v3644 = vadd.f32 0.0, %v3643
        %v3645 = vpop.f32.mrb[0].mxu0
        %v3646 = vpop.f32.mrb[0].mxu0
        %v3647 = vadd.f32 0.0, %v3646
        %v3648 = vpop.f32.mrb[0].mxu0
        %3649 = vmatprep.mubr.bf16.mxu0 0
        %3650 = vmatmul.mubr.bf16.gmra.mrb[0].mxu0 %v3523
        %v3651 = vpop.f32.mrb[0].mxu0
        %v3652 = vadd.f32 0.0, %v3651
        %v3653 = vpop.f32.mrb[0].mxu0
        %v3654 = vpop.f32.mrb[0].mxu0
        %v3655 = vadd.f32 0.0, %v3654
        %v3656 = vpop.f32.mrb[0].mxu0
        %3657 = vmatprep.mubr.bf16.mxu0 0
        %3658 = vmatmul.mubr.bf16.gmra.mrb[0].mxu0 %v3524
        %v3659 = vpop.f32.mrb[0].mxu0
        %v3660 = vadd.f32 0.0, %v3659
        %v3661 = vpop.f32.mrb[0].mxu0
        %v3662 = vpop.f32.mrb[0].mxu0
        %v3663 = vadd.f32 0.0, %v3662
        %v3664 = vpop.f32.mrb[0].mxu0
        %3665 = vmatprep.mubr.bf16.mxu0 0
        %3666 = vmatmul.mubr.bf16.gmra.mrb[0].mxu0 %v3525
        %v3667 = vpop.f32.mrb[0].mxu0
        %v3668 = vadd.f32 0.0, %v3667
        %v3669 = vpop.f32.mrb[0].mxu0
        %v3670 = vpop.f32.mrb[0].mxu0
        %v3671 = vadd.f32 0.0, %v3670
        %v3672 = vpop.f32.mrb[0].mxu0
        %3673 = vmatprep.mubr.bf16.mxu0 0
        %3674 = vmatmul.mubr.bf16.gmra.mrb[0].mxu0 %v3526
        %v3675 = vpop.f32.mrb[0].mxu0
        %v3676 = vadd.f32 0.0, %v3675
        %v3677 = vpop.f32.mrb[0].mxu0
        %v3678 = vpop.f32.mrb[0].mxu0
        %v3679 = vadd.f32 0.0, %v3678
        %v3680 = vpop.f32.mrb[0].mxu0
        %3681 = vmatprep.mubr.bf16.mxu0 0
        %3682 = vmatmul.mubr.bf16.gmra.mrb[0].mxu0 %v3527
        %v3683 = vpop.f32.mrb[0].mxu0
        %v3684 = vadd.f32 0.0, %v3683
        %v3685 = vpop.f32.mrb[0].mxu0
        %v3686 = vpop.f32.mrb[0].mxu0
        %v3687 = vadd.f32 0.0, %v3686
        %v3688 = vpop.f32.mrb[0].mxu0
        %3689 = vdwg.mxu0
        %v3690 = vadd.f32 %v2616, %v3628
        %v3691 = vadd.f32 %v2617, %v3631
        %v3692 = vadd.f32 %v2618, %v3636
        %v3693 = vadd.f32 %v2619, %v3639
        %v3694 = vadd.f32 %v2620, %v3644
        %v3695 = vadd.f32 %v2621, %v3647
        %v3696 = vadd.f32 %v2622, %v3652
        %v3697 = vadd.f32 %v2623, %v3655
        %v3698 = vadd.f32 %v2624, %v3660
        %v3699 = vadd.f32 %v2625, %v3663
        %v3700 = vadd.f32 %v2626, %v3668
        %v3701 = vadd.f32 %v2627, %v3671
        %v3702 = vadd.f32 %v2628, %v3676
        %v3703 = vadd.f32 %v2629, %v3679
        %v3704 = vadd.f32 %v2630, %v3684
        %v3705 = vadd.f32 %v2631, %v3687
        %v3706 = vadd.f32 %v905, %v3690
        %v3707 = vadd.f32 %v908, %v3691
        %v3708 = vadd.f32 %v913, %v3692
        %v3709 = vadd.f32 %v916, %v3693
        %v3710 = vadd.f32 %v921, %v3694
        %v3711 = vadd.f32 %v924, %v3695
        %v3712 = vadd.f32 %v929, %v3696
        %v3713 = vadd.f32 %v932, %v3697
        %v3714 = vadd.f32 %v937, %v3698
        %v3715 = vadd.f32 %v940, %v3699
        %v3716 = vadd.f32 %v945, %v3700
        %v3717 = vadd.f32 %v948, %v3701
        %v3718 = vadd.f32 %v953, %v3702
        %v3719 = vadd.f32 %v956, %v3703
        %v3720 = vadd.f32 %v961, %v3704
        %v3721 = vadd.f32 %v964, %v3705
        %v3722 = vld [vmem:[#allocation10] sm:$0x1]
        %v3723 = vld [vmem:[#allocation11] sm:$0x1]
        %v3724 = vsel %vm1187, %v3706, 0.0
        %3725 = vadd.xlane.f32.xlu0 %v3724
        %v3726 = vpop.xlane.xlu0 %3725
        %v3727 = vsel %vm1187, %v3707, 0.0
        %3728 = vadd.xlane.f32.xlu0 %v3727
        %v3729 = vpop.xlane.xlu0 %3728
        %v3730 = vsel %vm1187, %v3708, 0.0
        %3731 = vadd.xlane.f32.xlu0 %v3730
        %v3732 = vpop.xlane.xlu0 %3731
        %v3733 = vsel %vm1187, %v3709, 0.0
        %3734 = vadd.xlane.f32.xlu0 %v3733
        %v3735 = vpop.xlane.xlu0 %3734
        %v3736 = vsel %vm1187, %v3710, 0.0
        %3737 = vadd.xlane.f32.xlu0 %v3736
        %v3738 = vpop.xlane.xlu0 %3737
        %v3739 = vsel %vm1187, %v3711, 0.0
        %3740 = vadd.xlane.f32.xlu0 %v3739
        %v3741 = vpop.xlane.xlu0 %3740
        %v3742 = vsel %vm1187, %v3712, 0.0
        %3743 = vadd.xlane.f32.xlu0 %v3742
        %v3744 = vpop.xlane.xlu0 %3743
        %v3745 = vsel %vm1187, %v3713, 0.0
        %3746 = vadd.xlane.f32.xlu0 %v3745
        %v3747 = vpop.xlane.xlu0 %3746
        %v3748 = vsel %vm1187, %v3714, 0.0
        %3749 = vadd.xlane.f32.xlu0 %v3748
        %v3750 = vpop.xlane.xlu0 %3749
        %v3751 = vsel %vm1187, %v3715, 0.0
        %3752 = vadd.xlane.f32.xlu0 %v3751
        %v3753 = vpop.xlane.xlu0 %3752
        %v3754 = vsel %vm1187, %v3716, 0.0
        %3755 = vadd.xlane.f32.xlu0 %v3754
        %v3756 = vpop.xlane.xlu0 %3755
        %v3757 = vsel %vm1187, %v3717, 0.0
        %3758 = vadd.xlane.f32.xlu0 %v3757
        %v3759 = vpop.xlane.xlu0 %3758
        %v3760 = vsel %vm1187, %v3718, 0.0
        %3761 = vadd.xlane.f32.xlu0 %v3760
        %v3762 = vpop.xlane.xlu0 %3761
        %v3763 = vsel %vm1187, %v3719, 0.0
        %3764 = vadd.xlane.f32.xlu0 %v3763
        %v3765 = vpop.xlane.xlu0 %3764
        %v3766 = vsel %vm1187, %v3720, 0.0
        %3767 = vadd.xlane.f32.xlu0 %v3766
        %v3768 = vpop.xlane.xlu0 %3767
        %v3769 = vsel %vm1187, %v3721, 0.0
        %3770 = vadd.xlane.f32.xlu0 %v3769
        %v3771 = vpop.xlane.xlu0 %3770
        %v3772 = vrcp.pop 80.0
        %v3773 = vmul.f32 %v3726, %v3772
        %v3774 = vmul.f32 %v3729, %v3772
        %v3775 = vmul.f32 %v3732, %v3772
        %v3776 = vmul.f32 %v3735, %v3772
        %v3777 = vmul.f32 %v3738, %v3772
        %v3778 = vmul.f32 %v3741, %v3772
        %v3779 = vmul.f32 %v3744, %v3772
        %v3780 = vmul.f32 %v3747, %v3772
        %v3781 = vmul.f32 %v3750, %v3772
        %v3782 = vmul.f32 %v3753, %v3772
        %v3783 = vmul.f32 %v3756, %v3772
        %v3784 = vmul.f32 %v3759, %v3772
        %v3785 = vmul.f32 %v3762, %v3772
        %v3786 = vmul.f32 %v3765, %v3772
        %v3787 = vmul.f32 %v3768, %v3772
        %v3788 = vmul.f32 %v3771, %v3772
        %v3789 = vsub.f32 %v3706, %v3773
        %v3790 = vsub.f32 %v3707, %v3774
        %v3791 = vsub.f32 %v3708, %v3775
        %v3792 = vsub.f32 %v3709, %v3776
        %v3793 = vsub.f32 %v3710, %v3777
        %v3794 = vsub.f32 %v3711, %v3778
        %v3795 = vsub.f32 %v3712, %v3779
        %v3796 = vsub.f32 %v3713, %v3780
        %v3797 = vsub.f32 %v3714, %v3781
        %v3798 = vsub.f32 %v3715, %v3782
        %v3799 = vsub.f32 %v3716, %v3783
        %v3800 = vsub.f32 %v3717, %v3784
        %v3801 = vsub.f32 %v3718, %v3785
        %v3802 = vsub.f32 %v3719, %v3786
        %v3803 = vsub.f32 %v3720, %v3787
        %v3804 = vsub.f32 %v3721, %v3788
        %v3805 = vmul.f32 %v3789, %v3789
        %v3806 = vmul.f32 %v3790, %v3790
        %v3807 = vmul.f32 %v3791, %v3791
        %v3808 = vmul.f32 %v3792, %v3792
        %v3809 = vmul.f32 %v3793, %v3793
        %v3810 = vmul.f32 %v3794, %v3794
        %v3811 = vmul.f32 %v3795, %v3795
        %v3812 = vmul.f32 %v3796, %v3796
        %v3813 = vmul.f32 %v3797, %v3797
        %v3814 = vmul.f32 %v3798, %v3798
        %v3815 = vmul.f32 %v3799, %v3799
        %v3816 = vmul.f32 %v3800, %v3800
        %v3817 = vmul.f32 %v3801, %v3801
        %v3818 = vmul.f32 %v3802, %v3802
        %v3819 = vmul.f32 %v3803, %v3803
        %v3820 = vmul.f32 %v3804, %v3804
        %v3821 = vsel %vm1187, %v3805, 0.0
        %3822 = vadd.xlane.f32.xlu0 %v3821
        %v3823 = vpop.xlane.xlu0 %3822
        %v3824 = vsel %vm1187, %v3806, 0.0
        %3825 = vadd.xlane.f32.xlu0 %v3824
        %v3826 = vpop.xlane.xlu0 %3825
        %v3827 = vsel %vm1187, %v3807, 0.0
        %3828 = vadd.xlane.f32.xlu0 %v3827
        %v3829 = vpop.xlane.xlu0 %3828
        %v3830 = vsel %vm1187, %v3808, 0.0
        %3831 = vadd.xlane.f32.xlu0 %v3830
        %v3832 = vpop.xlane.xlu0 %3831
        %v3833 = vsel %vm1187, %v3809, 0.0
        %3834 = vadd.xlane.f32.xlu0 %v3833
        %v3835 = vpop.xlane.xlu0 %3834
        %v3836 = vsel %vm1187, %v3810, 0.0
        %3837 = vadd.xlane.f32.xlu0 %v3836
        %v3838 = vpop.xlane.xlu0 %3837
        %v3839 = vsel %vm1187, %v3811, 0.0
        %3840 = vadd.xlane.f32.xlu0 %v3839
        %v3841 = vpop.xlane.xlu0 %3840
        %v3842 = vsel %vm1187, %v3812, 0.0
        %3843 = vadd.xlane.f32.xlu0 %v3842
        %v3844 = vpop.xlane.xlu0 %3843
        %v3845 = vsel %vm1187, %v3813, 0.0
        %3846 = vadd.xlane.f32.xlu0 %v3845
        %v3847 = vpop.xlane.xlu0 %3846
        %v3848 = vsel %vm1187, %v3814, 0.0
        %3849 = vadd.xlane.f32.xlu0 %v3848
        %v3850 = vpop.xlane.xlu0 %3849
        %v3851 = vsel %vm1187, %v3815, 0.0
        %3852 = vadd.xlane.f32.xlu0 %v3851
        %v3853 = vpop.xlane.xlu0 %3852
        %v3854 = vsel %vm1187, %v3816, 0.0
        %3855 = vadd.xlane.f32.xlu0 %v3854
        %v3856 = vpop.xlane.xlu0 %3855
        %v3857 = vsel %vm1187, %v3817, 0.0
        %3858 = vadd.xlane.f32.xlu0 %v3857
        %v3859 = vpop.xlane.xlu0 %3858
        %v3860 = vsel %vm1187, %v3818, 0.0
        %3861 = vadd.xlane.f32.xlu0 %v3860
        %v3862 = vpop.xlane.xlu0 %3861
        %v3863 = vsel %vm1187, %v3819, 0.0
        %3864 = vadd.xlane.f32.xlu0 %v3863
        %v3865 = vpop.xlane.xlu0 %3864
        %v3866 = vsel %vm1187, %v3820, 0.0
        %3867 = vadd.xlane.f32.xlu0 %v3866
        %v3868 = vpop.xlane.xlu0 %3867
        %v3869 = vmul.f32 %v3823, %v3772
        %v3870 = vmul.f32 %v3826, %v3772
        %v3871 = vmul.f32 %v3829, %v3772
        %v3872 = vmul.f32 %v3832, %v3772
        %v3873 = vmul.f32 %v3835, %v3772
        %v3874 = vmul.f32 %v3838, %v3772
        %v3875 = vmul.f32 %v3841, %v3772
        %v3876 = vmul.f32 %v3844, %v3772
        %v3877 = vmul.f32 %v3847, %v3772
        %v3878 = vmul.f32 %v3850, %v3772
        %v3879 = vmul.f32 %v3853, %v3772
        %v3880 = vmul.f32 %v3856, %v3772
        %v3881 = vmul.f32 %v3859, %v3772
        %v3882 = vmul.f32 %v3862, %v3772
        %v3883 = vmul.f32 %v3865, %v3772
        %v3884 = vmul.f32 %v3868, %v3772
        %v3885 = vadd.f32 %v3869, 1e-05
        %v3886 = vadd.f32 %v3870, 1e-05
        %v3887 = vadd.f32 %v3871, 1e-05
        %v3888 = vadd.f32 %v3872, 1e-05
        %v3889 = vadd.f32 %v3873, 1e-05
        %v3890 = vadd.f32 %v3874, 1e-05
        %v3891 = vadd.f32 %v3875, 1e-05
        %v3892 = vadd.f32 %v3876, 1e-05
        %v3893 = vadd.f32 %v3877, 1e-05
        %v3894 = vadd.f32 %v3878, 1e-05
        %v3895 = vadd.f32 %v3879, 1e-05
        %v3896 = vadd.f32 %v3880, 1e-05
        %v3897 = vadd.f32 %v3881, 1e-05
        %v3898 = vadd.f32 %v3882, 1e-05
        %v3899 = vadd.f32 %v3883, 1e-05
        %v3900 = vadd.f32 %v3884, 1e-05
        %v3901 = vrsqrt.pop %v3885
        %v3902 = vrsqrt.pop %v3886
        %v3903 = vrsqrt.pop %v3887
        %v3904 = vrsqrt.pop %v3888
        %v3905 = vrsqrt.pop %v3889
        %v3906 = vrsqrt.pop %v3890
        %v3907 = vrsqrt.pop %v3891
        %v3908 = vrsqrt.pop %v3892
        %v3909 = vrsqrt.pop %v3893
        %v3910 = vrsqrt.pop %v3894
        %v3911 = vrsqrt.pop %v3895
        %v3912 = vrsqrt.pop %v3896
        %v3913 = vrsqrt.pop %v3897
        %v3914 = vrsqrt.pop %v3898
        %v3915 = vrsqrt.pop %v3899
        %v3916 = vrsqrt.pop %v3900
        %v3917 = vmul.f32 %v3789, %v3901
        %v3918 = vmul.f32 %v3790, %v3902
        %v3919 = vmul.f32 %v3791, %v3903
        %v3920 = vmul.f32 %v3792, %v3904
        %v3921 = vmul.f32 %v3793, %v3905
        %v3922 = vmul.f32 %v3794, %v3906
        %v3923 = vmul.f32 %v3795, %v3907
        %v3924 = vmul.f32 %v3796, %v3908
        %v3925 = vmul.f32 %v3797, %v3909
        %v3926 = vmul.f32 %v3798, %v3910
        %v3927 = vmul.f32 %v3799, %v3911
        %v3928 = vmul.f32 %v3800, %v3912
        %v3929 = vmul.f32 %v3801, %v3913
        %v3930 = vmul.f32 %v3802, %v3914
        %v3931 = vmul.f32 %v3803, %v3915
        %v3932 = vmul.f32 %v3804, %v3916
        %v3934 = vlaneseq
        %v3935 = vshrl.u32 %v3934, 7
        %v3936 = vsub.s32 0, %v3935
        %v3937 = vrot.slane %v3722, %v3936
        %v3939 = vmul.f32 %v3917, %v3937
        %v3940 = vmul.f32 %v3918, %v3937
        %v3941 = vmul.f32 %v3919, %v3937
        %v3942 = vmul.f32 %v3920, %v3937
        %v3943 = vmul.f32 %v3921, %v3937
        %v3944 = vmul.f32 %v3922, %v3937
        %v3945 = vmul.f32 %v3923, %v3937
        %v3946 = vmul.f32 %v3924, %v3937
        %v3947 = vmul.f32 %v3925, %v3937
        %v3948 = vmul.f32 %v3926, %v3937
        %v3949 = vmul.f32 %v3927, %v3937
        %v3950 = vmul.f32 %v3928, %v3937
        %v3951 = vmul.f32 %v3929, %v3937
        %v3952 = vmul.f32 %v3930, %v3937
        %v3953 = vmul.f32 %v3931, %v3937
        %v3954 = vmul.f32 %v3932, %v3937
        %v3956 = vlaneseq
        %v3957 = vshrl.u32 %v3956, 7
        %v3958 = vsub.s32 0, %v3957
        %v3959 = vrot.slane %v3723, %v3958
        %v3961 = vadd.f32 %v3939, %v3959
        %v3962 = vadd.f32 %v3940, %v3959
        %v3963 = vadd.f32 %v3941, %v3959
        %v3964 = vadd.f32 %v3942, %v3959
        %v3965 = vadd.f32 %v3943, %v3959
        %v3966 = vadd.f32 %v3944, %v3959
        %v3967 = vadd.f32 %v3945, %v3959
        %v3968 = vadd.f32 %v3946, %v3959
        %v3969 = vadd.f32 %v3947, %v3959
        %v3970 = vadd.f32 %v3948, %v3959
        %v3971 = vadd.f32 %v3949, %v3959
        %v3972 = vadd.f32 %v3950, %v3959
        %v3973 = vadd.f32 %v3951, %v3959
        %v3974 = vadd.f32 %v3952, %v3959
        %v3975 = vadd.f32 %v3953, %v3959
        %v3976 = vadd.f32 %v3954, %v3959
        %v3977 = vpack.c.bf16 %v3962, %v3961
        %v3978 = vpack.c.bf16 %v3964, %v3963
        %v3979 = vpack.c.bf16 %v3966, %v3965
        %v3980 = vpack.c.bf16 %v3968, %v3967
        %v3981 = vpack.c.bf16 %v3970, %v3969
        %v3982 = vpack.c.bf16 %v3972, %v3971
        %v3983 = vpack.c.bf16 %v3974, %v3973
        %v3984 = vpack.c.bf16 %v3976, %v3975
        %v3985 = vld [vmem:[%s9] sm:$0xff]
        %v3986 = vld [vmem:[%s9 + $0x8] sm:$0xff]
        %v3987 = vld [vmem:[%s9 + $0x10] sm:$0xff]
        %v3988 = vld [vmem:[%s9 + $0x18] sm:$0xff]
        %v3989 = vld [vmem:[%s9 + $0x20] sm:$0xff]
        %v3990 = vld [vmem:[%s9 + $0x28] sm:$0xff]
        %v3991 = vld [vmem:[%s9 + $0x30] sm:$0xff]
        %v3992 = vld [vmem:[%s9 + $0x38] sm:$0xff]
        %v3993 = vld [vmem:[%s9 + $0x40] sm:$0xff]
        %v3994 = vld [vmem:[%s9 + $0x48] sm:$0xff]
        %v3995 = vld [vmem:[%s10] sm:$0x3]
        %v3997 = vlaneseq
        %v3998 = vshrl.u32 %v3997, 7
        %v3999 = vsub.s32 0, %v3998
        %v4000 = vrot.slane %v3995, %v3999
        %v4001 = vlaneseq
        %v4002 = vshrl.u32 %v4001, 7
        %v4003 = vsub.s32 1, %v4002
        %v4004 = vrot.slane %v3995, %v4003
        %v4017 = vunpack.c.l.b16 %v3985
        %v4018 = vunpack.c.h.b16 %v3985
        %v4019 = vunpack.c.l.b16 %v3986
        %v4020 = vunpack.c.h.b16 %v3986
        %v4021 = vunpack.c.l.b16 %v3987
        %v4022 = vunpack.c.h.b16 %v3987
        %v4023 = vunpack.c.l.b16 %v3988
        %v4024 = vunpack.c.h.b16 %v3988
        %v4025 = vunpack.c.l.b16 %v3989
        %v4026 = vunpack.c.h.b16 %v3989
        %v4027 = vunpack.c.l.b16 %v3990
        %v4028 = vunpack.c.h.b16 %v3990
        %v4029 = vunpack.c.l.b16 %v3991
        %v4030 = vunpack.c.h.b16 %v3991
        %v4031 = vunpack.c.l.b16 %v3992
        %v4032 = vunpack.c.h.b16 %v3992
        %v4033 = vunpack.c.l.b16 %v3993
        %v4034 = vunpack.c.h.b16 %v3993
        %v4035 = vunpack.c.l.b16 %v3994
        %v4036 = vunpack.c.h.b16 %v3994
        %v4037 = vpack.c.b16 %v4019, %v4017
        %v4038 = vpack.c.b16 %v4020, %v4018
        %v4039 = vpack.c.b16 %v4023, %v4021
        %v4040 = vpack.c.b16 %v4024, %v4022
        %v4041 = vpack.c.b16 %v4027, %v4025
        %v4042 = vpack.c.b16 %v4028, %v4026
        %v4043 = vpack.c.b16 %v4031, %v4029
        %v4044 = vpack.c.b16 %v4032, %v4030
        %v4045 = vpack.c.b16 %v4035, %v4033
        %v4046 = vpack.c.b16 %v4036, %v4034
        %v4058 = vsel %vm1187, %v3977, 0
        %v4061 = vsel %vm1187, %v3978, 0
        %v4064 = vsel %vm1187, %v3979, 0
        %v4067 = vsel %vm1187, %v3980, 0
        %v4070 = vsel %vm1187, %v3981, 0
        %v4073 = vsel %vm1187, %v3982, 0
        %v4076 = vsel %vm1187, %v3983, 0
        %v4079 = vsel %vm1187, %v3984, 0
        %4081 = vmatprep.subr.bf16.mxu0 %v4038
        %4082 = vmatpush1.bf16.msra.mxu0 %v4037
        %4083 = vmatprep.subr.bf16.mxu0 %v4040
        %4084 = vmatpush1.bf16.msra.mxu0 %v4039
        %4085 = vmatprep.subr.bf16.mxu0 %v4042
        %4086 = vmatpush1.bf16.msra.mxu0 %v4041
        %4087 = vmatprep.subr.bf16.mxu0 %v4044
        %4088 = vmatpush1.bf16.msra.mxu0 %v4043
        %4089 = vmatprep.subr.bf16.mxu0 %v4046
        %4090 = vmatpush1.bf16.msra.mxu0 %v4045
        %4091 = vmatprep.subr.bf16.mxu0 0
        %4092 = vmatpush1.bf16.msra.mxu0 0
        %4093 = vmatprep.subr.bf16.mxu0 0
        %4094 = vmatpush1.bf16.msra.mxu0 0
        %4095 = vmatprep.subr.bf16.mxu0 0
        %4096 = vmatpush1.bf16.msra.mxu0 0
        %4097 = vmatprep.subr.bf16.mxu0 0
        %4098 = vmatpush1.bf16.msra.mxu0 0
        %4099 = vmatprep.subr.bf16.mxu0 0
        %4100 = vmatpush1.bf16.msra.mxu0 0
        %4101 = vmatprep.subr.bf16.mxu0 0
        %4102 = vmatpush1.bf16.msra.mxu0 0
        %4103 = vmatprep.subr.bf16.mxu0 0
        %4104 = vmatpush1.bf16.msra.mxu0 0
        %4105 = vmatprep.subr.bf16.mxu0 0
        %4106 = vmatpush1.bf16.msra.mxu0 0
        %4107 = vmatprep.subr.bf16.mxu0 0
        %4108 = vmatpush1.bf16.msra.mxu0 0
        %4109 = vmatprep.subr.bf16.mxu0 0
        %4110 = vmatpush1.bf16.msra.mxu0 0
        %4111 = vmatprep.subr.bf16.mxu0 0
        %4112 = vmatpush1.bf16.msra.mxu0 0
        %4113 = vmatprep.mubr.bf16.mxu0 0
        %4114 = vmatmul.mubr.bf16.gmra.mrb[0].mxu0 %v4058
        %v4115 = vpop.f32.mrb[0].mxu0
        %v4116 = vadd.f32 %v4000, %v4115
        %v4117 = vpop.f32.mrb[0].mxu0
        %v4118 = vadd.f32 %v4004, %v4117
        %v4119 = vpop.f32.mrb[0].mxu0
        %v4120 = vadd.f32 %v4000, %v4119
        %v4121 = vpop.f32.mrb[0].mxu0
        %v4122 = vadd.f32 %v4004, %v4121
        %4123 = vmatprep.mubr.bf16.mxu0 0
        %4124 = vmatmul.mubr.bf16.gmra.mrb[0].mxu0 %v4061
        %v4125 = vpop.f32.mrb[0].mxu0
        %v4126 = vadd.f32 %v4000, %v4125
        %v4127 = vpop.f32.mrb[0].mxu0
        %v4128 = vadd.f32 %v4004, %v4127
        %v4129 = vpop.f32.mrb[0].mxu0
        %v4130 = vadd.f32 %v4000, %v4129
        %v4131 = vpop.f32.mrb[0].mxu0
        %v4132 = vadd.f32 %v4004, %v4131
        %4133 = vmatprep.mubr.bf16.mxu0 0
        %4134 = vmatmul.mubr.bf16.gmra.mrb[0].mxu0 %v4064
        %v4135 = vpop.f32.mrb[0].mxu0
        %v4136 = vadd.f32 %v4000, %v4135
        %v4137 = vpop.f32.mrb[0].mxu0
        %v4138 = vadd.f32 %v4004, %v4137
        %v4139 = vpop.f32.mrb[0].mxu0
        %v4140 = vadd.f32 %v4000, %v4139
        %v4141 = vpop.f32.mrb[0].mxu0
        %v4142 = vadd.f32 %v4004, %v4141
        %4143 = vmatprep.mubr.bf16.mxu0 0
        %4144 = vmatmul.mubr.bf16.gmra.mrb[0].mxu0 %v4067
        %v4145 = vpop.f32.mrb[0].mxu0
        %v4146 = vadd.f32 %v4000, %v4145
        %v4147 = vpop.f32.mrb[0].mxu0
        %v4148 = vadd.f32 %v4004, %v4147
        %v4149 = vpop.f32.mrb[0].mxu0
        %v4150 = vadd.f32 %v4000, %v4149
        %v4151 = vpop.f32.mrb[0].mxu0
        %v4152 = vadd.f32 %v4004, %v4151
        %4153 = vmatprep.mubr.bf16.mxu0 0
        %4154 = vmatmul.mubr.bf16.gmra.mrb[0].mxu0 %v4070
        %v4155 = vpop.f32.mrb[0].mxu0
        %v4156 = vadd.f32 %v4000, %v4155
        %v4157 = vpop.f32.mrb[0].mxu0
        %v4158 = vadd.f32 %v4004, %v4157
        %v4159 = vpop.f32.mrb[0].mxu0
        %v4160 = vadd.f32 %v4000, %v4159
        %v4161 = vpop.f32.mrb[0].mxu0
        %v4162 = vadd.f32 %v4004, %v4161
        %4163 = vmatprep.mubr.bf16.mxu0 0
        %4164 = vmatmul.mubr.bf16.gmra.mrb[0].mxu0 %v4073
        %v4165 = vpop.f32.mrb[0].mxu0
        %v4166 = vadd.f32 %v4000, %v4165
        %v4167 = vpop.f32.mrb[0].mxu0
        %v4168 = vadd.f32 %v4004, %v4167
        %v4169 = vpop.f32.mrb[0].mxu0
        %v4170 = vadd.f32 %v4000, %v4169
        %v4171 = vpop.f32.mrb[0].mxu0
        %v4172 = vadd.f32 %v4004, %v4171
        %4173 = vmatprep.mubr.bf16.mxu0 0
        %4174 = vmatmul.mubr.bf16.gmra.mrb[0].mxu0 %v4076
        %v4175 = vpop.f32.mrb[0].mxu0
        %v4176 = vadd.f32 %v4000, %v4175
        %v4177 = vpop.f32.mrb[0].mxu0
        %v4178 = vadd.f32 %v4004, %v4177
        %v4179 = vpop.f32.mrb[0].mxu0
        %v4180 = vadd.f32 %v4000, %v4179
        %v4181 = vpop.f32.mrb[0].mxu0
        %v4182 = vadd.f32 %v4004, %v4181
        %4183 = vmatprep.mubr.bf16.mxu0 0
        %4184 = vmatmul.mubr.bf16.gmra.mrb[0].mxu0 %v4079
        %v4185 = vpop.f32.mrb[0].mxu0
        %v4186 = vadd.f32 %v4000, %v4185
        %v4187 = vpop.f32.mrb[0].mxu0
        %v4188 = vadd.f32 %v4004, %v4187
        %v4189 = vpop.f32.mrb[0].mxu0
        %v4190 = vadd.f32 %v4000, %v4189
        %v4191 = vpop.f32.mrb[0].mxu0
        %v4192 = vadd.f32 %v4004, %v4191
        %4193 = vdwg.mxu0
        %v4194 = vmax.f32 %v4116, 0.0
        %v4195 = vmax.f32 %v4118, 0.0
        %v4196 = vmax.f32 %v4120, 0.0
        %v4197 = vmax.f32 %v4122, 0.0
        %v4198 = vmax.f32 %v4126, 0.0
        %v4199 = vmax.f32 %v4128, 0.0
        %v4200 = vmax.f32 %v4130, 0.0
        %v4201 = vmax.f32 %v4132, 0.0
        %v4202 = vmax.f32 %v4136, 0.0
        %v4203 = vmax.f32 %v4138, 0.0
        %v4204 = vmax.f32 %v4140, 0.0
        %v4205 = vmax.f32 %v4142, 0.0
        %v4206 = vmax.f32 %v4146, 0.0
        %v4207 = vmax.f32 %v4148, 0.0
        %v4208 = vmax.f32 %v4150, 0.0
        %v4209 = vmax.f32 %v4152, 0.0
        %v4210 = vmax.f32 %v4156, 0.0
        %v4211 = vmax.f32 %v4158, 0.0
        %v4212 = vmax.f32 %v4160, 0.0
        %v4213 = vmax.f32 %v4162, 0.0
        %v4214 = vmax.f32 %v4166, 0.0
        %v4215 = vmax.f32 %v4168, 0.0
        %v4216 = vmax.f32 %v4170, 0.0
        %v4217 = vmax.f32 %v4172, 0.0
        %v4218 = vmax.f32 %v4176, 0.0
        %v4219 = vmax.f32 %v4178, 0.0
        %v4220 = vmax.f32 %v4180, 0.0
        %v4221 = vmax.f32 %v4182, 0.0
        %v4222 = vmax.f32 %v4186, 0.0
        %v4223 = vmax.f32 %v4188, 0.0
        %v4224 = vmax.f32 %v4190, 0.0
        %v4225 = vmax.f32 %v4192, 0.0
        %v4226 = vpack.c.bf16 %v4196, %v4194
        %v4227 = vpack.c.bf16 %v4197, %v4195
        %v4228 = vpack.c.bf16 %v4200, %v4198
        %v4229 = vpack.c.bf16 %v4201, %v4199
        %v4230 = vpack.c.bf16 %v4204, %v4202
        %v4231 = vpack.c.bf16 %v4205, %v4203
        %v4232 = vpack.c.bf16 %v4208, %v4206
        %v4233 = vpack.c.bf16 %v4209, %v4207
        %v4234 = vpack.c.bf16 %v4212, %v4210
        %v4235 = vpack.c.bf16 %v4213, %v4211
        %v4236 = vpack.c.bf16 %v4216, %v4214
        %v4237 = vpack.c.bf16 %v4217, %v4215
        %v4238 = vpack.c.bf16 %v4220, %v4218
        %v4239 = vpack.c.bf16 %v4221, %v4219
        %v4240 = vpack.c.bf16 %v4224, %v4222
        %v4241 = vpack.c.bf16 %v4225, %v4223
        %v4242 = vld [vmem:[%s11] sm:$0xf]
        %v4243 = vld [vmem:[%s11 + $0x4] sm:$0xf]
        %v4244 = vld [vmem:[%s11 + $0x8] sm:$0xf]
        %v4245 = vld [vmem:[%s11 + $0xc] sm:$0xf]
        %v4246 = vld [vmem:[%s11 + $0x10] sm:$0xf]
        %v4247 = vld [vmem:[%s11 + $0x14] sm:$0xf]
        %v4248 = vld [vmem:[%s11 + $0x18] sm:$0xf]
        %v4249 = vld [vmem:[%s11 + $0x1c] sm:$0xf]
        %v4250 = vld [vmem:[%s11 + $0x20] sm:$0xf]
        %v4251 = vld [vmem:[%s11 + $0x24] sm:$0xf]
        %v4252 = vld [vmem:[%s11 + $0x28] sm:$0xf]
        %v4253 = vld [vmem:[%s11 + $0x2c] sm:$0xf]
        %v4254 = vld [vmem:[%s11 + $0x30] sm:$0xf]
        %v4255 = vld [vmem:[%s11 + $0x34] sm:$0xf]
        %v4256 = vld [vmem:[%s11 + $0x38] sm:$0xf]
        %v4257 = vld [vmem:[%s11 + $0x3c] sm:$0xf]
        %v4258 = vld [vmem:[%s11 + $0x40] sm:$0xf]
        %v4259 = vld [vmem:[%s11 + $0x44] sm:$0xf]
        %v4260 = vld [vmem:[%s11 + $0x48] sm:$0xf]
        %v4261 = vld [vmem:[%s11 + $0x4c] sm:$0xf]
        %v4262 = vld [vmem:[%s11 + $0x50] sm:$0xf]
        %v4263 = vld [vmem:[%s11 + $0x54] sm:$0xf]
        %v4264 = vld [vmem:[%s11 + $0x58] sm:$0xf]
        %v4265 = vld [vmem:[%s11 + $0x5c] sm:$0xf]
        %v4266 = vld [vmem:[%s11 + $0x60] sm:$0xf]
        %v4267 = vld [vmem:[%s11 + $0x64] sm:$0xf]
        %v4268 = vld [vmem:[%s11 + $0x68] sm:$0xf]
        %v4269 = vld [vmem:[%s11 + $0x6c] sm:$0xf]
        %v4270 = vld [vmem:[%s11 + $0x70] sm:$0xf]
        %v4271 = vld [vmem:[%s11 + $0x74] sm:$0xf]
        %v4272 = vld [vmem:[%s11 + $0x78] sm:$0xf]
        %v4273 = vld [vmem:[%s11 + $0x7c] sm:$0xf]
        %v4274 = vld [vmem:[#allocation13] sm:$0x1]
        %v4276 = vlaneseq
        %v4277 = vshrl.u32 %v4276, 7
        %v4278 = vsub.s32 0, %v4277
        %v4279 = vrot.slane %v4274, %v4278
        %v4313 = vunpack.c.l.b16 %v4242
        %v4314 = vunpack.c.l.b16 %v4243
        %v4315 = vunpack.c.l.b16 %v4244
        %v4316 = vunpack.c.l.b16 %v4245
        %v4317 = vunpack.c.l.b16 %v4246
        %v4318 = vunpack.c.l.b16 %v4247
        %v4319 = vunpack.c.l.b16 %v4248
        %v4320 = vunpack.c.l.b16 %v4249
        %v4321 = vunpack.c.l.b16 %v4250
        %v4322 = vunpack.c.l.b16 %v4251
        %v4323 = vunpack.c.l.b16 %v4252
        %v4324 = vunpack.c.l.b16 %v4253
        %v4325 = vunpack.c.l.b16 %v4254
        %v4326 = vunpack.c.l.b16 %v4255
        %v4327 = vunpack.c.l.b16 %v4256
        %v4328 = vunpack.c.l.b16 %v4257
        %v4329 = vunpack.c.l.b16 %v4258
        %v4330 = vunpack.c.l.b16 %v4259
        %v4331 = vunpack.c.l.b16 %v4260
        %v4332 = vunpack.c.l.b16 %v4261
        %v4333 = vunpack.c.l.b16 %v4262
        %v4334 = vunpack.c.l.b16 %v4263
        %v4335 = vunpack.c.l.b16 %v4264
        %v4336 = vunpack.c.l.b16 %v4265
        %v4337 = vunpack.c.l.b16 %v4266
        %v4338 = vunpack.c.l.b16 %v4267
        %v4339 = vunpack.c.l.b16 %v4268
        %v4340 = vunpack.c.l.b16 %v4269
        %v4341 = vunpack.c.l.b16 %v4270
        %v4342 = vunpack.c.l.b16 %v4271
        %v4343 = vunpack.c.l.b16 %v4272
        %v4344 = vunpack.c.l.b16 %v4273
        %v4345 = vpack.c.b16 %v4314, %v4313
        %v4346 = vpack.c.b16 %v4316, %v4315
        %v4347 = vpack.c.b16 %v4318, %v4317
        %v4348 = vpack.c.b16 %v4320, %v4319
        %v4349 = vpack.c.b16 %v4322, %v4321
        %v4350 = vpack.c.b16 %v4324, %v4323
        %v4351 = vpack.c.b16 %v4326, %v4325
        %v4352 = vpack.c.b16 %v4328, %v4327
        %v4353 = vpack.c.b16 %v4330, %v4329
        %v4354 = vpack.c.b16 %v4332, %v4331
        %v4355 = vpack.c.b16 %v4334, %v4333
        %v4356 = vpack.c.b16 %v4336, %v4335
        %v4357 = vpack.c.b16 %v4338, %v4337
        %v4358 = vpack.c.b16 %v4340, %v4339
        %v4359 = vpack.c.b16 %v4342, %v4341
        %v4360 = vpack.c.b16 %v4344, %v4343
        %4377 = vmatprep.subr.bf16.mxu0 0
        %4378 = vmatpush1.bf16.msra.mxu0 %v4345
        %4379 = vmatprep.subr.bf16.mxu0 0
        %4380 = vmatpush1.bf16.msra.mxu0 %v4346
        %4381 = vmatprep.subr.bf16.mxu0 0
        %4382 = vmatpush1.bf16.msra.mxu0 %v4347
        %4383 = vmatprep.subr.bf16.mxu0 0
        %4384 = vmatpush1.bf16.msra.mxu0 %v4348
        %4385 = vmatprep.subr.bf16.mxu0 0
        %4386 = vmatpush1.bf16.msra.mxu0 %v4349
        %4387 = vmatprep.subr.bf16.mxu0 0
        %4388 = vmatpush1.bf16.msra.mxu0 %v4350
        %4389 = vmatprep.subr.bf16.mxu0 0
        %4390 = vmatpush1.bf16.msra.mxu0 %v4351
        %4391 = vmatprep.subr.bf16.mxu0 0
        %4392 = vmatpush1.bf16.msra.mxu0 %v4352
        %4393 = vmatprep.subr.bf16.mxu0 0
        %4394 = vmatpush1.bf16.msra.mxu0 %v4353
        %4395 = vmatprep.subr.bf16.mxu0 0
        %4396 = vmatpush1.bf16.msra.mxu0 %v4354
        %4397 = vmatprep.subr.bf16.mxu0 0
        %4398 = vmatpush1.bf16.msra.mxu0 %v4355
        %4399 = vmatprep.subr.bf16.mxu0 0
        %4400 = vmatpush1.bf16.msra.mxu0 %v4356
        %4401 = vmatprep.subr.bf16.mxu0 0
        %4402 = vmatpush1.bf16.msra.mxu0 %v4357
        %4403 = vmatprep.subr.bf16.mxu0 0
        %4404 = vmatpush1.bf16.msra.mxu0 %v4358
        %4405 = vmatprep.subr.bf16.mxu0 0
        %4406 = vmatpush1.bf16.msra.mxu0 %v4359
        %4407 = vmatprep.subr.bf16.mxu0 0
        %4408 = vmatpush1.bf16.msra.mxu0 %v4360
        %4409 = vmatprep.mubr.bf16.mxu0 %v4227
        %4410 = vmatmul.mubr.bf16.gmra.mrb[0].mxu0 %v4226
        %v4411 = vpop.f32.mrb[0].mxu0
        %v4412 = vadd.f32 %v4279, %v4411
        %v4413 = vpop.f32.mrb[0].mxu0
        %v4414 = vpop.f32.mrb[0].mxu0
        %v4415 = vadd.f32 %v4279, %v4414
        %v4416 = vpop.f32.mrb[0].mxu0
        %4417 = vmatprep.mubr.bf16.mxu0 %v4229
        %4418 = vmatmul.mubr.bf16.gmra.mrb[0].mxu0 %v4228
        %v4419 = vpop.f32.mrb[0].mxu0
        %v4420 = vadd.f32 %v4279, %v4419
        %v4421 = vpop.f32.mrb[0].mxu0
        %v4422 = vpop.f32.mrb[0].mxu0
        %v4423 = vadd.f32 %v4279, %v4422
        %v4424 = vpop.f32.mrb[0].mxu0
        %4425 = vmatprep.mubr.bf16.mxu0 %v4231
        %4426 = vmatmul.mubr.bf16.gmra.mrb[0].mxu0 %v4230
        %v4427 = vpop.f32.mrb[0].mxu0
        %v4428 = vadd.f32 %v4279, %v4427
        %v4429 = vpop.f32.mrb[0].mxu0
        %v4430 = vpop.f32.mrb[0].mxu0
        %v4431 = vadd.f32 %v4279, %v4430
        %v4432 = vpop.f32.mrb[0].mxu0
        %4433 = vmatprep.mubr.bf16.mxu0 %v4233
        %4434 = vmatmul.mubr.bf16.gmra.mrb[0].mxu0 %v4232
        %v4435 = vpop.f32.mrb[0].mxu0
        %v4436 = vadd.f32 %v4279, %v4435
        %v4437 = vpop.f32.mrb[0].mxu0
        %v4438 = vpop.f32.mrb[0].mxu0
        %v4439 = vadd.f32 %v4279, %v4438
        %v4440 = vpop.f32.mrb[0].mxu0
        %4441 = vmatprep.mubr.bf16.mxu0 %v4235
        %4442 = vmatmul.mubr.bf16.gmra.mrb[0].mxu0 %v4234
        %v4443 = vpop.f32.mrb[0].mxu0
        %v4444 = vadd.f32 %v4279, %v4443
        %v4445 = vpop.f32.mrb[0].mxu0
        %v4446 = vpop.f32.mrb[0].mxu0
        %v4447 = vadd.f32 %v4279, %v4446
        %v4448 = vpop.f32.mrb[0].mxu0
        %4449 = vmatprep.mubr.bf16.mxu0 %v4237
        %4450 = vmatmul.mubr.bf16.gmra.mrb[0].mxu0 %v4236
        %v4451 = vpop.f32.mrb[0].mxu0
        %v4452 = vadd.f32 %v4279, %v4451
        %v4453 = vpop.f32.mrb[0].mxu0
        %v4454 = vpop.f32.mrb[0].mxu0
        %v4455 = vadd.f32 %v4279, %v4454
        %v4456 = vpop.f32.mrb[0].mxu0
        %4457 = vmatprep.mubr.bf16.mxu0 %v4239
        %4458 = vmatmul.mubr.bf16.gmra.mrb[0].mxu0 %v4238
        %v4459 = vpop.f32.mrb[0].mxu0
        %v4460 = vadd.f32 %v4279, %v4459
        %v4461 = vpop.f32.mrb[0].mxu0
        %v4462 = vpop.f32.mrb[0].mxu0
        %v4463 = vadd.f32 %v4279, %v4462
        %v4464 = vpop.f32.mrb[0].mxu0
        %4465 = vmatprep.mubr.bf16.mxu0 %v4241
        %4466 = vmatmul.mubr.bf16.gmra.mrb[0].mxu0 %v4240
        %v4467 = vpop.f32.mrb[0].mxu0
        %v4468 = vadd.f32 %v4279, %v4467
        %v4469 = vpop.f32.mrb[0].mxu0
        %v4470 = vpop.f32.mrb[0].mxu0
        %v4471 = vadd.f32 %v4279, %v4470
        %v4472 = vpop.f32.mrb[0].mxu0
        %4473 = vdwg.mxu0
        %v4474 = vadd.f32 %v3961, %v4412
        %v4475 = vadd.f32 %v3962, %v4415
        %v4476 = vadd.f32 %v3963, %v4420
        %v4477 = vadd.f32 %v3964, %v4423
        %v4478 = vadd.f32 %v3965, %v4428
        %v4479 = vadd.f32 %v3966, %v4431
        %v4480 = vadd.f32 %v3967, %v4436
        %v4481 = vadd.f32 %v3968, %v4439
        %v4482 = vadd.f32 %v3969, %v4444
        %v4483 = vadd.f32 %v3970, %v4447
        %v4484 = vadd.f32 %v3971, %v4452
        %v4485 = vadd.f32 %v3972, %v4455
        %v4486 = vadd.f32 %v3973, %v4460
        %v4487 = vadd.f32 %v3974, %v4463
        %v4488 = vadd.f32 %v3975, %v4468
        %v4489 = vadd.f32 %v3976, %v4471
        %v4490 = vld [vmem:[#allocation14] sm:$0x1]
        %v4491 = vld [vmem:[#allocation16] sm:$0x1]
        %v4492 = vsel %vm1187, %v4474, 0.0
        %4493 = vadd.xlane.f32.xlu0 %v4492
        %v4494 = vpop.xlane.xlu0 %4493
        %v4495 = vsel %vm1187, %v4475, 0.0
        %4496 = vadd.xlane.f32.xlu0 %v4495
        %v4497 = vpop.xlane.xlu0 %4496
        %v4498 = vsel %vm1187, %v4476, 0.0
        %4499 = vadd.xlane.f32.xlu0 %v4498
        %v4500 = vpop.xlane.xlu0 %4499
        %v4501 = vsel %vm1187, %v4477, 0.0
        %4502 = vadd.xlane.f32.xlu0 %v4501
        %v4503 = vpop.xlane.xlu0 %4502
        %v4504 = vsel %vm1187, %v4478, 0.0
        %4505 = vadd.xlane.f32.xlu0 %v4504
        %v4506 = vpop.xlane.xlu0 %4505
        %v4507 = vsel %vm1187, %v4479, 0.0
        %4508 = vadd.xlane.f32.xlu0 %v4507
        %v4509 = vpop.xlane.xlu0 %4508
        %v4510 = vsel %vm1187, %v4480, 0.0
        %4511 = vadd.xlane.f32.xlu0 %v4510
        %v4512 = vpop.xlane.xlu0 %4511
        %v4513 = vsel %vm1187, %v4481, 0.0
        %4514 = vadd.xlane.f32.xlu0 %v4513
        %v4515 = vpop.xlane.xlu0 %4514
        %v4516 = vsel %vm1187, %v4482, 0.0
        %4517 = vadd.xlane.f32.xlu0 %v4516
        %v4518 = vpop.xlane.xlu0 %4517
        %v4519 = vsel %vm1187, %v4483, 0.0
        %4520 = vadd.xlane.f32.xlu0 %v4519
        %v4521 = vpop.xlane.xlu0 %4520
        %v4522 = vsel %vm1187, %v4484, 0.0
        %4523 = vadd.xlane.f32.xlu0 %v4522
        %v4524 = vpop.xlane.xlu0 %4523
        %v4525 = vsel %vm1187, %v4485, 0.0
        %4526 = vadd.xlane.f32.xlu0 %v4525
        %v4527 = vpop.xlane.xlu0 %4526
        %v4528 = vsel %vm1187, %v4486, 0.0
        %4529 = vadd.xlane.f32.xlu0 %v4528
        %v4530 = vpop.xlane.xlu0 %4529
        %v4531 = vsel %vm1187, %v4487, 0.0
        %4532 = vadd.xlane.f32.xlu0 %v4531
        %v4533 = vpop.xlane.xlu0 %4532
        %v4534 = vsel %vm1187, %v4488, 0.0
        %4535 = vadd.xlane.f32.xlu0 %v4534
        %v4536 = vpop.xlane.xlu0 %4535
        %v4537 = vsel %vm1187, %v4489, 0.0
        %4538 = vadd.xlane.f32.xlu0 %v4537
        %v4539 = vpop.xlane.xlu0 %4538
        %v4540 = vmul.f32 %v4494, %v3772
        %v4541 = vmul.f32 %v4497, %v3772
        %v4542 = vmul.f32 %v4500, %v3772
        %v4543 = vmul.f32 %v4503, %v3772
        %v4544 = vmul.f32 %v4506, %v3772
        %v4545 = vmul.f32 %v4509, %v3772
        %v4546 = vmul.f32 %v4512, %v3772
        %v4547 = vmul.f32 %v4515, %v3772
        %v4548 = vmul.f32 %v4518, %v3772
        %v4549 = vmul.f32 %v4521, %v3772
        %v4550 = vmul.f32 %v4524, %v3772
        %v4551 = vmul.f32 %v4527, %v3772
        %v4552 = vmul.f32 %v4530, %v3772
        %v4553 = vmul.f32 %v4533, %v3772
        %v4554 = vmul.f32 %v4536, %v3772
        %v4555 = vmul.f32 %v4539, %v3772
        %v4556 = vsub.f32 %v4474, %v4540
        %v4557 = vsub.f32 %v4475, %v4541
        %v4558 = vsub.f32 %v4476, %v4542
        %v4559 = vsub.f32 %v4477, %v4543
        %v4560 = vsub.f32 %v4478, %v4544
        %v4561 = vsub.f32 %v4479, %v4545
        %v4562 = vsub.f32 %v4480, %v4546
        %v4563 = vsub.f32 %v4481, %v4547
        %v4564 = vsub.f32 %v4482, %v4548
        %v4565 = vsub.f32 %v4483, %v4549
        %v4566 = vsub.f32 %v4484, %v4550
        %v4567 = vsub.f32 %v4485, %v4551
        %v4568 = vsub.f32 %v4486, %v4552
        %v4569 = vsub.f32 %v4487, %v4553
        %v4570 = vsub.f32 %v4488, %v4554
        %v4571 = vsub.f32 %v4489, %v4555
        %v4572 = vmul.f32 %v4556, %v4556
        %v4573 = vmul.f32 %v4557, %v4557
        %v4574 = vmul.f32 %v4558, %v4558
        %v4575 = vmul.f32 %v4559, %v4559
        %v4576 = vmul.f32 %v4560, %v4560
        %v4577 = vmul.f32 %v4561, %v4561
        %v4578 = vmul.f32 %v4562, %v4562
        %v4579 = vmul.f32 %v4563, %v4563
        %v4580 = vmul.f32 %v4564, %v4564
        %v4581 = vmul.f32 %v4565, %v4565
        %v4582 = vmul.f32 %v4566, %v4566
        %v4583 = vmul.f32 %v4567, %v4567
        %v4584 = vmul.f32 %v4568, %v4568
        %v4585 = vmul.f32 %v4569, %v4569
        %v4586 = vmul.f32 %v4570, %v4570
        %v4587 = vmul.f32 %v4571, %v4571
        %v4588 = vsel %vm1187, %v4572, 0.0
        %4589 = vadd.xlane.f32.xlu0 %v4588
        %v4590 = vpop.xlane.xlu0 %4589
        %v4591 = vsel %vm1187, %v4573, 0.0
        %4592 = vadd.xlane.f32.xlu0 %v4591
        %v4593 = vpop.xlane.xlu0 %4592
        %v4594 = vsel %vm1187, %v4574, 0.0
        %4595 = vadd.xlane.f32.xlu0 %v4594
        %v4596 = vpop.xlane.xlu0 %4595
        %v4597 = vsel %vm1187, %v4575, 0.0
        %4598 = vadd.xlane.f32.xlu0 %v4597
        %v4599 = vpop.xlane.xlu0 %4598
        %v4600 = vsel %vm1187, %v4576, 0.0
        %4601 = vadd.xlane.f32.xlu0 %v4600
        %v4602 = vpop.xlane.xlu0 %4601
        %v4603 = vsel %vm1187, %v4577, 0.0
        %4604 = vadd.xlane.f32.xlu0 %v4603
        %v4605 = vpop.xlane.xlu0 %4604
        %v4606 = vsel %vm1187, %v4578, 0.0
        %4607 = vadd.xlane.f32.xlu0 %v4606
        %v4608 = vpop.xlane.xlu0 %4607
        %v4609 = vsel %vm1187, %v4579, 0.0
        %4610 = vadd.xlane.f32.xlu0 %v4609
        %v4611 = vpop.xlane.xlu0 %4610
        %v4612 = vsel %vm1187, %v4580, 0.0
        %4613 = vadd.xlane.f32.xlu0 %v4612
        %v4614 = vpop.xlane.xlu0 %4613
        %v4615 = vsel %vm1187, %v4581, 0.0
        %4616 = vadd.xlane.f32.xlu0 %v4615
        %v4617 = vpop.xlane.xlu0 %4616
        %v4618 = vsel %vm1187, %v4582, 0.0
        %4619 = vadd.xlane.f32.xlu0 %v4618
        %v4620 = vpop.xlane.xlu0 %4619
        %v4621 = vsel %vm1187, %v4583, 0.0
        %4622 = vadd.xlane.f32.xlu0 %v4621
        %v4623 = vpop.xlane.xlu0 %4622
        %v4624 = vsel %vm1187, %v4584, 0.0
        %4625 = vadd.xlane.f32.xlu0 %v4624
        %v4626 = vpop.xlane.xlu0 %4625
        %v4627 = vsel %vm1187, %v4585, 0.0
        %4628 = vadd.xlane.f32.xlu0 %v4627
        %v4629 = vpop.xlane.xlu0 %4628
        %v4630 = vsel %vm1187, %v4586, 0.0
        %4631 = vadd.xlane.f32.xlu0 %v4630
        %v4632 = vpop.xlane.xlu0 %4631
        %v4633 = vsel %vm1187, %v4587, 0.0
        %4634 = vadd.xlane.f32.xlu0 %v4633
        %v4635 = vpop.xlane.xlu0 %4634
        %v4636 = vmul.f32 %v4590, %v3772
        %v4637 = vmul.f32 %v4593, %v3772
        %v4638 = vmul.f32 %v4596, %v3772
        %v4639 = vmul.f32 %v4599, %v3772
        %v4640 = vmul.f32 %v4602, %v3772
        %v4641 = vmul.f32 %v4605, %v3772
        %v4642 = vmul.f32 %v4608, %v3772
        %v4643 = vmul.f32 %v4611, %v3772
        %v4644 = vmul.f32 %v4614, %v3772
        %v4645 = vmul.f32 %v4617, %v3772
        %v4646 = vmul.f32 %v4620, %v3772
        %v4647 = vmul.f32 %v4623, %v3772
        %v4648 = vmul.f32 %v4626, %v3772
        %v4649 = vmul.f32 %v4629, %v3772
        %v4650 = vmul.f32 %v4632, %v3772
        %v4651 = vmul.f32 %v4635, %v3772
        %v4652 = vadd.f32 %v4636, 1e-05
        %v4653 = vadd.f32 %v4637, 1e-05
        %v4654 = vadd.f32 %v4638, 1e-05
        %v4655 = vadd.f32 %v4639, 1e-05
        %v4656 = vadd.f32 %v4640, 1e-05
        %v4657 = vadd.f32 %v4641, 1e-05
        %v4658 = vadd.f32 %v4642, 1e-05
        %v4659 = vadd.f32 %v4643, 1e-05
        %v4660 = vadd.f32 %v4644, 1e-05
        %v4661 = vadd.f32 %v4645, 1e-05
        %v4662 = vadd.f32 %v4646, 1e-05
        %v4663 = vadd.f32 %v4647, 1e-05
        %v4664 = vadd.f32 %v4648, 1e-05
        %v4665 = vadd.f32 %v4649, 1e-05
        %v4666 = vadd.f32 %v4650, 1e-05
        %v4667 = vadd.f32 %v4651, 1e-05
        %v4668 = vrsqrt.pop %v4652
        %v4669 = vrsqrt.pop %v4653
        %v4670 = vrsqrt.pop %v4654
        %v4671 = vrsqrt.pop %v4655
        %v4672 = vrsqrt.pop %v4656
        %v4673 = vrsqrt.pop %v4657
        %v4674 = vrsqrt.pop %v4658
        %v4675 = vrsqrt.pop %v4659
        %v4676 = vrsqrt.pop %v4660
        %v4677 = vrsqrt.pop %v4661
        %v4678 = vrsqrt.pop %v4662
        %v4679 = vrsqrt.pop %v4663
        %v4680 = vrsqrt.pop %v4664
        %v4681 = vrsqrt.pop %v4665
        %v4682 = vrsqrt.pop %v4666
        %v4683 = vrsqrt.pop %v4667
        %v4684 = vmul.f32 %v4556, %v4668
        %v4685 = vmul.f32 %v4557, %v4669
        %v4686 = vmul.f32 %v4558, %v4670
        %v4687 = vmul.f32 %v4559, %v4671
        %v4688 = vmul.f32 %v4560, %v4672
        %v4689 = vmul.f32 %v4561, %v4673
        %v4690 = vmul.f32 %v4562, %v4674
        %v4691 = vmul.f32 %v4563, %v4675
        %v4692 = vmul.f32 %v4564, %v4676
        %v4693 = vmul.f32 %v4565, %v4677
        %v4694 = vmul.f32 %v4566, %v4678
        %v4695 = vmul.f32 %v4567, %v4679
        %v4696 = vmul.f32 %v4568, %v4680
        %v4697 = vmul.f32 %v4569, %v4681
        %v4698 = vmul.f32 %v4570, %v4682
        %v4699 = vmul.f32 %v4571, %v4683
        %v4701 = vlaneseq
        %v4702 = vshrl.u32 %v4701, 7
        %v4703 = vsub.s32 0, %v4702
        %v4704 = vrot.slane %v4490, %v4703
        %v4706 = vmul.f32 %v4684, %v4704
        %v4707 = vmul.f32 %v4685, %v4704
        %v4708 = vmul.f32 %v4686, %v4704
        %v4709 = vmul.f32 %v4687, %v4704
        %v4710 = vmul.f32 %v4688, %v4704
        %v4711 = vmul.f32 %v4689, %v4704
        %v4712 = vmul.f32 %v4690, %v4704
        %v4713 = vmul.f32 %v4691, %v4704
        %v4714 = vmul.f32 %v4692, %v4704
        %v4715 = vmul.f32 %v4693, %v4704
        %v4716 = vmul.f32 %v4694, %v4704
        %v4717 = vmul.f32 %v4695, %v4704
        %v4718 = vmul.f32 %v4696, %v4704
        %v4719 = vmul.f32 %v4697, %v4704
        %v4720 = vmul.f32 %v4698, %v4704
        %v4721 = vmul.f32 %v4699, %v4704
        %v4723 = vlaneseq
        %v4724 = vshrl.u32 %v4723, 7
        %v4725 = vsub.s32 0, %v4724
        %v4726 = vrot.slane %v4491, %v4725
        %v4728 = vadd.f32 %v4706, %v4726
        %v4729 = vadd.f32 %v4707, %v4726
        %v4730 = vadd.f32 %v4708, %v4726
        %v4731 = vadd.f32 %v4709, %v4726
        %v4732 = vadd.f32 %v4710, %v4726
        %v4733 = vadd.f32 %v4711, %v4726
        %v4734 = vadd.f32 %v4712, %v4726
        %v4735 = vadd.f32 %v4713, %v4726
        %v4736 = vadd.f32 %v4714, %v4726
        %v4737 = vadd.f32 %v4715, %v4726
        %v4738 = vadd.f32 %v4716, %v4726
        %v4739 = vadd.f32 %v4717, %v4726
        %v4740 = vadd.f32 %v4718, %v4726
        %v4741 = vadd.f32 %v4719, %v4726
        %v4742 = vadd.f32 %v4720, %v4726
        %v4743 = vadd.f32 %v4721, %v4726
        %v4744 = vpack.c.bf16 %v4729, %v4728
        %v4745 = vpack.c.bf16 %v4731, %v4730
        %v4746 = vpack.c.bf16 %v4733, %v4732
        %v4747 = vpack.c.bf16 %v4735, %v4734
        %v4748 = vpack.c.bf16 %v4737, %v4736
        %v4749 = vpack.c.bf16 %v4739, %v4738
        %v4750 = vpack.c.bf16 %v4741, %v4740
        %v4751 = vpack.c.bf16 %v4743, %v4742
        %s4752 = scalar_lea.vmem %s3, 240
        %v4753 = vld [vmem:[%s4752] sm:$0xff]
        %v4754 = vld [vmem:[%s4752 + $0x8] sm:$0xff]
        %v4755 = vld [vmem:[%s4752 + $0x10] sm:$0xff]
        %v4756 = vld [vmem:[%s4752 + $0x18] sm:$0xff]
        %v4757 = vld [vmem:[%s4752 + $0x20] sm:$0xff]
        %v4758 = vld [vmem:[%s4752 + $0x28] sm:$0xff]
        %v4759 = vld [vmem:[%s4752 + $0x30] sm:$0xff]
        %v4760 = vld [vmem:[%s4752 + $0x38] sm:$0xff]
        %v4761 = vld [vmem:[%s4752 + $0x40] sm:$0xff]
        %v4762 = vld [vmem:[%s4752 + $0x48] sm:$0xff]
        %v4763 = vld [vmem:[%s4752 + $0x50] sm:$0xff]
        %v4764 = vld [vmem:[%s4752 + $0x58] sm:$0xff]
        %v4765 = vld [vmem:[%s4752 + $0x60] sm:$0xff]
        %v4766 = vld [vmem:[%s4752 + $0x68] sm:$0xff]
        %v4767 = vld [vmem:[%s4752 + $0x70] sm:$0xff]
        %v4768 = vld [vmem:[%s4752 + $0x78] sm:$0xff]
        %v4769 = vld [vmem:[%s4752 + $0x80] sm:$0xff]
        %v4770 = vld [vmem:[%s4752 + $0x88] sm:$0xff]
        %v4771 = vld [vmem:[%s4752 + $0x90] sm:$0xff]
        %v4772 = vld [vmem:[%s4752 + $0x98] sm:$0xff]
        %v4773 = vld [vmem:[%s4752 + $0xa0] sm:$0xff]
        %v4774 = vld [vmem:[%s4752 + $0xa8] sm:$0xff]
        %v4775 = vld [vmem:[%s4752 + $0xb0] sm:$0xff]
        %v4776 = vld [vmem:[%s4752 + $0xb8] sm:$0xff]
        %v4777 = vld [vmem:[%s4752 + $0xc0] sm:$0xff]
        %v4778 = vld [vmem:[%s4752 + $0xc8] sm:$0xff]
        %v4779 = vld [vmem:[%s4752 + $0xd0] sm:$0xff]
        %v4780 = vld [vmem:[%s4752 + $0xd8] sm:$0xff]
        %v4781 = vld [vmem:[%s4752 + $0xe0] sm:$0xff]
        %v4782 = vld [vmem:[%s4752 + $0xe8] sm:$0xff]
        %s4783 = scalar_lea.vmem [#allocation7], 6
        %v4784 = vld [vmem:[%s4783] sm:$0x3f]
        %v4786 = vlaneseq
        %v4787 = vshrl.u32 %v4786, 7
        %v4788 = vsub.s32 0, %v4787
        %v4789 = vrot.slane %v4784, %v4788
        %v4790 = vlaneseq
        %v4791 = vshrl.u32 %v4790, 7
        %v4792 = vsub.s32 1, %v4791
        %v4793 = vrot.slane %v4784, %v4792
        %v4794 = vlaneseq
        %v4795 = vshrl.u32 %v4794, 7
        %v4796 = vsub.s32 2, %v4795
        %v4797 = vrot.slane %v4784, %v4796
        %v4798 = vlaneseq
        %v4799 = vshrl.u32 %v4798, 7
        %v4800 = vsub.s32 3, %v4799
        %v4801 = vrot.slane %v4784, %v4800
        %v4802 = vlaneseq
        %v4803 = vshrl.u32 %v4802, 7
        %v4804 = vsub.s32 4, %v4803
        %v4805 = vrot.slane %v4784, %v4804
        %v4806 = vlaneseq
        %v4807 = vshrl.u32 %v4806, 7
        %v4808 = vsub.s32 5, %v4807
        %v4809 = vrot.slane %v4784, %v4808
        %v4846 = vunpack.c.l.b16 %v4753
        %v4847 = vunpack.c.h.b16 %v4753
        %v4848 = vunpack.c.l.b16 %v4754
        %v4849 = vunpack.c.h.b16 %v4754
        %v4850 = vunpack.c.l.b16 %v4755
        %v4851 = vunpack.c.h.b16 %v4755
        %v4852 = vunpack.c.l.b16 %v4756
        %v4853 = vunpack.c.h.b16 %v4756
        %v4854 = vunpack.c.l.b16 %v4757
        %v4855 = vunpack.c.h.b16 %v4757
        %v4856 = vunpack.c.l.b16 %v4758
        %v4857 = vunpack.c.h.b16 %v4758
        %v4858 = vunpack.c.l.b16 %v4759
        %v4859 = vunpack.c.h.b16 %v4759
        %v4860 = vunpack.c.l.b16 %v4760
        %v4861 = vunpack.c.h.b16 %v4760
        %v4862 = vunpack.c.l.b16 %v4761
        %v4863 = vunpack.c.h.b16 %v4761
        %v4864 = vunpack.c.l.b16 %v4762
        %v4865 = vunpack.c.h.b16 %v4762
        %v4866 = vunpack.c.l.b16 %v4763
        %v4867 = vunpack.c.h.b16 %v4763
        %v4868 = vunpack.c.l.b16 %v4764
        %v4869 = vunpack.c.h.b16 %v4764
        %v4870 = vunpack.c.l.b16 %v4765
        %v4871 = vunpack.c.h.b16 %v4765
        %v4872 = vunpack.c.l.b16 %v4766
        %v4873 = vunpack.c.h.b16 %v4766
        %v4874 = vunpack.c.l.b16 %v4767
        %v4875 = vunpack.c.h.b16 %v4767
        %v4876 = vunpack.c.l.b16 %v4768
        %v4877 = vunpack.c.h.b16 %v4768
        %v4878 = vunpack.c.l.b16 %v4769
        %v4879 = vunpack.c.h.b16 %v4769
        %v4880 = vunpack.c.l.b16 %v4770
        %v4881 = vunpack.c.h.b16 %v4770
        %v4882 = vunpack.c.l.b16 %v4771
        %v4883 = vunpack.c.h.b16 %v4771
        %v4884 = vunpack.c.l.b16 %v4772
        %v4885 = vunpack.c.h.b16 %v4772
        %v4886 = vunpack.c.l.b16 %v4773
        %v4887 = vunpack.c.h.b16 %v4773
        %v4888 = vunpack.c.l.b16 %v4774
        %v4889 = vunpack.c.h.b16 %v4774
        %v4890 = vunpack.c.l.b16 %v4775
        %v4891 = vunpack.c.h.b16 %v4775
        %v4892 = vunpack.c.l.b16 %v4776
        %v4893 = vunpack.c.h.b16 %v4776
        %v4894 = vunpack.c.l.b16 %v4777
        %v4895 = vunpack.c.h.b16 %v4777
        %v4896 = vunpack.c.l.b16 %v4778
        %v4897 = vunpack.c.h.b16 %v4778
        %v4898 = vunpack.c.l.b16 %v4779
        %v4899 = vunpack.c.h.b16 %v4779
        %v4900 = vunpack.c.l.b16 %v4780
        %v4901 = vunpack.c.h.b16 %v4780
        %v4902 = vunpack.c.l.b16 %v4781
        %v4903 = vunpack.c.h.b16 %v4781
        %v4904 = vunpack.c.l.b16 %v4782
        %v4905 = vunpack.c.h.b16 %v4782
        %v4906 = vpack.c.b16 %v4852, %v4846
        %v4907 = vpack.c.b16 %v4853, %v4847
        %v4908 = vpack.c.b16 %v4854, %v4848
        %v4909 = vpack.c.b16 %v4855, %v4849
        %v4910 = vpack.c.b16 %v4856, %v4850
        %v4911 = vpack.c.b16 %v4857, %v4851
        %v4912 = vpack.c.b16 %v4864, %v4858
        %v4913 = vpack.c.b16 %v4865, %v4859
        %v4914 = vpack.c.b16 %v4866, %v4860
        %v4915 = vpack.c.b16 %v4867, %v4861
        %v4916 = vpack.c.b16 %v4868, %v4862
        %v4917 = vpack.c.b16 %v4869, %v4863
        %v4918 = vpack.c.b16 %v4876, %v4870
        %v4919 = vpack.c.b16 %v4877, %v4871
        %v4920 = vpack.c.b16 %v4878, %v4872
        %v4921 = vpack.c.b16 %v4879, %v4873
        %v4922 = vpack.c.b16 %v4880, %v4874
        %v4923 = vpack.c.b16 %v4881, %v4875
        %v4924 = vpack.c.b16 %v4888, %v4882
        %v4925 = vpack.c.b16 %v4889, %v4883
        %v4926 = vpack.c.b16 %v4890, %v4884
        %v4927 = vpack.c.b16 %v4891, %v4885
        %v4928 = vpack.c.b16 %v4892, %v4886
        %v4929 = vpack.c.b16 %v4893, %v4887
        %v4930 = vpack.c.b16 %v4900, %v4894
        %v4931 = vpack.c.b16 %v4901, %v4895
        %v4932 = vpack.c.b16 %v4902, %v4896
        %v4933 = vpack.c.b16 %v4903, %v4897
        %v4934 = vpack.c.b16 %v4904, %v4898
        %v4935 = vpack.c.b16 %v4905, %v4899
        %v4967 = vsel %vm1187, %v4744, 0
        %v4970 = vsel %vm1187, %v4745, 0
        %v4973 = vsel %vm1187, %v4746, 0
        %v4976 = vsel %vm1187, %v4747, 0
        %v4979 = vsel %vm1187, %v4748, 0
        %v4982 = vsel %vm1187, %v4749, 0
        %v4985 = vsel %vm1187, %v4750, 0
        %v4988 = vsel %vm1187, %v4751, 0
        %4990 = vmatprep.subr.bf16.mxu0 %v4907
        %4991 = vmatpush1.bf16.msra.mxu0 %v4906
        %4992 = vmatprep.subr.bf16.mxu0 %v4913
        %4993 = vmatpush1.bf16.msra.mxu0 %v4912
        %4994 = vmatprep.subr.bf16.mxu0 %v4919
        %4995 = vmatpush1.bf16.msra.mxu0 %v4918
        %4996 = vmatprep.subr.bf16.mxu0 %v4925
        %4997 = vmatpush1.bf16.msra.mxu0 %v4924
        %4998 = vmatprep.subr.bf16.mxu0 %v4931
        %4999 = vmatpush1.bf16.msra.mxu0 %v4930
        %5000 = vmatprep.subr.bf16.mxu0 0
        %5001 = vmatpush1.bf16.msra.mxu0 0
        %5002 = vmatprep.subr.bf16.mxu0 0
        %5003 = vmatpush1.bf16.msra.mxu0 0
        %5004 = vmatprep.subr.bf16.mxu0 0
        %5005 = vmatpush1.bf16.msra.mxu0 0
        %5006 = vmatprep.subr.bf16.mxu0 0
        %5007 = vmatpush1.bf16.msra.mxu0 0
        %5008 = vmatprep.subr.bf16.mxu0 0
        %5009 = vmatpush1.bf16.msra.mxu0 0
        %5010 = vmatprep.subr.bf16.mxu0 0
        %5011 = vmatpush1.bf16.msra.mxu0 0
        %5012 = vmatprep.subr.bf16.mxu0 0
        %5013 = vmatpush1.bf16.msra.mxu0 0
        %5014 = vmatprep.subr.bf16.mxu0 0
        %5015 = vmatpush1.bf16.msra.mxu0 0
        %5016 = vmatprep.subr.bf16.mxu0 0
        %5017 = vmatpush1.bf16.msra.mxu0 0
        %5018 = vmatprep.subr.bf16.mxu0 0
        %5019 = vmatpush1.bf16.msra.mxu0 0
        %5020 = vmatprep.subr.bf16.mxu0 0
        %5021 = vmatpush1.bf16.msra.mxu0 0
        %5022 = vmatprep.mubr.bf16.mxu0 0
        %5023 = vmatmul.mubr.bf16.gmra.mrb[0].mxu0 %v4967
        %v5024 = vpop.f32.mrb[0].mxu0
        %v5025 = vadd.f32 %v4789, %v5024
        %v5026 = vpop.f32.mrb[0].mxu0
        %v5027 = vadd.f32 %v4793, %v5026
        %v5028 = vpop.f32.mrb[0].mxu0
        %v5029 = vadd.f32 %v4789, %v5028
        %v5030 = vpop.f32.mrb[0].mxu0
        %v5031 = vadd.f32 %v4793, %v5030
        %5032 = vmatprep.mubr.bf16.mxu0 0
        %5033 = vmatmul.mubr.bf16.gmra.mrb[0].mxu0 %v4970
        %v5034 = vpop.f32.mrb[0].mxu0
        %v5035 = vadd.f32 %v4789, %v5034
        %v5036 = vpop.f32.mrb[0].mxu0
        %v5037 = vadd.f32 %v4793, %v5036
        %v5038 = vpop.f32.mrb[0].mxu0
        %v5039 = vadd.f32 %v4789, %v5038
        %v5040 = vpop.f32.mrb[0].mxu0
        %v5041 = vadd.f32 %v4793, %v5040
        %5042 = vmatprep.mubr.bf16.mxu0 0
        %5043 = vmatmul.mubr.bf16.gmra.mrb[0].mxu0 %v4973
        %v5044 = vpop.f32.mrb[0].mxu0
        %v5045 = vadd.f32 %v4789, %v5044
        %v5046 = vpop.f32.mrb[0].mxu0
        %v5047 = vadd.f32 %v4793, %v5046
        %v5048 = vpop.f32.mrb[0].mxu0
        %v5049 = vadd.f32 %v4789, %v5048
        %v5050 = vpop.f32.mrb[0].mxu0
        %v5051 = vadd.f32 %v4793, %v5050
        %5052 = vmatprep.mubr.bf16.mxu0 0
        %5053 = vmatmul.mubr.bf16.gmra.mrb[0].mxu0 %v4976
        %v5054 = vpop.f32.mrb[0].mxu0
        %v5055 = vadd.f32 %v4789, %v5054
        %v5056 = vpop.f32.mrb[0].mxu0
        %v5057 = vadd.f32 %v4793, %v5056
        %v5058 = vpop.f32.mrb[0].mxu0
        %v5059 = vadd.f32 %v4789, %v5058
        %v5060 = vpop.f32.mrb[0].mxu0
        %v5061 = vadd.f32 %v4793, %v5060
        %5062 = vmatprep.mubr.bf16.mxu0 0
        %5063 = vmatmul.mubr.bf16.gmra.mrb[0].mxu0 %v4979
        %v5064 = vpop.f32.mrb[0].mxu0
        %v5065 = vadd.f32 %v4789, %v5064
        %v5066 = vpop.f32.mrb[0].mxu0
        %v5067 = vadd.f32 %v4793, %v5066
        %v5068 = vpop.f32.mrb[0].mxu0
        %v5069 = vadd.f32 %v4789, %v5068
        %v5070 = vpop.f32.mrb[0].mxu0
        %v5071 = vadd.f32 %v4793, %v5070
        %5072 = vmatprep.mubr.bf16.mxu0 0
        %5073 = vmatmul.mubr.bf16.gmra.mrb[0].mxu0 %v4982
        %v5074 = vpop.f32.mrb[0].mxu0
        %v5075 = vadd.f32 %v4789, %v5074
        %v5076 = vpop.f32.mrb[0].mxu0
        %v5077 = vadd.f32 %v4793, %v5076
        %v5078 = vpop.f32.mrb[0].mxu0
        %v5079 = vadd.f32 %v4789, %v5078
        %v5080 = vpop.f32.mrb[0].mxu0
        %v5081 = vadd.f32 %v4793, %v5080
        %5082 = vmatprep.mubr.bf16.mxu0 0
        %5083 = vmatmul.mubr.bf16.gmra.mrb[0].mxu0 %v4985
        %v5084 = vpop.f32.mrb[0].mxu0
        %v5085 = vadd.f32 %v4789, %v5084
        %v5086 = vpop.f32.mrb[0].mxu0
        %v5087 = vadd.f32 %v4793, %v5086
        %v5088 = vpop.f32.mrb[0].mxu0
        %v5089 = vadd.f32 %v4789, %v5088
        %v5090 = vpop.f32.mrb[0].mxu0
        %v5091 = vadd.f32 %v4793, %v5090
        %5092 = vmatprep.mubr.bf16.mxu0 0
        %5093 = vmatmul.mubr.bf16.gmra.mrb[0].mxu0 %v4988
        %v5094 = vpop.f32.mrb[0].mxu0
        %v5095 = vadd.f32 %v4789, %v5094
        %v5096 = vpop.f32.mrb[0].mxu0
        %v5097 = vadd.f32 %v4793, %v5096
        %v5098 = vpop.f32.mrb[0].mxu0
        %v5099 = vadd.f32 %v4789, %v5098
        %v5100 = vpop.f32.mrb[0].mxu0
        %v5101 = vadd.f32 %v4793, %v5100
        %5102 = vdwg.mxu0
        %5103 = vmatprep.subr.bf16.mxu0 %v4909
        %5104 = vmatpush1.bf16.msra.mxu0 %v4908
        %5105 = vmatprep.subr.bf16.mxu0 %v4915
        %5106 = vmatpush1.bf16.msra.mxu0 %v4914
        %5107 = vmatprep.subr.bf16.mxu0 %v4921
        %5108 = vmatpush1.bf16.msra.mxu0 %v4920
        %5109 = vmatprep.subr.bf16.mxu0 %v4927
        %5110 = vmatpush1.bf16.msra.mxu0 %v4926
        %5111 = vmatprep.subr.bf16.mxu0 %v4933
        %5112 = vmatpush1.bf16.msra.mxu0 %v4932
        %5113 = vmatprep.subr.bf16.mxu0 0
        %5114 = vmatpush1.bf16.msra.mxu0 0
        %5115 = vmatprep.subr.bf16.mxu0 0
        %5116 = vmatpush1.bf16.msra.mxu0 0
        %5117 = vmatprep.subr.bf16.mxu0 0
        %5118 = vmatpush1.bf16.msra.mxu0 0
        %5119 = vmatprep.subr.bf16.mxu0 0
        %5120 = vmatpush1.bf16.msra.mxu0 0
        %5121 = vmatprep.subr.bf16.mxu0 0
        %5122 = vmatpush1.bf16.msra.mxu0 0
        %5123 = vmatprep.subr.bf16.mxu0 0
        %5124 = vmatpush1.bf16.msra.mxu0 0
        %5125 = vmatprep.subr.bf16.mxu0 0
        %5126 = vmatpush1.bf16.msra.mxu0 0
        %5127 = vmatprep.subr.bf16.mxu0 0
        %5128 = vmatpush1.bf16.msra.mxu0 0
        %5129 = vmatprep.subr.bf16.mxu0 0
        %5130 = vmatpush1.bf16.msra.mxu0 0
        %5131 = vmatprep.subr.bf16.mxu0 0
        %5132 = vmatpush1.bf16.msra.mxu0 0
        %5133 = vmatprep.subr.bf16.mxu0 0
        %5134 = vmatpush1.bf16.msra.mxu0 0
        %5135 = vmatprep.mubr.bf16.mxu0 0
        %5136 = vmatmul.mubr.bf16.gmra.mrb[0].mxu0 %v4967
        %v5137 = vpop.f32.mrb[0].mxu0
        %v5138 = vadd.f32 %v4797, %v5137
        %v5139 = vpop.f32.mrb[0].mxu0
        %v5140 = vadd.f32 %v4801, %v5139
        %v5141 = vpop.f32.mrb[0].mxu0
        %v5142 = vadd.f32 %v4797, %v5141
        %v5143 = vpop.f32.mrb[0].mxu0
        %v5144 = vadd.f32 %v4801, %v5143
        %5145 = vmatprep.mubr.bf16.mxu0 0
        %5146 = vmatmul.mubr.bf16.gmra.mrb[0].mxu0 %v4970
        %v5147 = vpop.f32.mrb[0].mxu0
        %v5148 = vadd.f32 %v4797, %v5147
        %v5149 = vpop.f32.mrb[0].mxu0
        %v5150 = vadd.f32 %v4801, %v5149
        %v5151 = vpop.f32.mrb[0].mxu0
        %v5152 = vadd.f32 %v4797, %v5151
        %v5153 = vpop.f32.mrb[0].mxu0
        %v5154 = vadd.f32 %v4801, %v5153
        %5155 = vmatprep.mubr.bf16.mxu0 0
        %5156 = vmatmul.mubr.bf16.gmra.mrb[0].mxu0 %v4973
        %v5157 = vpop.f32.mrb[0].mxu0
        %v5158 = vadd.f32 %v4797, %v5157
        %v5159 = vpop.f32.mrb[0].mxu0
        %v5160 = vadd.f32 %v4801, %v5159
        %v5161 = vpop.f32.mrb[0].mxu0
        %v5162 = vadd.f32 %v4797, %v5161
        %v5163 = vpop.f32.mrb[0].mxu0
        %v5164 = vadd.f32 %v4801, %v5163
        %5165 = vmatprep.mubr.bf16.mxu0 0
        %5166 = vmatmul.mubr.bf16.gmra.mrb[0].mxu0 %v4976
        %v5167 = vpop.f32.mrb[0].mxu0
        %v5168 = vadd.f32 %v4797, %v5167
        %v5169 = vpop.f32.mrb[0].mxu0
        %v5170 = vadd.f32 %v4801, %v5169
        %v5171 = vpop.f32.mrb[0].mxu0
        %v5172 = vadd.f32 %v4797, %v5171
        %v5173 = vpop.f32.mrb[0].mxu0
        %v5174 = vadd.f32 %v4801, %v5173
        %5175 = vmatprep.mubr.bf16.mxu0 0
        %5176 = vmatmul.mubr.bf16.gmra.mrb[0].mxu0 %v4979
        %v5177 = vpop.f32.mrb[0].mxu0
        %v5178 = vadd.f32 %v4797, %v5177
        %v5179 = vpop.f32.mrb[0].mxu0
        %v5180 = vadd.f32 %v4801, %v5179
        %v5181 = vpop.f32.mrb[0].mxu0
        %v5182 = vadd.f32 %v4797, %v5181
        %v5183 = vpop.f32.mrb[0].mxu0
        %v5184 = vadd.f32 %v4801, %v5183
        %5185 = vmatprep.mubr.bf16.mxu0 0
        %5186 = vmatmul.mubr.bf16.gmra.mrb[0].mxu0 %v4982
        %v5187 = vpop.f32.mrb[0].mxu0
        %v5188 = vadd.f32 %v4797, %v5187
        %v5189 = vpop.f32.mrb[0].mxu0
        %v5190 = vadd.f32 %v4801, %v5189
        %v5191 = vpop.f32.mrb[0].mxu0
        %v5192 = vadd.f32 %v4797, %v5191
        %v5193 = vpop.f32.mrb[0].mxu0
        %v5194 = vadd.f32 %v4801, %v5193
        %5195 = vmatprep.mubr.bf16.mxu0 0
        %5196 = vmatmul.mubr.bf16.gmra.mrb[0].mxu0 %v4985
        %v5197 = vpop.f32.mrb[0].mxu0
        %v5198 = vadd.f32 %v4797, %v5197
        %v5199 = vpop.f32.mrb[0].mxu0
        %v5200 = vadd.f32 %v4801, %v5199
        %v5201 = vpop.f32.mrb[0].mxu0
        %v5202 = vadd.f32 %v4797, %v5201
        %v5203 = vpop.f32.mrb[0].mxu0
        %v5204 = vadd.f32 %v4801, %v5203
        %5205 = vmatprep.mubr.bf16.mxu0 0
        %5206 = vmatmul.mubr.bf16.gmra.mrb[0].mxu0 %v4988
        %v5207 = vpop.f32.mrb[0].mxu0
        %v5208 = vadd.f32 %v4797, %v5207
        %v5209 = vpop.f32.mrb[0].mxu0
        %v5210 = vadd.f32 %v4801, %v5209
        %v5211 = vpop.f32.mrb[0].mxu0
        %v5212 = vadd.f32 %v4797, %v5211
        %v5213 = vpop.f32.mrb[0].mxu0
        %v5214 = vadd.f32 %v4801, %v5213
        %5215 = vdwg.mxu0
        %5216 = vmatprep.subr.bf16.mxu0 %v4911
        %5217 = vmatpush1.bf16.msra.mxu0 %v4910
        %5218 = vmatprep.subr.bf16.mxu0 %v4917
        %5219 = vmatpush1.bf16.msra.mxu0 %v4916
        %5220 = vmatprep.subr.bf16.mxu0 %v4923
        %5221 = vmatpush1.bf16.msra.mxu0 %v4922
        %5222 = vmatprep.subr.bf16.mxu0 %v4929
        %5223 = vmatpush1.bf16.msra.mxu0 %v4928
        %5224 = vmatprep.subr.bf16.mxu0 %v4935
        %5225 = vmatpush1.bf16.msra.mxu0 %v4934
        %5226 = vmatprep.subr.bf16.mxu0 0
        %5227 = vmatpush1.bf16.msra.mxu0 0
        %5228 = vmatprep.subr.bf16.mxu0 0
        %5229 = vmatpush1.bf16.msra.mxu0 0
        %5230 = vmatprep.subr.bf16.mxu0 0
        %5231 = vmatpush1.bf16.msra.mxu0 0
        %5232 = vmatprep.subr.bf16.mxu0 0
        %5233 = vmatpush1.bf16.msra.mxu0 0
        %5234 = vmatprep.subr.bf16.mxu0 0
        %5235 = vmatpush1.bf16.msra.mxu0 0
        %5236 = vmatprep.subr.bf16.mxu0 0
        %5237 = vmatpush1.bf16.msra.mxu0 0
        %5238 = vmatprep.subr.bf16.mxu0 0
        %5239 = vmatpush1.bf16.msra.mxu0 0
        %5240 = vmatprep.subr.bf16.mxu0 0
        %5241 = vmatpush1.bf16.msra.mxu0 0
        %5242 = vmatprep.subr.bf16.mxu0 0
        %5243 = vmatpush1.bf16.msra.mxu0 0
        %5244 = vmatprep.subr.bf16.mxu0 0
        %5245 = vmatpush1.bf16.msra.mxu0 0
        %5246 = vmatprep.subr.bf16.mxu0 0
        %5247 = vmatpush1.bf16.msra.mxu0 0
        %5248 = vmatprep.mubr.bf16.mxu0 0
        %5249 = vmatmul.mubr.bf16.gmra.mrb[0].mxu0 %v4967
        %v5250 = vpop.f32.mrb[0].mxu0
        %v5251 = vadd.f32 %v4805, %v5250
        %v5252 = vpop.f32.mrb[0].mxu0
        %v5253 = vadd.f32 %v4809, %v5252
        %v5254 = vpop.f32.mrb[0].mxu0
        %v5255 = vadd.f32 %v4805, %v5254
        %v5256 = vpop.f32.mrb[0].mxu0
        %v5257 = vadd.f32 %v4809, %v5256
        %5258 = vmatprep.mubr.bf16.mxu0 0
        %5259 = vmatmul.mubr.bf16.gmra.mrb[0].mxu0 %v4970
        %v5260 = vpop.f32.mrb[0].mxu0
        %v5261 = vadd.f32 %v4805, %v5260
        %v5262 = vpop.f32.mrb[0].mxu0
        %v5263 = vadd.f32 %v4809, %v5262
        %v5264 = vpop.f32.mrb[0].mxu0
        %v5265 = vadd.f32 %v4805, %v5264
        %v5266 = vpop.f32.mrb[0].mxu0
        %v5267 = vadd.f32 %v4809, %v5266
        %5268 = vmatprep.mubr.bf16.mxu0 0
        %5269 = vmatmul.mubr.bf16.gmra.mrb[0].mxu0 %v4973
        %v5270 = vpop.f32.mrb[0].mxu0
        %v5271 = vadd.f32 %v4805, %v5270
        %v5272 = vpop.f32.mrb[0].mxu0
        %v5273 = vadd.f32 %v4809, %v5272
        %v5274 = vpop.f32.mrb[0].mxu0
        %v5275 = vadd.f32 %v4805, %v5274
        %v5276 = vpop.f32.mrb[0].mxu0
        %v5277 = vadd.f32 %v4809, %v5276
        %5278 = vmatprep.mubr.bf16.mxu0 0
        %5279 = vmatmul.mubr.bf16.gmra.mrb[0].mxu0 %v4976
        %v5280 = vpop.f32.mrb[0].mxu0
        %v5281 = vadd.f32 %v4805, %v5280
        %v5282 = vpop.f32.mrb[0].mxu0
        %v5283 = vadd.f32 %v4809, %v5282
        %v5284 = vpop.f32.mrb[0].mxu0
        %v5285 = vadd.f32 %v4805, %v5284
        %v5286 = vpop.f32.mrb[0].mxu0
        %v5287 = vadd.f32 %v4809, %v5286
        %5288 = vmatprep.mubr.bf16.mxu0 0
        %5289 = vmatmul.mubr.bf16.gmra.mrb[0].mxu0 %v4979
        %v5290 = vpop.f32.mrb[0].mxu0
        %v5291 = vadd.f32 %v4805, %v5290
        %v5292 = vpop.f32.mrb[0].mxu0
        %v5293 = vadd.f32 %v4809, %v5292
        %v5294 = vpop.f32.mrb[0].mxu0
        %v5295 = vadd.f32 %v4805, %v5294
        %v5296 = vpop.f32.mrb[0].mxu0
        %v5297 = vadd.f32 %v4809, %v5296
        %5298 = vmatprep.mubr.bf16.mxu0 0
        %5299 = vmatmul.mubr.bf16.gmra.mrb[0].mxu0 %v4982
        %v5300 = vpop.f32.mrb[0].mxu0
        %v5301 = vadd.f32 %v4805, %v5300
        %v5302 = vpop.f32.mrb[0].mxu0
        %v5303 = vadd.f32 %v4809, %v5302
        %v5304 = vpop.f32.mrb[0].mxu0
        %v5305 = vadd.f32 %v4805, %v5304
        %v5306 = vpop.f32.mrb[0].mxu0
        %v5307 = vadd.f32 %v4809, %v5306
        %5308 = vmatprep.mubr.bf16.mxu0 0
        %5309 = vmatmul.mubr.bf16.gmra.mrb[0].mxu0 %v4985
        %v5310 = vpop.f32.mrb[0].mxu0
        %v5311 = vadd.f32 %v4805, %v5310
        %v5312 = vpop.f32.mrb[0].mxu0
        %v5313 = vadd.f32 %v4809, %v5312
        %v5314 = vpop.f32.mrb[0].mxu0
        %v5315 = vadd.f32 %v4805, %v5314
        %v5316 = vpop.f32.mrb[0].mxu0
        %v5317 = vadd.f32 %v4809, %v5316
        %5318 = vmatprep.mubr.bf16.mxu0 0
        %5319 = vmatmul.mubr.bf16.gmra.mrb[0].mxu0 %v4988
        %v5320 = vpop.f32.mrb[0].mxu0
        %v5321 = vadd.f32 %v4805, %v5320
        %v5322 = vpop.f32.mrb[0].mxu0
        %v5323 = vadd.f32 %v4809, %v5322
        %v5324 = vpop.f32.mrb[0].mxu0
        %v5325 = vadd.f32 %v4805, %v5324
        %v5326 = vpop.f32.mrb[0].mxu0
        %v5327 = vadd.f32 %v4809, %v5326
        %5328 = vdwg.mxu0
        %s5329 = scalar_lea.vmem [#allocation8], 1
        %v5330 = vld [vmem:[%s5329] sm:$0x1]
        %v5331 = vpack.c.bf16 %v5029, %v5025
        %v5332 = vpack.c.bf16 %v5039, %v5035
        %v5333 = vpack.c.bf16 %v5049, %v5045
        %v5334 = vpack.c.bf16 %v5059, %v5055
        %v5335 = vpack.c.bf16 %v5069, %v5065
        %v5336 = vpack.c.bf16 %v5079, %v5075
        %v5337 = vpack.c.bf16 %v5089, %v5085
        %v5338 = vpack.c.bf16 %v5099, %v5095
        %v5339 = vpack.c.bf16 %v5142, %v5138
        %v5340 = vpack.c.bf16 %v5152, %v5148
        %v5341 = vpack.c.bf16 %v5162, %v5158
        %v5342 = vpack.c.bf16 %v5172, %v5168
        %v5343 = vpack.c.bf16 %v5182, %v5178
        %v5344 = vpack.c.bf16 %v5192, %v5188
        %v5345 = vpack.c.bf16 %v5202, %v5198
        %v5346 = vpack.c.bf16 %v5212, %v5208
        %v5347 = vpack.c.bf16 %v5255, %v5251
        %v5348 = vpack.c.bf16 %v5265, %v5261
        %v5349 = vpack.c.bf16 %v5275, %v5271
        %v5350 = vpack.c.bf16 %v5285, %v5281
        %v5351 = vpack.c.bf16 %v5295, %v5291
        %v5352 = vpack.c.bf16 %v5305, %v5301
        %v5353 = vpack.c.bf16 %v5315, %v5311
        %v5354 = vpack.c.bf16 %v5325, %v5321
        %5355 = vmatprep.subr.bf16.mxu0 0
        %5356 = vmatpush1.bf16.xpose.msra.mxu0 %v5339
        %5357 = vmatprep.subr.bf16.mxu0 0
        %5358 = vmatpush1.bf16.xpose.msra.mxu0 0
        %5359 = vmatprep.subr.bf16.mxu0 0
        %5360 = vmatpush1.bf16.xpose.msra.mxu0 0
        %5361 = vmatprep.subr.bf16.mxu0 0
        %5362 = vmatpush1.bf16.xpose.msra.mxu0 0
        %5363 = vmatprep.subr.bf16.mxu0 0
        %5364 = vmatpush1.bf16.xpose.msra.mxu0 0
        %5365 = vmatprep.subr.bf16.mxu0 0
        %5366 = vmatpush1.bf16.xpose.msra.mxu0 0
        %5367 = vmatprep.subr.bf16.mxu0 0
        %5368 = vmatpush1.bf16.xpose.msra.mxu0 0
        %5369 = vmatprep.subr.bf16.mxu0 0
        %5370 = vmatpush1.bf16.xpose.msra.mxu0 0
        %5371 = vmatprep.subr.bf16.mxu0 0
        %5372 = vmatpush1.bf16.xpose.msra.mxu0 0
        %5373 = vmatprep.subr.bf16.mxu0 0
        %5374 = vmatpush1.bf16.xpose.msra.mxu0 0
        %5375 = vmatprep.subr.bf16.mxu0 0
        %5376 = vmatpush1.bf16.xpose.msra.mxu0 0
        %5377 = vmatprep.subr.bf16.mxu0 0
        %5378 = vmatpush1.bf16.xpose.msra.mxu0 0
        %5379 = vmatprep.subr.bf16.mxu0 0
        %5380 = vmatpush1.bf16.xpose.msra.mxu0 0
        %5381 = vmatprep.subr.bf16.mxu0 0
        %5382 = vmatpush1.bf16.xpose.msra.mxu0 0
        %5383 = vmatprep.subr.bf16.mxu0 0
        %5384 = vmatpush1.bf16.xpose.msra.mxu0 0
        %5385 = vmatprep.subr.bf16.mxu0 0
        %5386 = vmatpush1.bf16.xpose.msra.mxu0 0
        %5387 = vmatprep.mubr.bf16.mxu0 0
        %5388 = vmatmul.mubr.bf16.gmra.mrb[0].mxu0 %v5331
        %v5389 = vpop.f32.mrb[0].mxu0
        %v5390 = vadd.f32 0.0, %v5389
        %v5391 = vpop.f32.mrb[0].mxu0
        %v5392 = vpop.f32.mrb[0].mxu0
        %v5393 = vadd.f32 0.0, %v5392
        %v5394 = vpop.f32.mrb[0].mxu0
        %5395 = vdwg.mxu0
        %5396 = vmatprep.subr.bf16.mxu0 0
        %5397 = vmatpush1.bf16.xpose.msra.mxu0 %v5340
        %5398 = vmatprep.subr.bf16.mxu0 0
        %5399 = vmatpush1.bf16.xpose.msra.mxu0 0
        %5400 = vmatprep.subr.bf16.mxu0 0
        %5401 = vmatpush1.bf16.xpose.msra.mxu0 0
        %5402 = vmatprep.subr.bf16.mxu0 0
        %5403 = vmatpush1.bf16.xpose.msra.mxu0 0
        %5404 = vmatprep.subr.bf16.mxu0 0
        %5405 = vmatpush1.bf16.xpose.msra.mxu0 0
        %5406 = vmatprep.subr.bf16.mxu0 0
        %5407 = vmatpush1.bf16.xpose.msra.mxu0 0
        %5408 = vmatprep.subr.bf16.mxu0 0
        %5409 = vmatpush1.bf16.xpose.msra.mxu0 0
        %5410 = vmatprep.subr.bf16.mxu0 0
        %5411 = vmatpush1.bf16.xpose.msra.mxu0 0
        %5412 = vmatprep.subr.bf16.mxu0 0
        %5413 = vmatpush1.bf16.xpose.msra.mxu0 0
        %5414 = vmatprep.subr.bf16.mxu0 0
        %5415 = vmatpush1.bf16.xpose.msra.mxu0 0
        %5416 = vmatprep.subr.bf16.mxu0 0
        %5417 = vmatpush1.bf16.xpose.msra.mxu0 0
        %5418 = vmatprep.subr.bf16.mxu0 0
        %5419 = vmatpush1.bf16.xpose.msra.mxu0 0
        %5420 = vmatprep.subr.bf16.mxu0 0
        %5421 = vmatpush1.bf16.xpose.msra.mxu0 0
        %5422 = vmatprep.subr.bf16.mxu0 0
        %5423 = vmatpush1.bf16.xpose.msra.mxu0 0
        %5424 = vmatprep.subr.bf16.mxu0 0
        %5425 = vmatpush1.bf16.xpose.msra.mxu0 0
        %5426 = vmatprep.subr.bf16.mxu0 0
        %5427 = vmatpush1.bf16.xpose.msra.mxu0 0
        %5428 = vmatprep.mubr.bf16.mxu0 0
        %5429 = vmatmul.mubr.bf16.gmra.mrb[0].mxu0 %v5332
        %v5430 = vpop.f32.mrb[0].mxu0
        %v5431 = vadd.f32 0.0, %v5430
        %v5432 = vpop.f32.mrb[0].mxu0
        %v5433 = vpop.f32.mrb[0].mxu0
        %v5434 = vadd.f32 0.0, %v5433
        %v5435 = vpop.f32.mrb[0].mxu0
        %5436 = vdwg.mxu0
        %5437 = vmatprep.subr.bf16.mxu0 0
        %5438 = vmatpush1.bf16.xpose.msra.mxu0 %v5341
        %5439 = vmatprep.subr.bf16.mxu0 0
        %5440 = vmatpush1.bf16.xpose.msra.mxu0 0
        %5441 = vmatprep.subr.bf16.mxu0 0
        %5442 = vmatpush1.bf16.xpose.msra.mxu0 0
        %5443 = vmatprep.subr.bf16.mxu0 0
        %5444 = vmatpush1.bf16.xpose.msra.mxu0 0
        %5445 = vmatprep.subr.bf16.mxu0 0
        %5446 = vmatpush1.bf16.xpose.msra.mxu0 0
        %5447 = vmatprep.subr.bf16.mxu0 0
        %5448 = vmatpush1.bf16.xpose.msra.mxu0 0
        %5449 = vmatprep.subr.bf16.mxu0 0
        %5450 = vmatpush1.bf16.xpose.msra.mxu0 0
        %5451 = vmatprep.subr.bf16.mxu0 0
        %5452 = vmatpush1.bf16.xpose.msra.mxu0 0
        %5453 = vmatprep.subr.bf16.mxu0 0
        %5454 = vmatpush1.bf16.xpose.msra.mxu0 0
        %5455 = vmatprep.subr.bf16.mxu0 0
        %5456 = vmatpush1.bf16.xpose.msra.mxu0 0
        %5457 = vmatprep.subr.bf16.mxu0 0
        %5458 = vmatpush1.bf16.xpose.msra.mxu0 0
        %5459 = vmatprep.subr.bf16.mxu0 0
        %5460 = vmatpush1.bf16.xpose.msra.mxu0 0
        %5461 = vmatprep.subr.bf16.mxu0 0
        %5462 = vmatpush1.bf16.xpose.msra.mxu0 0
        %5463 = vmatprep.subr.bf16.mxu0 0
        %5464 = vmatpush1.bf16.xpose.msra.mxu0 0
        %5465 = vmatprep.subr.bf16.mxu0 0
        %5466 = vmatpush1.bf16.xpose.msra.mxu0 0
        %5467 = vmatprep.subr.bf16.mxu0 0
        %5468 = vmatpush1.bf16.xpose.msra.mxu0 0
        %5469 = vmatprep.mubr.bf16.mxu0 0
        %5470 = vmatmul.mubr.bf16.gmra.mrb[0].mxu0 %v5333
        %v5471 = vpop.f32.mrb[0].mxu0
        %v5472 = vadd.f32 0.0, %v5471
        %v5473 = vpop.f32.mrb[0].mxu0
        %v5474 = vpop.f32.mrb[0].mxu0
        %v5475 = vadd.f32 0.0, %v5474
        %v5476 = vpop.f32.mrb[0].mxu0
        %5477 = vdwg.mxu0
        %5478 = vmatprep.subr.bf16.mxu0 0
        %5479 = vmatpush1.bf16.xpose.msra.mxu0 %v5342
        %5480 = vmatprep.subr.bf16.mxu0 0
        %5481 = vmatpush1.bf16.xpose.msra.mxu0 0
        %5482 = vmatprep.subr.bf16.mxu0 0
        %5483 = vmatpush1.bf16.xpose.msra.mxu0 0
        %5484 = vmatprep.subr.bf16.mxu0 0
        %5485 = vmatpush1.bf16.xpose.msra.mxu0 0
        %5486 = vmatprep.subr.bf16.mxu0 0
        %5487 = vmatpush1.bf16.xpose.msra.mxu0 0
        %5488 = vmatprep.subr.bf16.mxu0 0
        %5489 = vmatpush1.bf16.xpose.msra.mxu0 0
        %5490 = vmatprep.subr.bf16.mxu0 0
        %5491 = vmatpush1.bf16.xpose.msra.mxu0 0
        %5492 = vmatprep.subr.bf16.mxu0 0
        %5493 = vmatpush1.bf16.xpose.msra.mxu0 0
        %5494 = vmatprep.subr.bf16.mxu0 0
        %5495 = vmatpush1.bf16.xpose.msra.mxu0 0
        %5496 = vmatprep.subr.bf16.mxu0 0
        %5497 = vmatpush1.bf16.xpose.msra.mxu0 0
        %5498 = vmatprep.subr.bf16.mxu0 0
        %5499 = vmatpush1.bf16.xpose.msra.mxu0 0
        %5500 = vmatprep.subr.bf16.mxu0 0
        %5501 = vmatpush1.bf16.xpose.msra.mxu0 0
        %5502 = vmatprep.subr.bf16.mxu0 0
        %5503 = vmatpush1.bf16.xpose.msra.mxu0 0
        %5504 = vmatprep.subr.bf16.mxu0 0
        %5505 = vmatpush1.bf16.xpose.msra.mxu0 0
        %5506 = vmatprep.subr.bf16.mxu0 0
        %5507 = vmatpush1.bf16.xpose.msra.mxu0 0
        %5508 = vmatprep.subr.bf16.mxu0 0
        %5509 = vmatpush1.bf16.xpose.msra.mxu0 0
        %5510 = vmatprep.mubr.bf16.mxu0 0
        %5511 = vmatmul.mubr.bf16.gmra.mrb[0].mxu0 %v5334
        %v5512 = vpop.f32.mrb[0].mxu0
        %v5513 = vadd.f32 0.0, %v5512
        %v5514 = vpop.f32.mrb[0].mxu0
        %v5515 = vpop.f32.mrb[0].mxu0
        %v5516 = vadd.f32 0.0, %v5515
        %v5517 = vpop.f32.mrb[0].mxu0
        %5518 = vdwg.mxu0
        %5519 = vmatprep.subr.bf16.mxu0 0
        %5520 = vmatpush1.bf16.xpose.msra.mxu0 %v5343
        %5521 = vmatprep.subr.bf16.mxu0 0
        %5522 = vmatpush1.bf16.xpose.msra.mxu0 0
        %5523 = vmatprep.subr.bf16.mxu0 0
        %5524 = vmatpush1.bf16.xpose.msra.mxu0 0
        %5525 = vmatprep.subr.bf16.mxu0 0
        %5526 = vmatpush1.bf16.xpose.msra.mxu0 0
        %5527 = vmatprep.subr.bf16.mxu0 0
        %5528 = vmatpush1.bf16.xpose.msra.mxu0 0
        %5529 = vmatprep.subr.bf16.mxu0 0
        %5530 = vmatpush1.bf16.xpose.msra.mxu0 0
        %5531 = vmatprep.subr.bf16.mxu0 0
        %5532 = vmatpush1.bf16.xpose.msra.mxu0 0
        %5533 = vmatprep.subr.bf16.mxu0 0
        %5534 = vmatpush1.bf16.xpose.msra.mxu0 0
        %5535 = vmatprep.subr.bf16.mxu0 0
        %5536 = vmatpush1.bf16.xpose.msra.mxu0 0
        %5537 = vmatprep.subr.bf16.mxu0 0
        %5538 = vmatpush1.bf16.xpose.msra.mxu0 0
        %5539 = vmatprep.subr.bf16.mxu0 0
        %5540 = vmatpush1.bf16.xpose.msra.mxu0 0
        %5541 = vmatprep.subr.bf16.mxu0 0
        %5542 = vmatpush1.bf16.xpose.msra.mxu0 0
        %5543 = vmatprep.subr.bf16.mxu0 0
        %5544 = vmatpush1.bf16.xpose.msra.mxu0 0
        %5545 = vmatprep.subr.bf16.mxu0 0
        %5546 = vmatpush1.bf16.xpose.msra.mxu0 0
        %5547 = vmatprep.subr.bf16.mxu0 0
        %5548 = vmatpush1.bf16.xpose.msra.mxu0 0
        %5549 = vmatprep.subr.bf16.mxu0 0
        %5550 = vmatpush1.bf16.xpose.msra.mxu0 0
        %5551 = vmatprep.mubr.bf16.mxu0 0
        %5552 = vmatmul.mubr.bf16.gmra.mrb[0].mxu0 %v5335
        %v5553 = vpop.f32.mrb[0].mxu0
        %v5554 = vadd.f32 0.0, %v5553
        %v5555 = vpop.f32.mrb[0].mxu0
        %v5556 = vpop.f32.mrb[0].mxu0
        %v5557 = vadd.f32 0.0, %v5556
        %v5558 = vpop.f32.mrb[0].mxu0
        %5559 = vdwg.mxu0
        %5560 = vmatprep.subr.bf16.mxu0 0
        %5561 = vmatpush1.bf16.xpose.msra.mxu0 %v5344
        %5562 = vmatprep.subr.bf16.mxu0 0
        %5563 = vmatpush1.bf16.xpose.msra.mxu0 0
        %5564 = vmatprep.subr.bf16.mxu0 0
        %5565 = vmatpush1.bf16.xpose.msra.mxu0 0
        %5566 = vmatprep.subr.bf16.mxu0 0
        %5567 = vmatpush1.bf16.xpose.msra.mxu0 0
        %5568 = vmatprep.subr.bf16.mxu0 0
        %5569 = vmatpush1.bf16.xpose.msra.mxu0 0
        %5570 = vmatprep.subr.bf16.mxu0 0
        %5571 = vmatpush1.bf16.xpose.msra.mxu0 0
        %5572 = vmatprep.subr.bf16.mxu0 0
        %5573 = vmatpush1.bf16.xpose.msra.mxu0 0
        %5574 = vmatprep.subr.bf16.mxu0 0
        %5575 = vmatpush1.bf16.xpose.msra.mxu0 0
        %5576 = vmatprep.subr.bf16.mxu0 0
        %5577 = vmatpush1.bf16.xpose.msra.mxu0 0
        %5578 = vmatprep.subr.bf16.mxu0 0
        %5579 = vmatpush1.bf16.xpose.msra.mxu0 0
        %5580 = vmatprep.subr.bf16.mxu0 0
        %5581 = vmatpush1.bf16.xpose.msra.mxu0 0
        %5582 = vmatprep.subr.bf16.mxu0 0
        %5583 = vmatpush1.bf16.xpose.msra.mxu0 0
        %5584 = vmatprep.subr.bf16.mxu0 0
        %5585 = vmatpush1.bf16.xpose.msra.mxu0 0
        %5586 = vmatprep.subr.bf16.mxu0 0
        %5587 = vmatpush1.bf16.xpose.msra.mxu0 0
        %5588 = vmatprep.subr.bf16.mxu0 0
        %5589 = vmatpush1.bf16.xpose.msra.mxu0 0
        %5590 = vmatprep.subr.bf16.mxu0 0
        %5591 = vmatpush1.bf16.xpose.msra.mxu0 0
        %5592 = vmatprep.mubr.bf16.mxu0 0
        %5593 = vmatmul.mubr.bf16.gmra.mrb[0].mxu0 %v5336
        %v5594 = vpop.f32.mrb[0].mxu0
        %v5595 = vadd.f32 0.0, %v5594
        %v5596 = vpop.f32.mrb[0].mxu0
        %v5597 = vpop.f32.mrb[0].mxu0
        %v5598 = vadd.f32 0.0, %v5597
        %v5599 = vpop.f32.mrb[0].mxu0
        %5600 = vdwg.mxu0
        %5601 = vmatprep.subr.bf16.mxu0 0
        %5602 = vmatpush1.bf16.xpose.msra.mxu0 %v5345
        %5603 = vmatprep.subr.bf16.mxu0 0
        %5604 = vmatpush1.bf16.xpose.msra.mxu0 0
        %5605 = vmatprep.subr.bf16.mxu0 0
        %5606 = vmatpush1.bf16.xpose.msra.mxu0 0
        %5607 = vmatprep.subr.bf16.mxu0 0
        %5608 = vmatpush1.bf16.xpose.msra.mxu0 0
        %5609 = vmatprep.subr.bf16.mxu0 0
        %5610 = vmatpush1.bf16.xpose.msra.mxu0 0
        %5611 = vmatprep.subr.bf16.mxu0 0
        %5612 = vmatpush1.bf16.xpose.msra.mxu0 0
        %5613 = vmatprep.subr.bf16.mxu0 0
        %5614 = vmatpush1.bf16.xpose.msra.mxu0 0
        %5615 = vmatprep.subr.bf16.mxu0 0
        %5616 = vmatpush1.bf16.xpose.msra.mxu0 0
        %5617 = vmatprep.subr.bf16.mxu0 0
        %5618 = vmatpush1.bf16.xpose.msra.mxu0 0
        %5619 = vmatprep.subr.bf16.mxu0 0
        %5620 = vmatpush1.bf16.xpose.msra.mxu0 0
        %5621 = vmatprep.subr.bf16.mxu0 0
        %5622 = vmatpush1.bf16.xpose.msra.mxu0 0
        %5623 = vmatprep.subr.bf16.mxu0 0
        %5624 = vmatpush1.bf16.xpose.msra.mxu0 0
        %5625 = vmatprep.subr.bf16.mxu0 0
        %5626 = vmatpush1.bf16.xpose.msra.mxu0 0
        %5627 = vmatprep.subr.bf16.mxu0 0
        %5628 = vmatpush1.bf16.xpose.msra.mxu0 0
        %5629 = vmatprep.subr.bf16.mxu0 0
        %5630 = vmatpush1.bf16.xpose.msra.mxu0 0
        %5631 = vmatprep.subr.bf16.mxu0 0
        %5632 = vmatpush1.bf16.xpose.msra.mxu0 0
        %5633 = vmatprep.mubr.bf16.mxu0 0
        %5634 = vmatmul.mubr.bf16.gmra.mrb[0].mxu0 %v5337
        %v5635 = vpop.f32.mrb[0].mxu0
        %v5636 = vadd.f32 0.0, %v5635
        %v5637 = vpop.f32.mrb[0].mxu0
        %v5638 = vpop.f32.mrb[0].mxu0
        %v5639 = vadd.f32 0.0, %v5638
        %v5640 = vpop.f32.mrb[0].mxu0
        %5641 = vdwg.mxu0
        %5642 = vmatprep.subr.bf16.mxu0 0
        %5643 = vmatpush1.bf16.xpose.msra.mxu0 %v5346
        %5644 = vmatprep.subr.bf16.mxu0 0
        %5645 = vmatpush1.bf16.xpose.msra.mxu0 0
        %5646 = vmatprep.subr.bf16.mxu0 0
        %5647 = vmatpush1.bf16.xpose.msra.mxu0 0
        %5648 = vmatprep.subr.bf16.mxu0 0
        %5649 = vmatpush1.bf16.xpose.msra.mxu0 0
        %5650 = vmatprep.subr.bf16.mxu0 0
        %5651 = vmatpush1.bf16.xpose.msra.mxu0 0
        %5652 = vmatprep.subr.bf16.mxu0 0
        %5653 = vmatpush1.bf16.xpose.msra.mxu0 0
        %5654 = vmatprep.subr.bf16.mxu0 0
        %5655 = vmatpush1.bf16.xpose.msra.mxu0 0
        %5656 = vmatprep.subr.bf16.mxu0 0
        %5657 = vmatpush1.bf16.xpose.msra.mxu0 0
        %5658 = vmatprep.subr.bf16.mxu0 0
        %5659 = vmatpush1.bf16.xpose.msra.mxu0 0
        %5660 = vmatprep.subr.bf16.mxu0 0
        %5661 = vmatpush1.bf16.xpose.msra.mxu0 0
        %5662 = vmatprep.subr.bf16.mxu0 0
        %5663 = vmatpush1.bf16.xpose.msra.mxu0 0
        %5664 = vmatprep.subr.bf16.mxu0 0
        %5665 = vmatpush1.bf16.xpose.msra.mxu0 0
        %5666 = vmatprep.subr.bf16.mxu0 0
        %5667 = vmatpush1.bf16.xpose.msra.mxu0 0
        %5668 = vmatprep.subr.bf16.mxu0 0
        %5669 = vmatpush1.bf16.xpose.msra.mxu0 0
        %5670 = vmatprep.subr.bf16.mxu0 0
        %5671 = vmatpush1.bf16.xpose.msra.mxu0 0
        %5672 = vmatprep.subr.bf16.mxu0 0
        %5673 = vmatpush1.bf16.xpose.msra.mxu0 0
        %5674 = vmatprep.mubr.bf16.mxu0 0
        %5675 = vmatmul.mubr.bf16.gmra.mrb[0].mxu0 %v5338
        %v5676 = vpop.f32.mrb[0].mxu0
        %v5677 = vadd.f32 0.0, %v5676
        %v5678 = vpop.f32.mrb[0].mxu0
        %v5679 = vpop.f32.mrb[0].mxu0
        %v5680 = vadd.f32 0.0, %v5679
        %v5681 = vpop.f32.mrb[0].mxu0
        %5682 = vdwg.mxu0
        %v5683 = vsel %vm1904, %v5390, -inf
        %5684 = vmax.xlane.f32.xlu0 %v5683
        %v5685 = vpop.xlane.xlu0 %5684
        %v5686 = vsel %vm1904, %v5393, -inf
        %5687 = vmax.xlane.f32.xlu0 %v5686
        %v5688 = vpop.xlane.xlu0 %5687
        %v5689 = vsel %vm1904, %v5431, -inf
        %5690 = vmax.xlane.f32.xlu0 %v5689
        %v5691 = vpop.xlane.xlu0 %5690
        %v5692 = vsel %vm1904, %v5434, -inf
        %5693 = vmax.xlane.f32.xlu0 %v5692
        %v5694 = vpop.xlane.xlu0 %5693
        %v5695 = vsel %vm1904, %v5472, -inf
        %5696 = vmax.xlane.f32.xlu0 %v5695
        %v5697 = vpop.xlane.xlu0 %5696
        %v5698 = vsel %vm1904, %v5475, -inf
        %5699 = vmax.xlane.f32.xlu0 %v5698
        %v5700 = vpop.xlane.xlu0 %5699
        %v5701 = vsel %vm1904, %v5513, -inf
        %5702 = vmax.xlane.f32.xlu0 %v5701
        %v5703 = vpop.xlane.xlu0 %5702
        %v5704 = vsel %vm1904, %v5516, -inf
        %5705 = vmax.xlane.f32.xlu0 %v5704
        %v5706 = vpop.xlane.xlu0 %5705
        %v5707 = vsel %vm1904, %v5554, -inf
        %5708 = vmax.xlane.f32.xlu0 %v5707
        %v5709 = vpop.xlane.xlu0 %5708
        %v5710 = vsel %vm1904, %v5557, -inf
        %5711 = vmax.xlane.f32.xlu0 %v5710
        %v5712 = vpop.xlane.xlu0 %5711
        %v5713 = vsel %vm1904, %v5595, -inf
        %5714 = vmax.xlane.f32.xlu0 %v5713
        %v5715 = vpop.xlane.xlu0 %5714
        %v5716 = vsel %vm1904, %v5598, -inf
        %5717 = vmax.xlane.f32.xlu0 %v5716
        %v5718 = vpop.xlane.xlu0 %5717
        %v5719 = vsel %vm1904, %v5636, -inf
        %5720 = vmax.xlane.f32.xlu0 %v5719
        %v5721 = vpop.xlane.xlu0 %5720
        %v5722 = vsel %vm1904, %v5639, -inf
        %5723 = vmax.xlane.f32.xlu0 %v5722
        %v5724 = vpop.xlane.xlu0 %5723
        %v5725 = vsel %vm1904, %v5677, -inf
        %5726 = vmax.xlane.f32.xlu0 %v5725
        %v5727 = vpop.xlane.xlu0 %5726
        %v5728 = vsel %vm1904, %v5680, -inf
        %5729 = vmax.xlane.f32.xlu0 %v5728
        %v5730 = vpop.xlane.xlu0 %5729
        %v5731 = vsub.f32 %v5390, %v5685
        %v5732 = vsub.f32 %v5393, %v5688
        %v5733 = vsub.f32 %v5431, %v5691
        %v5734 = vsub.f32 %v5434, %v5694
        %v5735 = vsub.f32 %v5472, %v5697
        %v5736 = vsub.f32 %v5475, %v5700
        %v5737 = vsub.f32 %v5513, %v5703
        %v5738 = vsub.f32 %v5516, %v5706
        %v5739 = vsub.f32 %v5554, %v5709
        %v5740 = vsub.f32 %v5557, %v5712
        %v5741 = vsub.f32 %v5595, %v5715
        %v5742 = vsub.f32 %v5598, %v5718
        %v5743 = vsub.f32 %v5636, %v5721
        %v5744 = vsub.f32 %v5639, %v5724
        %v5745 = vsub.f32 %v5677, %v5727
        %v5746 = vsub.f32 %v5680, %v5730
        %v5747 = vmul.f32 %v5731, 1.442695
        %v5748 = vpow.pop %v5747
        %v5749 = vmul.f32 %v5732, 1.442695
        %v5750 = vpow.pop %v5749
        %v5751 = vmul.f32 %v5733, 1.442695
        %v5752 = vpow.pop %v5751
        %v5753 = vmul.f32 %v5734, 1.442695
        %v5754 = vpow.pop %v5753
        %v5755 = vmul.f32 %v5735, 1.442695
        %v5756 = vpow.pop %v5755
        %v5757 = vmul.f32 %v5736, 1.442695
        %v5758 = vpow.pop %v5757
        %v5759 = vmul.f32 %v5737, 1.442695
        %v5760 = vpow.pop %v5759
        %v5761 = vmul.f32 %v5738, 1.442695
        %v5762 = vpow.pop %v5761
        %v5763 = vmul.f32 %v5739, 1.442695
        %v5764 = vpow.pop %v5763
        %v5765 = vmul.f32 %v5740, 1.442695
        %v5766 = vpow.pop %v5765
        %v5767 = vmul.f32 %v5741, 1.442695
        %v5768 = vpow.pop %v5767
        %v5769 = vmul.f32 %v5742, 1.442695
        %v5770 = vpow.pop %v5769
        %v5771 = vmul.f32 %v5743, 1.442695
        %v5772 = vpow.pop %v5771
        %v5773 = vmul.f32 %v5744, 1.442695
        %v5774 = vpow.pop %v5773
        %v5775 = vmul.f32 %v5745, 1.442695
        %v5776 = vpow.pop %v5775
        %v5777 = vmul.f32 %v5746, 1.442695
        %v5778 = vpow.pop %v5777
        %v5779 = vsel %vm1904, %v5748, 0.0
        %5780 = vadd.xlane.f32.xlu0 %v5779
        %v5781 = vpop.xlane.xlu0 %5780
        %v5782 = vsel %vm1904, %v5750, 0.0
        %5783 = vadd.xlane.f32.xlu0 %v5782
        %v5784 = vpop.xlane.xlu0 %5783
        %v5785 = vsel %vm1904, %v5752, 0.0
        %5786 = vadd.xlane.f32.xlu0 %v5785
        %v5787 = vpop.xlane.xlu0 %5786
        %v5788 = vsel %vm1904, %v5754, 0.0
        %5789 = vadd.xlane.f32.xlu0 %v5788
        %v5790 = vpop.xlane.xlu0 %5789
        %v5791 = vsel %vm1904, %v5756, 0.0
        %5792 = vadd.xlane.f32.xlu0 %v5791
        %v5793 = vpop.xlane.xlu0 %5792
        %v5794 = vsel %vm1904, %v5758, 0.0
        %5795 = vadd.xlane.f32.xlu0 %v5794
        %v5796 = vpop.xlane.xlu0 %5795
        %v5797 = vsel %vm1904, %v5760, 0.0
        %5798 = vadd.xlane.f32.xlu0 %v5797
        %v5799 = vpop.xlane.xlu0 %5798
        %v5800 = vsel %vm1904, %v5762, 0.0
        %5801 = vadd.xlane.f32.xlu0 %v5800
        %v5802 = vpop.xlane.xlu0 %5801
        %v5803 = vsel %vm1904, %v5764, 0.0
        %5804 = vadd.xlane.f32.xlu0 %v5803
        %v5805 = vpop.xlane.xlu0 %5804
        %v5806 = vsel %vm1904, %v5766, 0.0
        %5807 = vadd.xlane.f32.xlu0 %v5806
        %v5808 = vpop.xlane.xlu0 %5807
        %v5809 = vsel %vm1904, %v5768, 0.0
        %5810 = vadd.xlane.f32.xlu0 %v5809
        %v5811 = vpop.xlane.xlu0 %5810
        %v5812 = vsel %vm1904, %v5770, 0.0
        %5813 = vadd.xlane.f32.xlu0 %v5812
        %v5814 = vpop.xlane.xlu0 %5813
        %v5815 = vsel %vm1904, %v5772, 0.0
        %5816 = vadd.xlane.f32.xlu0 %v5815
        %v5817 = vpop.xlane.xlu0 %5816
        %v5818 = vsel %vm1904, %v5774, 0.0
        %5819 = vadd.xlane.f32.xlu0 %v5818
        %v5820 = vpop.xlane.xlu0 %5819
        %v5821 = vsel %vm1904, %v5776, 0.0
        %5822 = vadd.xlane.f32.xlu0 %v5821
        %v5823 = vpop.xlane.xlu0 %5822
        %v5824 = vsel %vm1904, %v5778, 0.0
        %5825 = vadd.xlane.f32.xlu0 %v5824
        %v5826 = vpop.xlane.xlu0 %5825
        %v5827 = vrcp.pop %v5781
        %v5828 = vrcp.pop %v5784
        %v5829 = vrcp.pop %v5787
        %v5830 = vrcp.pop %v5790
        %v5831 = vrcp.pop %v5793
        %v5832 = vrcp.pop %v5796
        %v5833 = vrcp.pop %v5799
        %v5834 = vrcp.pop %v5802
        %v5835 = vrcp.pop %v5805
        %v5836 = vrcp.pop %v5808
        %v5837 = vrcp.pop %v5811
        %v5838 = vrcp.pop %v5814
        %v5839 = vrcp.pop %v5817
        %v5840 = vrcp.pop %v5820
        %v5841 = vrcp.pop %v5823
        %v5842 = vrcp.pop %v5826
        %v5843 = vmul.f32 %v5748, %v5827
        %v5844 = vmul.f32 %v5750, %v5828
        %v5845 = vmul.f32 %v5752, %v5829
        %v5846 = vmul.f32 %v5754, %v5830
        %v5847 = vmul.f32 %v5756, %v5831
        %v5848 = vmul.f32 %v5758, %v5832
        %v5849 = vmul.f32 %v5760, %v5833
        %v5850 = vmul.f32 %v5762, %v5834
        %v5851 = vmul.f32 %v5764, %v5835
        %v5852 = vmul.f32 %v5766, %v5836
        %v5853 = vmul.f32 %v5768, %v5837
        %v5854 = vmul.f32 %v5770, %v5838
        %v5855 = vmul.f32 %v5772, %v5839
        %v5856 = vmul.f32 %v5774, %v5840
        %v5857 = vmul.f32 %v5776, %v5841
        %v5858 = vmul.f32 %v5778, %v5842
        %v5859 = vpack.c.bf16 %v5844, %v5843
        %v5860 = vpack.c.bf16 %v5846, %v5845
        %v5861 = vpack.c.bf16 %v5848, %v5847
        %v5862 = vpack.c.bf16 %v5850, %v5849
        %v5863 = vpack.c.bf16 %v5852, %v5851
        %v5864 = vpack.c.bf16 %v5854, %v5853
        %v5865 = vpack.c.bf16 %v5856, %v5855
        %v5866 = vpack.c.bf16 %v5858, %v5857
        %v5868 = vsel %vm1904, %v5859, 0
        %5870 = vmatprep.subr.bf16.mxu0 0
        %5871 = vmatpush1.bf16.msra.mxu0 %v5347
        %5872 = vmatprep.subr.bf16.mxu0 0
        %5873 = vmatpush1.bf16.msra.mxu0 0
        %5874 = vmatprep.subr.bf16.mxu0 0
        %5875 = vmatpush1.bf16.msra.mxu0 0
        %5876 = vmatprep.subr.bf16.mxu0 0
        %5877 = vmatpush1.bf16.msra.mxu0 0
        %5878 = vmatprep.subr.bf16.mxu0 0
        %5879 = vmatpush1.bf16.msra.mxu0 0
        %5880 = vmatprep.subr.bf16.mxu0 0
        %5881 = vmatpush1.bf16.msra.mxu0 0
        %5882 = vmatprep.subr.bf16.mxu0 0
        %5883 = vmatpush1.bf16.msra.mxu0 0
        %5884 = vmatprep.subr.bf16.mxu0 0
        %5885 = vmatpush1.bf16.msra.mxu0 0
        %5886 = vmatprep.subr.bf16.mxu0 0
        %5887 = vmatpush1.bf16.msra.mxu0 0
        %5888 = vmatprep.subr.bf16.mxu0 0
        %5889 = vmatpush1.bf16.msra.mxu0 0
        %5890 = vmatprep.subr.bf16.mxu0 0
        %5891 = vmatpush1.bf16.msra.mxu0 0
        %5892 = vmatprep.subr.bf16.mxu0 0
        %5893 = vmatpush1.bf16.msra.mxu0 0
        %5894 = vmatprep.subr.bf16.mxu0 0
        %5895 = vmatpush1.bf16.msra.mxu0 0
        %5896 = vmatprep.subr.bf16.mxu0 0
        %5897 = vmatpush1.bf16.msra.mxu0 0
        %5898 = vmatprep.subr.bf16.mxu0 0
        %5899 = vmatpush1.bf16.msra.mxu0 0
        %5900 = vmatprep.subr.bf16.mxu0 0
        %5901 = vmatpush1.bf16.msra.mxu0 0
        %5902 = vmatprep.mubr.bf16.mxu0 0
        %5903 = vmatmul.mubr.bf16.gmra.mrb[0].mxu0 %v5868
        %v5904 = vpop.f32.mrb[0].mxu0
        %v5905 = vadd.f32 0.0, %v5904
        %v5906 = vpop.f32.mrb[0].mxu0
        %v5907 = vpop.f32.mrb[0].mxu0
        %v5908 = vadd.f32 0.0, %v5907
        %v5909 = vpop.f32.mrb[0].mxu0
        %5910 = vdwg.mxu0
        %v5912 = vsel %vm1904, %v5860, 0
        %5914 = vmatprep.subr.bf16.mxu0 0
        %5915 = vmatpush1.bf16.msra.mxu0 %v5348
        %5916 = vmatprep.subr.bf16.mxu0 0
        %5917 = vmatpush1.bf16.msra.mxu0 0
        %5918 = vmatprep.subr.bf16.mxu0 0
        %5919 = vmatpush1.bf16.msra.mxu0 0
        %5920 = vmatprep.subr.bf16.mxu0 0
        %5921 = vmatpush1.bf16.msra.mxu0 0
        %5922 = vmatprep.subr.bf16.mxu0 0
        %5923 = vmatpush1.bf16.msra.mxu0 0
        %5924 = vmatprep.subr.bf16.mxu0 0
        %5925 = vmatpush1.bf16.msra.mxu0 0
        %5926 = vmatprep.subr.bf16.mxu0 0
        %5927 = vmatpush1.bf16.msra.mxu0 0
        %5928 = vmatprep.subr.bf16.mxu0 0
        %5929 = vmatpush1.bf16.msra.mxu0 0
        %5930 = vmatprep.subr.bf16.mxu0 0
        %5931 = vmatpush1.bf16.msra.mxu0 0
        %5932 = vmatprep.subr.bf16.mxu0 0
        %5933 = vmatpush1.bf16.msra.mxu0 0
        %5934 = vmatprep.subr.bf16.mxu0 0
        %5935 = vmatpush1.bf16.msra.mxu0 0
        %5936 = vmatprep.subr.bf16.mxu0 0
        %5937 = vmatpush1.bf16.msra.mxu0 0
        %5938 = vmatprep.subr.bf16.mxu0 0
        %5939 = vmatpush1.bf16.msra.mxu0 0
        %5940 = vmatprep.subr.bf16.mxu0 0
        %5941 = vmatpush1.bf16.msra.mxu0 0
        %5942 = vmatprep.subr.bf16.mxu0 0
        %5943 = vmatpush1.bf16.msra.mxu0 0
        %5944 = vmatprep.subr.bf16.mxu0 0
        %5945 = vmatpush1.bf16.msra.mxu0 0
        %5946 = vmatprep.mubr.bf16.mxu0 0
        %5947 = vmatmul.mubr.bf16.gmra.mrb[0].mxu0 %v5912
        %v5948 = vpop.f32.mrb[0].mxu0
        %v5949 = vadd.f32 0.0, %v5948
        %v5950 = vpop.f32.mrb[0].mxu0
        %v5951 = vpop.f32.mrb[0].mxu0
        %v5952 = vadd.f32 0.0, %v5951
        %v5953 = vpop.f32.mrb[0].mxu0
        %5954 = vdwg.mxu0
        %v5956 = vsel %vm1904, %v5861, 0
        %5958 = vmatprep.subr.bf16.mxu0 0
        %5959 = vmatpush1.bf16.msra.mxu0 %v5349
        %5960 = vmatprep.subr.bf16.mxu0 0
        %5961 = vmatpush1.bf16.msra.mxu0 0
        %5962 = vmatprep.subr.bf16.mxu0 0
        %5963 = vmatpush1.bf16.msra.mxu0 0
        %5964 = vmatprep.subr.bf16.mxu0 0
        %5965 = vmatpush1.bf16.msra.mxu0 0
        %5966 = vmatprep.subr.bf16.mxu0 0
        %5967 = vmatpush1.bf16.msra.mxu0 0
        %5968 = vmatprep.subr.bf16.mxu0 0
        %5969 = vmatpush1.bf16.msra.mxu0 0
        %5970 = vmatprep.subr.bf16.mxu0 0
        %5971 = vmatpush1.bf16.msra.mxu0 0
        %5972 = vmatprep.subr.bf16.mxu0 0
        %5973 = vmatpush1.bf16.msra.mxu0 0
        %5974 = vmatprep.subr.bf16.mxu0 0
        %5975 = vmatpush1.bf16.msra.mxu0 0
        %5976 = vmatprep.subr.bf16.mxu0 0
        %5977 = vmatpush1.bf16.msra.mxu0 0
        %5978 = vmatprep.subr.bf16.mxu0 0
        %5979 = vmatpush1.bf16.msra.mxu0 0
        %5980 = vmatprep.subr.bf16.mxu0 0
        %5981 = vmatpush1.bf16.msra.mxu0 0
        %5982 = vmatprep.subr.bf16.mxu0 0
        %5983 = vmatpush1.bf16.msra.mxu0 0
        %5984 = vmatprep.subr.bf16.mxu0 0
        %5985 = vmatpush1.bf16.msra.mxu0 0
        %5986 = vmatprep.subr.bf16.mxu0 0
        %5987 = vmatpush1.bf16.msra.mxu0 0
        %5988 = vmatprep.subr.bf16.mxu0 0
        %5989 = vmatpush1.bf16.msra.mxu0 0
        %5990 = vmatprep.mubr.bf16.mxu0 0
        %5991 = vmatmul.mubr.bf16.gmra.mrb[0].mxu0 %v5956
        %v5992 = vpop.f32.mrb[0].mxu0
        %v5993 = vadd.f32 0.0, %v5992
        %v5994 = vpop.f32.mrb[0].mxu0
        %v5995 = vpop.f32.mrb[0].mxu0
        %v5996 = vadd.f32 0.0, %v5995
        %v5997 = vpop.f32.mrb[0].mxu0
        %5998 = vdwg.mxu0
        %v6000 = vsel %vm1904, %v5862, 0
        %6002 = vmatprep.subr.bf16.mxu0 0
        %6003 = vmatpush1.bf16.msra.mxu0 %v5350
        %6004 = vmatprep.subr.bf16.mxu0 0
        %6005 = vmatpush1.bf16.msra.mxu0 0
        %6006 = vmatprep.subr.bf16.mxu0 0
        %6007 = vmatpush1.bf16.msra.mxu0 0
        %6008 = vmatprep.subr.bf16.mxu0 0
        %6009 = vmatpush1.bf16.msra.mxu0 0
        %6010 = vmatprep.subr.bf16.mxu0 0
        %6011 = vmatpush1.bf16.msra.mxu0 0
        %6012 = vmatprep.subr.bf16.mxu0 0
        %6013 = vmatpush1.bf16.msra.mxu0 0
        %6014 = vmatprep.subr.bf16.mxu0 0
        %6015 = vmatpush1.bf16.msra.mxu0 0
        %6016 = vmatprep.subr.bf16.mxu0 0
        %6017 = vmatpush1.bf16.msra.mxu0 0
        %6018 = vmatprep.subr.bf16.mxu0 0
        %6019 = vmatpush1.bf16.msra.mxu0 0
        %6020 = vmatprep.subr.bf16.mxu0 0
        %6021 = vmatpush1.bf16.msra.mxu0 0
        %6022 = vmatprep.subr.bf16.mxu0 0
        %6023 = vmatpush1.bf16.msra.mxu0 0
        %6024 = vmatprep.subr.bf16.mxu0 0
        %6025 = vmatpush1.bf16.msra.mxu0 0
        %6026 = vmatprep.subr.bf16.mxu0 0
        %6027 = vmatpush1.bf16.msra.mxu0 0
        %6028 = vmatprep.subr.bf16.mxu0 0
        %6029 = vmatpush1.bf16.msra.mxu0 0
        %6030 = vmatprep.subr.bf16.mxu0 0
        %6031 = vmatpush1.bf16.msra.mxu0 0
        %6032 = vmatprep.subr.bf16.mxu0 0
        %6033 = vmatpush1.bf16.msra.mxu0 0
        %6034 = vmatprep.mubr.bf16.mxu0 0
        %6035 = vmatmul.mubr.bf16.gmra.mrb[0].mxu0 %v6000
        %v6036 = vpop.f32.mrb[0].mxu0
        %v6037 = vadd.f32 0.0, %v6036
        %v6038 = vpop.f32.mrb[0].mxu0
        %v6039 = vpop.f32.mrb[0].mxu0
        %v6040 = vadd.f32 0.0, %v6039
        %v6041 = vpop.f32.mrb[0].mxu0
        %6042 = vdwg.mxu0
        %v6044 = vsel %vm1904, %v5863, 0
        %6046 = vmatprep.subr.bf16.mxu0 0
        %6047 = vmatpush1.bf16.msra.mxu0 %v5351
        %6048 = vmatprep.subr.bf16.mxu0 0
        %6049 = vmatpush1.bf16.msra.mxu0 0
        %6050 = vmatprep.subr.bf16.mxu0 0
        %6051 = vmatpush1.bf16.msra.mxu0 0
        %6052 = vmatprep.subr.bf16.mxu0 0
        %6053 = vmatpush1.bf16.msra.mxu0 0
        %6054 = vmatprep.subr.bf16.mxu0 0
        %6055 = vmatpush1.bf16.msra.mxu0 0
        %6056 = vmatprep.subr.bf16.mxu0 0
        %6057 = vmatpush1.bf16.msra.mxu0 0
        %6058 = vmatprep.subr.bf16.mxu0 0
        %6059 = vmatpush1.bf16.msra.mxu0 0
        %6060 = vmatprep.subr.bf16.mxu0 0
        %6061 = vmatpush1.bf16.msra.mxu0 0
        %6062 = vmatprep.subr.bf16.mxu0 0
        %6063 = vmatpush1.bf16.msra.mxu0 0
        %6064 = vmatprep.subr.bf16.mxu0 0
        %6065 = vmatpush1.bf16.msra.mxu0 0
        %6066 = vmatprep.subr.bf16.mxu0 0
        %6067 = vmatpush1.bf16.msra.mxu0 0
        %6068 = vmatprep.subr.bf16.mxu0 0
        %6069 = vmatpush1.bf16.msra.mxu0 0
        %6070 = vmatprep.subr.bf16.mxu0 0
        %6071 = vmatpush1.bf16.msra.mxu0 0
        %6072 = vmatprep.subr.bf16.mxu0 0
        %6073 = vmatpush1.bf16.msra.mxu0 0
        %6074 = vmatprep.subr.bf16.mxu0 0
        %6075 = vmatpush1.bf16.msra.mxu0 0
        %6076 = vmatprep.subr.bf16.mxu0 0
        %6077 = vmatpush1.bf16.msra.mxu0 0
        %6078 = vmatprep.mubr.bf16.mxu0 0
        %6079 = vmatmul.mubr.bf16.gmra.mrb[0].mxu0 %v6044
        %v6080 = vpop.f32.mrb[0].mxu0
        %v6081 = vadd.f32 0.0, %v6080
        %v6082 = vpop.f32.mrb[0].mxu0
        %v6083 = vpop.f32.mrb[0].mxu0
        %v6084 = vadd.f32 0.0, %v6083
        %v6085 = vpop.f32.mrb[0].mxu0
        %6086 = vdwg.mxu0
        %v6088 = vsel %vm1904, %v5864, 0
        %6090 = vmatprep.subr.bf16.mxu0 0
        %6091 = vmatpush1.bf16.msra.mxu0 %v5352
        %6092 = vmatprep.subr.bf16.mxu0 0
        %6093 = vmatpush1.bf16.msra.mxu0 0
        %6094 = vmatprep.subr.bf16.mxu0 0
        %6095 = vmatpush1.bf16.msra.mxu0 0
        %6096 = vmatprep.subr.bf16.mxu0 0
        %6097 = vmatpush1.bf16.msra.mxu0 0
        %6098 = vmatprep.subr.bf16.mxu0 0
        %6099 = vmatpush1.bf16.msra.mxu0 0
        %6100 = vmatprep.subr.bf16.mxu0 0
        %6101 = vmatpush1.bf16.msra.mxu0 0
        %6102 = vmatprep.subr.bf16.mxu0 0
        %6103 = vmatpush1.bf16.msra.mxu0 0
        %6104 = vmatprep.subr.bf16.mxu0 0
        %6105 = vmatpush1.bf16.msra.mxu0 0
        %6106 = vmatprep.subr.bf16.mxu0 0
        %6107 = vmatpush1.bf16.msra.mxu0 0
        %6108 = vmatprep.subr.bf16.mxu0 0
        %6109 = vmatpush1.bf16.msra.mxu0 0
        %6110 = vmatprep.subr.bf16.mxu0 0
        %6111 = vmatpush1.bf16.msra.mxu0 0
        %6112 = vmatprep.subr.bf16.mxu0 0
        %6113 = vmatpush1.bf16.msra.mxu0 0
        %6114 = vmatprep.subr.bf16.mxu0 0
        %6115 = vmatpush1.bf16.msra.mxu0 0
        %6116 = vmatprep.subr.bf16.mxu0 0
        %6117 = vmatpush1.bf16.msra.mxu0 0
        %6118 = vmatprep.subr.bf16.mxu0 0
        %6119 = vmatpush1.bf16.msra.mxu0 0
        %6120 = vmatprep.subr.bf16.mxu0 0
        %6121 = vmatpush1.bf16.msra.mxu0 0
        %6122 = vmatprep.mubr.bf16.mxu0 0
        %6123 = vmatmul.mubr.bf16.gmra.mrb[0].mxu0 %v6088
        %v6124 = vpop.f32.mrb[0].mxu0
        %v6125 = vadd.f32 0.0, %v6124
        %v6126 = vpop.f32.mrb[0].mxu0
        %v6127 = vpop.f32.mrb[0].mxu0
        %v6128 = vadd.f32 0.0, %v6127
        %v6129 = vpop.f32.mrb[0].mxu0
        %6130 = vdwg.mxu0
        %v6132 = vsel %vm1904, %v5865, 0
        %6134 = vmatprep.subr.bf16.mxu0 0
        %6135 = vmatpush1.bf16.msra.mxu0 %v5353
        %6136 = vmatprep.subr.bf16.mxu0 0
        %6137 = vmatpush1.bf16.msra.mxu0 0
        %6138 = vmatprep.subr.bf16.mxu0 0
        %6139 = vmatpush1.bf16.msra.mxu0 0
        %6140 = vmatprep.subr.bf16.mxu0 0
        %6141 = vmatpush1.bf16.msra.mxu0 0
        %6142 = vmatprep.subr.bf16.mxu0 0
        %6143 = vmatpush1.bf16.msra.mxu0 0
        %6144 = vmatprep.subr.bf16.mxu0 0
        %6145 = vmatpush1.bf16.msra.mxu0 0
        %6146 = vmatprep.subr.bf16.mxu0 0
        %6147 = vmatpush1.bf16.msra.mxu0 0
        %6148 = vmatprep.subr.bf16.mxu0 0
        %6149 = vmatpush1.bf16.msra.mxu0 0
        %6150 = vmatprep.subr.bf16.mxu0 0
        %6151 = vmatpush1.bf16.msra.mxu0 0
        %6152 = vmatprep.subr.bf16.mxu0 0
        %6153 = vmatpush1.bf16.msra.mxu0 0
        %6154 = vmatprep.subr.bf16.mxu0 0
        %6155 = vmatpush1.bf16.msra.mxu0 0
        %6156 = vmatprep.subr.bf16.mxu0 0
        %6157 = vmatpush1.bf16.msra.mxu0 0
        %6158 = vmatprep.subr.bf16.mxu0 0
        %6159 = vmatpush1.bf16.msra.mxu0 0
        %6160 = vmatprep.subr.bf16.mxu0 0
        %6161 = vmatpush1.bf16.msra.mxu0 0
        %6162 = vmatprep.subr.bf16.mxu0 0
        %6163 = vmatpush1.bf16.msra.mxu0 0
        %6164 = vmatprep.subr.bf16.mxu0 0
        %6165 = vmatpush1.bf16.msra.mxu0 0
        %6166 = vmatprep.mubr.bf16.mxu0 0
        %6167 = vmatmul.mubr.bf16.gmra.mrb[0].mxu0 %v6132
        %v6168 = vpop.f32.mrb[0].mxu0
        %v6169 = vadd.f32 0.0, %v6168
        %v6170 = vpop.f32.mrb[0].mxu0
        %v6171 = vpop.f32.mrb[0].mxu0
        %v6172 = vadd.f32 0.0, %v6171
        %v6173 = vpop.f32.mrb[0].mxu0
        %6174 = vdwg.mxu0
        %v6176 = vsel %vm1904, %v5866, 0
        %6178 = vmatprep.subr.bf16.mxu0 0
        %6179 = vmatpush1.bf16.msra.mxu0 %v5354
        %6180 = vmatprep.subr.bf16.mxu0 0
        %6181 = vmatpush1.bf16.msra.mxu0 0
        %6182 = vmatprep.subr.bf16.mxu0 0
        %6183 = vmatpush1.bf16.msra.mxu0 0
        %6184 = vmatprep.subr.bf16.mxu0 0
        %6185 = vmatpush1.bf16.msra.mxu0 0
        %6186 = vmatprep.subr.bf16.mxu0 0
        %6187 = vmatpush1.bf16.msra.mxu0 0
        %6188 = vmatprep.subr.bf16.mxu0 0
        %6189 = vmatpush1.bf16.msra.mxu0 0
        %6190 = vmatprep.subr.bf16.mxu0 0
        %6191 = vmatpush1.bf16.msra.mxu0 0
        %6192 = vmatprep.subr.bf16.mxu0 0
        %6193 = vmatpush1.bf16.msra.mxu0 0
        %6194 = vmatprep.subr.bf16.mxu0 0
        %6195 = vmatpush1.bf16.msra.mxu0 0
        %6196 = vmatprep.subr.bf16.mxu0 0
        %6197 = vmatpush1.bf16.msra.mxu0 0
        %6198 = vmatprep.subr.bf16.mxu0 0
        %6199 = vmatpush1.bf16.msra.mxu0 0
        %6200 = vmatprep.subr.bf16.mxu0 0
        %6201 = vmatpush1.bf16.msra.mxu0 0
        %6202 = vmatprep.subr.bf16.mxu0 0
        %6203 = vmatpush1.bf16.msra.mxu0 0
        %6204 = vmatprep.subr.bf16.mxu0 0
        %6205 = vmatpush1.bf16.msra.mxu0 0
        %6206 = vmatprep.subr.bf16.mxu0 0
        %6207 = vmatpush1.bf16.msra.mxu0 0
        %6208 = vmatprep.subr.bf16.mxu0 0
        %6209 = vmatpush1.bf16.msra.mxu0 0
        %6210 = vmatprep.mubr.bf16.mxu0 0
        %6211 = vmatmul.mubr.bf16.gmra.mrb[0].mxu0 %v6176
        %v6212 = vpop.f32.mrb[0].mxu0
        %v6213 = vadd.f32 0.0, %v6212
        %v6214 = vpop.f32.mrb[0].mxu0
        %v6215 = vpop.f32.mrb[0].mxu0
        %v6216 = vadd.f32 0.0, %v6215
        %v6217 = vpop.f32.mrb[0].mxu0
        %6218 = vdwg.mxu0
        %v6219 = vpack.c.bf16 %v5908, %v5905
        %v6220 = vpack.c.bf16 %v5952, %v5949
        %v6221 = vpack.c.bf16 %v5996, %v5993
        %v6222 = vpack.c.bf16 %v6040, %v6037
        %v6223 = vpack.c.bf16 %v6084, %v6081
        %v6224 = vpack.c.bf16 %v6128, %v6125
        %v6225 = vpack.c.bf16 %v6172, %v6169
        %v6226 = vpack.c.bf16 %v6216, %v6213
        %s6227 = scalar_lea.vmem %s5, 128
        %v6228 = vld [vmem:[%s6227] sm:$0xf]
        %v6229 = vld [vmem:[%s6227 + $0x4] sm:$0xf]
        %v6230 = vld [vmem:[%s6227 + $0x8] sm:$0xf]
        %v6231 = vld [vmem:[%s6227 + $0xc] sm:$0xf]
        %v6232 = vld [vmem:[%s6227 + $0x10] sm:$0xf]
        %v6233 = vld [vmem:[%s6227 + $0x14] sm:$0xf]
        %v6234 = vld [vmem:[%s6227 + $0x18] sm:$0xf]
        %v6235 = vld [vmem:[%s6227 + $0x1c] sm:$0xf]
        %v6236 = vld [vmem:[%s6227 + $0x20] sm:$0xf]
        %v6237 = vld [vmem:[%s6227 + $0x24] sm:$0xf]
        %v6238 = vld [vmem:[%s6227 + $0x28] sm:$0xf]
        %v6239 = vld [vmem:[%s6227 + $0x2c] sm:$0xf]
        %v6240 = vld [vmem:[%s6227 + $0x30] sm:$0xf]
        %v6241 = vld [vmem:[%s6227 + $0x34] sm:$0xf]
        %v6242 = vld [vmem:[%s6227 + $0x38] sm:$0xf]
        %v6243 = vld [vmem:[%s6227 + $0x3c] sm:$0xf]
        %v6260 = vunpack.c.l.b16 %v6228
        %v6261 = vunpack.c.l.b16 %v6229
        %v6262 = vunpack.c.l.b16 %v6230
        %v6263 = vunpack.c.l.b16 %v6231
        %v6264 = vunpack.c.l.b16 %v6232
        %v6265 = vunpack.c.l.b16 %v6233
        %v6266 = vunpack.c.l.b16 %v6234
        %v6267 = vunpack.c.l.b16 %v6235
        %v6268 = vunpack.c.l.b16 %v6236
        %v6269 = vunpack.c.l.b16 %v6237
        %v6270 = vunpack.c.l.b16 %v6238
        %v6271 = vunpack.c.l.b16 %v6239
        %v6272 = vunpack.c.l.b16 %v6240
        %v6273 = vunpack.c.l.b16 %v6241
        %v6274 = vunpack.c.l.b16 %v6242
        %v6275 = vunpack.c.l.b16 %v6243
        %v6276 = vpack.c.b16 %v6261, %v6260
        %v6277 = vpack.c.b16 %v6263, %v6262
        %v6278 = vpack.c.b16 %v6265, %v6264
        %v6279 = vpack.c.b16 %v6267, %v6266
        %v6280 = vpack.c.b16 %v6269, %v6268
        %v6281 = vpack.c.b16 %v6271, %v6270
        %v6282 = vpack.c.b16 %v6273, %v6272
        %v6283 = vpack.c.b16 %v6275, %v6274
        %6292 = vmatprep.subr.bf16.mxu0 0
        %6293 = vmatpush1.bf16.msra.mxu0 %v6276
        %6294 = vmatprep.subr.bf16.mxu0 0
        %6295 = vmatpush1.bf16.msra.mxu0 %v6277
        %6296 = vmatprep.subr.bf16.mxu0 0
        %6297 = vmatpush1.bf16.msra.mxu0 %v6278
        %6298 = vmatprep.subr.bf16.mxu0 0
        %6299 = vmatpush1.bf16.msra.mxu0 %v6279
        %6300 = vmatprep.subr.bf16.mxu0 0
        %6301 = vmatpush1.bf16.msra.mxu0 %v6280
        %6302 = vmatprep.subr.bf16.mxu0 0
        %6303 = vmatpush1.bf16.msra.mxu0 %v6281
        %6304 = vmatprep.subr.bf16.mxu0 0
        %6305 = vmatpush1.bf16.msra.mxu0 %v6282
        %6306 = vmatprep.subr.bf16.mxu0 0
        %6307 = vmatpush1.bf16.msra.mxu0 %v6283
        %6308 = vmatprep.subr.bf16.mxu0 0
        %6309 = vmatpush1.bf16.msra.mxu0 0
        %6310 = vmatprep.subr.bf16.mxu0 0
        %6311 = vmatpush1.bf16.msra.mxu0 0
        %6312 = vmatprep.subr.bf16.mxu0 0
        %6313 = vmatpush1.bf16.msra.mxu0 0
        %6314 = vmatprep.subr.bf16.mxu0 0
        %6315 = vmatpush1.bf16.msra.mxu0 0
        %6316 = vmatprep.subr.bf16.mxu0 0
        %6317 = vmatpush1.bf16.msra.mxu0 0
        %6318 = vmatprep.subr.bf16.mxu0 0
        %6319 = vmatpush1.bf16.msra.mxu0 0
        %6320 = vmatprep.subr.bf16.mxu0 0
        %6321 = vmatpush1.bf16.msra.mxu0 0
        %6322 = vmatprep.subr.bf16.mxu0 0
        %6323 = vmatpush1.bf16.msra.mxu0 0
        %6324 = vmatprep.mubr.bf16.mxu0 0
        %6325 = vmatmul.mubr.bf16.gmra.mrb[0].mxu0 %v6219
        %v6326 = vpop.f32.mrb[0].mxu0
        %v6327 = vadd.f32 0.0, %v6326
        %v6328 = vpop.f32.mrb[0].mxu0
        %v6329 = vpop.f32.mrb[0].mxu0
        %v6330 = vadd.f32 0.0, %v6329
        %v6331 = vpop.f32.mrb[0].mxu0
        %6332 = vmatprep.mubr.bf16.mxu0 0
        %6333 = vmatmul.mubr.bf16.gmra.mrb[0].mxu0 %v6220
        %v6334 = vpop.f32.mrb[0].mxu0
        %v6335 = vadd.f32 0.0, %v6334
        %v6336 = vpop.f32.mrb[0].mxu0
        %v6337 = vpop.f32.mrb[0].mxu0
        %v6338 = vadd.f32 0.0, %v6337
        %v6339 = vpop.f32.mrb[0].mxu0
        %6340 = vmatprep.mubr.bf16.mxu0 0
        %6341 = vmatmul.mubr.bf16.gmra.mrb[0].mxu0 %v6221
        %v6342 = vpop.f32.mrb[0].mxu0
        %v6343 = vadd.f32 0.0, %v6342
        %v6344 = vpop.f32.mrb[0].mxu0
        %v6345 = vpop.f32.mrb[0].mxu0
        %v6346 = vadd.f32 0.0, %v6345
        %v6347 = vpop.f32.mrb[0].mxu0
        %6348 = vmatprep.mubr.bf16.mxu0 0
        %6349 = vmatmul.mubr.bf16.gmra.mrb[0].mxu0 %v6222
        %v6350 = vpop.f32.mrb[0].mxu0
        %v6351 = vadd.f32 0.0, %v6350
        %v6352 = vpop.f32.mrb[0].mxu0
        %v6353 = vpop.f32.mrb[0].mxu0
        %v6354 = vadd.f32 0.0, %v6353
        %v6355 = vpop.f32.mrb[0].mxu0
        %6356 = vmatprep.mubr.bf16.mxu0 0
        %6357 = vmatmul.mubr.bf16.gmra.mrb[0].mxu0 %v6223
        %v6358 = vpop.f32.mrb[0].mxu0
        %v6359 = vadd.f32 0.0, %v6358
        %v6360 = vpop.f32.mrb[0].mxu0
        %v6361 = vpop.f32.mrb[0].mxu0
        %v6362 = vadd.f32 0.0, %v6361
        %v6363 = vpop.f32.mrb[0].mxu0
        %6364 = vmatprep.mubr.bf16.mxu0 0
        %6365 = vmatmul.mubr.bf16.gmra.mrb[0].mxu0 %v6224
        %v6366 = vpop.f32.mrb[0].mxu0
        %v6367 = vadd.f32 0.0, %v6366
        %v6368 = vpop.f32.mrb[0].mxu0
        %v6369 = vpop.f32.mrb[0].mxu0
        %v6370 = vadd.f32 0.0, %v6369
        %v6371 = vpop.f32.mrb[0].mxu0
        %6372 = vmatprep.mubr.bf16.mxu0 0
        %6373 = vmatmul.mubr.bf16.gmra.mrb[0].mxu0 %v6225
        %v6374 = vpop.f32.mrb[0].mxu0
        %v6375 = vadd.f32 0.0, %v6374
        %v6376 = vpop.f32.mrb[0].mxu0
        %v6377 = vpop.f32.mrb[0].mxu0
        %v6378 = vadd.f32 0.0, %v6377
        %v6379 = vpop.f32.mrb[0].mxu0
        %6380 = vmatprep.mubr.bf16.mxu0 0
        %6381 = vmatmul.mubr.bf16.gmra.mrb[0].mxu0 %v6226
        %v6382 = vpop.f32.mrb[0].mxu0
        %v6383 = vadd.f32 0.0, %v6382
        %v6384 = vpop.f32.mrb[0].mxu0
        %v6385 = vpop.f32.mrb[0].mxu0
        %v6386 = vadd.f32 0.0, %v6385
        %v6387 = vpop.f32.mrb[0].mxu0
        %6388 = vdwg.mxu0
        %v6390 = vlaneseq
        %v6391 = vshrl.u32 %v6390, 7
        %v6392 = vsub.s32 0, %v6391
        %v6393 = vrot.slane %v5330, %v6392
        %v6395 = vadd.f32 %v6393, %v6327
        %v6396 = vadd.f32 %v6393, %v6330
        %v6397 = vadd.f32 %v6393, %v6335
        %v6398 = vadd.f32 %v6393, %v6338
        %v6399 = vadd.f32 %v6393, %v6343
        %v6400 = vadd.f32 %v6393, %v6346
        %v6401 = vadd.f32 %v6393, %v6351
        %v6402 = vadd.f32 %v6393, %v6354
        %v6403 = vadd.f32 %v6393, %v6359
        %v6404 = vadd.f32 %v6393, %v6362
        %v6405 = vadd.f32 %v6393, %v6367
        %v6406 = vadd.f32 %v6393, %v6370
        %v6407 = vadd.f32 %v6393, %v6375
        %v6408 = vadd.f32 %v6393, %v6378
        %v6409 = vadd.f32 %v6393, %v6383
        %v6410 = vadd.f32 %v6393, %v6386
        %v6411 = vpack.c.bf16 %v5031, %v5027
        %v6412 = vpack.c.bf16 %v5041, %v5037
        %v6413 = vpack.c.bf16 %v5051, %v5047
        %v6414 = vpack.c.bf16 %v5061, %v5057
        %v6415 = vpack.c.bf16 %v5071, %v5067
        %v6416 = vpack.c.bf16 %v5081, %v5077
        %v6417 = vpack.c.bf16 %v5091, %v5087
        %v6418 = vpack.c.bf16 %v5101, %v5097
        %v6419 = vpack.c.bf16 %v5144, %v5140
        %v6420 = vpack.c.bf16 %v5154, %v5150
        %v6421 = vpack.c.bf16 %v5164, %v5160
        %v6422 = vpack.c.bf16 %v5174, %v5170
        %v6423 = vpack.c.bf16 %v5184, %v5180
        %v6424 = vpack.c.bf16 %v5194, %v5190
        %v6425 = vpack.c.bf16 %v5204, %v5200
        %v6426 = vpack.c.bf16 %v5214, %v5210
        %v6427 = vpack.c.bf16 %v5257, %v5253
        %v6428 = vpack.c.bf16 %v5267, %v5263
        %v6429 = vpack.c.bf16 %v5277, %v5273
        %v6430 = vpack.c.bf16 %v5287, %v5283
        %v6431 = vpack.c.bf16 %v5297, %v5293
        %v6432 = vpack.c.bf16 %v5307, %v5303
        %v6433 = vpack.c.bf16 %v5317, %v5313
        %v6434 = vpack.c.bf16 %v5327, %v5323
        %6435 = vmatprep.subr.bf16.mxu0 0
        %6436 = vmatpush1.bf16.xpose.msra.mxu0 %v6419
        %6437 = vmatprep.subr.bf16.mxu0 0
        %6438 = vmatpush1.bf16.xpose.msra.mxu0 0
        %6439 = vmatprep.subr.bf16.mxu0 0
        %6440 = vmatpush1.bf16.xpose.msra.mxu0 0
        %6441 = vmatprep.subr.bf16.mxu0 0
        %6442 = vmatpush1.bf16.xpose.msra.mxu0 0
        %6443 = vmatprep.subr.bf16.mxu0 0
        %6444 = vmatpush1.bf16.xpose.msra.mxu0 0
        %6445 = vmatprep.subr.bf16.mxu0 0
        %6446 = vmatpush1.bf16.xpose.msra.mxu0 0
        %6447 = vmatprep.subr.bf16.mxu0 0
        %6448 = vmatpush1.bf16.xpose.msra.mxu0 0
        %6449 = vmatprep.subr.bf16.mxu0 0
        %6450 = vmatpush1.bf16.xpose.msra.mxu0 0
        %6451 = vmatprep.subr.bf16.mxu0 0
        %6452 = vmatpush1.bf16.xpose.msra.mxu0 0
        %6453 = vmatprep.subr.bf16.mxu0 0
        %6454 = vmatpush1.bf16.xpose.msra.mxu0 0
        %6455 = vmatprep.subr.bf16.mxu0 0
        %6456 = vmatpush1.bf16.xpose.msra.mxu0 0
        %6457 = vmatprep.subr.bf16.mxu0 0
        %6458 = vmatpush1.bf16.xpose.msra.mxu0 0
        %6459 = vmatprep.subr.bf16.mxu0 0
        %6460 = vmatpush1.bf16.xpose.msra.mxu0 0
        %6461 = vmatprep.subr.bf16.mxu0 0
        %6462 = vmatpush1.bf16.xpose.msra.mxu0 0
        %6463 = vmatprep.subr.bf16.mxu0 0
        %6464 = vmatpush1.bf16.xpose.msra.mxu0 0
        %6465 = vmatprep.subr.bf16.mxu0 0
        %6466 = vmatpush1.bf16.xpose.msra.mxu0 0
        %6467 = vmatprep.mubr.bf16.mxu0 0
        %6468 = vmatmul.mubr.bf16.gmra.mrb[0].mxu0 %v6411
        %v6469 = vpop.f32.mrb[0].mxu0
        %v6470 = vadd.f32 0.0, %v6469
        %v6471 = vpop.f32.mrb[0].mxu0
        %v6472 = vpop.f32.mrb[0].mxu0
        %v6473 = vadd.f32 0.0, %v6472
        %v6474 = vpop.f32.mrb[0].mxu0
        %6475 = vdwg.mxu0
        %6476 = vmatprep.subr.bf16.mxu0 0
        %6477 = vmatpush1.bf16.xpose.msra.mxu0 %v6420
        %6478 = vmatprep.subr.bf16.mxu0 0
        %6479 = vmatpush1.bf16.xpose.msra.mxu0 0
        %6480 = vmatprep.subr.bf16.mxu0 0
        %6481 = vmatpush1.bf16.xpose.msra.mxu0 0
        %6482 = vmatprep.subr.bf16.mxu0 0
        %6483 = vmatpush1.bf16.xpose.msra.mxu0 0
        %6484 = vmatprep.subr.bf16.mxu0 0
        %6485 = vmatpush1.bf16.xpose.msra.mxu0 0
        %6486 = vmatprep.subr.bf16.mxu0 0
        %6487 = vmatpush1.bf16.xpose.msra.mxu0 0
        %6488 = vmatprep.subr.bf16.mxu0 0
        %6489 = vmatpush1.bf16.xpose.msra.mxu0 0
        %6490 = vmatprep.subr.bf16.mxu0 0
        %6491 = vmatpush1.bf16.xpose.msra.mxu0 0
        %6492 = vmatprep.subr.bf16.mxu0 0
        %6493 = vmatpush1.bf16.xpose.msra.mxu0 0
        %6494 = vmatprep.subr.bf16.mxu0 0
        %6495 = vmatpush1.bf16.xpose.msra.mxu0 0
        %6496 = vmatprep.subr.bf16.mxu0 0
        %6497 = vmatpush1.bf16.xpose.msra.mxu0 0
        %6498 = vmatprep.subr.bf16.mxu0 0
        %6499 = vmatpush1.bf16.xpose.msra.mxu0 0
        %6500 = vmatprep.subr.bf16.mxu0 0
        %6501 = vmatpush1.bf16.xpose.msra.mxu0 0
        %6502 = vmatprep.subr.bf16.mxu0 0
        %6503 = vmatpush1.bf16.xpose.msra.mxu0 0
        %6504 = vmatprep.subr.bf16.mxu0 0
        %6505 = vmatpush1.bf16.xpose.msra.mxu0 0
        %6506 = vmatprep.subr.bf16.mxu0 0
        %6507 = vmatpush1.bf16.xpose.msra.mxu0 0
        %6508 = vmatprep.mubr.bf16.mxu0 0
        %6509 = vmatmul.mubr.bf16.gmra.mrb[0].mxu0 %v6412
        %v6510 = vpop.f32.mrb[0].mxu0
        %v6511 = vadd.f32 0.0, %v6510
        %v6512 = vpop.f32.mrb[0].mxu0
        %v6513 = vpop.f32.mrb[0].mxu0
        %v6514 = vadd.f32 0.0, %v6513
        %v6515 = vpop.f32.mrb[0].mxu0
        %6516 = vdwg.mxu0
        %6517 = vmatprep.subr.bf16.mxu0 0
        %6518 = vmatpush1.bf16.xpose.msra.mxu0 %v6421
        %6519 = vmatprep.subr.bf16.mxu0 0
        %6520 = vmatpush1.bf16.xpose.msra.mxu0 0
        %6521 = vmatprep.subr.bf16.mxu0 0
        %6522 = vmatpush1.bf16.xpose.msra.mxu0 0
        %6523 = vmatprep.subr.bf16.mxu0 0
        %6524 = vmatpush1.bf16.xpose.msra.mxu0 0
        %6525 = vmatprep.subr.bf16.mxu0 0
        %6526 = vmatpush1.bf16.xpose.msra.mxu0 0
        %6527 = vmatprep.subr.bf16.mxu0 0
        %6528 = vmatpush1.bf16.xpose.msra.mxu0 0
        %6529 = vmatprep.subr.bf16.mxu0 0
        %6530 = vmatpush1.bf16.xpose.msra.mxu0 0
        %6531 = vmatprep.subr.bf16.mxu0 0
        %6532 = vmatpush1.bf16.xpose.msra.mxu0 0
        %6533 = vmatprep.subr.bf16.mxu0 0
        %6534 = vmatpush1.bf16.xpose.msra.mxu0 0
        %6535 = vmatprep.subr.bf16.mxu0 0
        %6536 = vmatpush1.bf16.xpose.msra.mxu0 0
        %6537 = vmatprep.subr.bf16.mxu0 0
        %6538 = vmatpush1.bf16.xpose.msra.mxu0 0
        %6539 = vmatprep.subr.bf16.mxu0 0
        %6540 = vmatpush1.bf16.xpose.msra.mxu0 0
        %6541 = vmatprep.subr.bf16.mxu0 0
        %6542 = vmatpush1.bf16.xpose.msra.mxu0 0
        %6543 = vmatprep.subr.bf16.mxu0 0
        %6544 = vmatpush1.bf16.xpose.msra.mxu0 0
        %6545 = vmatprep.subr.bf16.mxu0 0
        %6546 = vmatpush1.bf16.xpose.msra.mxu0 0
        %6547 = vmatprep.subr.bf16.mxu0 0
        %6548 = vmatpush1.bf16.xpose.msra.mxu0 0
        %6549 = vmatprep.mubr.bf16.mxu0 0
        %6550 = vmatmul.mubr.bf16.gmra.mrb[0].mxu0 %v6413
        %v6551 = vpop.f32.mrb[0].mxu0
        %v6552 = vadd.f32 0.0, %v6551
        %v6553 = vpop.f32.mrb[0].mxu0
        %v6554 = vpop.f32.mrb[0].mxu0
        %v6555 = vadd.f32 0.0, %v6554
        %v6556 = vpop.f32.mrb[0].mxu0
        %6557 = vdwg.mxu0
        %6558 = vmatprep.subr.bf16.mxu0 0
        %6559 = vmatpush1.bf16.xpose.msra.mxu0 %v6422
        %6560 = vmatprep.subr.bf16.mxu0 0
        %6561 = vmatpush1.bf16.xpose.msra.mxu0 0
        %6562 = vmatprep.subr.bf16.mxu0 0
        %6563 = vmatpush1.bf16.xpose.msra.mxu0 0
        %6564 = vmatprep.subr.bf16.mxu0 0
        %6565 = vmatpush1.bf16.xpose.msra.mxu0 0
        %6566 = vmatprep.subr.bf16.mxu0 0
        %6567 = vmatpush1.bf16.xpose.msra.mxu0 0
        %6568 = vmatprep.subr.bf16.mxu0 0
        %6569 = vmatpush1.bf16.xpose.msra.mxu0 0
        %6570 = vmatprep.subr.bf16.mxu0 0
        %6571 = vmatpush1.bf16.xpose.msra.mxu0 0
        %6572 = vmatprep.subr.bf16.mxu0 0
        %6573 = vmatpush1.bf16.xpose.msra.mxu0 0
        %6574 = vmatprep.subr.bf16.mxu0 0
        %6575 = vmatpush1.bf16.xpose.msra.mxu0 0
        %6576 = vmatprep.subr.bf16.mxu0 0
        %6577 = vmatpush1.bf16.xpose.msra.mxu0 0
        %6578 = vmatprep.subr.bf16.mxu0 0
        %6579 = vmatpush1.bf16.xpose.msra.mxu0 0
        %6580 = vmatprep.subr.bf16.mxu0 0
        %6581 = vmatpush1.bf16.xpose.msra.mxu0 0
        %6582 = vmatprep.subr.bf16.mxu0 0
        %6583 = vmatpush1.bf16.xpose.msra.mxu0 0
        %6584 = vmatprep.subr.bf16.mxu0 0
        %6585 = vmatpush1.bf16.xpose.msra.mxu0 0
        %6586 = vmatprep.subr.bf16.mxu0 0
        %6587 = vmatpush1.bf16.xpose.msra.mxu0 0
        %6588 = vmatprep.subr.bf16.mxu0 0
        %6589 = vmatpush1.bf16.xpose.msra.mxu0 0
        %6590 = vmatprep.mubr.bf16.mxu0 0
        %6591 = vmatmul.mubr.bf16.gmra.mrb[0].mxu0 %v6414
        %v6592 = vpop.f32.mrb[0].mxu0
        %v6593 = vadd.f32 0.0, %v6592
        %v6594 = vpop.f32.mrb[0].mxu0
        %v6595 = vpop.f32.mrb[0].mxu0
        %v6596 = vadd.f32 0.0, %v6595
        %v6597 = vpop.f32.mrb[0].mxu0
        %6598 = vdwg.mxu0
        %6599 = vmatprep.subr.bf16.mxu0 0
        %6600 = vmatpush1.bf16.xpose.msra.mxu0 %v6423
        %6601 = vmatprep.subr.bf16.mxu0 0
        %6602 = vmatpush1.bf16.xpose.msra.mxu0 0
        %6603 = vmatprep.subr.bf16.mxu0 0
        %6604 = vmatpush1.bf16.xpose.msra.mxu0 0
        %6605 = vmatprep.subr.bf16.mxu0 0
        %6606 = vmatpush1.bf16.xpose.msra.mxu0 0
        %6607 = vmatprep.subr.bf16.mxu0 0
        %6608 = vmatpush1.bf16.xpose.msra.mxu0 0
        %6609 = vmatprep.subr.bf16.mxu0 0
        %6610 = vmatpush1.bf16.xpose.msra.mxu0 0
        %6611 = vmatprep.subr.bf16.mxu0 0
        %6612 = vmatpush1.bf16.xpose.msra.mxu0 0
        %6613 = vmatprep.subr.bf16.mxu0 0
        %6614 = vmatpush1.bf16.xpose.msra.mxu0 0
        %6615 = vmatprep.subr.bf16.mxu0 0
        %6616 = vmatpush1.bf16.xpose.msra.mxu0 0
        %6617 = vmatprep.subr.bf16.mxu0 0
        %6618 = vmatpush1.bf16.xpose.msra.mxu0 0
        %6619 = vmatprep.subr.bf16.mxu0 0
        %6620 = vmatpush1.bf16.xpose.msra.mxu0 0
        %6621 = vmatprep.subr.bf16.mxu0 0
        %6622 = vmatpush1.bf16.xpose.msra.mxu0 0
        %6623 = vmatprep.subr.bf16.mxu0 0
        %6624 = vmatpush1.bf16.xpose.msra.mxu0 0
        %6625 = vmatprep.subr.bf16.mxu0 0
        %6626 = vmatpush1.bf16.xpose.msra.mxu0 0
        %6627 = vmatprep.subr.bf16.mxu0 0
        %6628 = vmatpush1.bf16.xpose.msra.mxu0 0
        %6629 = vmatprep.subr.bf16.mxu0 0
        %6630 = vmatpush1.bf16.xpose.msra.mxu0 0
        %6631 = vmatprep.mubr.bf16.mxu0 0
        %6632 = vmatmul.mubr.bf16.gmra.mrb[0].mxu0 %v6415
        %v6633 = vpop.f32.mrb[0].mxu0
        %v6634 = vadd.f32 0.0, %v6633
        %v6635 = vpop.f32.mrb[0].mxu0
        %v6636 = vpop.f32.mrb[0].mxu0
        %v6637 = vadd.f32 0.0, %v6636
        %v6638 = vpop.f32.mrb[0].mxu0
        %6639 = vdwg.mxu0
        %6640 = vmatprep.subr.bf16.mxu0 0
        %6641 = vmatpush1.bf16.xpose.msra.mxu0 %v6424
        %6642 = vmatprep.subr.bf16.mxu0 0
        %6643 = vmatpush1.bf16.xpose.msra.mxu0 0
        %6644 = vmatprep.subr.bf16.mxu0 0
        %6645 = vmatpush1.bf16.xpose.msra.mxu0 0
        %6646 = vmatprep.subr.bf16.mxu0 0
        %6647 = vmatpush1.bf16.xpose.msra.mxu0 0
        %6648 = vmatprep.subr.bf16.mxu0 0
        %6649 = vmatpush1.bf16.xpose.msra.mxu0 0
        %6650 = vmatprep.subr.bf16.mxu0 0
        %6651 = vmatpush1.bf16.xpose.msra.mxu0 0
        %6652 = vmatprep.subr.bf16.mxu0 0
        %6653 = vmatpush1.bf16.xpose.msra.mxu0 0
        %6654 = vmatprep.subr.bf16.mxu0 0
        %6655 = vmatpush1.bf16.xpose.msra.mxu0 0
        %6656 = vmatprep.subr.bf16.mxu0 0
        %6657 = vmatpush1.bf16.xpose.msra.mxu0 0
        %6658 = vmatprep.subr.bf16.mxu0 0
        %6659 = vmatpush1.bf16.xpose.msra.mxu0 0
        %6660 = vmatprep.subr.bf16.mxu0 0
        %6661 = vmatpush1.bf16.xpose.msra.mxu0 0
        %6662 = vmatprep.subr.bf16.mxu0 0
        %6663 = vmatpush1.bf16.xpose.msra.mxu0 0
        %6664 = vmatprep.subr.bf16.mxu0 0
        %6665 = vmatpush1.bf16.xpose.msra.mxu0 0
        %6666 = vmatprep.subr.bf16.mxu0 0
        %6667 = vmatpush1.bf16.xpose.msra.mxu0 0
        %6668 = vmatprep.subr.bf16.mxu0 0
        %6669 = vmatpush1.bf16.xpose.msra.mxu0 0
        %6670 = vmatprep.subr.bf16.mxu0 0
        %6671 = vmatpush1.bf16.xpose.msra.mxu0 0
        %6672 = vmatprep.mubr.bf16.mxu0 0
        %6673 = vmatmul.mubr.bf16.gmra.mrb[0].mxu0 %v6416
        %v6674 = vpop.f32.mrb[0].mxu0
        %v6675 = vadd.f32 0.0, %v6674
        %v6676 = vpop.f32.mrb[0].mxu0
        %v6677 = vpop.f32.mrb[0].mxu0
        %v6678 = vadd.f32 0.0, %v6677
        %v6679 = vpop.f32.mrb[0].mxu0
        %6680 = vdwg.mxu0
        %6681 = vmatprep.subr.bf16.mxu0 0
        %6682 = vmatpush1.bf16.xpose.msra.mxu0 %v6425
        %6683 = vmatprep.subr.bf16.mxu0 0
        %6684 = vmatpush1.bf16.xpose.msra.mxu0 0
        %6685 = vmatprep.subr.bf16.mxu0 0
        %6686 = vmatpush1.bf16.xpose.msra.mxu0 0
        %6687 = vmatprep.subr.bf16.mxu0 0
        %6688 = vmatpush1.bf16.xpose.msra.mxu0 0
        %6689 = vmatprep.subr.bf16.mxu0 0
        %6690 = vmatpush1.bf16.xpose.msra.mxu0 0
        %6691 = vmatprep.subr.bf16.mxu0 0
        %6692 = vmatpush1.bf16.xpose.msra.mxu0 0
        %6693 = vmatprep.subr.bf16.mxu0 0
        %6694 = vmatpush1.bf16.xpose.msra.mxu0 0
        %6695 = vmatprep.subr.bf16.mxu0 0
        %6696 = vmatpush1.bf16.xpose.msra.mxu0 0
        %6697 = vmatprep.subr.bf16.mxu0 0
        %6698 = vmatpush1.bf16.xpose.msra.mxu0 0
        %6699 = vmatprep.subr.bf16.mxu0 0
        %6700 = vmatpush1.bf16.xpose.msra.mxu0 0
        %6701 = vmatprep.subr.bf16.mxu0 0
        %6702 = vmatpush1.bf16.xpose.msra.mxu0 0
        %6703 = vmatprep.subr.bf16.mxu0 0
        %6704 = vmatpush1.bf16.xpose.msra.mxu0 0
        %6705 = vmatprep.subr.bf16.mxu0 0
        %6706 = vmatpush1.bf16.xpose.msra.mxu0 0
        %6707 = vmatprep.subr.bf16.mxu0 0
        %6708 = vmatpush1.bf16.xpose.msra.mxu0 0
        %6709 = vmatprep.subr.bf16.mxu0 0
        %6710 = vmatpush1.bf16.xpose.msra.mxu0 0
        %6711 = vmatprep.subr.bf16.mxu0 0
        %6712 = vmatpush1.bf16.xpose.msra.mxu0 0
        %6713 = vmatprep.mubr.bf16.mxu0 0
        %6714 = vmatmul.mubr.bf16.gmra.mrb[0].mxu0 %v6417
        %v6715 = vpop.f32.mrb[0].mxu0
        %v6716 = vadd.f32 0.0, %v6715
        %v6717 = vpop.f32.mrb[0].mxu0
        %v6718 = vpop.f32.mrb[0].mxu0
        %v6719 = vadd.f32 0.0, %v6718
        %v6720 = vpop.f32.mrb[0].mxu0
        %6721 = vdwg.mxu0
        %6722 = vmatprep.subr.bf16.mxu0 0
        %6723 = vmatpush1.bf16.xpose.msra.mxu0 %v6426
        %6724 = vmatprep.subr.bf16.mxu0 0
        %6725 = vmatpush1.bf16.xpose.msra.mxu0 0
        %6726 = vmatprep.subr.bf16.mxu0 0
        %6727 = vmatpush1.bf16.xpose.msra.mxu0 0
        %6728 = vmatprep.subr.bf16.mxu0 0
        %6729 = vmatpush1.bf16.xpose.msra.mxu0 0
        %6730 = vmatprep.subr.bf16.mxu0 0
        %6731 = vmatpush1.bf16.xpose.msra.mxu0 0
        %6732 = vmatprep.subr.bf16.mxu0 0
        %6733 = vmatpush1.bf16.xpose.msra.mxu0 0
        %6734 = vmatprep.subr.bf16.mxu0 0
        %6735 = vmatpush1.bf16.xpose.msra.mxu0 0
        %6736 = vmatprep.subr.bf16.mxu0 0
        %6737 = vmatpush1.bf16.xpose.msra.mxu0 0
        %6738 = vmatprep.subr.bf16.mxu0 0
        %6739 = vmatpush1.bf16.xpose.msra.mxu0 0
        %6740 = vmatprep.subr.bf16.mxu0 0
        %6741 = vmatpush1.bf16.xpose.msra.mxu0 0
        %6742 = vmatprep.subr.bf16.mxu0 0
        %6743 = vmatpush1.bf16.xpose.msra.mxu0 0
        %6744 = vmatprep.subr.bf16.mxu0 0
        %6745 = vmatpush1.bf16.xpose.msra.mxu0 0
        %6746 = vmatprep.subr.bf16.mxu0 0
        %6747 = vmatpush1.bf16.xpose.msra.mxu0 0
        %6748 = vmatprep.subr.bf16.mxu0 0
        %6749 = vmatpush1.bf16.xpose.msra.mxu0 0
        %6750 = vmatprep.subr.bf16.mxu0 0
        %6751 = vmatpush1.bf16.xpose.msra.mxu0 0
        %6752 = vmatprep.subr.bf16.mxu0 0
        %6753 = vmatpush1.bf16.xpose.msra.mxu0 0
        %6754 = vmatprep.mubr.bf16.mxu0 0
        %6755 = vmatmul.mubr.bf16.gmra.mrb[0].mxu0 %v6418
        %v6756 = vpop.f32.mrb[0].mxu0
        %v6757 = vadd.f32 0.0, %v6756
        %v6758 = vpop.f32.mrb[0].mxu0
        %v6759 = vpop.f32.mrb[0].mxu0
        %v6760 = vadd.f32 0.0, %v6759
        %v6761 = vpop.f32.mrb[0].mxu0
        %6762 = vdwg.mxu0
        %v6763 = vsel %vm1904, %v6470, -inf
        %6764 = vmax.xlane.f32.xlu0 %v6763
        %v6765 = vpop.xlane.xlu0 %6764
        %v6766 = vsel %vm1904, %v6473, -inf
        %6767 = vmax.xlane.f32.xlu0 %v6766
        %v6768 = vpop.xlane.xlu0 %6767
        %v6769 = vsel %vm1904, %v6511, -inf
        %6770 = vmax.xlane.f32.xlu0 %v6769
        %v6771 = vpop.xlane.xlu0 %6770
        %v6772 = vsel %vm1904, %v6514, -inf
        %6773 = vmax.xlane.f32.xlu0 %v6772
        %v6774 = vpop.xlane.xlu0 %6773
        %v6775 = vsel %vm1904, %v6552, -inf
        %6776 = vmax.xlane.f32.xlu0 %v6775
        %v6777 = vpop.xlane.xlu0 %6776
        %v6778 = vsel %vm1904, %v6555, -inf
        %6779 = vmax.xlane.f32.xlu0 %v6778
        %v6780 = vpop.xlane.xlu0 %6779
        %v6781 = vsel %vm1904, %v6593, -inf
        %6782 = vmax.xlane.f32.xlu0 %v6781
        %v6783 = vpop.xlane.xlu0 %6782
        %v6784 = vsel %vm1904, %v6596, -inf
        %6785 = vmax.xlane.f32.xlu0 %v6784
        %v6786 = vpop.xlane.xlu0 %6785
        %v6787 = vsel %vm1904, %v6634, -inf
        %6788 = vmax.xlane.f32.xlu0 %v6787
        %v6789 = vpop.xlane.xlu0 %6788
        %v6790 = vsel %vm1904, %v6637, -inf
        %6791 = vmax.xlane.f32.xlu0 %v6790
        %v6792 = vpop.xlane.xlu0 %6791
        %v6793 = vsel %vm1904, %v6675, -inf
        %6794 = vmax.xlane.f32.xlu0 %v6793
        %v6795 = vpop.xlane.xlu0 %6794
        %v6796 = vsel %vm1904, %v6678, -inf
        %6797 = vmax.xlane.f32.xlu0 %v6796
        %v6798 = vpop.xlane.xlu0 %6797
        %v6799 = vsel %vm1904, %v6716, -inf
        %6800 = vmax.xlane.f32.xlu0 %v6799
        %v6801 = vpop.xlane.xlu0 %6800
        %v6802 = vsel %vm1904, %v6719, -inf
        %6803 = vmax.xlane.f32.xlu0 %v6802
        %v6804 = vpop.xlane.xlu0 %6803
        %v6805 = vsel %vm1904, %v6757, -inf
        %6806 = vmax.xlane.f32.xlu0 %v6805
        %v6807 = vpop.xlane.xlu0 %6806
        %v6808 = vsel %vm1904, %v6760, -inf
        %6809 = vmax.xlane.f32.xlu0 %v6808
        %v6810 = vpop.xlane.xlu0 %6809
        %v6811 = vsub.f32 %v6470, %v6765
        %v6812 = vsub.f32 %v6473, %v6768
        %v6813 = vsub.f32 %v6511, %v6771
        %v6814 = vsub.f32 %v6514, %v6774
        %v6815 = vsub.f32 %v6552, %v6777
        %v6816 = vsub.f32 %v6555, %v6780
        %v6817 = vsub.f32 %v6593, %v6783
        %v6818 = vsub.f32 %v6596, %v6786
        %v6819 = vsub.f32 %v6634, %v6789
        %v6820 = vsub.f32 %v6637, %v6792
        %v6821 = vsub.f32 %v6675, %v6795
        %v6822 = vsub.f32 %v6678, %v6798
        %v6823 = vsub.f32 %v6716, %v6801
        %v6824 = vsub.f32 %v6719, %v6804
        %v6825 = vsub.f32 %v6757, %v6807
        %v6826 = vsub.f32 %v6760, %v6810
        %v6827 = vmul.f32 %v6811, 1.442695
        %v6828 = vpow.pop %v6827
        %v6829 = vmul.f32 %v6812, 1.442695
        %v6830 = vpow.pop %v6829
        %v6831 = vmul.f32 %v6813, 1.442695
        %v6832 = vpow.pop %v6831
        %v6833 = vmul.f32 %v6814, 1.442695
        %v6834 = vpow.pop %v6833
        %v6835 = vmul.f32 %v6815, 1.442695
        %v6836 = vpow.pop %v6835
        %v6837 = vmul.f32 %v6816, 1.442695
        %v6838 = vpow.pop %v6837
        %v6839 = vmul.f32 %v6817, 1.442695
        %v6840 = vpow.pop %v6839
        %v6841 = vmul.f32 %v6818, 1.442695
        %v6842 = vpow.pop %v6841
        %v6843 = vmul.f32 %v6819, 1.442695
        %v6844 = vpow.pop %v6843
        %v6845 = vmul.f32 %v6820, 1.442695
        %v6846 = vpow.pop %v6845
        %v6847 = vmul.f32 %v6821, 1.442695
        %v6848 = vpow.pop %v6847
        %v6849 = vmul.f32 %v6822, 1.442695
        %v6850 = vpow.pop %v6849
        %v6851 = vmul.f32 %v6823, 1.442695
        %v6852 = vpow.pop %v6851
        %v6853 = vmul.f32 %v6824, 1.442695
        %v6854 = vpow.pop %v6853
        %v6855 = vmul.f32 %v6825, 1.442695
        %v6856 = vpow.pop %v6855
        %v6857 = vmul.f32 %v6826, 1.442695
        %v6858 = vpow.pop %v6857
        %v6859 = vsel %vm1904, %v6828, 0.0
        %6860 = vadd.xlane.f32.xlu0 %v6859
        %v6861 = vpop.xlane.xlu0 %6860
        %v6862 = vsel %vm1904, %v6830, 0.0
        %6863 = vadd.xlane.f32.xlu0 %v6862
        %v6864 = vpop.xlane.xlu0 %6863
        %v6865 = vsel %vm1904, %v6832, 0.0
        %6866 = vadd.xlane.f32.xlu0 %v6865
        %v6867 = vpop.xlane.xlu0 %6866
        %v6868 = vsel %vm1904, %v6834, 0.0
        %6869 = vadd.xlane.f32.xlu0 %v6868
        %v6870 = vpop.xlane.xlu0 %6869
        %v6871 = vsel %vm1904, %v6836, 0.0
        %6872 = vadd.xlane.f32.xlu0 %v6871
        %v6873 = vpop.xlane.xlu0 %6872
        %v6874 = vsel %vm1904, %v6838, 0.0
        %6875 = vadd.xlane.f32.xlu0 %v6874
        %v6876 = vpop.xlane.xlu0 %6875
        %v6877 = vsel %vm1904, %v6840, 0.0
        %6878 = vadd.xlane.f32.xlu0 %v6877
        %v6879 = vpop.xlane.xlu0 %6878
        %v6880 = vsel %vm1904, %v6842, 0.0
        %6881 = vadd.xlane.f32.xlu0 %v6880
        %v6882 = vpop.xlane.xlu0 %6881
        %v6883 = vsel %vm1904, %v6844, 0.0
        %6884 = vadd.xlane.f32.xlu0 %v6883
        %v6885 = vpop.xlane.xlu0 %6884
        %v6886 = vsel %vm1904, %v6846, 0.0
        %6887 = vadd.xlane.f32.xlu0 %v6886
        %v6888 = vpop.xlane.xlu0 %6887
        %v6889 = vsel %vm1904, %v6848, 0.0
        %6890 = vadd.xlane.f32.xlu0 %v6889
        %v6891 = vpop.xlane.xlu0 %6890
        %v6892 = vsel %vm1904, %v6850, 0.0
        %6893 = vadd.xlane.f32.xlu0 %v6892
        %v6894 = vpop.xlane.xlu0 %6893
        %v6895 = vsel %vm1904, %v6852, 0.0
        %6896 = vadd.xlane.f32.xlu0 %v6895
        %v6897 = vpop.xlane.xlu0 %6896
        %v6898 = vsel %vm1904, %v6854, 0.0
        %6899 = vadd.xlane.f32.xlu0 %v6898
        %v6900 = vpop.xlane.xlu0 %6899
        %v6901 = vsel %vm1904, %v6856, 0.0
        %6902 = vadd.xlane.f32.xlu0 %v6901
        %v6903 = vpop.xlane.xlu0 %6902
        %v6904 = vsel %vm1904, %v6858, 0.0
        %6905 = vadd.xlane.f32.xlu0 %v6904
        %v6906 = vpop.xlane.xlu0 %6905
        %v6907 = vrcp.pop %v6861
        %v6908 = vrcp.pop %v6864
        %v6909 = vrcp.pop %v6867
        %v6910 = vrcp.pop %v6870
        %v6911 = vrcp.pop %v6873
        %v6912 = vrcp.pop %v6876
        %v6913 = vrcp.pop %v6879
        %v6914 = vrcp.pop %v6882
        %v6915 = vrcp.pop %v6885
        %v6916 = vrcp.pop %v6888
        %v6917 = vrcp.pop %v6891
        %v6918 = vrcp.pop %v6894
        %v6919 = vrcp.pop %v6897
        %v6920 = vrcp.pop %v6900
        %v6921 = vrcp.pop %v6903
        %v6922 = vrcp.pop %v6906
        %v6923 = vmul.f32 %v6828, %v6907
        %v6924 = vmul.f32 %v6830, %v6908
        %v6925 = vmul.f32 %v6832, %v6909
        %v6926 = vmul.f32 %v6834, %v6910
        %v6927 = vmul.f32 %v6836, %v6911
        %v6928 = vmul.f32 %v6838, %v6912
        %v6929 = vmul.f32 %v6840, %v6913
        %v6930 = vmul.f32 %v6842, %v6914
        %v6931 = vmul.f32 %v6844, %v6915
        %v6932 = vmul.f32 %v6846, %v6916
        %v6933 = vmul.f32 %v6848, %v6917
        %v6934 = vmul.f32 %v6850, %v6918
        %v6935 = vmul.f32 %v6852, %v6919
        %v6936 = vmul.f32 %v6854, %v6920
        %v6937 = vmul.f32 %v6856, %v6921
        %v6938 = vmul.f32 %v6858, %v6922
        %v6939 = vpack.c.bf16 %v6924, %v6923
        %v6940 = vpack.c.bf16 %v6926, %v6925
        %v6941 = vpack.c.bf16 %v6928, %v6927
        %v6942 = vpack.c.bf16 %v6930, %v6929
        %v6943 = vpack.c.bf16 %v6932, %v6931
        %v6944 = vpack.c.bf16 %v6934, %v6933
        %v6945 = vpack.c.bf16 %v6936, %v6935
        %v6946 = vpack.c.bf16 %v6938, %v6937
        %v6948 = vsel %vm1904, %v6939, 0
        %6950 = vmatprep.subr.bf16.mxu0 0
        %6951 = vmatpush1.bf16.msra.mxu0 %v6427
        %6952 = vmatprep.subr.bf16.mxu0 0
        %6953 = vmatpush1.bf16.msra.mxu0 0
        %6954 = vmatprep.subr.bf16.mxu0 0
        %6955 = vmatpush1.bf16.msra.mxu0 0
        %6956 = vmatprep.subr.bf16.mxu0 0
        %6957 = vmatpush1.bf16.msra.mxu0 0
        %6958 = vmatprep.subr.bf16.mxu0 0
        %6959 = vmatpush1.bf16.msra.mxu0 0
        %6960 = vmatprep.subr.bf16.mxu0 0
        %6961 = vmatpush1.bf16.msra.mxu0 0
        %6962 = vmatprep.subr.bf16.mxu0 0
        %6963 = vmatpush1.bf16.msra.mxu0 0
        %6964 = vmatprep.subr.bf16.mxu0 0
        %6965 = vmatpush1.bf16.msra.mxu0 0
        %6966 = vmatprep.subr.bf16.mxu0 0
        %6967 = vmatpush1.bf16.msra.mxu0 0
        %6968 = vmatprep.subr.bf16.mxu0 0
        %6969 = vmatpush1.bf16.msra.mxu0 0
        %6970 = vmatprep.subr.bf16.mxu0 0
        %6971 = vmatpush1.bf16.msra.mxu0 0
        %6972 = vmatprep.subr.bf16.mxu0 0
        %6973 = vmatpush1.bf16.msra.mxu0 0
        %6974 = vmatprep.subr.bf16.mxu0 0
        %6975 = vmatpush1.bf16.msra.mxu0 0
        %6976 = vmatprep.subr.bf16.mxu0 0
        %6977 = vmatpush1.bf16.msra.mxu0 0
        %6978 = vmatprep.subr.bf16.mxu0 0
        %6979 = vmatpush1.bf16.msra.mxu0 0
        %6980 = vmatprep.subr.bf16.mxu0 0
        %6981 = vmatpush1.bf16.msra.mxu0 0
        %6982 = vmatprep.mubr.bf16.mxu0 0
        %6983 = vmatmul.mubr.bf16.gmra.mrb[0].mxu0 %v6948
        %v6984 = vpop.f32.mrb[0].mxu0
        %v6985 = vadd.f32 0.0, %v6984
        %v6986 = vpop.f32.mrb[0].mxu0
        %v6987 = vpop.f32.mrb[0].mxu0
        %v6988 = vadd.f32 0.0, %v6987
        %v6989 = vpop.f32.mrb[0].mxu0
        %6990 = vdwg.mxu0
        %v6992 = vsel %vm1904, %v6940, 0
        %6994 = vmatprep.subr.bf16.mxu0 0
        %6995 = vmatpush1.bf16.msra.mxu0 %v6428
        %6996 = vmatprep.subr.bf16.mxu0 0
        %6997 = vmatpush1.bf16.msra.mxu0 0
        %6998 = vmatprep.subr.bf16.mxu0 0
        %6999 = vmatpush1.bf16.msra.mxu0 0
        %7000 = vmatprep.subr.bf16.mxu0 0
        %7001 = vmatpush1.bf16.msra.mxu0 0
        %7002 = vmatprep.subr.bf16.mxu0 0
        %7003 = vmatpush1.bf16.msra.mxu0 0
        %7004 = vmatprep.subr.bf16.mxu0 0
        %7005 = vmatpush1.bf16.msra.mxu0 0
        %7006 = vmatprep.subr.bf16.mxu0 0
        %7007 = vmatpush1.bf16.msra.mxu0 0
        %7008 = vmatprep.subr.bf16.mxu0 0
        %7009 = vmatpush1.bf16.msra.mxu0 0
        %7010 = vmatprep.subr.bf16.mxu0 0
        %7011 = vmatpush1.bf16.msra.mxu0 0
        %7012 = vmatprep.subr.bf16.mxu0 0
        %7013 = vmatpush1.bf16.msra.mxu0 0
        %7014 = vmatprep.subr.bf16.mxu0 0
        %7015 = vmatpush1.bf16.msra.mxu0 0
        %7016 = vmatprep.subr.bf16.mxu0 0
        %7017 = vmatpush1.bf16.msra.mxu0 0
        %7018 = vmatprep.subr.bf16.mxu0 0
        %7019 = vmatpush1.bf16.msra.mxu0 0
        %7020 = vmatprep.subr.bf16.mxu0 0
        %7021 = vmatpush1.bf16.msra.mxu0 0
        %7022 = vmatprep.subr.bf16.mxu0 0
        %7023 = vmatpush1.bf16.msra.mxu0 0
        %7024 = vmatprep.subr.bf16.mxu0 0
        %7025 = vmatpush1.bf16.msra.mxu0 0
        %7026 = vmatprep.mubr.bf16.mxu0 0
        %7027 = vmatmul.mubr.bf16.gmra.mrb[0].mxu0 %v6992
        %v7028 = vpop.f32.mrb[0].mxu0
        %v7029 = vadd.f32 0.0, %v7028
        %v7030 = vpop.f32.mrb[0].mxu0
        %v7031 = vpop.f32.mrb[0].mxu0
        %v7032 = vadd.f32 0.0, %v7031
        %v7033 = vpop.f32.mrb[0].mxu0
        %7034 = vdwg.mxu0
        %v7036 = vsel %vm1904, %v6941, 0
        %7038 = vmatprep.subr.bf16.mxu0 0
        %7039 = vmatpush1.bf16.msra.mxu0 %v6429
        %7040 = vmatprep.subr.bf16.mxu0 0
        %7041 = vmatpush1.bf16.msra.mxu0 0
        %7042 = vmatprep.subr.bf16.mxu0 0
        %7043 = vmatpush1.bf16.msra.mxu0 0
        %7044 = vmatprep.subr.bf16.mxu0 0
        %7045 = vmatpush1.bf16.msra.mxu0 0
        %7046 = vmatprep.subr.bf16.mxu0 0
        %7047 = vmatpush1.bf16.msra.mxu0 0
        %7048 = vmatprep.subr.bf16.mxu0 0
        %7049 = vmatpush1.bf16.msra.mxu0 0
        %7050 = vmatprep.subr.bf16.mxu0 0
        %7051 = vmatpush1.bf16.msra.mxu0 0
        %7052 = vmatprep.subr.bf16.mxu0 0
        %7053 = vmatpush1.bf16.msra.mxu0 0
        %7054 = vmatprep.subr.bf16.mxu0 0
        %7055 = vmatpush1.bf16.msra.mxu0 0
        %7056 = vmatprep.subr.bf16.mxu0 0
        %7057 = vmatpush1.bf16.msra.mxu0 0
        %7058 = vmatprep.subr.bf16.mxu0 0
        %7059 = vmatpush1.bf16.msra.mxu0 0
        %7060 = vmatprep.subr.bf16.mxu0 0
        %7061 = vmatpush1.bf16.msra.mxu0 0
        %7062 = vmatprep.subr.bf16.mxu0 0
        %7063 = vmatpush1.bf16.msra.mxu0 0
        %7064 = vmatprep.subr.bf16.mxu0 0
        %7065 = vmatpush1.bf16.msra.mxu0 0
        %7066 = vmatprep.subr.bf16.mxu0 0
        %7067 = vmatpush1.bf16.msra.mxu0 0
        %7068 = vmatprep.subr.bf16.mxu0 0
        %7069 = vmatpush1.bf16.msra.mxu0 0
        %7070 = vmatprep.mubr.bf16.mxu0 0
        %7071 = vmatmul.mubr.bf16.gmra.mrb[0].mxu0 %v7036
        %v7072 = vpop.f32.mrb[0].mxu0
        %v7073 = vadd.f32 0.0, %v7072
        %v7074 = vpop.f32.mrb[0].mxu0
        %v7075 = vpop.f32.mrb[0].mxu0
        %v7076 = vadd.f32 0.0, %v7075
        %v7077 = vpop.f32.mrb[0].mxu0
        %7078 = vdwg.mxu0
        %v7080 = vsel %vm1904, %v6942, 0
        %7082 = vmatprep.subr.bf16.mxu0 0
        %7083 = vmatpush1.bf16.msra.mxu0 %v6430
        %7084 = vmatprep.subr.bf16.mxu0 0
        %7085 = vmatpush1.bf16.msra.mxu0 0
        %7086 = vmatprep.subr.bf16.mxu0 0
        %7087 = vmatpush1.bf16.msra.mxu0 0
        %7088 = vmatprep.subr.bf16.mxu0 0
        %7089 = vmatpush1.bf16.msra.mxu0 0
        %7090 = vmatprep.subr.bf16.mxu0 0
        %7091 = vmatpush1.bf16.msra.mxu0 0
        %7092 = vmatprep.subr.bf16.mxu0 0
        %7093 = vmatpush1.bf16.msra.mxu0 0
        %7094 = vmatprep.subr.bf16.mxu0 0
        %7095 = vmatpush1.bf16.msra.mxu0 0
        %7096 = vmatprep.subr.bf16.mxu0 0
        %7097 = vmatpush1.bf16.msra.mxu0 0
        %7098 = vmatprep.subr.bf16.mxu0 0
        %7099 = vmatpush1.bf16.msra.mxu0 0
        %7100 = vmatprep.subr.bf16.mxu0 0
        %7101 = vmatpush1.bf16.msra.mxu0 0
        %7102 = vmatprep.subr.bf16.mxu0 0
        %7103 = vmatpush1.bf16.msra.mxu0 0
        %7104 = vmatprep.subr.bf16.mxu0 0
        %7105 = vmatpush1.bf16.msra.mxu0 0
        %7106 = vmatprep.subr.bf16.mxu0 0
        %7107 = vmatpush1.bf16.msra.mxu0 0
        %7108 = vmatprep.subr.bf16.mxu0 0
        %7109 = vmatpush1.bf16.msra.mxu0 0
        %7110 = vmatprep.subr.bf16.mxu0 0
        %7111 = vmatpush1.bf16.msra.mxu0 0
        %7112 = vmatprep.subr.bf16.mxu0 0
        %7113 = vmatpush1.bf16.msra.mxu0 0
        %7114 = vmatprep.mubr.bf16.mxu0 0
        %7115 = vmatmul.mubr.bf16.gmra.mrb[0].mxu0 %v7080
        %v7116 = vpop.f32.mrb[0].mxu0
        %v7117 = vadd.f32 0.0, %v7116
        %v7118 = vpop.f32.mrb[0].mxu0
        %v7119 = vpop.f32.mrb[0].mxu0
        %v7120 = vadd.f32 0.0, %v7119
        %v7121 = vpop.f32.mrb[0].mxu0
        %7122 = vdwg.mxu0
        %v7124 = vsel %vm1904, %v6943, 0
        %7126 = vmatprep.subr.bf16.mxu0 0
        %7127 = vmatpush1.bf16.msra.mxu0 %v6431
        %7128 = vmatprep.subr.bf16.mxu0 0
        %7129 = vmatpush1.bf16.msra.mxu0 0
        %7130 = vmatprep.subr.bf16.mxu0 0
        %7131 = vmatpush1.bf16.msra.mxu0 0
        %7132 = vmatprep.subr.bf16.mxu0 0
        %7133 = vmatpush1.bf16.msra.mxu0 0
        %7134 = vmatprep.subr.bf16.mxu0 0
        %7135 = vmatpush1.bf16.msra.mxu0 0
        %7136 = vmatprep.subr.bf16.mxu0 0
        %7137 = vmatpush1.bf16.msra.mxu0 0
        %7138 = vmatprep.subr.bf16.mxu0 0
        %7139 = vmatpush1.bf16.msra.mxu0 0
        %7140 = vmatprep.subr.bf16.mxu0 0
        %7141 = vmatpush1.bf16.msra.mxu0 0
        %7142 = vmatprep.subr.bf16.mxu0 0
        %7143 = vmatpush1.bf16.msra.mxu0 0
        %7144 = vmatprep.subr.bf16.mxu0 0
        %7145 = vmatpush1.bf16.msra.mxu0 0
        %7146 = vmatprep.subr.bf16.mxu0 0
        %7147 = vmatpush1.bf16.msra.mxu0 0
        %7148 = vmatprep.subr.bf16.mxu0 0
        %7149 = vmatpush1.bf16.msra.mxu0 0
        %7150 = vmatprep.subr.bf16.mxu0 0
        %7151 = vmatpush1.bf16.msra.mxu0 0
        %7152 = vmatprep.subr.bf16.mxu0 0
        %7153 = vmatpush1.bf16.msra.mxu0 0
        %7154 = vmatprep.subr.bf16.mxu0 0
        %7155 = vmatpush1.bf16.msra.mxu0 0
        %7156 = vmatprep.subr.bf16.mxu0 0
        %7157 = vmatpush1.bf16.msra.mxu0 0
        %7158 = vmatprep.mubr.bf16.mxu0 0
        %7159 = vmatmul.mubr.bf16.gmra.mrb[0].mxu0 %v7124
        %v7160 = vpop.f32.mrb[0].mxu0
        %v7161 = vadd.f32 0.0, %v7160
        %v7162 = vpop.f32.mrb[0].mxu0
        %v7163 = vpop.f32.mrb[0].mxu0
        %v7164 = vadd.f32 0.0, %v7163
        %v7165 = vpop.f32.mrb[0].mxu0
        %7166 = vdwg.mxu0
        %v7168 = vsel %vm1904, %v6944, 0
        %7170 = vmatprep.subr.bf16.mxu0 0
        %7171 = vmatpush1.bf16.msra.mxu0 %v6432
        %7172 = vmatprep.subr.bf16.mxu0 0
        %7173 = vmatpush1.bf16.msra.mxu0 0
        %7174 = vmatprep.subr.bf16.mxu0 0
        %7175 = vmatpush1.bf16.msra.mxu0 0
        %7176 = vmatprep.subr.bf16.mxu0 0
        %7177 = vmatpush1.bf16.msra.mxu0 0
        %7178 = vmatprep.subr.bf16.mxu0 0
        %7179 = vmatpush1.bf16.msra.mxu0 0
        %7180 = vmatprep.subr.bf16.mxu0 0
        %7181 = vmatpush1.bf16.msra.mxu0 0
        %7182 = vmatprep.subr.bf16.mxu0 0
        %7183 = vmatpush1.bf16.msra.mxu0 0
        %7184 = vmatprep.subr.bf16.mxu0 0
        %7185 = vmatpush1.bf16.msra.mxu0 0
        %7186 = vmatprep.subr.bf16.mxu0 0
        %7187 = vmatpush1.bf16.msra.mxu0 0
        %7188 = vmatprep.subr.bf16.mxu0 0
        %7189 = vmatpush1.bf16.msra.mxu0 0
        %7190 = vmatprep.subr.bf16.mxu0 0
        %7191 = vmatpush1.bf16.msra.mxu0 0
        %7192 = vmatprep.subr.bf16.mxu0 0
        %7193 = vmatpush1.bf16.msra.mxu0 0
        %7194 = vmatprep.subr.bf16.mxu0 0
        %7195 = vmatpush1.bf16.msra.mxu0 0
        %7196 = vmatprep.subr.bf16.mxu0 0
        %7197 = vmatpush1.bf16.msra.mxu0 0
        %7198 = vmatprep.subr.bf16.mxu0 0
        %7199 = vmatpush1.bf16.msra.mxu0 0
        %7200 = vmatprep.subr.bf16.mxu0 0
        %7201 = vmatpush1.bf16.msra.mxu0 0
        %7202 = vmatprep.mubr.bf16.mxu0 0
        %7203 = vmatmul.mubr.bf16.gmra.mrb[0].mxu0 %v7168
        %v7204 = vpop.f32.mrb[0].mxu0
        %v7205 = vadd.f32 0.0, %v7204
        %v7206 = vpop.f32.mrb[0].mxu0
        %v7207 = vpop.f32.mrb[0].mxu0
        %v7208 = vadd.f32 0.0, %v7207
        %v7209 = vpop.f32.mrb[0].mxu0
        %7210 = vdwg.mxu0
        %v7212 = vsel %vm1904, %v6945, 0
        %7214 = vmatprep.subr.bf16.mxu0 0
        %7215 = vmatpush1.bf16.msra.mxu0 %v6433
        %7216 = vmatprep.subr.bf16.mxu0 0
        %7217 = vmatpush1.bf16.msra.mxu0 0
        %7218 = vmatprep.subr.bf16.mxu0 0
        %7219 = vmatpush1.bf16.msra.mxu0 0
        %7220 = vmatprep.subr.bf16.mxu0 0
        %7221 = vmatpush1.bf16.msra.mxu0 0
        %7222 = vmatprep.subr.bf16.mxu0 0
        %7223 = vmatpush1.bf16.msra.mxu0 0
        %7224 = vmatprep.subr.bf16.mxu0 0
        %7225 = vmatpush1.bf16.msra.mxu0 0
        %7226 = vmatprep.subr.bf16.mxu0 0
        %7227 = vmatpush1.bf16.msra.mxu0 0
        %7228 = vmatprep.subr.bf16.mxu0 0
        %7229 = vmatpush1.bf16.msra.mxu0 0
        %7230 = vmatprep.subr.bf16.mxu0 0
        %7231 = vmatpush1.bf16.msra.mxu0 0
        %7232 = vmatprep.subr.bf16.mxu0 0
        %7233 = vmatpush1.bf16.msra.mxu0 0
        %7234 = vmatprep.subr.bf16.mxu0 0
        %7235 = vmatpush1.bf16.msra.mxu0 0
        %7236 = vmatprep.subr.bf16.mxu0 0
        %7237 = vmatpush1.bf16.msra.mxu0 0
        %7238 = vmatprep.subr.bf16.mxu0 0
        %7239 = vmatpush1.bf16.msra.mxu0 0
        %7240 = vmatprep.subr.bf16.mxu0 0
        %7241 = vmatpush1.bf16.msra.mxu0 0
        %7242 = vmatprep.subr.bf16.mxu0 0
        %7243 = vmatpush1.bf16.msra.mxu0 0
        %7244 = vmatprep.subr.bf16.mxu0 0
        %7245 = vmatpush1.bf16.msra.mxu0 0
        %7246 = vmatprep.mubr.bf16.mxu0 0
        %7247 = vmatmul.mubr.bf16.gmra.mrb[0].mxu0 %v7212
        %v7248 = vpop.f32.mrb[0].mxu0
        %v7249 = vadd.f32 0.0, %v7248
        %v7250 = vpop.f32.mrb[0].mxu0
        %v7251 = vpop.f32.mrb[0].mxu0
        %v7252 = vadd.f32 0.0, %v7251
        %v7253 = vpop.f32.mrb[0].mxu0
        %7254 = vdwg.mxu0
        %v7256 = vsel %vm1904, %v6946, 0
        %7258 = vmatprep.subr.bf16.mxu0 0
        %7259 = vmatpush1.bf16.msra.mxu0 %v6434
        %7260 = vmatprep.subr.bf16.mxu0 0
        %7261 = vmatpush1.bf16.msra.mxu0 0
        %7262 = vmatprep.subr.bf16.mxu0 0
        %7263 = vmatpush1.bf16.msra.mxu0 0
        %7264 = vmatprep.subr.bf16.mxu0 0
        %7265 = vmatpush1.bf16.msra.mxu0 0
        %7266 = vmatprep.subr.bf16.mxu0 0
        %7267 = vmatpush1.bf16.msra.mxu0 0
        %7268 = vmatprep.subr.bf16.mxu0 0
        %7269 = vmatpush1.bf16.msra.mxu0 0
        %7270 = vmatprep.subr.bf16.mxu0 0
        %7271 = vmatpush1.bf16.msra.mxu0 0
        %7272 = vmatprep.subr.bf16.mxu0 0
        %7273 = vmatpush1.bf16.msra.mxu0 0
        %7274 = vmatprep.subr.bf16.mxu0 0
        %7275 = vmatpush1.bf16.msra.mxu0 0
        %7276 = vmatprep.subr.bf16.mxu0 0
        %7277 = vmatpush1.bf16.msra.mxu0 0
        %7278 = vmatprep.subr.bf16.mxu0 0
        %7279 = vmatpush1.bf16.msra.mxu0 0
        %7280 = vmatprep.subr.bf16.mxu0 0
        %7281 = vmatpush1.bf16.msra.mxu0 0
        %7282 = vmatprep.subr.bf16.mxu0 0
        %7283 = vmatpush1.bf16.msra.mxu0 0
        %7284 = vmatprep.subr.bf16.mxu0 0
        %7285 = vmatpush1.bf16.msra.mxu0 0
        %7286 = vmatprep.subr.bf16.mxu0 0
        %7287 = vmatpush1.bf16.msra.mxu0 0
        %7288 = vmatprep.subr.bf16.mxu0 0
        %7289 = vmatpush1.bf16.msra.mxu0 0
        %7290 = vmatprep.mubr.bf16.mxu0 0
        %7291 = vmatmul.mubr.bf16.gmra.mrb[0].mxu0 %v7256
        %v7292 = vpop.f32.mrb[0].mxu0
        %v7293 = vadd.f32 0.0, %v7292
        %v7294 = vpop.f32.mrb[0].mxu0
        %v7295 = vpop.f32.mrb[0].mxu0
        %v7296 = vadd.f32 0.0, %v7295
        %v7297 = vpop.f32.mrb[0].mxu0
        %7298 = vdwg.mxu0
        %v7299 = vpack.c.bf16 %v6988, %v6985
        %v7300 = vpack.c.bf16 %v7032, %v7029
        %v7301 = vpack.c.bf16 %v7076, %v7073
        %v7302 = vpack.c.bf16 %v7120, %v7117
        %v7303 = vpack.c.bf16 %v7164, %v7161
        %v7304 = vpack.c.bf16 %v7208, %v7205
        %v7305 = vpack.c.bf16 %v7252, %v7249
        %v7306 = vpack.c.bf16 %v7296, %v7293
        %s7307 = scalar_lea.vmem %s5, 192
        %v7308 = vld [vmem:[%s7307] sm:$0xf]
        %v7309 = vld [vmem:[%s7307 + $0x4] sm:$0xf]
        %v7310 = vld [vmem:[%s7307 + $0x8] sm:$0xf]
        %v7311 = vld [vmem:[%s7307 + $0xc] sm:$0xf]
        %v7312 = vld [vmem:[%s7307 + $0x10] sm:$0xf]
        %v7313 = vld [vmem:[%s7307 + $0x14] sm:$0xf]
        %v7314 = vld [vmem:[%s7307 + $0x18] sm:$0xf]
        %v7315 = vld [vmem:[%s7307 + $0x1c] sm:$0xf]
        %v7316 = vld [vmem:[%s7307 + $0x20] sm:$0xf]
        %v7317 = vld [vmem:[%s7307 + $0x24] sm:$0xf]
        %v7318 = vld [vmem:[%s7307 + $0x28] sm:$0xf]
        %v7319 = vld [vmem:[%s7307 + $0x2c] sm:$0xf]
        %v7320 = vld [vmem:[%s7307 + $0x30] sm:$0xf]
        %v7321 = vld [vmem:[%s7307 + $0x34] sm:$0xf]
        %v7322 = vld [vmem:[%s7307 + $0x38] sm:$0xf]
        %v7323 = vld [vmem:[%s7307 + $0x3c] sm:$0xf]
        %v7340 = vunpack.c.l.b16 %v7308
        %v7341 = vunpack.c.l.b16 %v7309
        %v7342 = vunpack.c.l.b16 %v7310
        %v7343 = vunpack.c.l.b16 %v7311
        %v7344 = vunpack.c.l.b16 %v7312
        %v7345 = vunpack.c.l.b16 %v7313
        %v7346 = vunpack.c.l.b16 %v7314
        %v7347 = vunpack.c.l.b16 %v7315
        %v7348 = vunpack.c.l.b16 %v7316
        %v7349 = vunpack.c.l.b16 %v7317
        %v7350 = vunpack.c.l.b16 %v7318
        %v7351 = vunpack.c.l.b16 %v7319
        %v7352 = vunpack.c.l.b16 %v7320
        %v7353 = vunpack.c.l.b16 %v7321
        %v7354 = vunpack.c.l.b16 %v7322
        %v7355 = vunpack.c.l.b16 %v7323
        %v7356 = vpack.c.b16 %v7341, %v7340
        %v7357 = vpack.c.b16 %v7343, %v7342
        %v7358 = vpack.c.b16 %v7345, %v7344
        %v7359 = vpack.c.b16 %v7347, %v7346
        %v7360 = vpack.c.b16 %v7349, %v7348
        %v7361 = vpack.c.b16 %v7351, %v7350
        %v7362 = vpack.c.b16 %v7353, %v7352
        %v7363 = vpack.c.b16 %v7355, %v7354
        %7372 = vmatprep.subr.bf16.mxu0 0
        %7373 = vmatpush1.bf16.msra.mxu0 %v7356
        %7374 = vmatprep.subr.bf16.mxu0 0
        %7375 = vmatpush1.bf16.msra.mxu0 %v7357
        %7376 = vmatprep.subr.bf16.mxu0 0
        %7377 = vmatpush1.bf16.msra.mxu0 %v7358
        %7378 = vmatprep.subr.bf16.mxu0 0
        %7379 = vmatpush1.bf16.msra.mxu0 %v7359
        %7380 = vmatprep.subr.bf16.mxu0 0
        %7381 = vmatpush1.bf16.msra.mxu0 %v7360
        %7382 = vmatprep.subr.bf16.mxu0 0
        %7383 = vmatpush1.bf16.msra.mxu0 %v7361
        %7384 = vmatprep.subr.bf16.mxu0 0
        %7385 = vmatpush1.bf16.msra.mxu0 %v7362
        %7386 = vmatprep.subr.bf16.mxu0 0
        %7387 = vmatpush1.bf16.msra.mxu0 %v7363
        %7388 = vmatprep.subr.bf16.mxu0 0
        %7389 = vmatpush1.bf16.msra.mxu0 0
        %7390 = vmatprep.subr.bf16.mxu0 0
        %7391 = vmatpush1.bf16.msra.mxu0 0
        %7392 = vmatprep.subr.bf16.mxu0 0
        %7393 = vmatpush1.bf16.msra.mxu0 0
        %7394 = vmatprep.subr.bf16.mxu0 0
        %7395 = vmatpush1.bf16.msra.mxu0 0
        %7396 = vmatprep.subr.bf16.mxu0 0
        %7397 = vmatpush1.bf16.msra.mxu0 0
        %7398 = vmatprep.subr.bf16.mxu0 0
        %7399 = vmatpush1.bf16.msra.mxu0 0
        %7400 = vmatprep.subr.bf16.mxu0 0
        %7401 = vmatpush1.bf16.msra.mxu0 0
        %7402 = vmatprep.subr.bf16.mxu0 0
        %7403 = vmatpush1.bf16.msra.mxu0 0
        %7404 = vmatprep.mubr.bf16.mxu0 0
        %7405 = vmatmul.mubr.bf16.gmra.mrb[0].mxu0 %v7299
        %v7406 = vpop.f32.mrb[0].mxu0
        %v7407 = vadd.f32 0.0, %v7406
        %v7408 = vpop.f32.mrb[0].mxu0
        %v7409 = vpop.f32.mrb[0].mxu0
        %v7410 = vadd.f32 0.0, %v7409
        %v7411 = vpop.f32.mrb[0].mxu0
        %7412 = vmatprep.mubr.bf16.mxu0 0
        %7413 = vmatmul.mubr.bf16.gmra.mrb[0].mxu0 %v7300
        %v7414 = vpop.f32.mrb[0].mxu0
        %v7415 = vadd.f32 0.0, %v7414
        %v7416 = vpop.f32.mrb[0].mxu0
        %v7417 = vpop.f32.mrb[0].mxu0
        %v7418 = vadd.f32 0.0, %v7417
        %v7419 = vpop.f32.mrb[0].mxu0
        %7420 = vmatprep.mubr.bf16.mxu0 0
        %7421 = vmatmul.mubr.bf16.gmra.mrb[0].mxu0 %v7301
        %v7422 = vpop.f32.mrb[0].mxu0
        %v7423 = vadd.f32 0.0, %v7422
        %v7424 = vpop.f32.mrb[0].mxu0
        %v7425 = vpop.f32.mrb[0].mxu0
        %v7426 = vadd.f32 0.0, %v7425
        %v7427 = vpop.f32.mrb[0].mxu0
        %7428 = vmatprep.mubr.bf16.mxu0 0
        %7429 = vmatmul.mubr.bf16.gmra.mrb[0].mxu0 %v7302
        %v7430 = vpop.f32.mrb[0].mxu0
        %v7431 = vadd.f32 0.0, %v7430
        %v7432 = vpop.f32.mrb[0].mxu0
        %v7433 = vpop.f32.mrb[0].mxu0
        %v7434 = vadd.f32 0.0, %v7433
        %v7435 = vpop.f32.mrb[0].mxu0
        %7436 = vmatprep.mubr.bf16.mxu0 0
        %7437 = vmatmul.mubr.bf16.gmra.mrb[0].mxu0 %v7303
        %v7438 = vpop.f32.mrb[0].mxu0
        %v7439 = vadd.f32 0.0, %v7438
        %v7440 = vpop.f32.mrb[0].mxu0
        %v7441 = vpop.f32.mrb[0].mxu0
        %v7442 = vadd.f32 0.0, %v7441
        %v7443 = vpop.f32.mrb[0].mxu0
        %7444 = vmatprep.mubr.bf16.mxu0 0
        %7445 = vmatmul.mubr.bf16.gmra.mrb[0].mxu0 %v7304
        %v7446 = vpop.f32.mrb[0].mxu0
        %v7447 = vadd.f32 0.0, %v7446
        %v7448 = vpop.f32.mrb[0].mxu0
        %v7449 = vpop.f32.mrb[0].mxu0
        %v7450 = vadd.f32 0.0, %v7449
        %v7451 = vpop.f32.mrb[0].mxu0
        %7452 = vmatprep.mubr.bf16.mxu0 0
        %7453 = vmatmul.mubr.bf16.gmra.mrb[0].mxu0 %v7305
        %v7454 = vpop.f32.mrb[0].mxu0
        %v7455 = vadd.f32 0.0, %v7454
        %v7456 = vpop.f32.mrb[0].mxu0
        %v7457 = vpop.f32.mrb[0].mxu0
        %v7458 = vadd.f32 0.0, %v7457
        %v7459 = vpop.f32.mrb[0].mxu0
        %7460 = vmatprep.mubr.bf16.mxu0 0
        %7461 = vmatmul.mubr.bf16.gmra.mrb[0].mxu0 %v7306
        %v7462 = vpop.f32.mrb[0].mxu0
        %v7463 = vadd.f32 0.0, %v7462
        %v7464 = vpop.f32.mrb[0].mxu0
        %v7465 = vpop.f32.mrb[0].mxu0
        %v7466 = vadd.f32 0.0, %v7465
        %v7467 = vpop.f32.mrb[0].mxu0
        %7468 = vdwg.mxu0
        %v7469 = vadd.f32 %v6395, %v7407
        %v7470 = vadd.f32 %v6396, %v7410
        %v7471 = vadd.f32 %v6397, %v7415
        %v7472 = vadd.f32 %v6398, %v7418
        %v7473 = vadd.f32 %v6399, %v7423
        %v7474 = vadd.f32 %v6400, %v7426
        %v7475 = vadd.f32 %v6401, %v7431
        %v7476 = vadd.f32 %v6402, %v7434
        %v7477 = vadd.f32 %v6403, %v7439
        %v7478 = vadd.f32 %v6404, %v7442
        %v7479 = vadd.f32 %v6405, %v7447
        %v7480 = vadd.f32 %v6406, %v7450
        %v7481 = vadd.f32 %v6407, %v7455
        %v7482 = vadd.f32 %v6408, %v7458
        %v7483 = vadd.f32 %v6409, %v7463
        %v7484 = vadd.f32 %v6410, %v7466
        %v7485 = vadd.f32 %v4728, %v7469
        %v7486 = vadd.f32 %v4729, %v7470
        %v7487 = vadd.f32 %v4730, %v7471
        %v7488 = vadd.f32 %v4731, %v7472
        %v7489 = vadd.f32 %v4732, %v7473
        %v7490 = vadd.f32 %v4733, %v7474
        %v7491 = vadd.f32 %v4734, %v7475
        %v7492 = vadd.f32 %v4735, %v7476
        %v7493 = vadd.f32 %v4736, %v7477
        %v7494 = vadd.f32 %v4737, %v7478
        %v7495 = vadd.f32 %v4738, %v7479
        %v7496 = vadd.f32 %v4739, %v7480
        %v7497 = vadd.f32 %v4740, %v7481
        %v7498 = vadd.f32 %v4741, %v7482
        %v7499 = vadd.f32 %v4742, %v7483
        %v7500 = vadd.f32 %v4743, %v7484
        %s7501 = scalar_lea.vmem [#allocation10], 1
        %v7502 = vld [vmem:[%s7501] sm:$0x1]
        %s7503 = scalar_lea.vmem [#allocation11], 1
        %v7504 = vld [vmem:[%s7503] sm:$0x1]
        %v7505 = vsel %vm1187, %v7485, 0.0
        %7506 = vadd.xlane.f32.xlu0 %v7505
        %v7507 = vpop.xlane.xlu0 %7506
        %v7508 = vsel %vm1187, %v7486, 0.0
        %7509 = vadd.xlane.f32.xlu0 %v7508
        %v7510 = vpop.xlane.xlu0 %7509
        %v7511 = vsel %vm1187, %v7487, 0.0
        %7512 = vadd.xlane.f32.xlu0 %v7511
        %v7513 = vpop.xlane.xlu0 %7512
        %v7514 = vsel %vm1187, %v7488, 0.0
        %7515 = vadd.xlane.f32.xlu0 %v7514
        %v7516 = vpop.xlane.xlu0 %7515
        %v7517 = vsel %vm1187, %v7489, 0.0
        %7518 = vadd.xlane.f32.xlu0 %v7517
        %v7519 = vpop.xlane.xlu0 %7518
        %v7520 = vsel %vm1187, %v7490, 0.0
        %7521 = vadd.xlane.f32.xlu0 %v7520
        %v7522 = vpop.xlane.xlu0 %7521
        %v7523 = vsel %vm1187, %v7491, 0.0
        %7524 = vadd.xlane.f32.xlu0 %v7523
        %v7525 = vpop.xlane.xlu0 %7524
        %v7526 = vsel %vm1187, %v7492, 0.0
        %7527 = vadd.xlane.f32.xlu0 %v7526
        %v7528 = vpop.xlane.xlu0 %7527
        %v7529 = vsel %vm1187, %v7493, 0.0
        %7530 = vadd.xlane.f32.xlu0 %v7529
        %v7531 = vpop.xlane.xlu0 %7530
        %v7532 = vsel %vm1187, %v7494, 0.0
        %7533 = vadd.xlane.f32.xlu0 %v7532
        %v7534 = vpop.xlane.xlu0 %7533
        %v7535 = vsel %vm1187, %v7495, 0.0
        %7536 = vadd.xlane.f32.xlu0 %v7535
        %v7537 = vpop.xlane.xlu0 %7536
        %v7538 = vsel %vm1187, %v7496, 0.0
        %7539 = vadd.xlane.f32.xlu0 %v7538
        %v7540 = vpop.xlane.xlu0 %7539
        %v7541 = vsel %vm1187, %v7497, 0.0
        %7542 = vadd.xlane.f32.xlu0 %v7541
        %v7543 = vpop.xlane.xlu0 %7542
        %v7544 = vsel %vm1187, %v7498, 0.0
        %7545 = vadd.xlane.f32.xlu0 %v7544
        %v7546 = vpop.xlane.xlu0 %7545
        %v7547 = vsel %vm1187, %v7499, 0.0
        %7548 = vadd.xlane.f32.xlu0 %v7547
        %v7549 = vpop.xlane.xlu0 %7548
        %v7550 = vsel %vm1187, %v7500, 0.0
        %7551 = vadd.xlane.f32.xlu0 %v7550
        %v7552 = vpop.xlane.xlu0 %7551
        %v7553 = vmul.f32 %v7507, %v3772
        %v7554 = vmul.f32 %v7510, %v3772
        %v7555 = vmul.f32 %v7513, %v3772
        %v7556 = vmul.f32 %v7516, %v3772
        %v7557 = vmul.f32 %v7519, %v3772
        %v7558 = vmul.f32 %v7522, %v3772
        %v7559 = vmul.f32 %v7525, %v3772
        %v7560 = vmul.f32 %v7528, %v3772
        %v7561 = vmul.f32 %v7531, %v3772
        %v7562 = vmul.f32 %v7534, %v3772
        %v7563 = vmul.f32 %v7537, %v3772
        %v7564 = vmul.f32 %v7540, %v3772
        %v7565 = vmul.f32 %v7543, %v3772
        %v7566 = vmul.f32 %v7546, %v3772
        %v7567 = vmul.f32 %v7549, %v3772
        %v7568 = vmul.f32 %v7552, %v3772
        %v7569 = vsub.f32 %v7485, %v7553
        %v7570 = vsub.f32 %v7486, %v7554
        %v7571 = vsub.f32 %v7487, %v7555
        %v7572 = vsub.f32 %v7488, %v7556
        %v7573 = vsub.f32 %v7489, %v7557
        %v7574 = vsub.f32 %v7490, %v7558
        %v7575 = vsub.f32 %v7491, %v7559
        %v7576 = vsub.f32 %v7492, %v7560
        %v7577 = vsub.f32 %v7493, %v7561
        %v7578 = vsub.f32 %v7494, %v7562
        %v7579 = vsub.f32 %v7495, %v7563
        %v7580 = vsub.f32 %v7496, %v7564
        %v7581 = vsub.f32 %v7497, %v7565
        %v7582 = vsub.f32 %v7498, %v7566
        %v7583 = vsub.f32 %v7499, %v7567
        %v7584 = vsub.f32 %v7500, %v7568
        %v7585 = vmul.f32 %v7569, %v7569
        %v7586 = vmul.f32 %v7570, %v7570
        %v7587 = vmul.f32 %v7571, %v7571
        %v7588 = vmul.f32 %v7572, %v7572
        %v7589 = vmul.f32 %v7573, %v7573
        %v7590 = vmul.f32 %v7574, %v7574
        %v7591 = vmul.f32 %v7575, %v7575
        %v7592 = vmul.f32 %v7576, %v7576
        %v7593 = vmul.f32 %v7577, %v7577
        %v7594 = vmul.f32 %v7578, %v7578
        %v7595 = vmul.f32 %v7579, %v7579
        %v7596 = vmul.f32 %v7580, %v7580
        %v7597 = vmul.f32 %v7581, %v7581
        %v7598 = vmul.f32 %v7582, %v7582
        %v7599 = vmul.f32 %v7583, %v7583
        %v7600 = vmul.f32 %v7584, %v7584
        %v7601 = vsel %vm1187, %v7585, 0.0
        %7602 = vadd.xlane.f32.xlu0 %v7601
        %v7603 = vpop.xlane.xlu0 %7602
        %v7604 = vsel %vm1187, %v7586, 0.0
        %7605 = vadd.xlane.f32.xlu0 %v7604
        %v7606 = vpop.xlane.xlu0 %7605
        %v7607 = vsel %vm1187, %v7587, 0.0
        %7608 = vadd.xlane.f32.xlu0 %v7607
        %v7609 = vpop.xlane.xlu0 %7608
        %v7610 = vsel %vm1187, %v7588, 0.0
        %7611 = vadd.xlane.f32.xlu0 %v7610
        %v7612 = vpop.xlane.xlu0 %7611
        %v7613 = vsel %vm1187, %v7589, 0.0
        %7614 = vadd.xlane.f32.xlu0 %v7613
        %v7615 = vpop.xlane.xlu0 %7614
        %v7616 = vsel %vm1187, %v7590, 0.0
        %7617 = vadd.xlane.f32.xlu0 %v7616
        %v7618 = vpop.xlane.xlu0 %7617
        %v7619 = vsel %vm1187, %v7591, 0.0
        %7620 = vadd.xlane.f32.xlu0 %v7619
        %v7621 = vpop.xlane.xlu0 %7620
        %v7622 = vsel %vm1187, %v7592, 0.0
        %7623 = vadd.xlane.f32.xlu0 %v7622
        %v7624 = vpop.xlane.xlu0 %7623
        %v7625 = vsel %vm1187, %v7593, 0.0
        %7626 = vadd.xlane.f32.xlu0 %v7625
        %v7627 = vpop.xlane.xlu0 %7626
        %v7628 = vsel %vm1187, %v7594, 0.0
        %7629 = vadd.xlane.f32.xlu0 %v7628
        %v7630 = vpop.xlane.xlu0 %7629
        %v7631 = vsel %vm1187, %v7595, 0.0
        %7632 = vadd.xlane.f32.xlu0 %v7631
        %v7633 = vpop.xlane.xlu0 %7632
        %v7634 = vsel %vm1187, %v7596, 0.0
        %7635 = vadd.xlane.f32.xlu0 %v7634
        %v7636 = vpop.xlane.xlu0 %7635
        %v7637 = vsel %vm1187, %v7597, 0.0
        %7638 = vadd.xlane.f32.xlu0 %v7637
        %v7639 = vpop.xlane.xlu0 %7638
        %v7640 = vsel %vm1187, %v7598, 0.0
        %7641 = vadd.xlane.f32.xlu0 %v7640
        %v7642 = vpop.xlane.xlu0 %7641
        %v7643 = vsel %vm1187, %v7599, 0.0
        %7644 = vadd.xlane.f32.xlu0 %v7643
        %v7645 = vpop.xlane.xlu0 %7644
        %v7646 = vsel %vm1187, %v7600, 0.0
        %7647 = vadd.xlane.f32.xlu0 %v7646
        %v7648 = vpop.xlane.xlu0 %7647
        %v7649 = vmul.f32 %v7603, %v3772
        %v7650 = vmul.f32 %v7606, %v3772
        %v7651 = vmul.f32 %v7609, %v3772
        %v7652 = vmul.f32 %v7612, %v3772
        %v7653 = vmul.f32 %v7615, %v3772
        %v7654 = vmul.f32 %v7618, %v3772
        %v7655 = vmul.f32 %v7621, %v3772
        %v7656 = vmul.f32 %v7624, %v3772
        %v7657 = vmul.f32 %v7627, %v3772
        %v7658 = vmul.f32 %v7630, %v3772
        %v7659 = vmul.f32 %v7633, %v3772
        %v7660 = vmul.f32 %v7636, %v3772
        %v7661 = vmul.f32 %v7639, %v3772
        %v7662 = vmul.f32 %v7642, %v3772
        %v7663 = vmul.f32 %v7645, %v3772
        %v7664 = vmul.f32 %v7648, %v3772
        %v7665 = vadd.f32 %v7649, 1e-05
        %v7666 = vadd.f32 %v7650, 1e-05
        %v7667 = vadd.f32 %v7651, 1e-05
        %v7668 = vadd.f32 %v7652, 1e-05
        %v7669 = vadd.f32 %v7653, 1e-05
        %v7670 = vadd.f32 %v7654, 1e-05
        %v7671 = vadd.f32 %v7655, 1e-05
        %v7672 = vadd.f32 %v7656, 1e-05
        %v7673 = vadd.f32 %v7657, 1e-05
        %v7674 = vadd.f32 %v7658, 1e-05
        %v7675 = vadd.f32 %v7659, 1e-05
        %v7676 = vadd.f32 %v7660, 1e-05
        %v7677 = vadd.f32 %v7661, 1e-05
        %v7678 = vadd.f32 %v7662, 1e-05
        %v7679 = vadd.f32 %v7663, 1e-05
        %v7680 = vadd.f32 %v7664, 1e-05
        %v7681 = vrsqrt.pop %v7665
        %v7682 = vrsqrt.pop %v7666
        %v7683 = vrsqrt.pop %v7667
        %v7684 = vrsqrt.pop %v7668
        %v7685 = vrsqrt.pop %v7669
        %v7686 = vrsqrt.pop %v7670
        %v7687 = vrsqrt.pop %v7671
        %v7688 = vrsqrt.pop %v7672
        %v7689 = vrsqrt.pop %v7673
        %v7690 = vrsqrt.pop %v7674
        %v7691 = vrsqrt.pop %v7675
        %v7692 = vrsqrt.pop %v7676
        %v7693 = vrsqrt.pop %v7677
        %v7694 = vrsqrt.pop %v7678
        %v7695 = vrsqrt.pop %v7679
        %v7696 = vrsqrt.pop %v7680
        %v7697 = vmul.f32 %v7569, %v7681
        %v7698 = vmul.f32 %v7570, %v7682
        %v7699 = vmul.f32 %v7571, %v7683
        %v7700 = vmul.f32 %v7572, %v7684
        %v7701 = vmul.f32 %v7573, %v7685
        %v7702 = vmul.f32 %v7574, %v7686
        %v7703 = vmul.f32 %v7575, %v7687
        %v7704 = vmul.f32 %v7576, %v7688
        %v7705 = vmul.f32 %v7577, %v7689
        %v7706 = vmul.f32 %v7578, %v7690
        %v7707 = vmul.f32 %v7579, %v7691
        %v7708 = vmul.f32 %v7580, %v7692
        %v7709 = vmul.f32 %v7581, %v7693
        %v7710 = vmul.f32 %v7582, %v7694
        %v7711 = vmul.f32 %v7583, %v7695
        %v7712 = vmul.f32 %v7584, %v7696
        %v7714 = vlaneseq
        %v7715 = vshrl.u32 %v7714, 7
        %v7716 = vsub.s32 0, %v7715
        %v7717 = vrot.slane %v7502, %v7716
        %v7719 = vmul.f32 %v7697, %v7717
        %v7720 = vmul.f32 %v7698, %v7717
        %v7721 = vmul.f32 %v7699, %v7717
        %v7722 = vmul.f32 %v7700, %v7717
        %v7723 = vmul.f32 %v7701, %v7717
        %v7724 = vmul.f32 %v7702, %v7717
        %v7725 = vmul.f32 %v7703, %v7717
        %v7726 = vmul.f32 %v7704, %v7717
        %v7727 = vmul.f32 %v7705, %v7717
        %v7728 = vmul.f32 %v7706, %v7717
        %v7729 = vmul.f32 %v7707, %v7717
        %v7730 = vmul.f32 %v7708, %v7717
        %v7731 = vmul.f32 %v7709, %v7717
        %v7732 = vmul.f32 %v7710, %v7717
        %v7733 = vmul.f32 %v7711, %v7717
        %v7734 = vmul.f32 %v7712, %v7717
        %v7736 = vlaneseq
        %v7737 = vshrl.u32 %v7736, 7
        %v7738 = vsub.s32 0, %v7737
        %v7739 = vrot.slane %v7504, %v7738
        %v7741 = vadd.f32 %v7719, %v7739
        %v7742 = vadd.f32 %v7720, %v7739
        %v7743 = vadd.f32 %v7721, %v7739
        %v7744 = vadd.f32 %v7722, %v7739
        %v7745 = vadd.f32 %v7723, %v7739
        %v7746 = vadd.f32 %v7724, %v7739
        %v7747 = vadd.f32 %v7725, %v7739
        %v7748 = vadd.f32 %v7726, %v7739
        %v7749 = vadd.f32 %v7727, %v7739
        %v7750 = vadd.f32 %v7728, %v7739
        %v7751 = vadd.f32 %v7729, %v7739
        %v7752 = vadd.f32 %v7730, %v7739
        %v7753 = vadd.f32 %v7731, %v7739
        %v7754 = vadd.f32 %v7732, %v7739
        %v7755 = vadd.f32 %v7733, %v7739
        %v7756 = vadd.f32 %v7734, %v7739
        %v7757 = vpack.c.bf16 %v7742, %v7741
        %v7758 = vpack.c.bf16 %v7744, %v7743
        %v7759 = vpack.c.bf16 %v7746, %v7745
        %v7760 = vpack.c.bf16 %v7748, %v7747
        %v7761 = vpack.c.bf16 %v7750, %v7749
        %v7762 = vpack.c.bf16 %v7752, %v7751
        %v7763 = vpack.c.bf16 %v7754, %v7753
        %v7764 = vpack.c.bf16 %v7756, %v7755
        %s7765 = scalar_lea.vmem %s9, 80
        %v7766 = vld [vmem:[%s7765] sm:$0xff]
        %v7767 = vld [vmem:[%s7765 + $0x8] sm:$0xff]
        %v7768 = vld [vmem:[%s7765 + $0x10] sm:$0xff]
        %v7769 = vld [vmem:[%s7765 + $0x18] sm:$0xff]
        %v7770 = vld [vmem:[%s7765 + $0x20] sm:$0xff]
        %v7771 = vld [vmem:[%s7765 + $0x28] sm:$0xff]
        %v7772 = vld [vmem:[%s7765 + $0x30] sm:$0xff]
        %v7773 = vld [vmem:[%s7765 + $0x38] sm:$0xff]
        %v7774 = vld [vmem:[%s7765 + $0x40] sm:$0xff]
        %v7775 = vld [vmem:[%s7765 + $0x48] sm:$0xff]
        %s7776 = scalar_lea.vmem %s10, 2
        %v7777 = vld [vmem:[%s7776] sm:$0x3]
        %v7779 = vlaneseq
        %v7780 = vshrl.u32 %v7779, 7
        %v7781 = vsub.s32 0, %v7780
        %v7782 = vrot.slane %v7777, %v7781
        %v7783 = vlaneseq
        %v7784 = vshrl.u32 %v7783, 7
        %v7785 = vsub.s32 1, %v7784
        %v7786 = vrot.slane %v7777, %v7785
        %v7799 = vunpack.c.l.b16 %v7766
        %v7800 = vunpack.c.h.b16 %v7766
        %v7801 = vunpack.c.l.b16 %v7767
        %v7802 = vunpack.c.h.b16 %v7767
        %v7803 = vunpack.c.l.b16 %v7768
        %v7804 = vunpack.c.h.b16 %v7768
        %v7805 = vunpack.c.l.b16 %v7769
        %v7806 = vunpack.c.h.b16 %v7769
        %v7807 = vunpack.c.l.b16 %v7770
        %v7808 = vunpack.c.h.b16 %v7770
        %v7809 = vunpack.c.l.b16 %v7771
        %v7810 = vunpack.c.h.b16 %v7771
        %v7811 = vunpack.c.l.b16 %v7772
        %v7812 = vunpack.c.h.b16 %v7772
        %v7813 = vunpack.c.l.b16 %v7773
        %v7814 = vunpack.c.h.b16 %v7773
        %v7815 = vunpack.c.l.b16 %v7774
        %v7816 = vunpack.c.h.b16 %v7774
        %v7817 = vunpack.c.l.b16 %v7775
        %v7818 = vunpack.c.h.b16 %v7775
        %v7819 = vpack.c.b16 %v7801, %v7799
        %v7820 = vpack.c.b16 %v7802, %v7800
        %v7821 = vpack.c.b16 %v7805, %v7803
        %v7822 = vpack.c.b16 %v7806, %v7804
        %v7823 = vpack.c.b16 %v7809, %v7807
        %v7824 = vpack.c.b16 %v7810, %v7808
        %v7825 = vpack.c.b16 %v7813, %v7811
        %v7826 = vpack.c.b16 %v7814, %v7812
        %v7827 = vpack.c.b16 %v7817, %v7815
        %v7828 = vpack.c.b16 %v7818, %v7816
        %v7840 = vsel %vm1187, %v7757, 0
        %v7843 = vsel %vm1187, %v7758, 0
        %v7846 = vsel %vm1187, %v7759, 0
        %v7849 = vsel %vm1187, %v7760, 0
        %v7852 = vsel %vm1187, %v7761, 0
        %v7855 = vsel %vm1187, %v7762, 0
        %v7858 = vsel %vm1187, %v7763, 0
        %v7861 = vsel %vm1187, %v7764, 0
        %7863 = vmatprep.subr.bf16.mxu0 %v7820
        %7864 = vmatpush1.bf16.msra.mxu0 %v7819
        %7865 = vmatprep.subr.bf16.mxu0 %v7822
        %7866 = vmatpush1.bf16.msra.mxu0 %v7821
        %7867 = vmatprep.subr.bf16.mxu0 %v7824
        %7868 = vmatpush1.bf16.msra.mxu0 %v7823
        %7869 = vmatprep.subr.bf16.mxu0 %v7826
        %7870 = vmatpush1.bf16.msra.mxu0 %v7825
        %7871 = vmatprep.subr.bf16.mxu0 %v7828
        %7872 = vmatpush1.bf16.msra.mxu0 %v7827
        %7873 = vmatprep.subr.bf16.mxu0 0
        %7874 = vmatpush1.bf16.msra.mxu0 0
        %7875 = vmatprep.subr.bf16.mxu0 0
        %7876 = vmatpush1.bf16.msra.mxu0 0
        %7877 = vmatprep.subr.bf16.mxu0 0
        %7878 = vmatpush1.bf16.msra.mxu0 0
        %7879 = vmatprep.subr.bf16.mxu0 0
        %7880 = vmatpush1.bf16.msra.mxu0 0
        %7881 = vmatprep.subr.bf16.mxu0 0
        %7882 = vmatpush1.bf16.msra.mxu0 0
        %7883 = vmatprep.subr.bf16.mxu0 0
        %7884 = vmatpush1.bf16.msra.mxu0 0
        %7885 = vmatprep.subr.bf16.mxu0 0
        %7886 = vmatpush1.bf16.msra.mxu0 0
        %7887 = vmatprep.subr.bf16.mxu0 0
        %7888 = vmatpush1.bf16.msra.mxu0 0
        %7889 = vmatprep.subr.bf16.mxu0 0
        %7890 = vmatpush1.bf16.msra.mxu0 0
        %7891 = vmatprep.subr.bf16.mxu0 0
        %7892 = vmatpush1.bf16.msra.mxu0 0
        %7893 = vmatprep.subr.bf16.mxu0 0
        %7894 = vmatpush1.bf16.msra.mxu0 0
        %7895 = vmatprep.mubr.bf16.mxu0 0
        %7896 = vmatmul.mubr.bf16.gmra.mrb[0].mxu0 %v7840
        %v7897 = vpop.f32.mrb[0].mxu0
        %v7898 = vadd.f32 %v7782, %v7897
        %v7899 = vpop.f32.mrb[0].mxu0
        %v7900 = vadd.f32 %v7786, %v7899
        %v7901 = vpop.f32.mrb[0].mxu0
        %v7902 = vadd.f32 %v7782, %v7901
        %v7903 = vpop.f32.mrb[0].mxu0
        %v7904 = vadd.f32 %v7786, %v7903
        %7905 = vmatprep.mubr.bf16.mxu0 0
        %7906 = vmatmul.mubr.bf16.gmra.mrb[0].mxu0 %v7843
        %v7907 = vpop.f32.mrb[0].mxu0
        %v7908 = vadd.f32 %v7782, %v7907
        %v7909 = vpop.f32.mrb[0].mxu0
        %v7910 = vadd.f32 %v7786, %v7909
        %v7911 = vpop.f32.mrb[0].mxu0
        %v7912 = vadd.f32 %v7782, %v7911
        %v7913 = vpop.f32.mrb[0].mxu0
        %v7914 = vadd.f32 %v7786, %v7913
        %7915 = vmatprep.mubr.bf16.mxu0 0
        %7916 = vmatmul.mubr.bf16.gmra.mrb[0].mxu0 %v7846
        %v7917 = vpop.f32.mrb[0].mxu0
        %v7918 = vadd.f32 %v7782, %v7917
        %v7919 = vpop.f32.mrb[0].mxu0
        %v7920 = vadd.f32 %v7786, %v7919
        %v7921 = vpop.f32.mrb[0].mxu0
        %v7922 = vadd.f32 %v7782, %v7921
        %v7923 = vpop.f32.mrb[0].mxu0
        %v7924 = vadd.f32 %v7786, %v7923
        %7925 = vmatprep.mubr.bf16.mxu0 0
        %7926 = vmatmul.mubr.bf16.gmra.mrb[0].mxu0 %v7849
        %v7927 = vpop.f32.mrb[0].mxu0
        %v7928 = vadd.f32 %v7782, %v7927
        %v7929 = vpop.f32.mrb[0].mxu0
        %v7930 = vadd.f32 %v7786, %v7929
        %v7931 = vpop.f32.mrb[0].mxu0
        %v7932 = vadd.f32 %v7782, %v7931
        %v7933 = vpop.f32.mrb[0].mxu0
        %v7934 = vadd.f32 %v7786, %v7933
        %7935 = vmatprep.mubr.bf16.mxu0 0
        %7936 = vmatmul.mubr.bf16.gmra.mrb[0].mxu0 %v7852
        %v7937 = vpop.f32.mrb[0].mxu0
        %v7938 = vadd.f32 %v7782, %v7937
        %v7939 = vpop.f32.mrb[0].mxu0
        %v7940 = vadd.f32 %v7786, %v7939
        %v7941 = vpop.f32.mrb[0].mxu0
        %v7942 = vadd.f32 %v7782, %v7941
        %v7943 = vpop.f32.mrb[0].mxu0
        %v7944 = vadd.f32 %v7786, %v7943
        %7945 = vmatprep.mubr.bf16.mxu0 0
        %7946 = vmatmul.mubr.bf16.gmra.mrb[0].mxu0 %v7855
        %v7947 = vpop.f32.mrb[0].mxu0
        %v7948 = vadd.f32 %v7782, %v7947
        %v7949 = vpop.f32.mrb[0].mxu0
        %v7950 = vadd.f32 %v7786, %v7949
        %v7951 = vpop.f32.mrb[0].mxu0
        %v7952 = vadd.f32 %v7782, %v7951
        %v7953 = vpop.f32.mrb[0].mxu0
        %v7954 = vadd.f32 %v7786, %v7953
        %7955 = vmatprep.mubr.bf16.mxu0 0
        %7956 = vmatmul.mubr.bf16.gmra.mrb[0].mxu0 %v7858
        %v7957 = vpop.f32.mrb[0].mxu0
        %v7958 = vadd.f32 %v7782, %v7957
        %v7959 = vpop.f32.mrb[0].mxu0
        %v7960 = vadd.f32 %v7786, %v7959
        %v7961 = vpop.f32.mrb[0].mxu0
        %v7962 = vadd.f32 %v7782, %v7961
        %v7963 = vpop.f32.mrb[0].mxu0
        %v7964 = vadd.f32 %v7786, %v7963
        %7965 = vmatprep.mubr.bf16.mxu0 0
        %7966 = vmatmul.mubr.bf16.gmra.mrb[0].mxu0 %v7861
        %v7967 = vpop.f32.mrb[0].mxu0
        %v7968 = vadd.f32 %v7782, %v7967
        %v7969 = vpop.f32.mrb[0].mxu0
        %v7970 = vadd.f32 %v7786, %v7969
        %v7971 = vpop.f32.mrb[0].mxu0
        %v7972 = vadd.f32 %v7782, %v7971
        %v7973 = vpop.f32.mrb[0].mxu0
        %v7974 = vadd.f32 %v7786, %v7973
        %7975 = vdwg.mxu0
        %v7976 = vmax.f32 %v7898, 0.0
        %v7977 = vmax.f32 %v7900, 0.0
        %v7978 = vmax.f32 %v7902, 0.0
        %v7979 = vmax.f32 %v7904, 0.0
        %v7980 = vmax.f32 %v7908, 0.0
        %v7981 = vmax.f32 %v7910, 0.0
        %v7982 = vmax.f32 %v7912, 0.0
        %v7983 = vmax.f32 %v7914, 0.0
        %v7984 = vmax.f32 %v7918, 0.0
        %v7985 = vmax.f32 %v7920, 0.0
        %v7986 = vmax.f32 %v7922, 0.0
        %v7987 = vmax.f32 %v7924, 0.0
        %v7988 = vmax.f32 %v7928, 0.0
        %v7989 = vmax.f32 %v7930, 0.0
        %v7990 = vmax.f32 %v7932, 0.0
        %v7991 = vmax.f32 %v7934, 0.0
        %v7992 = vmax.f32 %v7938, 0.0
        %v7993 = vmax.f32 %v7940, 0.0
        %v7994 = vmax.f32 %v7942, 0.0
        %v7995 = vmax.f32 %v7944, 0.0
        %v7996 = vmax.f32 %v7948, 0.0
        %v7997 = vmax.f32 %v7950, 0.0
        %v7998 = vmax.f32 %v7952, 0.0
        %v7999 = vmax.f32 %v7954, 0.0
        %v8000 = vmax.f32 %v7958, 0.0
        %v8001 = vmax.f32 %v7960, 0.0
        %v8002 = vmax.f32 %v7962, 0.0
        %v8003 = vmax.f32 %v7964, 0.0
        %v8004 = vmax.f32 %v7968, 0.0
        %v8005 = vmax.f32 %v7970, 0.0
        %v8006 = vmax.f32 %v7972, 0.0
        %v8007 = vmax.f32 %v7974, 0.0
        %v8008 = vpack.c.bf16 %v7978, %v7976
        %v8009 = vpack.c.bf16 %v7979, %v7977
        %v8010 = vpack.c.bf16 %v7982, %v7980
        %v8011 = vpack.c.bf16 %v7983, %v7981
        %v8012 = vpack.c.bf16 %v7986, %v7984
        %v8013 = vpack.c.bf16 %v7987, %v7985
        %v8014 = vpack.c.bf16 %v7990, %v7988
        %v8015 = vpack.c.bf16 %v7991, %v7989
        %v8016 = vpack.c.bf16 %v7994, %v7992
        %v8017 = vpack.c.bf16 %v7995, %v7993
        %v8018 = vpack.c.bf16 %v7998, %v7996
        %v8019 = vpack.c.bf16 %v7999, %v7997
        %v8020 = vpack.c.bf16 %v8002, %v8000
        %v8021 = vpack.c.bf16 %v8003, %v8001
        %v8022 = vpack.c.bf16 %v8006, %v8004
        %v8023 = vpack.c.bf16 %v8007, %v8005
        %s8024 = scalar_lea.vmem %s11, 128
        %v8025 = vld [vmem:[%s8024] sm:$0xf]
        %v8026 = vld [vmem:[%s8024 + $0x4] sm:$0xf]
        %v8027 = vld [vmem:[%s8024 + $0x8] sm:$0xf]
        %v8028 = vld [vmem:[%s8024 + $0xc] sm:$0xf]
        %v8029 = vld [vmem:[%s8024 + $0x10] sm:$0xf]
        %v8030 = vld [vmem:[%s8024 + $0x14] sm:$0xf]
        %v8031 = vld [vmem:[%s8024 + $0x18] sm:$0xf]
        %v8032 = vld [vmem:[%s8024 + $0x1c] sm:$0xf]
        %v8033 = vld [vmem:[%s8024 + $0x20] sm:$0xf]
        %v8034 = vld [vmem:[%s8024 + $0x24] sm:$0xf]
        %v8035 = vld [vmem:[%s8024 + $0x28] sm:$0xf]
        %v8036 = vld [vmem:[%s8024 + $0x2c] sm:$0xf]
        %v8037 = vld [vmem:[%s8024 + $0x30] sm:$0xf]
        %v8038 = vld [vmem:[%s8024 + $0x34] sm:$0xf]
        %v8039 = vld [vmem:[%s8024 + $0x38] sm:$0xf]
        %v8040 = vld [vmem:[%s8024 + $0x3c] sm:$0xf]
        %v8041 = vld [vmem:[%s8024 + $0x40] sm:$0xf]
        %v8042 = vld [vmem:[%s8024 + $0x44] sm:$0xf]
        %v8043 = vld [vmem:[%s8024 + $0x48] sm:$0xf]
        %v8044 = vld [vmem:[%s8024 + $0x4c] sm:$0xf]
        %v8045 = vld [vmem:[%s8024 + $0x50] sm:$0xf]
        %v8046 = vld [vmem:[%s8024 + $0x54] sm:$0xf]
        %v8047 = vld [vmem:[%s8024 + $0x58] sm:$0xf]
        %v8048 = vld [vmem:[%s8024 + $0x5c] sm:$0xf]
        %v8049 = vld [vmem:[%s8024 + $0x60] sm:$0xf]
        %v8050 = vld [vmem:[%s8024 + $0x64] sm:$0xf]
        %v8051 = vld [vmem:[%s8024 + $0x68] sm:$0xf]
        %v8052 = vld [vmem:[%s8024 + $0x6c] sm:$0xf]
        %v8053 = vld [vmem:[%s8024 + $0x70] sm:$0xf]
        %v8054 = vld [vmem:[%s8024 + $0x74] sm:$0xf]
        %v8055 = vld [vmem:[%s8024 + $0x78] sm:$0xf]
        %v8056 = vld [vmem:[%s8024 + $0x7c] sm:$0xf]
        %s8057 = scalar_lea.vmem [#allocation13], 1
        %v8058 = vld [vmem:[%s8057] sm:$0x1]
        %v8060 = vlaneseq
        %v8061 = vshrl.u32 %v8060, 7
        %v8062 = vsub.s32 0, %v8061
        %v8063 = vrot.slane %v8058, %v8062
        %v8097 = vunpack.c.l.b16 %v8025
        %v8098 = vunpack.c.l.b16 %v8026
        %v8099 = vunpack.c.l.b16 %v8027
        %v8100 = vunpack.c.l.b16 %v8028
        %v8101 = vunpack.c.l.b16 %v8029
        %v8102 = vunpack.c.l.b16 %v8030
        %v8103 = vunpack.c.l.b16 %v8031
        %v8104 = vunpack.c.l.b16 %v8032
        %v8105 = vunpack.c.l.b16 %v8033
        %v8106 = vunpack.c.l.b16 %v8034
        %v8107 = vunpack.c.l.b16 %v8035
        %v8108 = vunpack.c.l.b16 %v8036
        %v8109 = vunpack.c.l.b16 %v8037
        %v8110 = vunpack.c.l.b16 %v8038
        %v8111 = vunpack.c.l.b16 %v8039
        %v8112 = vunpack.c.l.b16 %v8040
        %v8113 = vunpack.c.l.b16 %v8041
        %v8114 = vunpack.c.l.b16 %v8042
        %v8115 = vunpack.c.l.b16 %v8043
        %v8116 = vunpack.c.l.b16 %v8044
        %v8117 = vunpack.c.l.b16 %v8045
        %v8118 = vunpack.c.l.b16 %v8046
        %v8119 = vunpack.c.l.b16 %v8047
        %v8120 = vunpack.c.l.b16 %v8048
        %v8121 = vunpack.c.l.b16 %v8049
        %v8122 = vunpack.c.l.b16 %v8050
        %v8123 = vunpack.c.l.b16 %v8051
        %v8124 = vunpack.c.l.b16 %v8052
        %v8125 = vunpack.c.l.b16 %v8053
        %v8126 = vunpack.c.l.b16 %v8054
        %v8127 = vunpack.c.l.b16 %v8055
        %v8128 = vunpack.c.l.b16 %v8056
        %v8129 = vpack.c.b16 %v8098, %v8097
        %v8130 = vpack.c.b16 %v8100, %v8099
        %v8131 = vpack.c.b16 %v8102, %v8101
        %v8132 = vpack.c.b16 %v8104, %v8103
        %v8133 = vpack.c.b16 %v8106, %v8105
        %v8134 = vpack.c.b16 %v8108, %v8107
        %v8135 = vpack.c.b16 %v8110, %v8109
        %v8136 = vpack.c.b16 %v8112, %v8111
        %v8137 = vpack.c.b16 %v8114, %v8113
        %v8138 = vpack.c.b16 %v8116, %v8115
        %v8139 = vpack.c.b16 %v8118, %v8117
        %v8140 = vpack.c.b16 %v8120, %v8119
        %v8141 = vpack.c.b16 %v8122, %v8121
        %v8142 = vpack.c.b16 %v8124, %v8123
        %v8143 = vpack.c.b16 %v8126, %v8125
        %v8144 = vpack.c.b16 %v8128, %v8127
        %8161 = vmatprep.subr.bf16.mxu0 0
        %8162 = vmatpush1.bf16.msra.mxu0 %v8129
        %8163 = vmatprep.subr.bf16.mxu0 0
        %8164 = vmatpush1.bf16.msra.mxu0 %v8130
        %8165 = vmatprep.subr.bf16.mxu0 0
        %8166 = vmatpush1.bf16.msra.mxu0 %v8131
        %8167 = vmatprep.subr.bf16.mxu0 0
        %8168 = vmatpush1.bf16.msra.mxu0 %v8132
        %8169 = vmatprep.subr.bf16.mxu0 0
        %8170 = vmatpush1.bf16.msra.mxu0 %v8133
        %8171 = vmatprep.subr.bf16.mxu0 0
        %8172 = vmatpush1.bf16.msra.mxu0 %v8134
        %8173 = vmatprep.subr.bf16.mxu0 0
        %8174 = vmatpush1.bf16.msra.mxu0 %v8135
        %8175 = vmatprep.subr.bf16.mxu0 0
        %8176 = vmatpush1.bf16.msra.mxu0 %v8136
        %8177 = vmatprep.subr.bf16.mxu0 0
        %8178 = vmatpush1.bf16.msra.mxu0 %v8137
        %8179 = vmatprep.subr.bf16.mxu0 0
        %8180 = vmatpush1.bf16.msra.mxu0 %v8138
        %8181 = vmatprep.subr.bf16.mxu0 0
        %8182 = vmatpush1.bf16.msra.mxu0 %v8139
        %8183 = vmatprep.subr.bf16.mxu0 0
        %8184 = vmatpush1.bf16.msra.mxu0 %v8140
        %8185 = vmatprep.subr.bf16.mxu0 0
        %8186 = vmatpush1.bf16.msra.mxu0 %v8141
        %8187 = vmatprep.subr.bf16.mxu0 0
        %8188 = vmatpush1.bf16.msra.mxu0 %v8142
        %8189 = vmatprep.subr.bf16.mxu0 0
        %8190 = vmatpush1.bf16.msra.mxu0 %v8143
        %8191 = vmatprep.subr.bf16.mxu0 0
        %8192 = vmatpush1.bf16.msra.mxu0 %v8144
        %8193 = vmatprep.mubr.bf16.mxu0 %v8009
        %8194 = vmatmul.mubr.bf16.gmra.mrb[0].mxu0 %v8008
        %v8195 = vpop.f32.mrb[0].mxu0
        %v8196 = vadd.f32 %v8063, %v8195
        %v8197 = vpop.f32.mrb[0].mxu0
        %v8198 = vpop.f32.mrb[0].mxu0
        %v8199 = vadd.f32 %v8063, %v8198
        %v8200 = vpop.f32.mrb[0].mxu0
        %8201 = vmatprep.mubr.bf16.mxu0 %v8011
        %8202 = vmatmul.mubr.bf16.gmra.mrb[0].mxu0 %v8010
        %v8203 = vpop.f32.mrb[0].mxu0
        %v8204 = vadd.f32 %v8063, %v8203
        %v8205 = vpop.f32.mrb[0].mxu0
        %v8206 = vpop.f32.mrb[0].mxu0
        %v8207 = vadd.f32 %v8063, %v8206
        %v8208 = vpop.f32.mrb[0].mxu0
        %8209 = vmatprep.mubr.bf16.mxu0 %v8013
        %8210 = vmatmul.mubr.bf16.gmra.mrb[0].mxu0 %v8012
        %v8211 = vpop.f32.mrb[0].mxu0
        %v8212 = vadd.f32 %v8063, %v8211
        %v8213 = vpop.f32.mrb[0].mxu0
        %v8214 = vpop.f32.mrb[0].mxu0
        %v8215 = vadd.f32 %v8063, %v8214
        %v8216 = vpop.f32.mrb[0].mxu0
        %8217 = vmatprep.mubr.bf16.mxu0 %v8015
        %8218 = vmatmul.mubr.bf16.gmra.mrb[0].mxu0 %v8014
        %v8219 = vpop.f32.mrb[0].mxu0
        %v8220 = vadd.f32 %v8063, %v8219
        %v8221 = vpop.f32.mrb[0].mxu0
        %v8222 = vpop.f32.mrb[0].mxu0
        %v8223 = vadd.f32 %v8063, %v8222
        %v8224 = vpop.f32.mrb[0].mxu0
        %8225 = vmatprep.mubr.bf16.mxu0 %v8017
        %8226 = vmatmul.mubr.bf16.gmra.mrb[0].mxu0 %v8016
        %v8227 = vpop.f32.mrb[0].mxu0
        %v8228 = vadd.f32 %v8063, %v8227
        %v8229 = vpop.f32.mrb[0].mxu0
        %v8230 = vpop.f32.mrb[0].mxu0
        %v8231 = vadd.f32 %v8063, %v8230
        %v8232 = vpop.f32.mrb[0].mxu0
        %8233 = vmatprep.mubr.bf16.mxu0 %v8019
        %8234 = vmatmul.mubr.bf16.gmra.mrb[0].mxu0 %v8018
        %v8235 = vpop.f32.mrb[0].mxu0
        %v8236 = vadd.f32 %v8063, %v8235
        %v8237 = vpop.f32.mrb[0].mxu0
        %v8238 = vpop.f32.mrb[0].mxu0
        %v8239 = vadd.f32 %v8063, %v8238
        %v8240 = vpop.f32.mrb[0].mxu0
        %8241 = vmatprep.mubr.bf16.mxu0 %v8021
        %8242 = vmatmul.mubr.bf16.gmra.mrb[0].mxu0 %v8020
        %v8243 = vpop.f32.mrb[0].mxu0
        %v8244 = vadd.f32 %v8063, %v8243
        %v8245 = vpop.f32.mrb[0].mxu0
        %v8246 = vpop.f32.mrb[0].mxu0
        %v8247 = vadd.f32 %v8063, %v8246
        %v8248 = vpop.f32.mrb[0].mxu0
        %8249 = vmatprep.mubr.bf16.mxu0 %v8023
        %8250 = vmatmul.mubr.bf16.gmra.mrb[0].mxu0 %v8022
        %v8251 = vpop.f32.mrb[0].mxu0
        %v8252 = vadd.f32 %v8063, %v8251
        %v8253 = vpop.f32.mrb[0].mxu0
        %v8254 = vpop.f32.mrb[0].mxu0
        %v8255 = vadd.f32 %v8063, %v8254
        %v8256 = vpop.f32.mrb[0].mxu0
        %8257 = vdwg.mxu0
        %v8258 = vadd.f32 %v7741, %v8196
        %v8259 = vadd.f32 %v7742, %v8199
        %v8260 = vadd.f32 %v7743, %v8204
        %v8261 = vadd.f32 %v7744, %v8207
        %v8262 = vadd.f32 %v7745, %v8212
        %v8263 = vadd.f32 %v7746, %v8215
        %v8264 = vadd.f32 %v7747, %v8220
        %v8265 = vadd.f32 %v7748, %v8223
        %v8266 = vadd.f32 %v7749, %v8228
        %v8267 = vadd.f32 %v7750, %v8231
        %v8268 = vadd.f32 %v7751, %v8236
        %v8269 = vadd.f32 %v7752, %v8239
        %v8270 = vadd.f32 %v7753, %v8244
        %v8271 = vadd.f32 %v7754, %v8247
        %v8272 = vadd.f32 %v7755, %v8252
        %v8273 = vadd.f32 %v7756, %v8255
        %s8274 = scalar_lea.vmem [#allocation14], 1
        %v8275 = vld [vmem:[%s8274] sm:$0x1]
        %s8276 = scalar_lea.vmem [#allocation16], 1
        %v8277 = vld [vmem:[%s8276] sm:$0x1]
        %v8278 = vsel %vm1187, %v8258, 0.0
        %8279 = vadd.xlane.f32.xlu0 %v8278
        %v8280 = vpop.xlane.xlu0 %8279
        %v8281 = vsel %vm1187, %v8259, 0.0
        %8282 = vadd.xlane.f32.xlu0 %v8281
        %v8283 = vpop.xlane.xlu0 %8282
        %v8284 = vsel %vm1187, %v8260, 0.0
        %8285 = vadd.xlane.f32.xlu0 %v8284
        %v8286 = vpop.xlane.xlu0 %8285
        %v8287 = vsel %vm1187, %v8261, 0.0
        %8288 = vadd.xlane.f32.xlu0 %v8287
        %v8289 = vpop.xlane.xlu0 %8288
        %v8290 = vsel %vm1187, %v8262, 0.0
        %8291 = vadd.xlane.f32.xlu0 %v8290
        %v8292 = vpop.xlane.xlu0 %8291
        %v8293 = vsel %vm1187, %v8263, 0.0
        %8294 = vadd.xlane.f32.xlu0 %v8293
        %v8295 = vpop.xlane.xlu0 %8294
        %v8296 = vsel %vm1187, %v8264, 0.0
        %8297 = vadd.xlane.f32.xlu0 %v8296
        %v8298 = vpop.xlane.xlu0 %8297
        %v8299 = vsel %vm1187, %v8265, 0.0
        %8300 = vadd.xlane.f32.xlu0 %v8299
        %v8301 = vpop.xlane.xlu0 %8300
        %v8302 = vsel %vm1187, %v8266, 0.0
        %8303 = vadd.xlane.f32.xlu0 %v8302
        %v8304 = vpop.xlane.xlu0 %8303
        %v8305 = vsel %vm1187, %v8267, 0.0
        %8306 = vadd.xlane.f32.xlu0 %v8305
        %v8307 = vpop.xlane.xlu0 %8306
        %v8308 = vsel %vm1187, %v8268, 0.0
        %8309 = vadd.xlane.f32.xlu0 %v8308
        %v8310 = vpop.xlane.xlu0 %8309
        %v8311 = vsel %vm1187, %v8269, 0.0
        %8312 = vadd.xlane.f32.xlu0 %v8311
        %v8313 = vpop.xlane.xlu0 %8312
        %v8314 = vsel %vm1187, %v8270, 0.0
        %8315 = vadd.xlane.f32.xlu0 %v8314
        %v8316 = vpop.xlane.xlu0 %8315
        %v8317 = vsel %vm1187, %v8271, 0.0
        %8318 = vadd.xlane.f32.xlu0 %v8317
        %v8319 = vpop.xlane.xlu0 %8318
        %v8320 = vsel %vm1187, %v8272, 0.0
        %8321 = vadd.xlane.f32.xlu0 %v8320
        %v8322 = vpop.xlane.xlu0 %8321
        %v8323 = vsel %vm1187, %v8273, 0.0
        %8324 = vadd.xlane.f32.xlu0 %v8323
        %v8325 = vpop.xlane.xlu0 %8324
        %v8326 = vmul.f32 %v8280, %v3772
        %v8327 = vmul.f32 %v8283, %v3772
        %v8328 = vmul.f32 %v8286, %v3772
        %v8329 = vmul.f32 %v8289, %v3772
        %v8330 = vmul.f32 %v8292, %v3772
        %v8331 = vmul.f32 %v8295, %v3772
        %v8332 = vmul.f32 %v8298, %v3772
        %v8333 = vmul.f32 %v8301, %v3772
        %v8334 = vmul.f32 %v8304, %v3772
        %v8335 = vmul.f32 %v8307, %v3772
        %v8336 = vmul.f32 %v8310, %v3772
        %v8337 = vmul.f32 %v8313, %v3772
        %v8338 = vmul.f32 %v8316, %v3772
        %v8339 = vmul.f32 %v8319, %v3772
        %v8340 = vmul.f32 %v8322, %v3772
        %v8341 = vmul.f32 %v8325, %v3772
        %v8342 = vsub.f32 %v8258, %v8326
        %v8343 = vsub.f32 %v8259, %v8327
        %v8344 = vsub.f32 %v8260, %v8328
        %v8345 = vsub.f32 %v8261, %v8329
        %v8346 = vsub.f32 %v8262, %v8330
        %v8347 = vsub.f32 %v8263, %v8331
        %v8348 = vsub.f32 %v8264, %v8332
        %v8349 = vsub.f32 %v8265, %v8333
        %v8350 = vsub.f32 %v8266, %v8334
        %v8351 = vsub.f32 %v8267, %v8335
        %v8352 = vsub.f32 %v8268, %v8336
        %v8353 = vsub.f32 %v8269, %v8337
        %v8354 = vsub.f32 %v8270, %v8338
        %v8355 = vsub.f32 %v8271, %v8339
        %v8356 = vsub.f32 %v8272, %v8340
        %v8357 = vsub.f32 %v8273, %v8341
        %v8358 = vmul.f32 %v8342, %v8342
        %v8359 = vmul.f32 %v8343, %v8343
        %v8360 = vmul.f32 %v8344, %v8344
        %v8361 = vmul.f32 %v8345, %v8345
        %v8362 = vmul.f32 %v8346, %v8346
        %v8363 = vmul.f32 %v8347, %v8347
        %v8364 = vmul.f32 %v8348, %v8348
        %v8365 = vmul.f32 %v8349, %v8349
        %v8366 = vmul.f32 %v8350, %v8350
        %v8367 = vmul.f32 %v8351, %v8351
        %v8368 = vmul.f32 %v8352, %v8352
        %v8369 = vmul.f32 %v8353, %v8353
        %v8370 = vmul.f32 %v8354, %v8354
        %v8371 = vmul.f32 %v8355, %v8355
        %v8372 = vmul.f32 %v8356, %v8356
        %v8373 = vmul.f32 %v8357, %v8357
        %v8374 = vsel %vm1187, %v8358, 0.0
        %8375 = vadd.xlane.f32.xlu0 %v8374
        %v8376 = vpop.xlane.xlu0 %8375
        %v8377 = vsel %vm1187, %v8359, 0.0
        %8378 = vadd.xlane.f32.xlu0 %v8377
        %v8379 = vpop.xlane.xlu0 %8378
        %v8380 = vsel %vm1187, %v8360, 0.0
        %8381 = vadd.xlane.f32.xlu0 %v8380
        %v8382 = vpop.xlane.xlu0 %8381
        %v8383 = vsel %vm1187, %v8361, 0.0
        %8384 = vadd.xlane.f32.xlu0 %v8383
        %v8385 = vpop.xlane.xlu0 %8384
        %v8386 = vsel %vm1187, %v8362, 0.0
        %8387 = vadd.xlane.f32.xlu0 %v8386
        %v8388 = vpop.xlane.xlu0 %8387
        %v8389 = vsel %vm1187, %v8363, 0.0
        %8390 = vadd.xlane.f32.xlu0 %v8389
        %v8391 = vpop.xlane.xlu0 %8390
        %v8392 = vsel %vm1187, %v8364, 0.0
        %8393 = vadd.xlane.f32.xlu0 %v8392
        %v8394 = vpop.xlane.xlu0 %8393
        %v8395 = vsel %vm1187, %v8365, 0.0
        %8396 = vadd.xlane.f32.xlu0 %v8395
        %v8397 = vpop.xlane.xlu0 %8396
        %v8398 = vsel %vm1187, %v8366, 0.0
        %8399 = vadd.xlane.f32.xlu0 %v8398
        %v8400 = vpop.xlane.xlu0 %8399
        %v8401 = vsel %vm1187, %v8367, 0.0
        %8402 = vadd.xlane.f32.xlu0 %v8401
        %v8403 = vpop.xlane.xlu0 %8402
        %v8404 = vsel %vm1187, %v8368, 0.0
        %8405 = vadd.xlane.f32.xlu0 %v8404
        %v8406 = vpop.xlane.xlu0 %8405
        %v8407 = vsel %vm1187, %v8369, 0.0
        %8408 = vadd.xlane.f32.xlu0 %v8407
        %v8409 = vpop.xlane.xlu0 %8408
        %v8410 = vsel %vm1187, %v8370, 0.0
        %8411 = vadd.xlane.f32.xlu0 %v8410
        %v8412 = vpop.xlane.xlu0 %8411
        %v8413 = vsel %vm1187, %v8371, 0.0
        %8414 = vadd.xlane.f32.xlu0 %v8413
        %v8415 = vpop.xlane.xlu0 %8414
        %v8416 = vsel %vm1187, %v8372, 0.0
        %8417 = vadd.xlane.f32.xlu0 %v8416
        %v8418 = vpop.xlane.xlu0 %8417
        %v8419 = vsel %vm1187, %v8373, 0.0
        %8420 = vadd.xlane.f32.xlu0 %v8419
        %v8421 = vpop.xlane.xlu0 %8420
        %v8422 = vmul.f32 %v8376, %v3772
        %v8423 = vmul.f32 %v8379, %v3772
        %v8424 = vmul.f32 %v8382, %v3772
        %v8425 = vmul.f32 %v8385, %v3772
        %v8426 = vmul.f32 %v8388, %v3772
        %v8427 = vmul.f32 %v8391, %v3772
        %v8428 = vmul.f32 %v8394, %v3772
        %v8429 = vmul.f32 %v8397, %v3772
        %v8430 = vmul.f32 %v8400, %v3772
        %v8431 = vmul.f32 %v8403, %v3772
        %v8432 = vmul.f32 %v8406, %v3772
        %v8433 = vmul.f32 %v8409, %v3772
        %v8434 = vmul.f32 %v8412, %v3772
        %v8435 = vmul.f32 %v8415, %v3772
        %v8436 = vmul.f32 %v8418, %v3772
        %v8437 = vmul.f32 %v8421, %v3772
        %v8438 = vadd.f32 %v8422, 1e-05
        %v8439 = vadd.f32 %v8423, 1e-05
        %v8440 = vadd.f32 %v8424, 1e-05
        %v8441 = vadd.f32 %v8425, 1e-05
        %v8442 = vadd.f32 %v8426, 1e-05
        %v8443 = vadd.f32 %v8427, 1e-05
        %v8444 = vadd.f32 %v8428, 1e-05
        %v8445 = vadd.f32 %v8429, 1e-05
        %v8446 = vadd.f32 %v8430, 1e-05
        %v8447 = vadd.f32 %v8431, 1e-05
        %v8448 = vadd.f32 %v8432, 1e-05
        %v8449 = vadd.f32 %v8433, 1e-05
        %v8450 = vadd.f32 %v8434, 1e-05
        %v8451 = vadd.f32 %v8435, 1e-05
        %v8452 = vadd.f32 %v8436, 1e-05
        %v8453 = vadd.f32 %v8437, 1e-05
        %v8454 = vrsqrt.pop %v8438
        %v8455 = vrsqrt.pop %v8439
        %v8456 = vrsqrt.pop %v8440
        %v8457 = vrsqrt.pop %v8441
        %v8458 = vrsqrt.pop %v8442
        %v8459 = vrsqrt.pop %v8443
        %v8460 = vrsqrt.pop %v8444
        %v8461 = vrsqrt.pop %v8445
        %v8462 = vrsqrt.pop %v8446
        %v8463 = vrsqrt.pop %v8447
        %v8464 = vrsqrt.pop %v8448
        %v8465 = vrsqrt.pop %v8449
        %v8466 = vrsqrt.pop %v8450
        %v8467 = vrsqrt.pop %v8451
        %v8468 = vrsqrt.pop %v8452
        %v8469 = vrsqrt.pop %v8453
        %v8470 = vmul.f32 %v8342, %v8454
        %v8471 = vmul.f32 %v8343, %v8455
        %v8472 = vmul.f32 %v8344, %v8456
        %v8473 = vmul.f32 %v8345, %v8457
        %v8474 = vmul.f32 %v8346, %v8458
        %v8475 = vmul.f32 %v8347, %v8459
        %v8476 = vmul.f32 %v8348, %v8460
        %v8477 = vmul.f32 %v8349, %v8461
        %v8478 = vmul.f32 %v8350, %v8462
        %v8479 = vmul.f32 %v8351, %v8463
        %v8480 = vmul.f32 %v8352, %v8464
        %v8481 = vmul.f32 %v8353, %v8465
        %v8482 = vmul.f32 %v8354, %v8466
        %v8483 = vmul.f32 %v8355, %v8467
        %v8484 = vmul.f32 %v8356, %v8468
        %v8485 = vmul.f32 %v8357, %v8469
        %v8487 = vlaneseq
        %v8488 = vshrl.u32 %v8487, 7
        %v8489 = vsub.s32 0, %v8488
        %v8490 = vrot.slane %v8275, %v8489
        %v8492 = vmul.f32 %v8470, %v8490
        %v8493 = vmul.f32 %v8471, %v8490
        %v8494 = vmul.f32 %v8472, %v8490
        %v8495 = vmul.f32 %v8473, %v8490
        %v8496 = vmul.f32 %v8474, %v8490
        %v8497 = vmul.f32 %v8475, %v8490
        %v8498 = vmul.f32 %v8476, %v8490
        %v8499 = vmul.f32 %v8477, %v8490
        %v8500 = vmul.f32 %v8478, %v8490
        %v8501 = vmul.f32 %v8479, %v8490
        %v8502 = vmul.f32 %v8480, %v8490
        %v8503 = vmul.f32 %v8481, %v8490
        %v8504 = vmul.f32 %v8482, %v8490
        %v8505 = vmul.f32 %v8483, %v8490
        %v8506 = vmul.f32 %v8484, %v8490
        %v8507 = vmul.f32 %v8485, %v8490
        %v8509 = vlaneseq
        %v8510 = vshrl.u32 %v8509, 7
        %v8511 = vsub.s32 0, %v8510
        %v8512 = vrot.slane %v8277, %v8511
        %v8514 = vadd.f32 %v8492, %v8512
        %v8515 = vadd.f32 %v8493, %v8512
        %v8516 = vadd.f32 %v8494, %v8512
        %v8517 = vadd.f32 %v8495, %v8512
        %v8518 = vadd.f32 %v8496, %v8512
        %v8519 = vadd.f32 %v8497, %v8512
        %v8520 = vadd.f32 %v8498, %v8512
        %v8521 = vadd.f32 %v8499, %v8512
        %v8522 = vadd.f32 %v8500, %v8512
        %v8523 = vadd.f32 %v8501, %v8512
        %v8524 = vadd.f32 %v8502, %v8512
        %v8525 = vadd.f32 %v8503, %v8512
        %v8526 = vadd.f32 %v8504, %v8512
        %v8527 = vadd.f32 %v8505, %v8512
        %v8528 = vadd.f32 %v8506, %v8512
        %v8529 = vadd.f32 %v8507, %v8512
        %v8530 = vsel %vm1187, %v8514, 0.0
        %v8531 = vsel %vm1187, %v8515, 0.0
        %v8532 = vadd.f32 %v8530, %v8531
        %v8533 = vrot.slane %v8532, 4
        %v8534 = vadd.f32 %v8532, %v8533
        %v8535 = vrot.slane %v8534, 2
        %v8536 = vadd.f32 %v8534, %v8535
        %v8537 = vrot.slane %v8536, 1
        %v8538 = vadd.f32 %v8536, %v8537
        %v8539 = vsel %vm1187, %v8516, 0.0
        %v8540 = vsel %vm1187, %v8517, 0.0
        %v8541 = vadd.f32 %v8539, %v8540
        %v8542 = vrot.slane %v8541, 4
        %v8543 = vadd.f32 %v8541, %v8542
        %v8544 = vrot.slane %v8543, 2
        %v8545 = vadd.f32 %v8543, %v8544
        %v8546 = vrot.slane %v8545, 1
        %v8547 = vadd.f32 %v8545, %v8546
        %v8548 = vsel %vm1187, %v8518, 0.0
        %v8549 = vsel %vm1187, %v8519, 0.0
        %v8550 = vadd.f32 %v8548, %v8549
        %v8551 = vrot.slane %v8550, 4
        %v8552 = vadd.f32 %v8550, %v8551
        %v8553 = vrot.slane %v8552, 2
        %v8554 = vadd.f32 %v8552, %v8553
        %v8555 = vrot.slane %v8554, 1
        %v8556 = vadd.f32 %v8554, %v8555
        %v8557 = vsel %vm1187, %v8520, 0.0
        %v8558 = vsel %vm1187, %v8521, 0.0
        %v8559 = vadd.f32 %v8557, %v8558
        %v8560 = vrot.slane %v8559, 4
        %v8561 = vadd.f32 %v8559, %v8560
        %v8562 = vrot.slane %v8561, 2
        %v8563 = vadd.f32 %v8561, %v8562
        %v8564 = vrot.slane %v8563, 1
        %v8565 = vadd.f32 %v8563, %v8564
        %v8566 = vsel %vm1187, %v8522, 0.0
        %v8567 = vsel %vm1187, %v8523, 0.0
        %v8568 = vadd.f32 %v8566, %v8567
        %v8569 = vrot.slane %v8568, 4
        %v8570 = vadd.f32 %v8568, %v8569
        %v8571 = vrot.slane %v8570, 2
        %v8572 = vadd.f32 %v8570, %v8571
        %v8573 = vrot.slane %v8572, 1
        %v8574 = vadd.f32 %v8572, %v8573
        %v8575 = vsel %vm1187, %v8524, 0.0
        %v8576 = vsel %vm1187, %v8525, 0.0
        %v8577 = vadd.f32 %v8575, %v8576
        %v8578 = vrot.slane %v8577, 4
        %v8579 = vadd.f32 %v8577, %v8578
        %v8580 = vrot.slane %v8579, 2
        %v8581 = vadd.f32 %v8579, %v8580
        %v8582 = vrot.slane %v8581, 1
        %v8583 = vadd.f32 %v8581, %v8582
        %v8584 = vsel %vm1187, %v8526, 0.0
        %v8585 = vsel %vm1187, %v8527, 0.0
        %v8586 = vadd.f32 %v8584, %v8585
        %v8587 = vrot.slane %v8586, 4
        %v8588 = vadd.f32 %v8586, %v8587
        %v8589 = vrot.slane %v8588, 2
        %v8590 = vadd.f32 %v8588, %v8589
        %v8591 = vrot.slane %v8590, 1
        %v8592 = vadd.f32 %v8590, %v8591
        %v8593 = vsel %vm1187, %v8528, 0.0
        %v8594 = vsel %vm1187, %v8529, 0.0
        %v8595 = vadd.f32 %v8593, %v8594
        %v8596 = vrot.slane %v8595, 4
        %v8597 = vadd.f32 %v8595, %v8596
        %v8598 = vrot.slane %v8597, 2
        %v8599 = vadd.f32 %v8597, %v8598
        %v8600 = vrot.slane %v8599, 1
        %v8601 = vadd.f32 %v8599, %v8600
        %v8602 = vrcp.pop 16.0
        %v8603 = vmul.f32 %v8538, %v8602
        %v8604 = vmul.f32 %v8547, %v8602
        %v8605 = vmul.f32 %v8556, %v8602
        %v8606 = vmul.f32 %v8565, %v8602
        %v8607 = vmul.f32 %v8574, %v8602
        %v8608 = vmul.f32 %v8583, %v8602
        %v8609 = vmul.f32 %v8592, %v8602
        %v8610 = vmul.f32 %v8601, %v8602
        %v8611 = vpack.c.bf16 %v8603, %v8603
        %v8612 = vpack.c.bf16 %v8604, %v8604
        %v8613 = vpack.c.bf16 %v8605, %v8605
        %v8614 = vpack.c.bf16 %v8606, %v8606
        %v8615 = vpack.c.bf16 %v8607, %v8607
        %v8616 = vpack.c.bf16 %v8608, %v8608
        %v8617 = vpack.c.bf16 %v8609, %v8609
        %v8618 = vpack.c.bf16 %v8610, %v8610
        %v8619 = vld [vmem:[#allocation17] sm:$0xf]
        %v8620 = vld [vmem:[#allocation17 + $0x4] sm:$0xf]
        %v8621 = vld [vmem:[#allocation17 + $0x8] sm:$0xf]
        %v8622 = vld [vmem:[#allocation17 + $0xc] sm:$0xf]
        %v8623 = vld [vmem:[#allocation17 + $0x10] sm:$0xf]
        %v8624 = vld [vmem:[#allocation17 + $0x14] sm:$0xf]
        %v8625 = vld [vmem:[#allocation17 + $0x18] sm:$0xf]
        %v8626 = vld [vmem:[#allocation17 + $0x1c] sm:$0xf]
        %v8627 = vld [vmem:[#allocation17 + $0x20] sm:$0xf]
        %v8628 = vld [vmem:[#allocation17 + $0x24] sm:$0xf]
        %v8629 = vld [vmem:[#allocation19] sm:$0x1]
        %v8631 = vlaneseq
        %v8632 = vshrl.u32 %v8631, 7
        %v8633 = vsub.s32 0, %v8632
        %v8634 = vrot.slane %v8629, %v8633
        %v8644 = vunpack.c.l.b16 %v8611
        %v8645 = vunpack.c.l.b16 %v8612
        %v8646 = vunpack.c.l.b16 %v8613
        %v8647 = vunpack.c.l.b16 %v8614
        %v8648 = vunpack.c.l.b16 %v8615
        %v8649 = vunpack.c.l.b16 %v8616
        %v8650 = vunpack.c.l.b16 %v8617
        %v8651 = vunpack.c.l.b16 %v8618
        %vm8652 = vcmask 1041409
        %v8653 = vsel %vm8652, %v8645, %v8644
        %vm8654 = vcmask 1042434
        %v8655 = vsel %vm8654, %v8646, %v8653
        %vm8656 = vcmask 1043459
        %v8657 = vsel %vm8656, %v8647, %v8655
        %vm8658 = vcmask 1044484
        %v8659 = vsel %vm8658, %v8648, %v8657
        %vm8660 = vcmask 1045509
        %v8661 = vsel %vm8660, %v8649, %v8659
        %vm8662 = vcmask 1046534
        %v8663 = vsel %vm8662, %v8650, %v8661
        %vm8664 = vcmask 1047559
        %v8665 = vsel %vm8664, %v8651, %v8663
        %v8666 = vpack.c.b16 %v8665, %v8665
        %v8677 = vunpack.c.l.b16 %v8619
        %v8678 = vunpack.c.l.b16 %v8620
        %v8679 = vunpack.c.l.b16 %v8621
        %v8680 = vunpack.c.l.b16 %v8622
        %v8681 = vunpack.c.l.b16 %v8623
        %v8682 = vunpack.c.l.b16 %v8624
        %v8683 = vunpack.c.l.b16 %v8625
        %v8684 = vunpack.c.l.b16 %v8626
        %v8685 = vunpack.c.l.b16 %v8627
        %v8686 = vunpack.c.l.b16 %v8628
        %v8687 = vpack.c.b16 %v8678, %v8677
        %v8688 = vpack.c.b16 %v8680, %v8679
        %v8689 = vpack.c.b16 %v8682, %v8681
        %v8690 = vpack.c.b16 %v8684, %v8683
        %v8691 = vpack.c.b16 %v8686, %v8685
        %v8698 = vsel %vm1187, %v8666, 0
        %8700 = vmatprep.subr.bf16.mxu0 0
        %8701 = vmatpush1.bf16.msra.mxu0 %v8687
        %8702 = vmatprep.subr.bf16.mxu0 0
        %8703 = vmatpush1.bf16.msra.mxu0 %v8688
        %8704 = vmatprep.subr.bf16.mxu0 0
        %8705 = vmatpush1.bf16.msra.mxu0 %v8689
        %8706 = vmatprep.subr.bf16.mxu0 0
        %8707 = vmatpush1.bf16.msra.mxu0 %v8690
        %8708 = vmatprep.subr.bf16.mxu0 0
        %8709 = vmatpush1.bf16.msra.mxu0 %v8691
        %8710 = vmatprep.subr.bf16.mxu0 0
        %8711 = vmatpush1.bf16.msra.mxu0 0
        %8712 = vmatprep.subr.bf16.mxu0 0
        %8713 = vmatpush1.bf16.msra.mxu0 0
        %8714 = vmatprep.subr.bf16.mxu0 0
        %8715 = vmatpush1.bf16.msra.mxu0 0
        %8716 = vmatprep.subr.bf16.mxu0 0
        %8717 = vmatpush1.bf16.msra.mxu0 0
        %8718 = vmatprep.subr.bf16.mxu0 0
        %8719 = vmatpush1.bf16.msra.mxu0 0
        %8720 = vmatprep.subr.bf16.mxu0 0
        %8721 = vmatpush1.bf16.msra.mxu0 0
        %8722 = vmatprep.subr.bf16.mxu0 0
        %8723 = vmatpush1.bf16.msra.mxu0 0
        %8724 = vmatprep.subr.bf16.mxu0 0
        %8725 = vmatpush1.bf16.msra.mxu0 0
        %8726 = vmatprep.subr.bf16.mxu0 0
        %8727 = vmatpush1.bf16.msra.mxu0 0
        %8728 = vmatprep.subr.bf16.mxu0 0
        %8729 = vmatpush1.bf16.msra.mxu0 0
        %8730 = vmatprep.subr.bf16.mxu0 0
        %8731 = vmatpush1.bf16.msra.mxu0 0
        %8732 = vmatprep.mubr.bf16.mxu0 0
        %8733 = vmatmul.mubr.bf16.gmra.mrb[0].mxu0 %v8698
        %v8734 = vpop.f32.mrb[0].mxu0
        %v8735 = vadd.f32 %v8634, %v8734
        %v8736 = vpop.f32.mrb[0].mxu0
        %v8737 = vpop.f32.mrb[0].mxu0
        %v8738 = vpop.f32.mrb[0].mxu0
        %8739 = vdwg.mxu0
        %v8740 = vmax.f32 %v8735, 0.0
        %v8741 = vpack.c.bf16 %v8740, %v8740
        %v8742 = vld [vmem:[#allocation20] sm:$0xff]
        %v8743 = vld [vmem:[#allocation20 + $0x8] sm:$0xff]
        %v8744 = vld [vmem:[#allocation20 + $0x10] sm:$0xf]
        %v8745 = vld [vmem:[#allocation20 + $0x14] sm:$0xff]
        %v8746 = vld [vmem:[#allocation20 + $0x1c] sm:$0xff]
        %v8747 = vld [vmem:[#allocation20 + $0x24] sm:$0xf]
        %v8748 = vld [vmem:[#allocation20 + $0x28] sm:$0xff]
        %v8749 = vld [vmem:[#allocation20 + $0x30] sm:$0xff]
        %v8750 = vld [vmem:[#allocation20 + $0x38] sm:$0xf]
        %v8751 = vld [vmem:[#allocation20 + $0x3c] sm:$0xff]
        %v8752 = vld [vmem:[#allocation20 + $0x44] sm:$0xff]
        %v8753 = vld [vmem:[#allocation20 + $0x4c] sm:$0xf]
        %v8754 = vld [vmem:[#allocation20 + $0x50] sm:$0xff]
        %v8755 = vld [vmem:[#allocation20 + $0x58] sm:$0xff]
        %v8756 = vld [vmem:[#allocation20 + $0x60] sm:$0xf]
        %v8757 = vld [vmem:[#allocation20 + $0x64] sm:$0xff]
        %v8758 = vld [vmem:[#allocation20 + $0x6c] sm:$0xff]
        %v8759 = vld [vmem:[#allocation20 + $0x74] sm:$0xf]
        %v8760 = vld [vmem:[#allocation20 + $0x78] sm:$0xff]
        %v8761 = vld [vmem:[#allocation20 + $0x80] sm:$0xff]
        %v8762 = vld [vmem:[#allocation20 + $0x88] sm:$0xf]
        %v8763 = vld [vmem:[#allocation20 + $0x8c] sm:$0xff]
        %v8764 = vld [vmem:[#allocation20 + $0x94] sm:$0xff]
        %v8765 = vld [vmem:[#allocation20 + $0x9c] sm:$0xf]
        %v8766 = vld [vmem:[#allocation20 + $0xa0] sm:$0xff]
        %v8767 = vld [vmem:[#allocation20 + $0xa8] sm:$0xff]
        %v8768 = vld [vmem:[#allocation20 + $0xb0] sm:$0xf]
        %v8769 = vld [vmem:[#allocation20 + $0xb4] sm:$0xff]
        %v8770 = vld [vmem:[#allocation20 + $0xbc] sm:$0xff]
        %v8771 = vld [vmem:[#allocation20 + $0xc4] sm:$0xf]
        %v8772 = vld [vmem:[#allocation22] sm:$0x1f]
        %v8774 = vlaneseq
        %v8775 = vshrl.u32 %v8774, 7
        %v8776 = vsub.s32 0, %v8775
        %v8777 = vrot.slane %v8772, %v8776
        %v8778 = vlaneseq
        %v8779 = vshrl.u32 %v8778, 7
        %v8780 = vsub.s32 1, %v8779
        %v8781 = vrot.slane %v8772, %v8780
        %v8782 = vlaneseq
        %v8783 = vshrl.u32 %v8782, 7
        %v8784 = vsub.s32 2, %v8783
        %v8785 = vrot.slane %v8772, %v8784
        %v8786 = vlaneseq
        %v8787 = vshrl.u32 %v8786, 7
        %v8788 = vsub.s32 3, %v8787
        %v8789 = vrot.slane %v8772, %v8788
        %v8790 = vlaneseq
        %v8791 = vshrl.u32 %v8790, 7
        %v8792 = vsub.s32 4, %v8791
        %v8793 = vrot.slane %v8772, %v8792
        %v8829 = vunpack.c.l.b16 %v8742
        %v8830 = vunpack.c.h.b16 %v8742
        %v8831 = vunpack.c.l.b16 %v8743
        %v8832 = vunpack.c.h.b16 %v8743
        %v8833 = vunpack.c.l.b16 %v8744
        %v8834 = vunpack.c.l.b16 %v8745
        %v8835 = vunpack.c.h.b16 %v8745
        %v8836 = vunpack.c.l.b16 %v8746
        %v8837 = vunpack.c.h.b16 %v8746
        %v8838 = vunpack.c.l.b16 %v8747
        %v8839 = vunpack.c.l.b16 %v8748
        %v8840 = vunpack.c.h.b16 %v8748
        %v8841 = vunpack.c.l.b16 %v8749
        %v8842 = vunpack.c.h.b16 %v8749
        %v8843 = vunpack.c.l.b16 %v8750
        %v8844 = vunpack.c.l.b16 %v8751
        %v8845 = vunpack.c.h.b16 %v8751
        %v8846 = vunpack.c.l.b16 %v8752
        %v8847 = vunpack.c.h.b16 %v8752
        %v8848 = vunpack.c.l.b16 %v8753
        %v8849 = vunpack.c.l.b16 %v8754
        %v8850 = vunpack.c.h.b16 %v8754
        %v8851 = vunpack.c.l.b16 %v8755
        %v8852 = vunpack.c.h.b16 %v8755
        %v8853 = vunpack.c.l.b16 %v8756
        %v8854 = vunpack.c.l.b16 %v8757
        %v8855 = vunpack.c.h.b16 %v8757
        %v8856 = vunpack.c.l.b16 %v8758
        %v8857 = vunpack.c.h.b16 %v8758
        %v8858 = vunpack.c.l.b16 %v8759
        %v8859 = vunpack.c.l.b16 %v8760
        %v8860 = vunpack.c.h.b16 %v8760
        %v8861 = vunpack.c.l.b16 %v8761
        %v8862 = vunpack.c.h.b16 %v8761
        %v8863 = vunpack.c.l.b16 %v8762
        %v8864 = vunpack.c.l.b16 %v8763
        %v8865 = vunpack.c.h.b16 %v8763
        %v8866 = vunpack.c.l.b16 %v8764
        %v8867 = vunpack.c.h.b16 %v8764
        %v8868 = vunpack.c.l.b16 %v8765
        %v8869 = vunpack.c.l.b16 %v8766
        %v8870 = vunpack.c.h.b16 %v8766
        %v8871 = vunpack.c.l.b16 %v8767
        %v8872 = vunpack.c.h.b16 %v8767
        %v8873 = vunpack.c.l.b16 %v8768
        %v8874 = vunpack.c.l.b16 %v8769
        %v8875 = vunpack.c.h.b16 %v8769
        %v8876 = vunpack.c.l.b16 %v8770
        %v8877 = vunpack.c.h.b16 %v8770
        %v8878 = vunpack.c.l.b16 %v8771
        %v8879 = vpack.c.b16 %v8834, %v8829
        %v8880 = vpack.c.b16 %v8835, %v8830
        %v8881 = vpack.c.b16 %v8836, %v8831
        %v8882 = vpack.c.b16 %v8837, %v8832
        %v8883 = vpack.c.b16 %v8838, %v8833
        %v8884 = vpack.c.b16 %v8844, %v8839
        %v8885 = vpack.c.b16 %v8845, %v8840
        %v8886 = vpack.c.b16 %v8846, %v8841
        %v8887 = vpack.c.b16 %v8847, %v8842
        %v8888 = vpack.c.b16 %v8848, %v8843
        %v8889 = vpack.c.b16 %v8854, %v8849
        %v8890 = vpack.c.b16 %v8855, %v8850
        %v8891 = vpack.c.b16 %v8856, %v8851
        %v8892 = vpack.c.b16 %v8857, %v8852
        %v8893 = vpack.c.b16 %v8858, %v8853
        %v8894 = vpack.c.b16 %v8864, %v8859
        %v8895 = vpack.c.b16 %v8865, %v8860
        %v8896 = vpack.c.b16 %v8866, %v8861
        %v8897 = vpack.c.b16 %v8867, %v8862
        %v8898 = vpack.c.b16 %v8868, %v8863
        %v8899 = vpack.c.b16 %v8874, %v8869
        %v8900 = vpack.c.b16 %v8875, %v8870
        %v8901 = vpack.c.b16 %v8876, %v8871
        %v8902 = vpack.c.b16 %v8877, %v8872
        %v8903 = vpack.c.b16 %v8878, %v8873
        %v8930 = vsel %vm1187, %v8741, 0
        %8932 = vmatprep.subr.bf16.mxu0 %v8880
        %8933 = vmatpush1.bf16.msra.mxu0 %v8879
        %8934 = vmatprep.subr.bf16.mxu0 %v8885
        %8935 = vmatpush1.bf16.msra.mxu0 %v8884
        %8936 = vmatprep.subr.bf16.mxu0 %v8890
        %8937 = vmatpush1.bf16.msra.mxu0 %v8889
        %8938 = vmatprep.subr.bf16.mxu0 %v8895
        %8939 = vmatpush1.bf16.msra.mxu0 %v8894
        %8940 = vmatprep.subr.bf16.mxu0 %v8900
        %8941 = vmatpush1.bf16.msra.mxu0 %v8899
        %8942 = vmatprep.subr.bf16.mxu0 0
        %8943 = vmatpush1.bf16.msra.mxu0 0
        %8944 = vmatprep.subr.bf16.mxu0 0
        %8945 = vmatpush1.bf16.msra.mxu0 0
        %8946 = vmatprep.subr.bf16.mxu0 0
        %8947 = vmatpush1.bf16.msra.mxu0 0
        %8948 = vmatprep.subr.bf16.mxu0 0
        %8949 = vmatpush1.bf16.msra.mxu0 0
        %8950 = vmatprep.subr.bf16.mxu0 0
        %8951 = vmatpush1.bf16.msra.mxu0 0
        %8952 = vmatprep.subr.bf16.mxu0 0
        %8953 = vmatpush1.bf16.msra.mxu0 0
        %8954 = vmatprep.subr.bf16.mxu0 0
        %8955 = vmatpush1.bf16.msra.mxu0 0
        %8956 = vmatprep.subr.bf16.mxu0 0
        %8957 = vmatpush1.bf16.msra.mxu0 0
        %8958 = vmatprep.subr.bf16.mxu0 0
        %8959 = vmatpush1.bf16.msra.mxu0 0
        %8960 = vmatprep.subr.bf16.mxu0 0
        %8961 = vmatpush1.bf16.msra.mxu0 0
        %8962 = vmatprep.subr.bf16.mxu0 0
        %8963 = vmatpush1.bf16.msra.mxu0 0
        %8964 = vmatprep.mubr.bf16.mxu0 0
        %8965 = vmatmul.mubr.bf16.gmra.mrb[0].mxu0 %v8930
        %v8966 = vpop.f32.mrb[0].mxu0
        %v8967 = vadd.f32 %v8777, %v8966
        %v8968 = vpop.f32.mrb[0].mxu0
        %v8969 = vadd.f32 %v8781, %v8968
        %v8970 = vpop.f32.mrb[0].mxu0
        %v8971 = vpop.f32.mrb[0].mxu0
        %8972 = vdwg.mxu0
        %8973 = vmatprep.subr.bf16.mxu0 %v8882
        %8974 = vmatpush1.bf16.msra.mxu0 %v8881
        %8975 = vmatprep.subr.bf16.mxu0 %v8887
        %8976 = vmatpush1.bf16.msra.mxu0 %v8886
        %8977 = vmatprep.subr.bf16.mxu0 %v8892
        %8978 = vmatpush1.bf16.msra.mxu0 %v8891
        %8979 = vmatprep.subr.bf16.mxu0 %v8897
        %8980 = vmatpush1.bf16.msra.mxu0 %v8896
        %8981 = vmatprep.subr.bf16.mxu0 %v8902
        %8982 = vmatpush1.bf16.msra.mxu0 %v8901
        %8983 = vmatprep.subr.bf16.mxu0 0
        %8984 = vmatpush1.bf16.msra.mxu0 0
        %8985 = vmatprep.subr.bf16.mxu0 0
        %8986 = vmatpush1.bf16.msra.mxu0 0
        %8987 = vmatprep.subr.bf16.mxu0 0
        %8988 = vmatpush1.bf16.msra.mxu0 0
        %8989 = vmatprep.subr.bf16.mxu0 0
        %8990 = vmatpush1.bf16.msra.mxu0 0
        %8991 = vmatprep.subr.bf16.mxu0 0
        %8992 = vmatpush1.bf16.msra.mxu0 0
        %8993 = vmatprep.subr.bf16.mxu0 0
        %8994 = vmatpush1.bf16.msra.mxu0 0
        %8995 = vmatprep.subr.bf16.mxu0 0
        %8996 = vmatpush1.bf16.msra.mxu0 0
        %8997 = vmatprep.subr.bf16.mxu0 0
        %8998 = vmatpush1.bf16.msra.mxu0 0
        %8999 = vmatprep.subr.bf16.mxu0 0
        %9000 = vmatpush1.bf16.msra.mxu0 0
        %9001 = vmatprep.subr.bf16.mxu0 0
        %9002 = vmatpush1.bf16.msra.mxu0 0
        %9003 = vmatprep.subr.bf16.mxu0 0
        %9004 = vmatpush1.bf16.msra.mxu0 0
        %9005 = vmatprep.mubr.bf16.mxu0 0
        %9006 = vmatmul.mubr.bf16.gmra.mrb[0].mxu0 %v8930
        %v9007 = vpop.f32.mrb[0].mxu0
        %v9008 = vadd.f32 %v8785, %v9007
        %v9009 = vpop.f32.mrb[0].mxu0
        %v9010 = vadd.f32 %v8789, %v9009
        %v9011 = vpop.f32.mrb[0].mxu0
        %v9012 = vpop.f32.mrb[0].mxu0
        %9013 = vdwg.mxu0
        %9014 = vmatprep.subr.bf16.mxu0 0
        %9015 = vmatpush1.bf16.msra.mxu0 %v8883
        %9016 = vmatprep.subr.bf16.mxu0 0
        %9017 = vmatpush1.bf16.msra.mxu0 %v8888
        %9018 = vmatprep.subr.bf16.mxu0 0
        %9019 = vmatpush1.bf16.msra.mxu0 %v8893
        %9020 = vmatprep.subr.bf16.mxu0 0
        %9021 = vmatpush1.bf16.msra.mxu0 %v8898
        %9022 = vmatprep.subr.bf16.mxu0 0
        %9023 = vmatpush1.bf16.msra.mxu0 %v8903
        %9024 = vmatprep.subr.bf16.mxu0 0
        %9025 = vmatpush1.bf16.msra.mxu0 0
        %9026 = vmatprep.subr.bf16.mxu0 0
        %9027 = vmatpush1.bf16.msra.mxu0 0
        %9028 = vmatprep.subr.bf16.mxu0 0
        %9029 = vmatpush1.bf16.msra.mxu0 0
        %9030 = vmatprep.subr.bf16.mxu0 0
        %9031 = vmatpush1.bf16.msra.mxu0 0
        %9032 = vmatprep.subr.bf16.mxu0 0
        %9033 = vmatpush1.bf16.msra.mxu0 0
        %9034 = vmatprep.subr.bf16.mxu0 0
        %9035 = vmatpush1.bf16.msra.mxu0 0
        %9036 = vmatprep.subr.bf16.mxu0 0
        %9037 = vmatpush1.bf16.msra.mxu0 0
        %9038 = vmatprep.subr.bf16.mxu0 0
        %9039 = vmatpush1.bf16.msra.mxu0 0
        %9040 = vmatprep.subr.bf16.mxu0 0
        %9041 = vmatpush1.bf16.msra.mxu0 0
        %9042 = vmatprep.subr.bf16.mxu0 0
        %9043 = vmatpush1.bf16.msra.mxu0 0
        %9044 = vmatprep.subr.bf16.mxu0 0
        %9045 = vmatpush1.bf16.msra.mxu0 0
        %9046 = vmatprep.mubr.bf16.mxu0 0
        %9047 = vmatmul.mubr.bf16.gmra.mrb[0].mxu0 %v8930
        %v9048 = vpop.f32.mrb[0].mxu0
        %v9049 = vadd.f32 %v8793, %v9048
        %v9050 = vpop.f32.mrb[0].mxu0
        %v9051 = vpop.f32.mrb[0].mxu0
        %v9052 = vpop.f32.mrb[0].mxu0
        %9053 = vdwg.mxu0
        %9054 = vst [vmem:[%s781] sm:$0xff] %v8967
        %9055 = vst [vmem:[%s781 + $0x8] sm:$0xff] %v8969
        %9056 = vst [vmem:[%s781 + $0x10] sm:$0xff] %v9008
        %9057 = vst [vmem:[%s781 + $0x18] sm:$0xff] %v9010
        %9058 = vst [vmem:[%s781 + $0x20] sm:$0xff] %v9049
        %s9059 = sand.u32 %s452, 1
        %s9060 = scalar_lea.sflag [#allocation4], %s9059
        %s9061 = sand.u32 %s452, 1
        %s9062 = smul.addr %s9061, 40
        %s9063 = scalar_lea.vmem [#allocation23], %s9062
        // Predicated region
        $region149: #{medium_classifier.1} parent=95 // pred_check
          %p9064 = pneg %p462
        $region150: #{medium_classifier.1} parent=95 // pred_check_branch
          %9066 = sbr.rel (%p9064) target = $region152
        $region151: #{medium_classifier.1} parent=95 // pred_region
          %s9068 = ssub.s32 640, 640
          %9069 = vsyncadd %s9060, %s9068
          %s9070 = smul.addr %s40, 5
          %s9071 = smul.addr %s9070, 128
          %s9072 = scalar_lea.hbm %s19, %s9071
          %s9074 = sshll.u32 %s9063, 4
          %s9075 = int_to_ptr.vmem [resolvable:$true] %s9074
          %9077 = dma.vmem_to_hbm [thread:$0]  %s9075, 640, %s9072, %s9060
        $region152: #{medium_classifier.1} parent=95 // pred_fallthru
          _
      $region96: #{medium_classifier.1} parent=5 // pred_fallthru
        _
      %p9078 = scmp.le.s32.totalorder 2, %s35
      // Predicated region
      $region153: #{medium_classifier.1} parent=5 // pred_check
        %p9079 = pneg %p9078
      $region154: #{medium_classifier.1} parent=5 // pred_check_branch
        %9081 = sbr.rel (%p9079) target = $region156
      $region155: #{medium_classifier.1} parent=5 // pred_region
        %s9082 = ssub.s32 %s35, 2
        // Predicated region
        $region157: #{medium_classifier.1} parent=155 // pred_check
          %p9083 = pneg %p468
        $region158: #{medium_classifier.1} parent=155 // pred_check_branch
          %9085 = sbr.rel (%p9083) target = $region160
        $region159: #{medium_classifier.1} parent=155 // pred_region
          %s9086 = sand.u32 %s453, 1
          %s9087 = scalar_lea.sflag [#allocation4], %s9086
          %s9088 = sand.u32 %s453, 1
          %s9089 = smul.addr %s9088, 40
          %s9090 = scalar_lea.vmem [#allocation23], %s9089
          %9091 = dma.done %s9087, 640
        $region160: #{medium_classifier.1} parent=155 // pred_fallthru
          _
      $region156: #{medium_classifier.1} parent=5 // pred_fallthru
        _
    $region6: #{medium_classifier.1} parent=1 // loop_footer
      %s39 = sadd.s32 1, %s35
    $region7: #{medium_classifier.1} parent=1 // loop_footer_branch
      %34 = sbr.rel target = $region3
    $region8: #{medium_classifier.1} parent=1 // loop_exit
      _
    %9092 = vsyncpa [#allocation3], 1
    %s9093 = scalar_lea.sflag [#allocation3], 1
    %9094 = vsyncpa %s9093, 1
    %9095 = vsyncpa [#allocation6], 1
    %9096 = vsyncpa [#allocation9], 1
    %9097 = vsyncpa [#allocation12], 1
    %9098 = vsyncpa [#allocation15], 1
    %9099 = vsyncpa [#allocation18], 1
    %9100 = vsyncpa [#allocation21], 1
    %9101 = vsyncpa [#allocation4], 1
    %s9102 = scalar_lea.sflag [#allocation4], 1
    %9103 = vsyncpa %s9102, 1

</llo_original>
